<compile_context>
chip_gen: v7x
topology: tpu7x:2x2x1
jax: 0.10.0
libtpu: 0.0.40
codegen_flags: <defaults>
</compile_context>

<pallas_src>
import functools

import jax
import jax.numpy as jnp
from jax.experimental import pallas as pl
from jax.experimental.pallas import tpu as pltpu

EPS = 1e-5


def _round_up(x, m):
    return (x + m - 1) // m * m


# ----------------------------- fused Pallas kernel ----------------------------

def _skconv2_fused_kernel(xp_ref, w_ref, scale_ref, bias_ref,
                          wfc_ref, zscale_ref, zbias_ref, wfcs_ref, bfcs_ref,
                          o_ref, feas_ref,
                          *, M, H, W, Cp, dils, maxd):
    """Whole SKConv2 forward for one image (grid over batch).

    xp_ref   : (1, H+2*maxd, W+2*maxd, Cp) bf16  zero-padded NHWC input
    w_ref    : (M, 3, 3*Cp, Cp)            bf16  grouped conv weights, block-diag
                                                 dense, kw taps packed into K
    scale_ref, bias_ref : (M, Cp) f32      conv-bias + eval-mode BN folded affine
    wfc_ref  : (Cp, d) bf16;  zscale/zbias : (1, d) f32   (fc + folded BN1d)
    wfcs_ref : (M, d, Cp) bf16;  bfcs_ref : (M, Cp) f32
    o_ref    : (1, H, W, Cp) f32
    feas_ref : VMEM scratch (M, H*W, Cp) f32 -- branch outputs stay on chip
    """
    HW = H * W

    # ---- M branches: grouped dilated 3x3 conv + folded BN + ReLU -------------
    for m in range(M):
        dil = dils[m]
        off = maxd - dil               # offset inside the max-dilation padding
        acc = jnp.zeros((HW, Cp), jnp.float32)
        for kh in range(3):
            r0 = off + kh * dil
            rows = xp_ref[0, r0:r0 + H, :, :]                    # (H, Wp, Cp)
            # pack the 3 kw taps into the contraction dim (lane-aligned concat)
            lhs = jnp.concatenate(
                [rows[:, off + kw * dil: off + kw * dil + W, :]
                 for kw in range(3)], axis=-1)                   # (H, W, 3*Cp)
            acc = acc + jnp.dot(lhs.reshape(HW, 3 * Cp), w_ref[m, kh, :, :],
                                preferred_element_type=jnp.float32)
        fea = jnp.maximum(acc * scale_ref[m:m + 1, :] + bias_ref[m:m + 1, :], 0.0)
        feas_ref[m, :, :] = fea                                  # keep in VMEM

    # ---- branch sum + global average pool ------------------------------------
    fea_u = feas_ref[0, :, :]
    for m in range(1, M):
        fea_u = fea_u + feas_ref[m, :, :]
    s = jnp.sum(fea_u, axis=0, keepdims=True) * (1.0 / HW)       # (1, Cp) f32

    # ---- fc (+ folded BN1d), per-branch fcs, softmax over branches -----------
    z = jnp.dot(s.astype(jnp.bfloat16), wfc_ref[...],
                preferred_element_type=jnp.float32)              # (1, d)
    z = (z * zscale_ref[...] + zbias_ref[...]).astype(jnp.bfloat16)
    logits = jnp.concatenate(
        [jnp.dot(z, wfcs_ref[m, :, :], preferred_element_type=jnp.float32)
         + bfcs_ref[m:m + 1, :] for m in range(M)], axis=0)      # (M, Cp)
    lg = logits - jnp.max(logits, axis=0, keepdims=True)
    ex = jnp.exp(lg)
    att = ex / jnp.sum(ex, axis=0, keepdims=True)                # softmax over M

    # ---- attention-weighted branch fusion ------------------------------------
    fused = feas_ref[0, :, :] * att[0:1, :]
    for m in range(1, M):
        fused = fused + feas_ref[m, :, :] * att[m:m + 1, :]
    o_ref[...] = fused.reshape(1, H, W, Cp)


# --------------------------------- wrapper ------------------------------------

def sk_conv2_forward(x_nchw, params):
    """Pallas implementation of SKConv2.forward (eval-mode BN)."""
    dils = tuple(br["dil"] for br in params["branches"])
    M, maxd = len(dils), max(dils)
    B, C, H, W = x_nchw.shape
    Cp = params["Cp"]
    d = params["zscale"].shape[1]

    # NCHW -> NHWC, bf16 matmul operand, channel pad to Cp, spatial halo pad.
    # TODO(synk): the spatial zero-pad could be folded into the kernel with
    # border masking to save one HBM pass over x; kept in the wrapper for now.
    x = jnp.transpose(x_nchw, (0, 2, 3, 1)).astype(jnp.bfloat16)
    xp = jnp.pad(x, ((0, 0), (maxd, maxd), (maxd, maxd), (0, Cp - C)))
    Hp, Wp = H + 2 * maxd, W + 2 * maxd

    kernel = functools.partial(_skconv2_fused_kernel, M=M, H=H, W=W,
                               Cp=Cp, dils=dils, maxd=maxd)

    flops = B * (M * 3 * 2 * H * W * (3 * Cp) * Cp + 2 * Cp * d + M * 2 * d * Cp)
    bytes_accessed = (xp.size * 2 + B * H * W * Cp * 4
                      + params["w_packed"].size * 2)
    cost = pl.CostEstimate(flops=flops, transcendentals=B * M * Cp,
                           bytes_accessed=bytes_accessed)

    out_p = pl.pallas_call(
        kernel,
        out_shape=jax.ShapeDtypeStruct((B, H, W, Cp), jnp.float32),
        grid=(B,),
        in_specs=[
            pl.BlockSpec((1, Hp, Wp, Cp), lambda b: (b, 0, 0, 0)),
            pl.BlockSpec((M, 3, 3 * Cp, Cp), lambda b: (0, 0, 0, 0)),
            pl.BlockSpec((M, Cp), lambda b: (0, 0)),
            pl.BlockSpec((M, Cp), lambda b: (0, 0)),
            pl.BlockSpec((Cp, d), lambda b: (0, 0)),
            pl.BlockSpec((1, d), lambda b: (0, 0)),
            pl.BlockSpec((1, d), lambda b: (0, 0)),
            pl.BlockSpec((M, d, Cp), lambda b: (0, 0, 0)),
            pl.BlockSpec((M, Cp), lambda b: (0, 0)),
        ],
        out_specs=pl.BlockSpec((1, H, W, Cp), lambda b: (b, 0, 0, 0)),
        scratch_shapes=[pltpu.VMEM((M, H * W, Cp), jnp.float32)],
        compiler_params=pltpu.CompilerParams(dimension_semantics=("parallel",)),
        cost_estimate=cost,
    )(xp, params["w_packed"], params["scale_p"], params["bias_p"],
      params["wfc_p"], params["zscale"], params["zbias"],
      params["wfcs_p"], params["bfcs_p"])

    out = out_p[..., :C]                                  # drop lane padding
    return jnp.transpose(out, (0, 3, 1, 2))               # NHWC -> NCHW


# --------------------------- parameter construction ---------------------------

def _bn_fold(gamma, beta, mean, var, conv_bias):
    scale = gamma / jnp.sqrt(var + EPS)
    bias = beta + (conv_bias - mean) * scale
    return scale, bias


def _grouped_to_blockdiag(w, G):
    """(C_out, C_in/G, 3, 3) grouped-conv weight -> (3, 3, C, C) dense
    block-diagonal weights indexed [kh][kw][ci, co]."""
    C, Cg, KH, KW = w.shape
    taps = jnp.zeros((KH, KW, C, C), jnp.float32)
    for g in range(G):
        blk = w[g * Cg:(g + 1) * Cg]                      # (co_l, ci_l, 3, 3)
        blk = jnp.transpose(blk, (2, 3, 1, 0))            # (3, 3, ci_l, co_l)
        taps = taps.at[:, :, g * Cg:(g + 1) * Cg, g * Cg:(g + 1) * Cg].set(blk)
    return taps


def _pack_conv_weights(branches, G, Cp):
    """Per branch: block-diag per-tap weights, kw packed into the K dim,
    channels zero-padded to Cp.  Returns (M, 3, 3*Cp, Cp) bf16."""
    packed = []
    for br in branches:
        taps = _grouped_to_blockdiag(br["w"], G)          # (3, 3, C, C)
        C = taps.shape[-1]
        taps = jnp.pad(taps, ((0, 0), (0, 0), (0, Cp - C), (0, Cp - C)))
        per_kh = [jnp.concatenate([taps[kh, kw] for kw in range(3)], axis=0)
                  for kh in range(3)]                     # each (3*Cp, Cp)
        packed.append(jnp.stack(per_kh, axis=0))          # (3, 3*Cp, Cp)
    return jnp.stack(packed, axis=0).astype(jnp.bfloat16)


def init_params(key, C, M=2, G=32, r=16, L=32):
    d = max(int(C / r), L)
    Cg = C // G
    Cp = _round_up(C, 128)
    keys = iter(jax.random.split(key, 6 * M + 6 + 2 * M))

    branches = []
    for i in range(M):                                    # use_1x1=False path
        w = jax.random.normal(next(keys), (C, Cg, 3, 3), jnp.float32) * 0.1
        b = jax.random.normal(next(keys), (C,), jnp.float32) * 0.1
        gamma = jax.random.uniform(next(keys), (C,), jnp.float32, 0.5, 1.5)
        beta = jax.random.normal(next(keys), (C,), jnp.float32) * 0.1
        mean = jax.random.normal(next(keys), (C,), jnp.float32) * 0.1
        var = jax.random.uniform(next(keys), (C,), jnp.float32, 0.5, 1.5)
        scale, bias = _bn_fold(gamma, beta, mean, var, b)
        branches.append(dict(w=w, b=b, gamma=gamma, beta=beta, mean=mean,
                             var=var, dil=i + 1, scale=scale, bias=bias))

    wfc_raw = jax.random.normal(next(keys), (d, C), jnp.float32) * 0.1  # Conv1d(C->d)
    bfc = jax.random.normal(next(keys), (d,), jnp.float32) * 0.1
    gamma_z = jax.random.uniform(next(keys), (d,), jnp.float32, 0.5, 1.5)
    beta_z = jax.random.normal(next(keys), (d,), jnp.float32) * 0.1
    mean_z = jax.random.normal(next(keys), (d,), jnp.float32) * 0.1
    var_z = jax.random.uniform(next(keys), (d,), jnp.float32, 0.5, 1.5)
    zscale, zbias = _bn_fold(gamma_z, beta_z, mean_z, var_z, bfc)

    wfcs_raw, bfcs = [], []
    for _ in range(M):                                    # Conv1d(d->C) x M
        wfcs_raw.append(jax.random.normal(next(keys), (C, d), jnp.float32) * 0.1)
        bfcs.append(jax.random.normal(next(keys), (C,), jnp.float32) * 0.1)
    wfcs_raw = jnp.stack(wfcs_raw)                        # (M, C, d)
    bfcs = jnp.stack(bfcs)                                # (M, C)

    pad_c = Cp - C
    params = dict(
        G=G, d=d, Cp=Cp, branches=branches,
        wfc_raw=wfc_raw, bfc=bfc, gamma_z=gamma_z, beta_z=beta_z,
        mean_z=mean_z, var_z=var_z, wfcs_raw=wfcs_raw, bfcs_raw=bfcs)

    # kernel-side packed / padded parameters
    params["w_packed"] = _pack_conv_weights(branches, G, Cp)        # (M,3,3Cp,Cp) bf16
    params["scale_p"] = jnp.stack(
        [jnp.pad(br["scale"], (0, pad_c)) for br in branches])      # (M, Cp) f32
    params["bias_p"] = jnp.stack(
        [jnp.pad(br["bias"], (0, pad_c)) for br in branches])       # (M, Cp) f32
    params["wfc_p"] = jnp.pad(wfc_raw.T, ((0, pad_c), (0, 0))).astype(jnp.bfloat16)
    params["zscale"] = zscale.reshape(1, d)
    params["zbias"] = zbias.reshape(1, d)
    params["wfcs_p"] = jnp.pad(jnp.transpose(wfcs_raw, (0, 2, 1)),
                               ((0, 0), (0, 0), (0, pad_c))).astype(jnp.bfloat16)
    params["bfcs_p"] = jnp.pad(bfcs, ((0, 0), (0, pad_c)))          # (M, Cp) f32
    return params


# ----------------------------- pure-JAX reference ------------------------------

def reference_forward(x_nchw, params):
    G = params["G"]
    M = len(params["branches"])
    feas = []
    for br in params["branches"]:
        dil = br["dil"]
        y = jax.lax.conv_general_dilated(
            x_nchw, br["w"], window_strides=(1, 1),
            padding=((dil, dil), (dil, dil)), rhs_dilation=(dil, dil),
            dimension_numbers=("NCHW", "OIHW", "NCHW"),
            feature_group_count=G)
        y = y + br["b"][None, :, None, None]
        y = (y - br["mean"][None, :, None, None]) / jnp.sqrt(
            br["var"][None, :, None, None] + EPS)
        y = y * br["gamma"][None, :, None, None] + br["beta"][None, :, None, None]
        feas.append(jnp.maximum(y, 0.0))
    feas = jnp.stack(feas, axis=1)                        # (B, M, C, H, W)
    fea_u = jnp.sum(feas, axis=1)
    fea_s = jnp.mean(fea_u, axis=(2, 3))                  # (B, C)
    z = fea_s @ params["wfc_raw"].T + params["bfc"]
    z = (z - params["mean_z"]) / jnp.sqrt(params["var_z"] + EPS)
    z = z * params["gamma_z"] + params["beta_z"]          # (B, d)
    logits = jnp.stack([z @ params["wfcs_raw"][m].T + params["bfcs_raw"][m]
                        for m in range(M)], axis=1)       # (B, M, C)
    att = jax.nn.softmax(logits, axis=1)
    return jnp.sum(feas * att[:, :, :, None, None], axis=1)


# ------------------------------------- main ------------------------------------

if __name__ == "__main__":
    # Small SKConv2 instance: features=64, M=2 branches, G=4 groups, r=16, L=32.
    B, C, H, W = 2, 64, 16, 16
    M, G, r, L = 2, 4, 16, 32

    key = jax.random.PRNGKey(0)
    kx, kp = jax.random.split(key)
    x = jax.random.normal(kx, (B, C, H, W), jnp.float32)
    params = init_params(kp, C, M=M, G=G, r=r, L=L)

    out = jax.block_until_ready(sk_conv2_forward(x, params))
    ref = jax.block_until_ready(reference_forward(x, params))

    assert out.shape == (B, C, H, W), out.shape
    if not bool(jnp.allclose(out, ref, rtol=5e-2, atol=5e-2)):
        raise SystemExit(
            f"mismatch: max abs err = {float(jnp.max(jnp.abs(out - ref)))}")
    print("KERNEL_OK")
</pallas_src>

<mosaic_0001>
module attributes {stable_mosaic.version = 11 : i64} {
  func.func @_skconv2_fused_kernel(%arg0: i32, %arg1: memref<1x20x20x128xbf16, #tpu.memory_space<vmem>>, %arg2: memref<2x3x384x128xbf16, #tpu.memory_space<vmem>>, %arg3: memref<2x128xf32, #tpu.memory_space<vmem>>, %arg4: memref<2x128xf32, #tpu.memory_space<vmem>>, %arg5: memref<128x32xbf16, #tpu.memory_space<vmem>>, %arg6: memref<1x32xf32, #tpu.memory_space<vmem>>, %arg7: memref<1x32xf32, #tpu.memory_space<vmem>>, %arg8: memref<2x32x128xbf16, #tpu.memory_space<vmem>>, %arg9: memref<2x128xf32, #tpu.memory_space<vmem>>, %arg10: memref<1x16x16x128xf32, #tpu.memory_space<vmem>>, %arg11: memref<2x256x128xf32, #tpu.memory_space<vmem>>) attributes {dimension_semantics = [#tpu.dimension_semantics<parallel>], iteration_bounds = array<i64: 2>, scalar_prefetch = 0 : i64, scratch_operands = 1 : i64, tpu.core_type = #tpu.core_type<tc>, window_params = [{transform_indices = @transform_0, window_bounds = array<i64: 1, 20, 20, 128>}, {pipeline_mode = #tpu.pipeline_mode<synchronous>, transform_indices = @transform_1, window_bounds = array<i64: 2, 3, 384, 128>}, {pipeline_mode = #tpu.pipeline_mode<synchronous>, transform_indices = @transform_2, window_bounds = array<i64: 2, 128>}, {pipeline_mode = #tpu.pipeline_mode<synchronous>, transform_indices = @transform_3, window_bounds = array<i64: 2, 128>}, {pipeline_mode = #tpu.pipeline_mode<synchronous>, transform_indices = @transform_4, window_bounds = array<i64: 128, 32>}, {pipeline_mode = #tpu.pipeline_mode<synchronous>, transform_indices = @transform_5, window_bounds = array<i64: 1, 32>}, {pipeline_mode = #tpu.pipeline_mode<synchronous>, transform_indices = @transform_6, window_bounds = array<i64: 1, 32>}, {pipeline_mode = #tpu.pipeline_mode<synchronous>, transform_indices = @transform_7, window_bounds = array<i64: 2, 32, 128>}, {pipeline_mode = #tpu.pipeline_mode<synchronous>, transform_indices = @transform_8, window_bounds = array<i64: 2, 128>}, {transform_indices = @transform_9, window_bounds = array<i64: 1, 16, 16, 128>}]} {
    %cst = arith.constant 0.000000e+00 : f32
    %0 = vector.broadcast %cst : f32 to vector<256x128xf32>
    %c0 = arith.constant 0 : index
    %c1 = arith.constant 1 : index
    %c0_0 = arith.constant 0 : index
    %c0_1 = arith.constant 0 : index
    %1 = vector.load %arg1[%c0, %c1, %c0_0, %c0_1] : memref<1x20x20x128xbf16, #tpu.memory_space<vmem>>, vector<1x16x20x128xbf16>
    %2 = vector.shape_cast %1 : vector<1x16x20x128xbf16> to vector<16x20x128xbf16>
    %3 = vector.extract_strided_slice %2 {offsets = [0, 1, 0], sizes = [16, 16, 128], strides = [1, 1, 1]} : vector<16x20x128xbf16> to vector<16x16x128xbf16>
    %4 = vector.extract_strided_slice %2 {offsets = [0, 2, 0], sizes = [16, 16, 128], strides = [1, 1, 1]} : vector<16x20x128xbf16> to vector<16x16x128xbf16>
    %5 = vector.extract_strided_slice %2 {offsets = [0, 3, 0], sizes = [16, 16, 128], strides = [1, 1, 1]} : vector<16x20x128xbf16> to vector<16x16x128xbf16>
    %6 = tpu.concatenate %3, %4, %5 in 2 : vector<16x16x128xbf16>, vector<16x16x128xbf16>, vector<16x16x128xbf16> -> vector<16x16x384xbf16>
    %7 = vector.shape_cast %6 : vector<16x16x384xbf16> to vector<256x384xbf16>
    %c0_2 = arith.constant 0 : index
    %c0_3 = arith.constant 0 : index
    %c0_4 = arith.constant 0 : index
    %c0_5 = arith.constant 0 : index
    %8 = vector.load %arg2[%c0_2, %c0_3, %c0_4, %c0_5] : memref<2x3x384x128xbf16, #tpu.memory_space<vmem>>, vector<1x1x384x128xbf16>
    %9 = vector.shape_cast %8 : vector<1x1x384x128xbf16> to vector<384x128xbf16>
    %cst_6 = arith.constant dense<0.000000e+00> : vector<256x128xf32>
    %10 = tpu.matmul %7, %9, %cst_6 {dimension_numbers = #tpu.dot_dimension_numbers<[1], [0], [0], [1], [0, 0, 1, 1], [], []>} : vector<256x384xbf16>, vector<384x128xbf16>, vector<256x128xf32> -> vector<256x128xf32>
    %11 = arith.addf %0, %10 : vector<256x128xf32>
    %c0_7 = arith.constant 0 : index
    %c2 = arith.constant 2 : index
    %c0_8 = arith.constant 0 : index
    %c0_9 = arith.constant 0 : index
    %12 = vector.load %arg1[%c0_7, %c2, %c0_8, %c0_9] : memref<1x20x20x128xbf16, #tpu.memory_space<vmem>>, vector<1x16x20x128xbf16>
    %13 = vector.shape_cast %12 : vector<1x16x20x128xbf16> to vector<16x20x128xbf16>
    %14 = vector.extract_strided_slice %13 {offsets = [0, 1, 0], sizes = [16, 16, 128], strides = [1, 1, 1]} : vector<16x20x128xbf16> to vector<16x16x128xbf16>
    %15 = vector.extract_strided_slice %13 {offsets = [0, 2, 0], sizes = [16, 16, 128], strides = [1, 1, 1]} : vector<16x20x128xbf16> to vector<16x16x128xbf16>
    %16 = vector.extract_strided_slice %13 {offsets = [0, 3, 0], sizes = [16, 16, 128], strides = [1, 1, 1]} : vector<16x20x128xbf16> to vector<16x16x128xbf16>
    %17 = tpu.concatenate %14, %15, %16 in 2 : vector<16x16x128xbf16>, vector<16x16x128xbf16>, vector<16x16x128xbf16> -> vector<16x16x384xbf16>
    %18 = vector.shape_cast %17 : vector<16x16x384xbf16> to vector<256x384xbf16>
    %c0_10 = arith.constant 0 : index
    %c1_11 = arith.constant 1 : index
    %c0_12 = arith.constant 0 : index
    %c0_13 = arith.constant 0 : index
    %19 = vector.load %arg2[%c0_10, %c1_11, %c0_12, %c0_13] : memref<2x3x384x128xbf16, #tpu.memory_space<vmem>>, vector<1x1x384x128xbf16>
    %20 = vector.shape_cast %19 : vector<1x1x384x128xbf16> to vector<384x128xbf16>
    %cst_14 = arith.constant dense<0.000000e+00> : vector<256x128xf32>
    %21 = tpu.matmul %18, %20, %cst_14 {dimension_numbers = #tpu.dot_dimension_numbers<[1], [0], [0], [1], [0, 0, 1, 1], [], []>} : vector<256x384xbf16>, vector<384x128xbf16>, vector<256x128xf32> -> vector<256x128xf32>
    %22 = arith.addf %11, %21 : vector<256x128xf32>
    %c0_15 = arith.constant 0 : index
    %c3 = arith.constant 3 : index
    %c0_16 = arith.constant 0 : index
    %c0_17 = arith.constant 0 : index
    %23 = vector.load %arg1[%c0_15, %c3, %c0_16, %c0_17] : memref<1x20x20x128xbf16, #tpu.memory_space<vmem>>, vector<1x16x20x128xbf16>
    %24 = vector.shape_cast %23 : vector<1x16x20x128xbf16> to vector<16x20x128xbf16>
    %25 = vector.extract_strided_slice %24 {offsets = [0, 1, 0], sizes = [16, 16, 128], strides = [1, 1, 1]} : vector<16x20x128xbf16> to vector<16x16x128xbf16>
    %26 = vector.extract_strided_slice %24 {offsets = [0, 2, 0], sizes = [16, 16, 128], strides = [1, 1, 1]} : vector<16x20x128xbf16> to vector<16x16x128xbf16>
    %27 = vector.extract_strided_slice %24 {offsets = [0, 3, 0], sizes = [16, 16, 128], strides = [1, 1, 1]} : vector<16x20x128xbf16> to vector<16x16x128xbf16>
    %28 = tpu.concatenate %25, %26, %27 in 2 : vector<16x16x128xbf16>, vector<16x16x128xbf16>, vector<16x16x128xbf16> -> vector<16x16x384xbf16>
    %29 = vector.shape_cast %28 : vector<16x16x384xbf16> to vector<256x384xbf16>
    %c0_18 = arith.constant 0 : index
    %c2_19 = arith.constant 2 : index
    %c0_20 = arith.constant 0 : index
    %c0_21 = arith.constant 0 : index
    %30 = vector.load %arg2[%c0_18, %c2_19, %c0_20, %c0_21] : memref<2x3x384x128xbf16, #tpu.memory_space<vmem>>, vector<1x1x384x128xbf16>
    %31 = vector.shape_cast %30 : vector<1x1x384x128xbf16> to vector<384x128xbf16>
    %cst_22 = arith.constant dense<0.000000e+00> : vector<256x128xf32>
    %32 = tpu.matmul %29, %31, %cst_22 {dimension_numbers = #tpu.dot_dimension_numbers<[1], [0], [0], [1], [0, 0, 1, 1], [], []>} : vector<256x384xbf16>, vector<384x128xbf16>, vector<256x128xf32> -> vector<256x128xf32>
    %33 = arith.addf %22, %32 : vector<256x128xf32>
    %c0_23 = arith.constant 0 : index
    %c0_24 = arith.constant 0 : index
    %34 = vector.load %arg3[%c0_23, %c0_24] : memref<2x128xf32, #tpu.memory_space<vmem>>, vector<1x128xf32>
    %35 = vector.broadcast %34 : vector<1x128xf32> to vector<256x128xf32>
    %36 = arith.mulf %33, %35 : vector<256x128xf32>
    %c0_25 = arith.constant 0 : index
    %c0_26 = arith.constant 0 : index
    %37 = vector.load %arg4[%c0_25, %c0_26] : memref<2x128xf32, #tpu.memory_space<vmem>>, vector<1x128xf32>
    %38 = vector.broadcast %37 : vector<1x128xf32> to vector<256x128xf32>
    %39 = arith.addf %36, %38 : vector<256x128xf32>
    %cst_27 = arith.constant 0.000000e+00 : f32
    %40 = vector.broadcast %cst_27 : f32 to vector<256x128xf32>
    %41 = arith.maximumf %39, %40 : vector<256x128xf32>
    %c0_28 = arith.constant 0 : index
    %c0_29 = arith.constant 0 : index
    %c0_30 = arith.constant 0 : index
    %42 = vector.load %arg11[%c0_28, %c0_29, %c0_30] : memref<2x256x128xf32, #tpu.memory_space<vmem>>, vector<1x256x128xf32>
    %43 = vector.shape_cast %42 : vector<1x256x128xf32> to vector<256x128xf32>
    %44 = vector.shape_cast %41 : vector<256x128xf32> to vector<1x256x128xf32>
    tpu.vector_store %arg11[%c0_28, %c0_29, %c0_30], %44 {strides = array<i32>} : memref<2x256x128xf32, #tpu.memory_space<vmem>>, vector<1x256x128xf32>,
    %cst_31 = arith.constant 0.000000e+00 : f32
    %45 = vector.broadcast %cst_31 : f32 to vector<256x128xf32>
    %c0_32 = arith.constant 0 : index
    %c0_33 = arith.constant 0 : index
    %c0_34 = arith.constant 0 : index
    %c0_35 = arith.constant 0 : index
    %46 = vector.load %arg1[%c0_32, %c0_33, %c0_34, %c0_35] : memref<1x20x20x128xbf16, #tpu.memory_space<vmem>>, vector<1x16x20x128xbf16>
    %47 = vector.shape_cast %46 : vector<1x16x20x128xbf16> to vector<16x20x128xbf16>
    %48 = vector.extract_strided_slice %47 {offsets = [0, 0, 0], sizes = [16, 16, 128], strides = [1, 1, 1]} : vector<16x20x128xbf16> to vector<16x16x128xbf16>
    %49 = vector.extract_strided_slice %47 {offsets = [0, 2, 0], sizes = [16, 16, 128], strides = [1, 1, 1]} : vector<16x20x128xbf16> to vector<16x16x128xbf16>
    %50 = vector.extract_strided_slice %47 {offsets = [0, 4, 0], sizes = [16, 16, 128], strides = [1, 1, 1]} : vector<16x20x128xbf16> to vector<16x16x128xbf16>
    %51 = tpu.concatenate %48, %49, %50 in 2 : vector<16x16x128xbf16>, vector<16x16x128xbf16>, vector<16x16x128xbf16> -> vector<16x16x384xbf16>
    %52 = vector.shape_cast %51 : vector<16x16x384xbf16> to vector<256x384xbf16>
    %c1_36 = arith.constant 1 : index
    %c0_37 = arith.constant 0 : index
    %c0_38 = arith.constant 0 : index
    %c0_39 = arith.constant 0 : index
    %53 = vector.load %arg2[%c1_36, %c0_37, %c0_38, %c0_39] : memref<2x3x384x128xbf16, #tpu.memory_space<vmem>>, vector<1x1x384x128xbf16>
    %54 = vector.shape_cast %53 : vector<1x1x384x128xbf16> to vector<384x128xbf16>
    %cst_40 = arith.constant dense<0.000000e+00> : vector<256x128xf32>
    %55 = tpu.matmul %52, %54, %cst_40 {dimension_numbers = #tpu.dot_dimension_numbers<[1], [0], [0], [1], [0, 0, 1, 1], [], []>} : vector<256x384xbf16>, vector<384x128xbf16>, vector<256x128xf32> -> vector<256x128xf32>
    %56 = arith.addf %45, %55 : vector<256x128xf32>
    %c0_41 = arith.constant 0 : index
    %c2_42 = arith.constant 2 : index
    %c0_43 = arith.constant 0 : index
    %c0_44 = arith.constant 0 : index
    %57 = vector.load %arg1[%c0_41, %c2_42, %c0_43, %c0_44] : memref<1x20x20x128xbf16, #tpu.memory_space<vmem>>, vector<1x16x20x128xbf16>
    %58 = vector.shape_cast %57 : vector<1x16x20x128xbf16> to vector<16x20x128xbf16>
    %59 = vector.extract_strided_slice %58 {offsets = [0, 0, 0], sizes = [16, 16, 128], strides = [1, 1, 1]} : vector<16x20x128xbf16> to vector<16x16x128xbf16>
    %60 = vector.extract_strided_slice %58 {offsets = [0, 2, 0], sizes = [16, 16, 128], strides = [1, 1, 1]} : vector<16x20x128xbf16> to vector<16x16x128xbf16>
    %61 = vector.extract_strided_slice %58 {offsets = [0, 4, 0], sizes = [16, 16, 128], strides = [1, 1, 1]} : vector<16x20x128xbf16> to vector<16x16x128xbf16>
    %62 = tpu.concatenate %59, %60, %61 in 2 : vector<16x16x128xbf16>, vector<16x16x128xbf16>, vector<16x16x128xbf16> -> vector<16x16x384xbf16>
    %63 = vector.shape_cast %62 : vector<16x16x384xbf16> to vector<256x384xbf16>
    %c1_45 = arith.constant 1 : index
    %c1_46 = arith.constant 1 : index
    %c0_47 = arith.constant 0 : index
    %c0_48 = arith.constant 0 : index
    %64 = vector.load %arg2[%c1_45, %c1_46, %c0_47, %c0_48] : memref<2x3x384x128xbf16, #tpu.memory_space<vmem>>, vector<1x1x384x128xbf16>
    %65 = vector.shape_cast %64 : vector<1x1x384x128xbf16> to vector<384x128xbf16>
    %cst_49 = arith.constant dense<0.000000e+00> : vector<256x128xf32>
    %66 = tpu.matmul %63, %65, %cst_49 {dimension_numbers = #tpu.dot_dimension_numbers<[1], [0], [0], [1], [0, 0, 1, 1], [], []>} : vector<256x384xbf16>, vector<384x128xbf16>, vector<256x128xf32> -> vector<256x128xf32>
    %67 = arith.addf %56, %66 : vector<256x128xf32>
    %c0_50 = arith.constant 0 : index
    %c4 = arith.constant 4 : index
    %c0_51 = arith.constant 0 : index
    %c0_52 = arith.constant 0 : index
    %68 = vector.load %arg1[%c0_50, %c4, %c0_51, %c0_52] : memref<1x20x20x128xbf16, #tpu.memory_space<vmem>>, vector<1x16x20x128xbf16>
    %69 = vector.shape_cast %68 : vector<1x16x20x128xbf16> to vector<16x20x128xbf16>
    %70 = vector.extract_strided_slice %69 {offsets = [0, 0, 0], sizes = [16, 16, 128], strides = [1, 1, 1]} : vector<16x20x128xbf16> to vector<16x16x128xbf16>
    %71 = vector.extract_strided_slice %69 {offsets = [0, 2, 0], sizes = [16, 16, 128], strides = [1, 1, 1]} : vector<16x20x128xbf16> to vector<16x16x128xbf16>
    %72 = vector.extract_strided_slice %69 {offsets = [0, 4, 0], sizes = [16, 16, 128], strides = [1, 1, 1]} : vector<16x20x128xbf16> to vector<16x16x128xbf16>
    %73 = tpu.concatenate %70, %71, %72 in 2 : vector<16x16x128xbf16>, vector<16x16x128xbf16>, vector<16x16x128xbf16> -> vector<16x16x384xbf16>
    %74 = vector.shape_cast %73 : vector<16x16x384xbf16> to vector<256x384xbf16>
    %c1_53 = arith.constant 1 : index
    %c2_54 = arith.constant 2 : index
    %c0_55 = arith.constant 0 : index
    %c0_56 = arith.constant 0 : index
    %75 = vector.load %arg2[%c1_53, %c2_54, %c0_55, %c0_56] : memref<2x3x384x128xbf16, #tpu.memory_space<vmem>>, vector<1x1x384x128xbf16>
    %76 = vector.shape_cast %75 : vector<1x1x384x128xbf16> to vector<384x128xbf16>
    %cst_57 = arith.constant dense<0.000000e+00> : vector<256x128xf32>
    %77 = tpu.matmul %74, %76, %cst_57 {dimension_numbers = #tpu.dot_dimension_numbers<[1], [0], [0], [1], [0, 0, 1, 1], [], []>} : vector<256x384xbf16>, vector<384x128xbf16>, vector<256x128xf32> -> vector<256x128xf32>
    %78 = arith.addf %67, %77 : vector<256x128xf32>
    %c1_58 = arith.constant 1 : index
    %c0_59 = arith.constant 0 : index
    %79 = vector.load %arg3[%c1_58, %c0_59] : memref<2x128xf32, #tpu.memory_space<vmem>>, vector<1x128xf32>
    %80 = vector.broadcast %79 : vector<1x128xf32> to vector<256x128xf32>
    %81 = arith.mulf %78, %80 : vector<256x128xf32>
    %c1_60 = arith.constant 1 : index
    %c0_61 = arith.constant 0 : index
    %82 = vector.load %arg4[%c1_60, %c0_61] : memref<2x128xf32, #tpu.memory_space<vmem>>, vector<1x128xf32>
    %83 = vector.broadcast %82 : vector<1x128xf32> to vector<256x128xf32>
    %84 = arith.addf %81, %83 : vector<256x128xf32>
    %cst_62 = arith.constant 0.000000e+00 : f32
    %85 = vector.broadcast %cst_62 : f32 to vector<256x128xf32>
    %86 = arith.maximumf %84, %85 : vector<256x128xf32>
    %c1_63 = arith.constant 1 : index
    %c0_64 = arith.constant 0 : index
    %c0_65 = arith.constant 0 : index
    %87 = vector.load %arg11[%c1_63, %c0_64, %c0_65] : memref<2x256x128xf32, #tpu.memory_space<vmem>>, vector<1x256x128xf32>
    %88 = vector.shape_cast %87 : vector<1x256x128xf32> to vector<256x128xf32>
    %89 = vector.shape_cast %86 : vector<256x128xf32> to vector<1x256x128xf32>
    tpu.vector_store %arg11[%c1_63, %c0_64, %c0_65], %89 {strides = array<i32>} : memref<2x256x128xf32, #tpu.memory_space<vmem>>, vector<1x256x128xf32>,
    %c0_66 = arith.constant 0 : index
    %c0_67 = arith.constant 0 : index
    %c0_68 = arith.constant 0 : index
    %90 = vector.load %arg11[%c0_66, %c0_67, %c0_68] : memref<2x256x128xf32, #tpu.memory_space<vmem>>, vector<1x256x128xf32>
    %91 = vector.shape_cast %90 : vector<1x256x128xf32> to vector<256x128xf32>
    %c1_69 = arith.constant 1 : index
    %c0_70 = arith.constant 0 : index
    %c0_71 = arith.constant 0 : index
    %92 = vector.load %arg11[%c1_69, %c0_70, %c0_71] : memref<2x256x128xf32, #tpu.memory_space<vmem>>, vector<1x256x128xf32>
    %93 = vector.shape_cast %92 : vector<1x256x128xf32> to vector<256x128xf32>
    %94 = arith.addf %91, %93 : vector<256x128xf32>
    %cst_72 = arith.constant dense<0.000000e+00> : vector<128xf32>
    %95 = vector.multi_reduction <add>, %94, %cst_72 [0] : vector<256x128xf32> to vector<128xf32>
    %96 = vector.shape_cast %95 : vector<128xf32> to vector<1x128xf32>
    %cst_73 = arith.constant 3.906250e-03 : f32
    %97 = vector.broadcast %cst_73 : f32 to vector<1x128xf32>
    %98 = arith.mulf %96, %97 : vector<1x128xf32>
    %99 = arith.truncf %98 : vector<1x128xf32> to vector<1x128xbf16>
    %c0_74 = arith.constant 0 : index
    %c0_75 = arith.constant 0 : index
    %100 = vector.load %arg5[%c0_74, %c0_75] : memref<128x32xbf16, #tpu.memory_space<vmem>>, vector<128x32xbf16>
    %cst_76 = arith.constant dense<0.000000e+00> : vector<1x32xf32>
    %101 = tpu.matmul %99, %100, %cst_76 {dimension_numbers = #tpu.dot_dimension_numbers<[1], [0], [0], [1], [0, 0, 1, 1], [], []>} : vector<1x128xbf16>, vector<128x32xbf16>, vector<1x32xf32> -> vector<1x32xf32>
    %c0_77 = arith.constant 0 : index
    %c0_78 = arith.constant 0 : index
    %102 = vector.load %arg6[%c0_77, %c0_78] : memref<1x32xf32, #tpu.memory_space<vmem>>, vector<1x32xf32>
    %103 = arith.mulf %101, %102 : vector<1x32xf32>
    %c0_79 = arith.constant 0 : index
    %c0_80 = arith.constant 0 : index
    %104 = vector.load %arg7[%c0_79, %c0_80] : memref<1x32xf32, #tpu.memory_space<vmem>>, vector<1x32xf32>
    %105 = arith.addf %103, %104 : vector<1x32xf32>
    %106 = arith.truncf %105 : vector<1x32xf32> to vector<1x32xbf16>
    %c0_81 = arith.constant 0 : index
    %c0_82 = arith.constant 0 : index
    %c0_83 = arith.constant 0 : index
    %107 = vector.load %arg8[%c0_81, %c0_82, %c0_83] : memref<2x32x128xbf16, #tpu.memory_space<vmem>>, vector<1x32x128xbf16>
    %108 = vector.shape_cast %107 : vector<1x32x128xbf16> to vector<32x128xbf16>
    %cst_84 = arith.constant dense<0.000000e+00> : vector<1x128xf32>
    %109 = tpu.matmul %106, %108, %cst_84 {dimension_numbers = #tpu.dot_dimension_numbers<[1], [0], [0], [1], [0, 0, 1, 1], [], []>} : vector<1x32xbf16>, vector<32x128xbf16>, vector<1x128xf32> -> vector<1x128xf32>
    %c0_85 = arith.constant 0 : index
    %c0_86 = arith.constant 0 : index
    %110 = vector.load %arg9[%c0_85, %c0_86] : memref<2x128xf32, #tpu.memory_space<vmem>>, vector<1x128xf32>
    %111 = arith.addf %109, %110 : vector<1x128xf32>
    %c1_87 = arith.constant 1 : index
    %c0_88 = arith.constant 0 : index
    %c0_89 = arith.constant 0 : index
    %112 = vector.load %arg8[%c1_87, %c0_88, %c0_89] : memref<2x32x128xbf16, #tpu.memory_space<vmem>>, vector<1x32x128xbf16>
    %113 = vector.shape_cast %112 : vector<1x32x128xbf16> to vector<32x128xbf16>
    %cst_90 = arith.constant dense<0.000000e+00> : vector<1x128xf32>
    %114 = tpu.matmul %106, %113, %cst_90 {dimension_numbers = #tpu.dot_dimension_numbers<[1], [0], [0], [1], [0, 0, 1, 1], [], []>} : vector<1x32xbf16>, vector<32x128xbf16>, vector<1x128xf32> -> vector<1x128xf32>
    %c1_91 = arith.constant 1 : index
    %c0_92 = arith.constant 0 : index
    %115 = vector.load %arg9[%c1_91, %c0_92] : memref<2x128xf32, #tpu.memory_space<vmem>>, vector<1x128xf32>
    %116 = arith.addf %114, %115 : vector<1x128xf32>
    %117 = tpu.concatenate %111, %116 in 0 : vector<1x128xf32>, vector<1x128xf32> -> vector<2x128xf32>
    %cst_93 = arith.constant dense<0xFF800000> : vector<128xf32>
    %118 = vector.multi_reduction <maximumf>, %117, %cst_93 [0] : vector<2x128xf32> to vector<128xf32>
    %119 = vector.shape_cast %118 : vector<128xf32> to vector<1x128xf32>
    %120 = vector.broadcast %119 : vector<1x128xf32> to vector<2x128xf32>
    %121 = arith.subf %117, %120 : vector<2x128xf32>
    %122 = math.exp %121 : vector<2x128xf32>
    %cst_94 = arith.constant dense<0.000000e+00> : vector<128xf32>
    %123 = vector.multi_reduction <add>, %122, %cst_94 [0] : vector<2x128xf32> to vector<128xf32>
    %124 = vector.shape_cast %123 : vector<128xf32> to vector<1x128xf32>
    %125 = vector.broadcast %124 : vector<1x128xf32> to vector<2x128xf32>
    %126 = arith.divf %122, %125 : vector<2x128xf32>
    %c0_95 = arith.constant 0 : index
    %c0_96 = arith.constant 0 : index
    %c0_97 = arith.constant 0 : index
    %127 = vector.load %arg11[%c0_95, %c0_96, %c0_97] : memref<2x256x128xf32, #tpu.memory_space<vmem>>, vector<1x256x128xf32>
    %128 = vector.shape_cast %127 : vector<1x256x128xf32> to vector<256x128xf32>
    %129 = vector.extract_strided_slice %126 {offsets = [0, 0], sizes = [1, 128], strides = [1, 1]} : vector<2x128xf32> to vector<1x128xf32>
    %130 = vector.broadcast %129 : vector<1x128xf32> to vector<256x128xf32>
    %131 = arith.mulf %128, %130 : vector<256x128xf32>
    %c1_98 = arith.constant 1 : index
    %c0_99 = arith.constant 0 : index
    %c0_100 = arith.constant 0 : index
    %132 = vector.load %arg11[%c1_98, %c0_99, %c0_100] : memref<2x256x128xf32, #tpu.memory_space<vmem>>, vector<1x256x128xf32>
    %133 = vector.shape_cast %132 : vector<1x256x128xf32> to vector<256x128xf32>
    %134 = vector.extract_strided_slice %126 {offsets = [1, 0], sizes = [1, 128], strides = [1, 1]} : vector<2x128xf32> to vector<1x128xf32>
    %135 = vector.broadcast %134 : vector<1x128xf32> to vector<256x128xf32>
    %136 = arith.mulf %133, %135 : vector<256x128xf32>
    %137 = arith.addf %131, %136 : vector<256x128xf32>
    %138 = vector.shape_cast %137 : vector<256x128xf32> to vector<1x16x16x128xf32>
    %c0_101 = arith.constant 0 : index
    %c0_102 = arith.constant 0 : index
    %c0_103 = arith.constant 0 : index
    %c0_104 = arith.constant 0 : index
    %139 = vector.load %arg10[%c0_101, %c0_102, %c0_103, %c0_104] : memref<1x16x16x128xf32, #tpu.memory_space<vmem>>, vector<1x16x16x128xf32>
    tpu.vector_store %arg10[%c0_101, %c0_102, %c0_103, %c0_104], %138 {strides = array<i32>} : memref<1x16x16x128xf32, #tpu.memory_space<vmem>>, vector<1x16x16x128xf32>,
    return
  }
  func.func @transform_0(%arg0: i32) -> (i32, i32, i32, i32) {
    %c0_i32 = arith.constant 0 : i32
    %c0_i32_0 = arith.constant 0 : i32
    %c0_i32_1 = arith.constant 0 : i32
    %c0_i32_2 = arith.constant 0 : i32
    return %arg0, %c0_i32, %c0_i32_0, %c0_i32_1 : i32, i32, i32, i32
  }
  func.func @transform_1(%arg0: i32) -> (i32, i32, i32, i32) {
    %c0_i32 = arith.constant 0 : i32
    %c0_i32_0 = arith.constant 0 : i32
    %c0_i32_1 = arith.constant 0 : i32
    %c0_i32_2 = arith.constant 0 : i32
    %c0_i32_3 = arith.constant 0 : i32
    return %c0_i32, %c0_i32_0, %c0_i32_1, %c0_i32_2 : i32, i32, i32, i32
  }
  func.func @transform_2(%arg0: i32) -> (i32, i32) {
    %c0_i32 = arith.constant 0 : i32
    %c0_i32_0 = arith.constant 0 : i32
    %c0_i32_1 = arith.constant 0 : i32
    return %c0_i32, %c0_i32_0 : i32, i32
  }
  func.func @transform_3(%arg0: i32) -> (i32, i32) {
    %c0_i32 = arith.constant 0 : i32
    %c0_i32_0 = arith.constant 0 : i32
    %c0_i32_1 = arith.constant 0 : i32
    return %c0_i32, %c0_i32_0 : i32, i32
  }
  func.func @transform_4(%arg0: i32) -> (i32, i32) {
    %c0_i32 = arith.constant 0 : i32
    %c0_i32_0 = arith.constant 0 : i32
    %c0_i32_1 = arith.constant 0 : i32
    return %c0_i32, %c0_i32_0 : i32, i32
  }
  func.func @transform_5(%arg0: i32) -> (i32, i32) {
    %c0_i32 = arith.constant 0 : i32
    %c0_i32_0 = arith.constant 0 : i32
    %c0_i32_1 = arith.constant 0 : i32
    return %c0_i32, %c0_i32_0 : i32, i32
  }
  func.func @transform_6(%arg0: i32) -> (i32, i32) {
    %c0_i32 = arith.constant 0 : i32
    %c0_i32_0 = arith.constant 0 : i32
    %c0_i32_1 = arith.constant 0 : i32
    return %c0_i32, %c0_i32_0 : i32, i32
  }
  func.func @transform_7(%arg0: i32) -> (i32, i32, i32) {
    %c0_i32 = arith.constant 0 : i32
    %c0_i32_0 = arith.constant 0 : i32
    %c0_i32_1 = arith.constant 0 : i32
    %c0_i32_2 = arith.constant 0 : i32
    return %c0_i32, %c0_i32_0, %c0_i32_1 : i32, i32, i32
  }
  func.func @transform_8(%arg0: i32) -> (i32, i32) {
    %c0_i32 = arith.constant 0 : i32
    %c0_i32_0 = arith.constant 0 : i32
    %c0_i32_1 = arith.constant 0 : i32
    return %c0_i32, %c0_i32_0 : i32, i32
  }
  func.func @transform_9(%arg0: i32) -> (i32, i32, i32, i32) {
    %c0_i32 = arith.constant 0 : i32
    %c0_i32_0 = arith.constant 0 : i32
    %c0_i32_1 = arith.constant 0 : i32
    %c0_i32_2 = arith.constant 0 : i32
    return %arg0, %c0_i32, %c0_i32_0, %c0_i32_1 : i32, i32, i32, i32
  }
}

</mosaic_0001>

<llo_original>
// kernel: tpu_custom_call.1
$region0: #{tpu_custom_call.1}
  #allocation0 [shape = 'u32[]', space=smem, size = 0x4, offset = 0x4, fixed_abs, tag = 'smem constant byte address 0x4 - core index']
  #allocation1 [shape = 'u32[144,128]{1,0:T(1,128)}', space=vmem, size = 0x12000, scoped, tag = 'internal scratch']
  #allocation2 [shape = 'f32[2,256,128]{2,1,0:T(8,128)}', space=vmem, size = 0x40000, scoped, tag = 'scratch operand']
  %s0 = inlined_call_operand.vmem [shape: bf16[2,20,20,128], index: 0, kind: input, shape index: {}]
  %s1 = inlined_call_operand.hbm [shape: bf16[2,3,384,128], index: 1, kind: input, shape index: {}]
  %s2 = inlined_call_operand.vmem [shape: f32[2,128], index: 2, kind: input, shape index: {}]
  %s3 = inlined_call_operand.vmem [shape: f32[2,128], index: 3, kind: input, shape index: {}]
  %s4 = inlined_call_operand.vmem [shape: bf16[128,32], index: 4, kind: input, shape index: {}]
  %s5 = inlined_call_operand.vmem [shape: f32[1,32], index: 5, kind: input, shape index: {}]
  %s6 = inlined_call_operand.vmem [shape: f32[1,32], index: 6, kind: input, shape index: {}]
  %s7 = inlined_call_operand.vmem [shape: bf16[2,32,128], index: 7, kind: input, shape index: {}]
  %s8 = inlined_call_operand.vmem [shape: f32[2,128], index: 8, kind: input, shape index: {}]
  %s9 = inlined_call_operand.hbm [shape: f32[2,16,16,128], index: 9, kind: output, shape index: {}]
  %s10 = sld [smem:[#allocation0]]
  $region73: #{tpu_custom_call.1} parent=0
    _
  %s12 = ssub.s32 1, %s10
  %s13 = scalar_select 0, %s12, %s10
  $region1: #{tpu_custom_call.1} parent=0
    #allocation3 [shape = 'u8[589824]{0}', space=vmem, size = 0x90000, scoped, tag = 'input window, operand 1, single buffered']
    #allocation4 [shape = 's32[2]{0}', space=sflag, size = 0x8, scoped, tag = 'scoped memory for tpu_custom_call.1']
    #allocation5 [shape = 's32[2]{0}', space=sflag, size = 0x8, scoped, tag = 'scoped memory for tpu_custom_call.1']
    #allocation6 [shape = 'u8[262144]{0}', space=vmem, size = 0x40000, scoped, tag = 'output window, operand 0']
    %14 = vsyncpa [#allocation4], 0
    %15 = vsyncpa [#allocation5], 0
    %s16 = scalar_lea.sflag [#allocation5], 1
    %17 = vsyncpa %s16, 0
    loop: start=0, step=1, limit=4
    $region2: #{tpu_custom_call.1} parent=1 // loop_pre_header
      _
    $region3: #{tpu_custom_call.1} parent=1 // loop_header
      %s19 = sphi 0, %s23
      %p20 = scmp.ge.s32.totalorder %s19, 4
      %s29 = sphi 0, %s31
      %s32 = sphi 0, %s29
      %s33 = sphi 0, %s32
      %s49 = sphi 0, %s33
      %s53 = sphi 0, %s53
      %s55 = sphi 0, %s53
      %s56 = sphi 0, %s55
      %s70 = sphi 0, %s56
      %s74 = sphi 0, %s74
      %s76 = sphi 0, %s74
      %s77 = sphi 0, %s76
      %s91 = sphi 0, %s77
      %s95 = sphi 0, %s95
      %s97 = sphi 0, %s95
      %s98 = sphi 0, %s97
      %s112 = sphi 0, %s98
      %s116 = sphi 0, %s116
      %s118 = sphi 0, %s116
      %s119 = sphi 0, %s118
      %s133 = sphi 0, %s119
      %s137 = sphi 0, %s137
      %s139 = sphi 0, %s137
      %s140 = sphi 0, %s139
      %s154 = sphi 0, %s140
      %s158 = sphi 0, %s158
      %s160 = sphi 0, %s158
      %s161 = sphi 0, %s160
      %s175 = sphi 0, %s161
      %s179 = sphi 0, %s179
      %s181 = sphi 0, %s179
      %s182 = sphi 0, %s181
      %s196 = sphi 0, %s182
      %s200 = sphi 0, %s200
      %s202 = sphi 0, %s200
      %s203 = sphi 0, %s202
      %s217 = sphi 0, %s203
      %s223 = sphi 0, %s225
      %s226 = sphi 0, %s223
      %s227 = sphi 0, %s226
      %s243 = sphi 0, %s227
    $region4: #{tpu_custom_call.1} parent=1 // loop_header_branch
      %22 = sbr.rel (%p20) target = $region8
    $region5: #{tpu_custom_call.1} parent=1 // loop_body
      %s24 = ssub.s32 %s19, 1
      %s25 = ssub.s32 %s19, 2
      %s26 = sadd.s32 %s19, 1
      %s27 = ssub.s32 %s19, %s26
      %p28 = scmp.eq.s32.totalorder %s27, 0
      %s30 = sadd.s32 %s29, 1
      %s31 = scalar_select %p28, %s29, %s30
      %p34 = pneg %p28
      %p35 = scmp.eq.s32.totalorder %s19, 1
      %p36 = por %p34, %p35
      %p37 = scmp.ne.s32.totalorder %s29, %s32
      %p38 = scmp.eq.s32.totalorder %s19, 0
      %p39 = por %p37, %p38
      %p40 = scmp.ne.s32.totalorder %s29, %s32
      %p41 = scmp.eq.s32.totalorder %s24, 1
      %p42 = por %p40, %p41
      %p43 = scmp.ne.s32.totalorder %s32, %s33
      %p44 = scmp.eq.s32.totalorder %s24, 0
      %p45 = por %p43, %p44
      %p46 = scmp.ne.s32.totalorder %s32, %s33
      %p47 = scmp.eq.s32.totalorder %s25, 1
      %p48 = por %p46, %p47
      %p50 = scmp.ne.s32.totalorder %s33, %s49
      %p51 = scmp.eq.s32.totalorder %s25, 0
      %p52 = por %p50, %p51
      %s54 = sadd.s32 %s53, 1
      %p57 = scmp.eq.s32.totalorder %s19, 1
      %p58 = scmp.ne.s32.totalorder %s53, %s55
      %p59 = scmp.eq.s32.totalorder %s19, 0
      %p60 = por %p58, %p59
      %p61 = scmp.ne.s32.totalorder %s53, %s55
      %p62 = scmp.eq.s32.totalorder %s24, 1
      %p63 = por %p61, %p62
      %p64 = scmp.ne.s32.totalorder %s55, %s56
      %p65 = scmp.eq.s32.totalorder %s24, 0
      %p66 = por %p64, %p65
      %p67 = scmp.ne.s32.totalorder %s55, %s56
      %p68 = scmp.eq.s32.totalorder %s25, 1
      %p69 = por %p67, %p68
      %p71 = scmp.ne.s32.totalorder %s56, %s70
      %p72 = scmp.eq.s32.totalorder %s25, 0
      %p73 = por %p71, %p72
      %s75 = sadd.s32 %s74, 1
      %p78 = scmp.eq.s32.totalorder %s19, 1
      %p79 = scmp.ne.s32.totalorder %s74, %s76
      %p80 = scmp.eq.s32.totalorder %s19, 0
      %p81 = por %p79, %p80
      %p82 = scmp.ne.s32.totalorder %s74, %s76
      %p83 = scmp.eq.s32.totalorder %s24, 1
      %p84 = por %p82, %p83
      %p85 = scmp.ne.s32.totalorder %s76, %s77
      %p86 = scmp.eq.s32.totalorder %s24, 0
      %p87 = por %p85, %p86
      %p88 = scmp.ne.s32.totalorder %s76, %s77
      %p89 = scmp.eq.s32.totalorder %s25, 1
      %p90 = por %p88, %p89
      %p92 = scmp.ne.s32.totalorder %s77, %s91
      %p93 = scmp.eq.s32.totalorder %s25, 0
      %p94 = por %p92, %p93
      %s96 = sadd.s32 %s95, 1
      %p99 = scmp.eq.s32.totalorder %s19, 1
      %p100 = scmp.ne.s32.totalorder %s95, %s97
      %p101 = scmp.eq.s32.totalorder %s19, 0
      %p102 = por %p100, %p101
      %p103 = scmp.ne.s32.totalorder %s95, %s97
      %p104 = scmp.eq.s32.totalorder %s24, 1
      %p105 = por %p103, %p104
      %p106 = scmp.ne.s32.totalorder %s97, %s98
      %p107 = scmp.eq.s32.totalorder %s24, 0
      %p108 = por %p106, %p107
      %p109 = scmp.ne.s32.totalorder %s97, %s98
      %p110 = scmp.eq.s32.totalorder %s25, 1
      %p111 = por %p109, %p110
      %p113 = scmp.ne.s32.totalorder %s98, %s112
      %p114 = scmp.eq.s32.totalorder %s25, 0
      %p115 = por %p113, %p114
      %s117 = sadd.s32 %s116, 1
      %p120 = scmp.eq.s32.totalorder %s19, 1
      %p121 = scmp.ne.s32.totalorder %s116, %s118
      %p122 = scmp.eq.s32.totalorder %s19, 0
      %p123 = por %p121, %p122
      %p124 = scmp.ne.s32.totalorder %s116, %s118
      %p125 = scmp.eq.s32.totalorder %s24, 1
      %p126 = por %p124, %p125
      %p127 = scmp.ne.s32.totalorder %s118, %s119
      %p128 = scmp.eq.s32.totalorder %s24, 0
      %p129 = por %p127, %p128
      %p130 = scmp.ne.s32.totalorder %s118, %s119
      %p131 = scmp.eq.s32.totalorder %s25, 1
      %p132 = por %p130, %p131
      %p134 = scmp.ne.s32.totalorder %s119, %s133
      %p135 = scmp.eq.s32.totalorder %s25, 0
      %p136 = por %p134, %p135
      %s138 = sadd.s32 %s137, 1
      %p141 = scmp.eq.s32.totalorder %s19, 1
      %p142 = scmp.ne.s32.totalorder %s137, %s139
      %p143 = scmp.eq.s32.totalorder %s19, 0
      %p144 = por %p142, %p143
      %p145 = scmp.ne.s32.totalorder %s137, %s139
      %p146 = scmp.eq.s32.totalorder %s24, 1
      %p147 = por %p145, %p146
      %p148 = scmp.ne.s32.totalorder %s139, %s140
      %p149 = scmp.eq.s32.totalorder %s24, 0
      %p150 = por %p148, %p149
      %p151 = scmp.ne.s32.totalorder %s139, %s140
      %p152 = scmp.eq.s32.totalorder %s25, 1
      %p153 = por %p151, %p152
      %p155 = scmp.ne.s32.totalorder %s140, %s154
      %p156 = scmp.eq.s32.totalorder %s25, 0
      %p157 = por %p155, %p156
      %s159 = sadd.s32 %s158, 1
      %p162 = scmp.eq.s32.totalorder %s19, 1
      %p163 = scmp.ne.s32.totalorder %s158, %s160
      %p164 = scmp.eq.s32.totalorder %s19, 0
      %p165 = por %p163, %p164
      %p166 = scmp.ne.s32.totalorder %s158, %s160
      %p167 = scmp.eq.s32.totalorder %s24, 1
      %p168 = por %p166, %p167
      %p169 = scmp.ne.s32.totalorder %s160, %s161
      %p170 = scmp.eq.s32.totalorder %s24, 0
      %p171 = por %p169, %p170
      %p172 = scmp.ne.s32.totalorder %s160, %s161
      %p173 = scmp.eq.s32.totalorder %s25, 1
      %p174 = por %p172, %p173
      %p176 = scmp.ne.s32.totalorder %s161, %s175
      %p177 = scmp.eq.s32.totalorder %s25, 0
      %p178 = por %p176, %p177
      %s180 = sadd.s32 %s179, 1
      %p183 = scmp.eq.s32.totalorder %s19, 1
      %p184 = scmp.ne.s32.totalorder %s179, %s181
      %p185 = scmp.eq.s32.totalorder %s19, 0
      %p186 = por %p184, %p185
      %p187 = scmp.ne.s32.totalorder %s179, %s181
      %p188 = scmp.eq.s32.totalorder %s24, 1
      %p189 = por %p187, %p188
      %p190 = scmp.ne.s32.totalorder %s181, %s182
      %p191 = scmp.eq.s32.totalorder %s24, 0
      %p192 = por %p190, %p191
      %p193 = scmp.ne.s32.totalorder %s181, %s182
      %p194 = scmp.eq.s32.totalorder %s25, 1
      %p195 = por %p193, %p194
      %p197 = scmp.ne.s32.totalorder %s182, %s196
      %p198 = scmp.eq.s32.totalorder %s25, 0
      %p199 = por %p197, %p198
      %s201 = sadd.s32 %s200, 1
      %p204 = scmp.eq.s32.totalorder %s19, 1
      %p205 = scmp.ne.s32.totalorder %s200, %s202
      %p206 = scmp.eq.s32.totalorder %s19, 0
      %p207 = por %p205, %p206
      %p208 = scmp.ne.s32.totalorder %s200, %s202
      %p209 = scmp.eq.s32.totalorder %s24, 1
      %p210 = por %p208, %p209
      %p211 = scmp.ne.s32.totalorder %s202, %s203
      %p212 = scmp.eq.s32.totalorder %s24, 0
      %p213 = por %p211, %p212
      %p214 = scmp.ne.s32.totalorder %s202, %s203
      %p215 = scmp.eq.s32.totalorder %s25, 1
      %p216 = por %p214, %p215
      %p218 = scmp.ne.s32.totalorder %s203, %s217
      %p219 = scmp.eq.s32.totalorder %s25, 0
      %p220 = por %p218, %p219
      %s221 = ssub.s32 %s19, %s26
      %p222 = scmp.eq.s32.totalorder %s221, 0
      %s224 = sadd.s32 %s223, 1
      %s225 = scalar_select %p222, %s223, %s224
      %p228 = pneg %p222
      %p229 = scmp.eq.s32.totalorder %s19, 1
      %p230 = por %p228, %p229
      %p231 = scmp.ne.s32.totalorder %s223, %s226
      %p232 = scmp.eq.s32.totalorder %s19, 0
      %p233 = por %p231, %p232
      %p234 = scmp.ne.s32.totalorder %s223, %s226
      %p235 = scmp.eq.s32.totalorder %s24, 1
      %p236 = por %p234, %p235
      %p237 = scmp.ne.s32.totalorder %s226, %s227
      %p238 = scmp.eq.s32.totalorder %s24, 0
      %p239 = por %p237, %p238
      %p240 = scmp.ne.s32.totalorder %s226, %s227
      %p241 = scmp.eq.s32.totalorder %s25, 1
      %p242 = por %p240, %p241
      %p244 = scmp.ne.s32.totalorder %s227, %s243
      %p245 = scmp.eq.s32.totalorder %s25, 0
      %p246 = por %p244, %p245
      %p247 = scmp.le.s32.totalorder 1, %s19
      %p248 = scmp.lt.s32.totalorder %s19, 3
      %p249 = pnand %p247, %p248
      %p250 = pneg %p249
      // Predicated region
      $region9: #{tpu_custom_call.1} parent=5 // pred_check
        _
      $region10: #{tpu_custom_call.1} parent=5 // pred_check_branch
        %252 = sbr.rel (%p249) target = $region12
      $region11: #{tpu_custom_call.1} parent=5 // pred_region
        %s253 = ssub.s32 %s19, 1
        // Predicated region
        $region13: #{tpu_custom_call.1} parent=11 // pred_check
          %p254 = pneg %p66
        $region14: #{tpu_custom_call.1} parent=11 // pred_check_branch
          %256 = sbr.rel (%p254) target = $region16
        $region15: #{tpu_custom_call.1} parent=11 // pred_region
          %s258 = ssub.s32 18432, 18432
          %259 = vsyncadd [#allocation4], %s258
          %s260 = sshll.u32 [#allocation3], 4
          %s261 = int_to_ptr.vmem [resolvable:$true] %s260
          %266 = dma.hbm_to_vmem [thread:$0]  %s1, 18432, %s261, [#allocation4], 64, 64, 4
        $region16: #{tpu_custom_call.1} parent=11 // pred_fallthru
          _
        // Predicated region
        $region17: #{tpu_custom_call.1} parent=11 // pred_check
          %p267 = pneg %p87
        $region18: #{tpu_custom_call.1} parent=11 // pred_check_branch
          %269 = sbr.rel (%p267) target = $region20
        $region19: #{tpu_custom_call.1} parent=11 // pred_region
          _
        $region20: #{tpu_custom_call.1} parent=11 // pred_fallthru
          _
        // Predicated region
        $region21: #{tpu_custom_call.1} parent=11 // pred_check
          %p270 = pneg %p108
        $region22: #{tpu_custom_call.1} parent=11 // pred_check_branch
          %272 = sbr.rel (%p270) target = $region24
        $region23: #{tpu_custom_call.1} parent=11 // pred_region
          _
        $region24: #{tpu_custom_call.1} parent=11 // pred_fallthru
          _
        // Predicated region
        $region25: #{tpu_custom_call.1} parent=11 // pred_check
          %p273 = pneg %p129
        $region26: #{tpu_custom_call.1} parent=11 // pred_check_branch
          %275 = sbr.rel (%p273) target = $region28
        $region27: #{tpu_custom_call.1} parent=11 // pred_region
          _
        $region28: #{tpu_custom_call.1} parent=11 // pred_fallthru
          _
        // Predicated region
        $region29: #{tpu_custom_call.1} parent=11 // pred_check
          %p276 = pneg %p150
        $region30: #{tpu_custom_call.1} parent=11 // pred_check_branch
          %278 = sbr.rel (%p276) target = $region32
        $region31: #{tpu_custom_call.1} parent=11 // pred_region
          _
        $region32: #{tpu_custom_call.1} parent=11 // pred_fallthru
          _
        // Predicated region
        $region33: #{tpu_custom_call.1} parent=11 // pred_check
          %p279 = pneg %p171
        $region34: #{tpu_custom_call.1} parent=11 // pred_check_branch
          %281 = sbr.rel (%p279) target = $region36
        $region35: #{tpu_custom_call.1} parent=11 // pred_region
          _
        $region36: #{tpu_custom_call.1} parent=11 // pred_fallthru
          _
        // Predicated region
        $region37: #{tpu_custom_call.1} parent=11 // pred_check
          %p282 = pneg %p192
        $region38: #{tpu_custom_call.1} parent=11 // pred_check_branch
          %284 = sbr.rel (%p282) target = $region40
        $region39: #{tpu_custom_call.1} parent=11 // pred_region
          _
        $region40: #{tpu_custom_call.1} parent=11 // pred_fallthru
          _
        // Predicated region
        $region41: #{tpu_custom_call.1} parent=11 // pred_check
          %p285 = pneg %p213
        $region42: #{tpu_custom_call.1} parent=11 // pred_check_branch
          %287 = sbr.rel (%p285) target = $region44
        $region43: #{tpu_custom_call.1} parent=11 // pred_region
          _
        $region44: #{tpu_custom_call.1} parent=11 // pred_fallthru
          _
      $region12: #{tpu_custom_call.1} parent=5 // pred_fallthru
        _
      %p288 = scmp.lt.s32.totalorder %s19, 2
      // Predicated region
      $region45: #{tpu_custom_call.1} parent=5 // pred_check
        %p289 = pneg %p288
      $region46: #{tpu_custom_call.1} parent=5 // pred_check_branch
        %291 = sbr.rel (%p289) target = $region48
      $region47: #{tpu_custom_call.1} parent=5 // pred_region
        // Predicated region
        $region49: #{tpu_custom_call.1} parent=47 // pred_check
          %p292 = pneg %p39
        $region50: #{tpu_custom_call.1} parent=47 // pred_check_branch
          %294 = sbr.rel (%p292) target = $region52
        $region51: #{tpu_custom_call.1} parent=47 // pred_region
          %p295 = scmp.lt.s32.totalorder %s19, 1
          %s296 = scalar_select %p295, %s19, 1
          %s297 = smul.addr %s296, 60
          %s298 = smul.addr %s297, 4
          %s299 = scalar_lea.vmem %s0, %s298
        $region52: #{tpu_custom_call.1} parent=47 // pred_fallthru
          _
      $region48: #{tpu_custom_call.1} parent=5 // pred_fallthru
        _
      %p300 = scmp.le.s32.totalorder 1, %s19
      %p301 = scmp.lt.s32.totalorder %s19, 3
      %p302 = pnand %p300, %p301
      %p303 = pneg %p302
      // Predicated region
      $region53: #{tpu_custom_call.1} parent=5 // pred_check
        _
      $region54: #{tpu_custom_call.1} parent=5 // pred_check_branch
        %305 = sbr.rel (%p302) target = $region56
      $region55: #{tpu_custom_call.1} parent=5 // pred_region
        %s306 = ssub.s32 %s19, 1
        // Predicated region
        $region57: #{tpu_custom_call.1} parent=55 // pred_check
          %p307 = pneg %p66
        $region58: #{tpu_custom_call.1} parent=55 // pred_check_branch
          %309 = sbr.rel (%p307) target = $region60
        $region59: #{tpu_custom_call.1} parent=55 // pred_region
          %310 = dma.done [#allocation4], 18432
        $region60: #{tpu_custom_call.1} parent=55 // pred_fallthru
          _
        %p311 = scmp.lt.s32.totalorder %s24, 1
        %s312 = scalar_select %p311, %s24, 1
        %s313 = smul.addr %s312, 60
        %s314 = smul.addr %s313, 4
        %s315 = scalar_lea.vmem %s0, %s314
        %p316 = pneg %p45
        %p317 = pneg %p42
        %p318 = pneg %p66
        %p319 = pneg %p63
        %p320 = pneg %p87
        %p321 = pneg %p84
        %p322 = pneg %p108
        %p323 = pneg %p105
        %p324 = pneg %p129
        %p325 = pneg %p126
        %p326 = pneg %p150
        %p327 = pneg %p147
        %p328 = pneg %p171
        %p329 = pneg %p168
        %p330 = pneg %p192
        %p331 = pneg %p189
        %p332 = pneg %p213
        %p333 = pneg %p210
        %p334 = pneg %p239
        %p335 = pneg %p236
        %s336 = sand.u32 %s226, 1
        %s337 = scalar_lea.sflag [#allocation5], %s336
        %s338 = sand.u32 %s226, 1
        %s339 = smul.addr %s338, 256
        %s340 = scalar_lea.vmem [#allocation6], %s339
        %p341 = scmp.lt.s32.totalorder %s24, 1
        %s342 = scalar_select %p341, %s24, 1
        %s343 = smul.addr %s342, 60
        %s344 = smul.addr %s343, 4
        %s345 = scalar_lea.vmem %s0, %s344
        %s347 = scalar_lea.vmem %s345, 12
        %v348 = vld [vmem:[%s347] sm:$0xf]
        %v349 = vld [vmem:[%s347 + $0x4] sm:$0xf]
        %v350 = vld [vmem:[%s347 + $0x8] sm:$0x3]
        %v351 = vld [vmem:[%s347 + $0xc] sm:$0xf]
        %v352 = vld [vmem:[%s347 + $0x10] sm:$0xf]
        %v353 = vld [vmem:[%s347 + $0x14] sm:$0x3]
        %v354 = vld [vmem:[%s347 + $0x18] sm:$0xf]
        %v355 = vld [vmem:[%s347 + $0x1c] sm:$0xf]
        %v356 = vld [vmem:[%s347 + $0x20] sm:$0x3]
        %v357 = vld [vmem:[%s347 + $0x24] sm:$0xf]
        %v358 = vld [vmem:[%s347 + $0x28] sm:$0xf]
        %v359 = vld [vmem:[%s347 + $0x2c] sm:$0x3]
        %v360 = vld [vmem:[%s347 + $0x30] sm:$0xf]
        %v361 = vld [vmem:[%s347 + $0x34] sm:$0xf]
        %v362 = vld [vmem:[%s347 + $0x38] sm:$0x3]
        %v363 = vld [vmem:[%s347 + $0x3c] sm:$0xf]
        %v364 = vld [vmem:[%s347 + $0x40] sm:$0xf]
        %v365 = vld [vmem:[%s347 + $0x44] sm:$0x3]
        %v366 = vld [vmem:[%s347 + $0x48] sm:$0xf]
        %v367 = vld [vmem:[%s347 + $0x4c] sm:$0xf]
        %v368 = vld [vmem:[%s347 + $0x50] sm:$0x3]
        %v369 = vld [vmem:[%s347 + $0x54] sm:$0xf]
        %v370 = vld [vmem:[%s347 + $0x58] sm:$0xf]
        %v371 = vld [vmem:[%s347 + $0x5c] sm:$0x3]
        %v372 = vld [vmem:[%s347 + $0x60] sm:$0xf]
        %v373 = vld [vmem:[%s347 + $0x64] sm:$0xf]
        %v374 = vld [vmem:[%s347 + $0x68] sm:$0x3]
        %v375 = vld [vmem:[%s347 + $0x6c] sm:$0xf]
        %v376 = vld [vmem:[%s347 + $0x70] sm:$0xf]
        %v377 = vld [vmem:[%s347 + $0x74] sm:$0x3]
        %v378 = vld [vmem:[%s347 + $0x78] sm:$0xf]
        %v379 = vld [vmem:[%s347 + $0x7c] sm:$0xf]
        %v380 = vld [vmem:[%s347 + $0x80] sm:$0x3]
        %v381 = vld [vmem:[%s347 + $0x84] sm:$0xf]
        %v382 = vld [vmem:[%s347 + $0x88] sm:$0xf]
        %v383 = vld [vmem:[%s347 + $0x8c] sm:$0x3]
        %v384 = vld [vmem:[%s347 + $0x90] sm:$0xf]
        %v385 = vld [vmem:[%s347 + $0x94] sm:$0xf]
        %v386 = vld [vmem:[%s347 + $0x98] sm:$0x3]
        %v387 = vld [vmem:[%s347 + $0x9c] sm:$0xf]
        %v388 = vld [vmem:[%s347 + $0xa0] sm:$0xf]
        %v389 = vld [vmem:[%s347 + $0xa4] sm:$0x3]
        %v390 = vld [vmem:[%s347 + $0xa8] sm:$0xf]
        %v391 = vld [vmem:[%s347 + $0xac] sm:$0xf]
        %v392 = vld [vmem:[%s347 + $0xb0] sm:$0x3]
        %v393 = vld [vmem:[%s347 + $0xb4] sm:$0xf]
        %v394 = vld [vmem:[%s347 + $0xb8] sm:$0xf]
        %v395 = vld [vmem:[%s347 + $0xbc] sm:$0x3]
        %v444 = vunpack.c.l.b16 %v348
        %v445 = vunpack.c.l.b16 %v349
        %v446 = vunpack.c.l.b16 %v350
        %v447 = vunpack.c.l.b16 %v351
        %v448 = vunpack.c.l.b16 %v352
        %v449 = vunpack.c.l.b16 %v353
        %v450 = vunpack.c.l.b16 %v354
        %v451 = vunpack.c.l.b16 %v355
        %v452 = vunpack.c.l.b16 %v356
        %v453 = vunpack.c.l.b16 %v357
        %v454 = vunpack.c.l.b16 %v358
        %v455 = vunpack.c.l.b16 %v359
        %v456 = vunpack.c.l.b16 %v360
        %v457 = vunpack.c.l.b16 %v361
        %v458 = vunpack.c.l.b16 %v362
        %v459 = vunpack.c.l.b16 %v363
        %v460 = vunpack.c.l.b16 %v364
        %v461 = vunpack.c.l.b16 %v365
        %v462 = vunpack.c.l.b16 %v366
        %v463 = vunpack.c.l.b16 %v367
        %v464 = vunpack.c.l.b16 %v368
        %v465 = vunpack.c.l.b16 %v369
        %v466 = vunpack.c.l.b16 %v370
        %v467 = vunpack.c.l.b16 %v371
        %v468 = vunpack.c.l.b16 %v372
        %v469 = vunpack.c.l.b16 %v373
        %v470 = vunpack.c.l.b16 %v374
        %v471 = vunpack.c.l.b16 %v375
        %v472 = vunpack.c.l.b16 %v376
        %v473 = vunpack.c.l.b16 %v377
        %v474 = vunpack.c.l.b16 %v378
        %v475 = vunpack.c.l.b16 %v379
        %v476 = vunpack.c.l.b16 %v380
        %v477 = vunpack.c.l.b16 %v381
        %v478 = vunpack.c.l.b16 %v382
        %v479 = vunpack.c.l.b16 %v383
        %v480 = vunpack.c.l.b16 %v384
        %v481 = vunpack.c.l.b16 %v385
        %v482 = vunpack.c.l.b16 %v386
        %v483 = vunpack.c.l.b16 %v387
        %v484 = vunpack.c.l.b16 %v388
        %v485 = vunpack.c.l.b16 %v389
        %v486 = vunpack.c.l.b16 %v390
        %v487 = vunpack.c.l.b16 %v391
        %v488 = vunpack.c.l.b16 %v392
        %v489 = vunpack.c.l.b16 %v393
        %v490 = vunpack.c.l.b16 %v394
        %v491 = vunpack.c.l.b16 %v395
        %v492 = vpack.c.b16 %v445, %v444
        %v493 = vpack.c.b16 %v446, %v446
        %v494 = vpack.c.b16 %v448, %v447
        %v495 = vpack.c.b16 %v449, %v449
        %v496 = vpack.c.b16 %v451, %v450
        %v497 = vpack.c.b16 %v452, %v452
        %v498 = vpack.c.b16 %v454, %v453
        %v499 = vpack.c.b16 %v455, %v455
        %v500 = vpack.c.b16 %v457, %v456
        %v501 = vpack.c.b16 %v458, %v458
        %v502 = vpack.c.b16 %v460, %v459
        %v503 = vpack.c.b16 %v461, %v461
        %v504 = vpack.c.b16 %v463, %v462
        %v505 = vpack.c.b16 %v464, %v464
        %v506 = vpack.c.b16 %v466, %v465
        %v507 = vpack.c.b16 %v467, %v467
        %v508 = vpack.c.b16 %v469, %v468
        %v509 = vpack.c.b16 %v470, %v470
        %v510 = vpack.c.b16 %v472, %v471
        %v511 = vpack.c.b16 %v473, %v473
        %v512 = vpack.c.b16 %v475, %v474
        %v513 = vpack.c.b16 %v476, %v476
        %v514 = vpack.c.b16 %v478, %v477
        %v515 = vpack.c.b16 %v479, %v479
        %v516 = vpack.c.b16 %v481, %v480
        %v517 = vpack.c.b16 %v482, %v482
        %v518 = vpack.c.b16 %v484, %v483
        %v519 = vpack.c.b16 %v485, %v485
        %v520 = vpack.c.b16 %v487, %v486
        %v521 = vpack.c.b16 %v488, %v488
        %v522 = vpack.c.b16 %v490, %v489
        %v523 = vpack.c.b16 %v491, %v491
        %vm524 = vsmask.f32 7424
        %v526 = vshrl.u32 %v492, 16
        %v528 = vshll.u32 %v492, 16
        %v530 = vrot.slane %v528, 1
        %v531 = vor.u32 %v526, %v530
        %v533 = vshll.u32 %v493, 16
        %v535 = vrot.slane %v533, 1
        %v536 = vsel %vm524, %v531, %v535
        %v537 = vshrl.u32 %v493, 16
        %v540 = vshrl.u32 %v494, 16
        %v542 = vshll.u32 %v494, 16
        %v544 = vrot.slane %v542, 1
        %v545 = vor.u32 %v540, %v544
        %v547 = vshll.u32 %v495, 16
        %v549 = vrot.slane %v547, 1
        %v550 = vsel %vm524, %v545, %v549
        %v551 = vshrl.u32 %v495, 16
        %v554 = vshrl.u32 %v496, 16
        %v556 = vshll.u32 %v496, 16
        %v558 = vrot.slane %v556, 1
        %v559 = vor.u32 %v554, %v558
        %v561 = vshll.u32 %v497, 16
        %v563 = vrot.slane %v561, 1
        %v564 = vsel %vm524, %v559, %v563
        %v565 = vshrl.u32 %v497, 16
        %v568 = vshrl.u32 %v498, 16
        %v570 = vshll.u32 %v498, 16
        %v572 = vrot.slane %v570, 1
        %v573 = vor.u32 %v568, %v572
        %v575 = vshll.u32 %v499, 16
        %v577 = vrot.slane %v575, 1
        %v578 = vsel %vm524, %v573, %v577
        %v579 = vshrl.u32 %v499, 16
        %v582 = vshrl.u32 %v500, 16
        %v584 = vshll.u32 %v500, 16
        %v586 = vrot.slane %v584, 1
        %v587 = vor.u32 %v582, %v586
        %v589 = vshll.u32 %v501, 16
        %v591 = vrot.slane %v589, 1
        %v592 = vsel %vm524, %v587, %v591
        %v593 = vshrl.u32 %v501, 16
        %v596 = vshrl.u32 %v502, 16
        %v598 = vshll.u32 %v502, 16
        %v600 = vrot.slane %v598, 1
        %v601 = vor.u32 %v596, %v600
        %v603 = vshll.u32 %v503, 16
        %v605 = vrot.slane %v603, 1
        %v606 = vsel %vm524, %v601, %v605
        %v607 = vshrl.u32 %v503, 16
        %v610 = vshrl.u32 %v504, 16
        %v612 = vshll.u32 %v504, 16
        %v614 = vrot.slane %v612, 1
        %v615 = vor.u32 %v610, %v614
        %v617 = vshll.u32 %v505, 16
        %v619 = vrot.slane %v617, 1
        %v620 = vsel %vm524, %v615, %v619
        %v621 = vshrl.u32 %v505, 16
        %v624 = vshrl.u32 %v506, 16
        %v626 = vshll.u32 %v506, 16
        %v628 = vrot.slane %v626, 1
        %v629 = vor.u32 %v624, %v628
        %v631 = vshll.u32 %v507, 16
        %v633 = vrot.slane %v631, 1
        %v634 = vsel %vm524, %v629, %v633
        %v635 = vshrl.u32 %v507, 16
        %v638 = vshrl.u32 %v508, 16
        %v640 = vshll.u32 %v508, 16
        %v642 = vrot.slane %v640, 1
        %v643 = vor.u32 %v638, %v642
        %v645 = vshll.u32 %v509, 16
        %v647 = vrot.slane %v645, 1
        %v648 = vsel %vm524, %v643, %v647
        %v649 = vshrl.u32 %v509, 16
        %v652 = vshrl.u32 %v510, 16
        %v654 = vshll.u32 %v510, 16
        %v656 = vrot.slane %v654, 1
        %v657 = vor.u32 %v652, %v656
        %v659 = vshll.u32 %v511, 16
        %v661 = vrot.slane %v659, 1
        %v662 = vsel %vm524, %v657, %v661
        %v663 = vshrl.u32 %v511, 16
        %v666 = vshrl.u32 %v512, 16
        %v668 = vshll.u32 %v512, 16
        %v670 = vrot.slane %v668, 1
        %v671 = vor.u32 %v666, %v670
        %v673 = vshll.u32 %v513, 16
        %v675 = vrot.slane %v673, 1
        %v676 = vsel %vm524, %v671, %v675
        %v677 = vshrl.u32 %v513, 16
        %v680 = vshrl.u32 %v514, 16
        %v682 = vshll.u32 %v514, 16
        %v684 = vrot.slane %v682, 1
        %v685 = vor.u32 %v680, %v684
        %v687 = vshll.u32 %v515, 16
        %v689 = vrot.slane %v687, 1
        %v690 = vsel %vm524, %v685, %v689
        %v691 = vshrl.u32 %v515, 16
        %v694 = vshrl.u32 %v516, 16
        %v696 = vshll.u32 %v516, 16
        %v698 = vrot.slane %v696, 1
        %v699 = vor.u32 %v694, %v698
        %v701 = vshll.u32 %v517, 16
        %v703 = vrot.slane %v701, 1
        %v704 = vsel %vm524, %v699, %v703
        %v705 = vshrl.u32 %v517, 16
        %v708 = vshrl.u32 %v518, 16
        %v710 = vshll.u32 %v518, 16
        %v712 = vrot.slane %v710, 1
        %v713 = vor.u32 %v708, %v712
        %v715 = vshll.u32 %v519, 16
        %v717 = vrot.slane %v715, 1
        %v718 = vsel %vm524, %v713, %v717
        %v719 = vshrl.u32 %v519, 16
        %v722 = vshrl.u32 %v520, 16
        %v724 = vshll.u32 %v520, 16
        %v726 = vrot.slane %v724, 1
        %v727 = vor.u32 %v722, %v726
        %v729 = vshll.u32 %v521, 16
        %v731 = vrot.slane %v729, 1
        %v732 = vsel %vm524, %v727, %v731
        %v733 = vshrl.u32 %v521, 16
        %v736 = vshrl.u32 %v522, 16
        %v738 = vshll.u32 %v522, 16
        %v740 = vrot.slane %v738, 1
        %v741 = vor.u32 %v736, %v740
        %v743 = vshll.u32 %v523, 16
        %v745 = vrot.slane %v743, 1
        %v746 = vsel %vm524, %v741, %v745
        %v747 = vshrl.u32 %v523, 16
        %vm749 = vcmask 1046528
        %v750 = vrot.slane %v492, 1
        %v751 = vrot.slane %v493, 1
        %v752 = vsel %vm749, %v750, %v751
        %v753 = vrot.slane %v494, 1
        %v754 = vrot.slane %v495, 1
        %v755 = vsel %vm749, %v753, %v754
        %v756 = vrot.slane %v496, 1
        %v757 = vrot.slane %v497, 1
        %v758 = vsel %vm749, %v756, %v757
        %v759 = vrot.slane %v498, 1
        %v760 = vrot.slane %v499, 1
        %v761 = vsel %vm749, %v759, %v760
        %v762 = vrot.slane %v500, 1
        %v763 = vrot.slane %v501, 1
        %v764 = vsel %vm749, %v762, %v763
        %v765 = vrot.slane %v502, 1
        %v766 = vrot.slane %v503, 1
        %v767 = vsel %vm749, %v765, %v766
        %v768 = vrot.slane %v504, 1
        %v769 = vrot.slane %v505, 1
        %v770 = vsel %vm749, %v768, %v769
        %v771 = vrot.slane %v506, 1
        %v772 = vrot.slane %v507, 1
        %v773 = vsel %vm749, %v771, %v772
        %v774 = vrot.slane %v508, 1
        %v775 = vrot.slane %v509, 1
        %v776 = vsel %vm749, %v774, %v775
        %v777 = vrot.slane %v510, 1
        %v778 = vrot.slane %v511, 1
        %v779 = vsel %vm749, %v777, %v778
        %v780 = vrot.slane %v512, 1
        %v781 = vrot.slane %v513, 1
        %v782 = vsel %vm749, %v780, %v781
        %v783 = vrot.slane %v514, 1
        %v784 = vrot.slane %v515, 1
        %v785 = vsel %vm749, %v783, %v784
        %v786 = vrot.slane %v516, 1
        %v787 = vrot.slane %v517, 1
        %v788 = vsel %vm749, %v786, %v787
        %v789 = vrot.slane %v518, 1
        %v790 = vrot.slane %v519, 1
        %v791 = vsel %vm749, %v789, %v790
        %v792 = vrot.slane %v520, 1
        %v793 = vrot.slane %v521, 1
        %v794 = vsel %vm749, %v792, %v793
        %v795 = vrot.slane %v522, 1
        %v796 = vrot.slane %v523, 1
        %v797 = vsel %vm749, %v795, %v796
        %v799 = vshrl.u32 %v536, 16
        %v801 = vshll.u32 %v536, 16
        %v803 = vrot.slane %v801, 1
        %v804 = vor.u32 %v799, %v803
        %v806 = vshll.u32 %v537, 16
        %v808 = vrot.slane %v806, 1
        %v809 = vsel %vm524, %v804, %v808
        %v811 = vshrl.u32 %v752, 16
        %v813 = vshll.u32 %v752, 16
        %v815 = vrot.slane %v813, 1
        %v816 = vor.u32 %v811, %v815
        %v818 = vshll.u32 %v751, 16
        %v820 = vrot.slane %v818, 1
        %v821 = vsel %vm524, %v816, %v820
        %v823 = vshrl.u32 %v550, 16
        %v825 = vshll.u32 %v550, 16
        %v827 = vrot.slane %v825, 1
        %v828 = vor.u32 %v823, %v827
        %v830 = vshll.u32 %v551, 16
        %v832 = vrot.slane %v830, 1
        %v833 = vsel %vm524, %v828, %v832
        %v835 = vshrl.u32 %v755, 16
        %v837 = vshll.u32 %v755, 16
        %v839 = vrot.slane %v837, 1
        %v840 = vor.u32 %v835, %v839
        %v842 = vshll.u32 %v754, 16
        %v844 = vrot.slane %v842, 1
        %v845 = vsel %vm524, %v840, %v844
        %v847 = vshrl.u32 %v564, 16
        %v849 = vshll.u32 %v564, 16
        %v851 = vrot.slane %v849, 1
        %v852 = vor.u32 %v847, %v851
        %v854 = vshll.u32 %v565, 16
        %v856 = vrot.slane %v854, 1
        %v857 = vsel %vm524, %v852, %v856
        %v859 = vshrl.u32 %v758, 16
        %v861 = vshll.u32 %v758, 16
        %v863 = vrot.slane %v861, 1
        %v864 = vor.u32 %v859, %v863
        %v866 = vshll.u32 %v757, 16
        %v868 = vrot.slane %v866, 1
        %v869 = vsel %vm524, %v864, %v868
        %v871 = vshrl.u32 %v578, 16
        %v873 = vshll.u32 %v578, 16
        %v875 = vrot.slane %v873, 1
        %v876 = vor.u32 %v871, %v875
        %v878 = vshll.u32 %v579, 16
        %v880 = vrot.slane %v878, 1
        %v881 = vsel %vm524, %v876, %v880
        %v883 = vshrl.u32 %v761, 16
        %v885 = vshll.u32 %v761, 16
        %v887 = vrot.slane %v885, 1
        %v888 = vor.u32 %v883, %v887
        %v890 = vshll.u32 %v760, 16
        %v892 = vrot.slane %v890, 1
        %v893 = vsel %vm524, %v888, %v892
        %v895 = vshrl.u32 %v592, 16
        %v897 = vshll.u32 %v592, 16
        %v899 = vrot.slane %v897, 1
        %v900 = vor.u32 %v895, %v899
        %v902 = vshll.u32 %v593, 16
        %v904 = vrot.slane %v902, 1
        %v905 = vsel %vm524, %v900, %v904
        %v907 = vshrl.u32 %v764, 16
        %v909 = vshll.u32 %v764, 16
        %v911 = vrot.slane %v909, 1
        %v912 = vor.u32 %v907, %v911
        %v914 = vshll.u32 %v763, 16
        %v916 = vrot.slane %v914, 1
        %v917 = vsel %vm524, %v912, %v916
        %v919 = vshrl.u32 %v606, 16
        %v921 = vshll.u32 %v606, 16
        %v923 = vrot.slane %v921, 1
        %v924 = vor.u32 %v919, %v923
        %v926 = vshll.u32 %v607, 16
        %v928 = vrot.slane %v926, 1
        %v929 = vsel %vm524, %v924, %v928
        %v931 = vshrl.u32 %v767, 16
        %v933 = vshll.u32 %v767, 16
        %v935 = vrot.slane %v933, 1
        %v936 = vor.u32 %v931, %v935
        %v938 = vshll.u32 %v766, 16
        %v940 = vrot.slane %v938, 1
        %v941 = vsel %vm524, %v936, %v940
        %v943 = vshrl.u32 %v620, 16
        %v945 = vshll.u32 %v620, 16
        %v947 = vrot.slane %v945, 1
        %v948 = vor.u32 %v943, %v947
        %v950 = vshll.u32 %v621, 16
        %v952 = vrot.slane %v950, 1
        %v953 = vsel %vm524, %v948, %v952
        %v955 = vshrl.u32 %v770, 16
        %v957 = vshll.u32 %v770, 16
        %v959 = vrot.slane %v957, 1
        %v960 = vor.u32 %v955, %v959
        %v962 = vshll.u32 %v769, 16
        %v964 = vrot.slane %v962, 1
        %v965 = vsel %vm524, %v960, %v964
        %v967 = vshrl.u32 %v634, 16
        %v969 = vshll.u32 %v634, 16
        %v971 = vrot.slane %v969, 1
        %v972 = vor.u32 %v967, %v971
        %v974 = vshll.u32 %v635, 16
        %v976 = vrot.slane %v974, 1
        %v977 = vsel %vm524, %v972, %v976
        %v979 = vshrl.u32 %v773, 16
        %v981 = vshll.u32 %v773, 16
        %v983 = vrot.slane %v981, 1
        %v984 = vor.u32 %v979, %v983
        %v986 = vshll.u32 %v772, 16
        %v988 = vrot.slane %v986, 1
        %v989 = vsel %vm524, %v984, %v988
        %v991 = vshrl.u32 %v648, 16
        %v993 = vshll.u32 %v648, 16
        %v995 = vrot.slane %v993, 1
        %v996 = vor.u32 %v991, %v995
        %v998 = vshll.u32 %v649, 16
        %v1000 = vrot.slane %v998, 1
        %v1001 = vsel %vm524, %v996, %v1000
        %v1003 = vshrl.u32 %v776, 16
        %v1005 = vshll.u32 %v776, 16
        %v1007 = vrot.slane %v1005, 1
        %v1008 = vor.u32 %v1003, %v1007
        %v1010 = vshll.u32 %v775, 16
        %v1012 = vrot.slane %v1010, 1
        %v1013 = vsel %vm524, %v1008, %v1012
        %v1015 = vshrl.u32 %v662, 16
        %v1017 = vshll.u32 %v662, 16
        %v1019 = vrot.slane %v1017, 1
        %v1020 = vor.u32 %v1015, %v1019
        %v1022 = vshll.u32 %v663, 16
        %v1024 = vrot.slane %v1022, 1
        %v1025 = vsel %vm524, %v1020, %v1024
        %v1027 = vshrl.u32 %v779, 16
        %v1029 = vshll.u32 %v779, 16
        %v1031 = vrot.slane %v1029, 1
        %v1032 = vor.u32 %v1027, %v1031
        %v1034 = vshll.u32 %v778, 16
        %v1036 = vrot.slane %v1034, 1
        %v1037 = vsel %vm524, %v1032, %v1036
        %v1039 = vshrl.u32 %v676, 16
        %v1041 = vshll.u32 %v676, 16
        %v1043 = vrot.slane %v1041, 1
        %v1044 = vor.u32 %v1039, %v1043
        %v1046 = vshll.u32 %v677, 16
        %v1048 = vrot.slane %v1046, 1
        %v1049 = vsel %vm524, %v1044, %v1048
        %v1051 = vshrl.u32 %v782, 16
        %v1053 = vshll.u32 %v782, 16
        %v1055 = vrot.slane %v1053, 1
        %v1056 = vor.u32 %v1051, %v1055
        %v1058 = vshll.u32 %v781, 16
        %v1060 = vrot.slane %v1058, 1
        %v1061 = vsel %vm524, %v1056, %v1060
        %v1063 = vshrl.u32 %v690, 16
        %v1065 = vshll.u32 %v690, 16
        %v1067 = vrot.slane %v1065, 1
        %v1068 = vor.u32 %v1063, %v1067
        %v1070 = vshll.u32 %v691, 16
        %v1072 = vrot.slane %v1070, 1
        %v1073 = vsel %vm524, %v1068, %v1072
        %v1075 = vshrl.u32 %v785, 16
        %v1077 = vshll.u32 %v785, 16
        %v1079 = vrot.slane %v1077, 1
        %v1080 = vor.u32 %v1075, %v1079
        %v1082 = vshll.u32 %v784, 16
        %v1084 = vrot.slane %v1082, 1
        %v1085 = vsel %vm524, %v1080, %v1084
        %v1087 = vshrl.u32 %v704, 16
        %v1089 = vshll.u32 %v704, 16
        %v1091 = vrot.slane %v1089, 1
        %v1092 = vor.u32 %v1087, %v1091
        %v1094 = vshll.u32 %v705, 16
        %v1096 = vrot.slane %v1094, 1
        %v1097 = vsel %vm524, %v1092, %v1096
        %v1099 = vshrl.u32 %v788, 16
        %v1101 = vshll.u32 %v788, 16
        %v1103 = vrot.slane %v1101, 1
        %v1104 = vor.u32 %v1099, %v1103
        %v1106 = vshll.u32 %v787, 16
        %v1108 = vrot.slane %v1106, 1
        %v1109 = vsel %vm524, %v1104, %v1108
        %v1111 = vshrl.u32 %v718, 16
        %v1113 = vshll.u32 %v718, 16
        %v1115 = vrot.slane %v1113, 1
        %v1116 = vor.u32 %v1111, %v1115
        %v1118 = vshll.u32 %v719, 16
        %v1120 = vrot.slane %v1118, 1
        %v1121 = vsel %vm524, %v1116, %v1120
        %v1123 = vshrl.u32 %v791, 16
        %v1125 = vshll.u32 %v791, 16
        %v1127 = vrot.slane %v1125, 1
        %v1128 = vor.u32 %v1123, %v1127
        %v1130 = vshll.u32 %v790, 16
        %v1132 = vrot.slane %v1130, 1
        %v1133 = vsel %vm524, %v1128, %v1132
        %v1135 = vshrl.u32 %v732, 16
        %v1137 = vshll.u32 %v732, 16
        %v1139 = vrot.slane %v1137, 1
        %v1140 = vor.u32 %v1135, %v1139
        %v1142 = vshll.u32 %v733, 16
        %v1144 = vrot.slane %v1142, 1
        %v1145 = vsel %vm524, %v1140, %v1144
        %v1147 = vshrl.u32 %v794, 16
        %v1149 = vshll.u32 %v794, 16
        %v1151 = vrot.slane %v1149, 1
        %v1152 = vor.u32 %v1147, %v1151
        %v1154 = vshll.u32 %v793, 16
        %v1156 = vrot.slane %v1154, 1
        %v1157 = vsel %vm524, %v1152, %v1156
        %v1159 = vshrl.u32 %v746, 16
        %v1161 = vshll.u32 %v746, 16
        %v1163 = vrot.slane %v1161, 1
        %v1164 = vor.u32 %v1159, %v1163
        %v1166 = vshll.u32 %v747, 16
        %v1168 = vrot.slane %v1166, 1
        %v1169 = vsel %vm524, %v1164, %v1168
        %v1171 = vshrl.u32 %v797, 16
        %v1173 = vshll.u32 %v797, 16
        %v1175 = vrot.slane %v1173, 1
        %v1176 = vor.u32 %v1171, %v1175
        %v1178 = vshll.u32 %v796, 16
        %v1180 = vrot.slane %v1178, 1
        %v1181 = vsel %vm524, %v1176, %v1180
        %v1230 = vld [vmem:[#allocation3] sm:$0xf]
        %v1231 = vld [vmem:[#allocation3 + $0x4] sm:$0xf]
        %v1232 = vld [vmem:[#allocation3 + $0x8] sm:$0xf]
        %v1233 = vld [vmem:[#allocation3 + $0xc] sm:$0xf]
        %v1234 = vld [vmem:[#allocation3 + $0x10] sm:$0xf]
        %v1235 = vld [vmem:[#allocation3 + $0x14] sm:$0xf]
        %v1236 = vld [vmem:[#allocation3 + $0x18] sm:$0xf]
        %v1237 = vld [vmem:[#allocation3 + $0x1c] sm:$0xf]
        %v1238 = vld [vmem:[#allocation3 + $0x20] sm:$0xf]
        %v1239 = vld [vmem:[#allocation3 + $0x24] sm:$0xf]
        %v1240 = vld [vmem:[#allocation3 + $0x28] sm:$0xf]
        %v1241 = vld [vmem:[#allocation3 + $0x2c] sm:$0xf]
        %v1242 = vld [vmem:[#allocation3 + $0x30] sm:$0xf]
        %v1243 = vld [vmem:[#allocation3 + $0x34] sm:$0xf]
        %v1244 = vld [vmem:[#allocation3 + $0x38] sm:$0xf]
        %v1245 = vld [vmem:[#allocation3 + $0x3c] sm:$0xf]
        %v1246 = vld [vmem:[#allocation3 + $0x40] sm:$0xf]
        %v1247 = vld [vmem:[#allocation3 + $0x44] sm:$0xf]
        %v1248 = vld [vmem:[#allocation3 + $0x48] sm:$0xf]
        %v1249 = vld [vmem:[#allocation3 + $0x4c] sm:$0xf]
        %v1250 = vld [vmem:[#allocation3 + $0x50] sm:$0xf]
        %v1251 = vld [vmem:[#allocation3 + $0x54] sm:$0xf]
        %v1252 = vld [vmem:[#allocation3 + $0x58] sm:$0xf]
        %v1253 = vld [vmem:[#allocation3 + $0x5c] sm:$0xf]
        %v1254 = vld [vmem:[#allocation3 + $0x60] sm:$0xf]
        %v1255 = vld [vmem:[#allocation3 + $0x64] sm:$0xf]
        %v1256 = vld [vmem:[#allocation3 + $0x68] sm:$0xf]
        %v1257 = vld [vmem:[#allocation3 + $0x6c] sm:$0xf]
        %v1258 = vld [vmem:[#allocation3 + $0x70] sm:$0xf]
        %v1259 = vld [vmem:[#allocation3 + $0x74] sm:$0xf]
        %v1260 = vld [vmem:[#allocation3 + $0x78] sm:$0xf]
        %v1261 = vld [vmem:[#allocation3 + $0x7c] sm:$0xf]
        %v1262 = vld [vmem:[#allocation3 + $0x80] sm:$0xf]
        %v1263 = vld [vmem:[#allocation3 + $0x84] sm:$0xf]
        %v1264 = vld [vmem:[#allocation3 + $0x88] sm:$0xf]
        %v1265 = vld [vmem:[#allocation3 + $0x8c] sm:$0xf]
        %v1266 = vld [vmem:[#allocation3 + $0x90] sm:$0xf]
        %v1267 = vld [vmem:[#allocation3 + $0x94] sm:$0xf]
        %v1268 = vld [vmem:[#allocation3 + $0x98] sm:$0xf]
        %v1269 = vld [vmem:[#allocation3 + $0x9c] sm:$0xf]
        %v1270 = vld [vmem:[#allocation3 + $0xa0] sm:$0xf]
        %v1271 = vld [vmem:[#allocation3 + $0xa4] sm:$0xf]
        %v1272 = vld [vmem:[#allocation3 + $0xa8] sm:$0xf]
        %v1273 = vld [vmem:[#allocation3 + $0xac] sm:$0xf]
        %v1274 = vld [vmem:[#allocation3 + $0xb0] sm:$0xf]
        %v1275 = vld [vmem:[#allocation3 + $0xb4] sm:$0xf]
        %v1276 = vld [vmem:[#allocation3 + $0xb8] sm:$0xf]
        %v1277 = vld [vmem:[#allocation3 + $0xbc] sm:$0xf]
        %s1278 = scalar_lea.vmem %s345, 24
        %v1279 = vld [vmem:[%s1278] sm:$0xf]
        %v1280 = vld [vmem:[%s1278 + $0x4] sm:$0xf]
        %v1281 = vld [vmem:[%s1278 + $0x8] sm:$0x3]
        %v1282 = vld [vmem:[%s1278 + $0xc] sm:$0xf]
        %v1283 = vld [vmem:[%s1278 + $0x10] sm:$0xf]
        %v1284 = vld [vmem:[%s1278 + $0x14] sm:$0x3]
        %v1285 = vld [vmem:[%s1278 + $0x18] sm:$0xf]
        %v1286 = vld [vmem:[%s1278 + $0x1c] sm:$0xf]
        %v1287 = vld [vmem:[%s1278 + $0x20] sm:$0x3]
        %v1288 = vld [vmem:[%s1278 + $0x24] sm:$0xf]
        %v1289 = vld [vmem:[%s1278 + $0x28] sm:$0xf]
        %v1290 = vld [vmem:[%s1278 + $0x2c] sm:$0x3]
        %v1291 = vld [vmem:[%s1278 + $0x30] sm:$0xf]
        %v1292 = vld [vmem:[%s1278 + $0x34] sm:$0xf]
        %v1293 = vld [vmem:[%s1278 + $0x38] sm:$0x3]
        %v1294 = vld [vmem:[%s1278 + $0x3c] sm:$0xf]
        %v1295 = vld [vmem:[%s1278 + $0x40] sm:$0xf]
        %v1296 = vld [vmem:[%s1278 + $0x44] sm:$0x3]
        %v1297 = vld [vmem:[%s1278 + $0x48] sm:$0xf]
        %v1298 = vld [vmem:[%s1278 + $0x4c] sm:$0xf]
        %v1299 = vld [vmem:[%s1278 + $0x50] sm:$0x3]
        %v1300 = vld [vmem:[%s1278 + $0x54] sm:$0xf]
        %v1301 = vld [vmem:[%s1278 + $0x58] sm:$0xf]
        %v1302 = vld [vmem:[%s1278 + $0x5c] sm:$0x3]
        %v1303 = vld [vmem:[%s1278 + $0x60] sm:$0xf]
        %v1304 = vld [vmem:[%s1278 + $0x64] sm:$0xf]
        %v1305 = vld [vmem:[%s1278 + $0x68] sm:$0x3]
        %v1306 = vld [vmem:[%s1278 + $0x6c] sm:$0xf]
        %v1307 = vld [vmem:[%s1278 + $0x70] sm:$0xf]
        %v1308 = vld [vmem:[%s1278 + $0x74] sm:$0x3]
        %v1309 = vld [vmem:[%s1278 + $0x78] sm:$0xf]
        %v1310 = vld [vmem:[%s1278 + $0x7c] sm:$0xf]
        %v1311 = vld [vmem:[%s1278 + $0x80] sm:$0x3]
        %v1312 = vld [vmem:[%s1278 + $0x84] sm:$0xf]
        %v1313 = vld [vmem:[%s1278 + $0x88] sm:$0xf]
        %v1314 = vld [vmem:[%s1278 + $0x8c] sm:$0x3]
        %v1315 = vld [vmem:[%s1278 + $0x90] sm:$0xf]
        %v1316 = vld [vmem:[%s1278 + $0x94] sm:$0xf]
        %v1317 = vld [vmem:[%s1278 + $0x98] sm:$0x3]
        %v1318 = vld [vmem:[%s1278 + $0x9c] sm:$0xf]
        %v1319 = vld [vmem:[%s1278 + $0xa0] sm:$0xf]
        %v1320 = vld [vmem:[%s1278 + $0xa4] sm:$0x3]
        %v1321 = vld [vmem:[%s1278 + $0xa8] sm:$0xf]
        %v1322 = vld [vmem:[%s1278 + $0xac] sm:$0xf]
        %v1323 = vld [vmem:[%s1278 + $0xb0] sm:$0x3]
        %v1324 = vld [vmem:[%s1278 + $0xb4] sm:$0xf]
        %v1325 = vld [vmem:[%s1278 + $0xb8] sm:$0xf]
        %v1326 = vld [vmem:[%s1278 + $0xbc] sm:$0x3]
        %v1375 = vunpack.c.l.b16 %v1279
        %v1376 = vunpack.c.l.b16 %v1280
        %v1377 = vunpack.c.l.b16 %v1281
        %v1378 = vunpack.c.l.b16 %v1282
        %v1379 = vunpack.c.l.b16 %v1283
        %v1380 = vunpack.c.l.b16 %v1284
        %v1381 = vunpack.c.l.b16 %v1285
        %v1382 = vunpack.c.l.b16 %v1286
        %v1383 = vunpack.c.l.b16 %v1287
        %v1384 = vunpack.c.l.b16 %v1288
        %v1385 = vunpack.c.l.b16 %v1289
        %v1386 = vunpack.c.l.b16 %v1290
        %v1387 = vunpack.c.l.b16 %v1291
        %v1388 = vunpack.c.l.b16 %v1292
        %v1389 = vunpack.c.l.b16 %v1293
        %v1390 = vunpack.c.l.b16 %v1294
        %v1391 = vunpack.c.l.b16 %v1295
        %v1392 = vunpack.c.l.b16 %v1296
        %v1393 = vunpack.c.l.b16 %v1297
        %v1394 = vunpack.c.l.b16 %v1298
        %v1395 = vunpack.c.l.b16 %v1299
        %v1396 = vunpack.c.l.b16 %v1300
        %v1397 = vunpack.c.l.b16 %v1301
        %v1398 = vunpack.c.l.b16 %v1302
        %v1399 = vunpack.c.l.b16 %v1303
        %v1400 = vunpack.c.l.b16 %v1304
        %v1401 = vunpack.c.l.b16 %v1305
        %v1402 = vunpack.c.l.b16 %v1306
        %v1403 = vunpack.c.l.b16 %v1307
        %v1404 = vunpack.c.l.b16 %v1308
        %v1405 = vunpack.c.l.b16 %v1309
        %v1406 = vunpack.c.l.b16 %v1310
        %v1407 = vunpack.c.l.b16 %v1311
        %v1408 = vunpack.c.l.b16 %v1312
        %v1409 = vunpack.c.l.b16 %v1313
        %v1410 = vunpack.c.l.b16 %v1314
        %v1411 = vunpack.c.l.b16 %v1315
        %v1412 = vunpack.c.l.b16 %v1316
        %v1413 = vunpack.c.l.b16 %v1317
        %v1414 = vunpack.c.l.b16 %v1318
        %v1415 = vunpack.c.l.b16 %v1319
        %v1416 = vunpack.c.l.b16 %v1320
        %v1417 = vunpack.c.l.b16 %v1321
        %v1418 = vunpack.c.l.b16 %v1322
        %v1419 = vunpack.c.l.b16 %v1323
        %v1420 = vunpack.c.l.b16 %v1324
        %v1421 = vunpack.c.l.b16 %v1325
        %v1422 = vunpack.c.l.b16 %v1326
        %v1423 = vpack.c.b16 %v1376, %v1375
        %v1424 = vpack.c.b16 %v1377, %v1377
        %v1425 = vpack.c.b16 %v1379, %v1378
        %v1426 = vpack.c.b16 %v1380, %v1380
        %v1427 = vpack.c.b16 %v1382, %v1381
        %v1428 = vpack.c.b16 %v1383, %v1383
        %v1429 = vpack.c.b16 %v1385, %v1384
        %v1430 = vpack.c.b16 %v1386, %v1386
        %v1431 = vpack.c.b16 %v1388, %v1387
        %v1432 = vpack.c.b16 %v1389, %v1389
        %v1433 = vpack.c.b16 %v1391, %v1390
        %v1434 = vpack.c.b16 %v1392, %v1392
        %v1435 = vpack.c.b16 %v1394, %v1393
        %v1436 = vpack.c.b16 %v1395, %v1395
        %v1437 = vpack.c.b16 %v1397, %v1396
        %v1438 = vpack.c.b16 %v1398, %v1398
        %v1439 = vpack.c.b16 %v1400, %v1399
        %v1440 = vpack.c.b16 %v1401, %v1401
        %v1441 = vpack.c.b16 %v1403, %v1402
        %v1442 = vpack.c.b16 %v1404, %v1404
        %v1443 = vpack.c.b16 %v1406, %v1405
        %v1444 = vpack.c.b16 %v1407, %v1407
        %v1445 = vpack.c.b16 %v1409, %v1408
        %v1446 = vpack.c.b16 %v1410, %v1410
        %v1447 = vpack.c.b16 %v1412, %v1411
        %v1448 = vpack.c.b16 %v1413, %v1413
        %v1449 = vpack.c.b16 %v1415, %v1414
        %v1450 = vpack.c.b16 %v1416, %v1416
        %v1451 = vpack.c.b16 %v1418, %v1417
        %v1452 = vpack.c.b16 %v1419, %v1419
        %v1453 = vpack.c.b16 %v1421, %v1420
        %v1454 = vpack.c.b16 %v1422, %v1422
        %v1456 = vshrl.u32 %v1423, 16
        %v1458 = vshll.u32 %v1423, 16
        %v1460 = vrot.slane %v1458, 1
        %v1461 = vor.u32 %v1456, %v1460
        %v1463 = vshll.u32 %v1424, 16
        %v1465 = vrot.slane %v1463, 1
        %v1466 = vsel %vm524, %v1461, %v1465
        %v1467 = vshrl.u32 %v1424, 16
        %v1470 = vshrl.u32 %v1425, 16
        %v1472 = vshll.u32 %v1425, 16
        %v1474 = vrot.slane %v1472, 1
        %v1475 = vor.u32 %v1470, %v1474
        %v1477 = vshll.u32 %v1426, 16
        %v1479 = vrot.slane %v1477, 1
        %v1480 = vsel %vm524, %v1475, %v1479
        %v1481 = vshrl.u32 %v1426, 16
        %v1484 = vshrl.u32 %v1427, 16
        %v1486 = vshll.u32 %v1427, 16
        %v1488 = vrot.slane %v1486, 1
        %v1489 = vor.u32 %v1484, %v1488
        %v1491 = vshll.u32 %v1428, 16
        %v1493 = vrot.slane %v1491, 1
        %v1494 = vsel %vm524, %v1489, %v1493
        %v1495 = vshrl.u32 %v1428, 16
        %v1498 = vshrl.u32 %v1429, 16
        %v1500 = vshll.u32 %v1429, 16
        %v1502 = vrot.slane %v1500, 1
        %v1503 = vor.u32 %v1498, %v1502
        %v1505 = vshll.u32 %v1430, 16
        %v1507 = vrot.slane %v1505, 1
        %v1508 = vsel %vm524, %v1503, %v1507
        %v1509 = vshrl.u32 %v1430, 16
        %v1512 = vshrl.u32 %v1431, 16
        %v1514 = vshll.u32 %v1431, 16
        %v1516 = vrot.slane %v1514, 1
        %v1517 = vor.u32 %v1512, %v1516
        %v1519 = vshll.u32 %v1432, 16
        %v1521 = vrot.slane %v1519, 1
        %v1522 = vsel %vm524, %v1517, %v1521
        %v1523 = vshrl.u32 %v1432, 16
        %v1526 = vshrl.u32 %v1433, 16
        %v1528 = vshll.u32 %v1433, 16
        %v1530 = vrot.slane %v1528, 1
        %v1531 = vor.u32 %v1526, %v1530
        %v1533 = vshll.u32 %v1434, 16
        %v1535 = vrot.slane %v1533, 1
        %v1536 = vsel %vm524, %v1531, %v1535
        %v1537 = vshrl.u32 %v1434, 16
        %v1540 = vshrl.u32 %v1435, 16
        %v1542 = vshll.u32 %v1435, 16
        %v1544 = vrot.slane %v1542, 1
        %v1545 = vor.u32 %v1540, %v1544
        %v1547 = vshll.u32 %v1436, 16
        %v1549 = vrot.slane %v1547, 1
        %v1550 = vsel %vm524, %v1545, %v1549
        %v1551 = vshrl.u32 %v1436, 16
        %v1554 = vshrl.u32 %v1437, 16
        %v1556 = vshll.u32 %v1437, 16
        %v1558 = vrot.slane %v1556, 1
        %v1559 = vor.u32 %v1554, %v1558
        %v1561 = vshll.u32 %v1438, 16
        %v1563 = vrot.slane %v1561, 1
        %v1564 = vsel %vm524, %v1559, %v1563
        %v1565 = vshrl.u32 %v1438, 16
        %v1568 = vshrl.u32 %v1439, 16
        %v1570 = vshll.u32 %v1439, 16
        %v1572 = vrot.slane %v1570, 1
        %v1573 = vor.u32 %v1568, %v1572
        %v1575 = vshll.u32 %v1440, 16
        %v1577 = vrot.slane %v1575, 1
        %v1578 = vsel %vm524, %v1573, %v1577
        %v1579 = vshrl.u32 %v1440, 16
        %v1582 = vshrl.u32 %v1441, 16
        %v1584 = vshll.u32 %v1441, 16
        %v1586 = vrot.slane %v1584, 1
        %v1587 = vor.u32 %v1582, %v1586
        %v1589 = vshll.u32 %v1442, 16
        %v1591 = vrot.slane %v1589, 1
        %v1592 = vsel %vm524, %v1587, %v1591
        %v1593 = vshrl.u32 %v1442, 16
        %v1596 = vshrl.u32 %v1443, 16
        %v1598 = vshll.u32 %v1443, 16
        %v1600 = vrot.slane %v1598, 1
        %v1601 = vor.u32 %v1596, %v1600
        %v1603 = vshll.u32 %v1444, 16
        %v1605 = vrot.slane %v1603, 1
        %v1606 = vsel %vm524, %v1601, %v1605
        %v1607 = vshrl.u32 %v1444, 16
        %v1610 = vshrl.u32 %v1445, 16
        %v1612 = vshll.u32 %v1445, 16
        %v1614 = vrot.slane %v1612, 1
        %v1615 = vor.u32 %v1610, %v1614
        %v1617 = vshll.u32 %v1446, 16
        %v1619 = vrot.slane %v1617, 1
        %v1620 = vsel %vm524, %v1615, %v1619
        %v1621 = vshrl.u32 %v1446, 16
        %v1624 = vshrl.u32 %v1447, 16
        %v1626 = vshll.u32 %v1447, 16
        %v1628 = vrot.slane %v1626, 1
        %v1629 = vor.u32 %v1624, %v1628
        %v1631 = vshll.u32 %v1448, 16
        %v1633 = vrot.slane %v1631, 1
        %v1634 = vsel %vm524, %v1629, %v1633
        %v1635 = vshrl.u32 %v1448, 16
        %v1638 = vshrl.u32 %v1449, 16
        %v1640 = vshll.u32 %v1449, 16
        %v1642 = vrot.slane %v1640, 1
        %v1643 = vor.u32 %v1638, %v1642
        %v1645 = vshll.u32 %v1450, 16
        %v1647 = vrot.slane %v1645, 1
        %v1648 = vsel %vm524, %v1643, %v1647
        %v1649 = vshrl.u32 %v1450, 16
        %v1652 = vshrl.u32 %v1451, 16
        %v1654 = vshll.u32 %v1451, 16
        %v1656 = vrot.slane %v1654, 1
        %v1657 = vor.u32 %v1652, %v1656
        %v1659 = vshll.u32 %v1452, 16
        %v1661 = vrot.slane %v1659, 1
        %v1662 = vsel %vm524, %v1657, %v1661
        %v1663 = vshrl.u32 %v1452, 16
        %v1666 = vshrl.u32 %v1453, 16
        %v1668 = vshll.u32 %v1453, 16
        %v1670 = vrot.slane %v1668, 1
        %v1671 = vor.u32 %v1666, %v1670
        %v1673 = vshll.u32 %v1454, 16
        %v1675 = vrot.slane %v1673, 1
        %v1676 = vsel %vm524, %v1671, %v1675
        %v1677 = vshrl.u32 %v1454, 16
        %v1679 = vrot.slane %v1423, 1
        %v1680 = vrot.slane %v1424, 1
        %v1681 = vsel %vm749, %v1679, %v1680
        %v1682 = vrot.slane %v1425, 1
        %v1683 = vrot.slane %v1426, 1
        %v1684 = vsel %vm749, %v1682, %v1683
        %v1685 = vrot.slane %v1427, 1
        %v1686 = vrot.slane %v1428, 1
        %v1687 = vsel %vm749, %v1685, %v1686
        %v1688 = vrot.slane %v1429, 1
        %v1689 = vrot.slane %v1430, 1
        %v1690 = vsel %vm749, %v1688, %v1689
        %v1691 = vrot.slane %v1431, 1
        %v1692 = vrot.slane %v1432, 1
        %v1693 = vsel %vm749, %v1691, %v1692
        %v1694 = vrot.slane %v1433, 1
        %v1695 = vrot.slane %v1434, 1
        %v1696 = vsel %vm749, %v1694, %v1695
        %v1697 = vrot.slane %v1435, 1
        %v1698 = vrot.slane %v1436, 1
        %v1699 = vsel %vm749, %v1697, %v1698
        %v1700 = vrot.slane %v1437, 1
        %v1701 = vrot.slane %v1438, 1
        %v1702 = vsel %vm749, %v1700, %v1701
        %v1703 = vrot.slane %v1439, 1
        %v1704 = vrot.slane %v1440, 1
        %v1705 = vsel %vm749, %v1703, %v1704
        %v1706 = vrot.slane %v1441, 1
        %v1707 = vrot.slane %v1442, 1
        %v1708 = vsel %vm749, %v1706, %v1707
        %v1709 = vrot.slane %v1443, 1
        %v1710 = vrot.slane %v1444, 1
        %v1711 = vsel %vm749, %v1709, %v1710
        %v1712 = vrot.slane %v1445, 1
        %v1713 = vrot.slane %v1446, 1
        %v1714 = vsel %vm749, %v1712, %v1713
        %v1715 = vrot.slane %v1447, 1
        %v1716 = vrot.slane %v1448, 1
        %v1717 = vsel %vm749, %v1715, %v1716
        %v1718 = vrot.slane %v1449, 1
        %v1719 = vrot.slane %v1450, 1
        %v1720 = vsel %vm749, %v1718, %v1719
        %v1721 = vrot.slane %v1451, 1
        %v1722 = vrot.slane %v1452, 1
        %v1723 = vsel %vm749, %v1721, %v1722
        %v1724 = vrot.slane %v1453, 1
        %v1725 = vrot.slane %v1454, 1
        %v1726 = vsel %vm749, %v1724, %v1725
        %v1728 = vshrl.u32 %v1466, 16
        %v1730 = vshll.u32 %v1466, 16
        %v1732 = vrot.slane %v1730, 1
        %v1733 = vor.u32 %v1728, %v1732
        %v1735 = vshll.u32 %v1467, 16
        %v1737 = vrot.slane %v1735, 1
        %v1738 = vsel %vm524, %v1733, %v1737
        %v1740 = vshrl.u32 %v1681, 16
        %v1742 = vshll.u32 %v1681, 16
        %v1744 = vrot.slane %v1742, 1
        %v1745 = vor.u32 %v1740, %v1744
        %v1747 = vshll.u32 %v1680, 16
        %v1749 = vrot.slane %v1747, 1
        %v1750 = vsel %vm524, %v1745, %v1749
        %v1752 = vshrl.u32 %v1480, 16
        %v1754 = vshll.u32 %v1480, 16
        %v1756 = vrot.slane %v1754, 1
        %v1757 = vor.u32 %v1752, %v1756
        %v1759 = vshll.u32 %v1481, 16
        %v1761 = vrot.slane %v1759, 1
        %v1762 = vsel %vm524, %v1757, %v1761
        %v1764 = vshrl.u32 %v1684, 16
        %v1766 = vshll.u32 %v1684, 16
        %v1768 = vrot.slane %v1766, 1
        %v1769 = vor.u32 %v1764, %v1768
        %v1771 = vshll.u32 %v1683, 16
        %v1773 = vrot.slane %v1771, 1
        %v1774 = vsel %vm524, %v1769, %v1773
        %v1776 = vshrl.u32 %v1494, 16
        %v1778 = vshll.u32 %v1494, 16
        %v1780 = vrot.slane %v1778, 1
        %v1781 = vor.u32 %v1776, %v1780
        %v1783 = vshll.u32 %v1495, 16
        %v1785 = vrot.slane %v1783, 1
        %v1786 = vsel %vm524, %v1781, %v1785
        %v1788 = vshrl.u32 %v1687, 16
        %v1790 = vshll.u32 %v1687, 16
        %v1792 = vrot.slane %v1790, 1
        %v1793 = vor.u32 %v1788, %v1792
        %v1795 = vshll.u32 %v1686, 16
        %v1797 = vrot.slane %v1795, 1
        %v1798 = vsel %vm524, %v1793, %v1797
        %v1800 = vshrl.u32 %v1508, 16
        %v1802 = vshll.u32 %v1508, 16
        %v1804 = vrot.slane %v1802, 1
        %v1805 = vor.u32 %v1800, %v1804
        %v1807 = vshll.u32 %v1509, 16
        %v1809 = vrot.slane %v1807, 1
        %v1810 = vsel %vm524, %v1805, %v1809
        %v1812 = vshrl.u32 %v1690, 16
        %v1814 = vshll.u32 %v1690, 16
        %v1816 = vrot.slane %v1814, 1
        %v1817 = vor.u32 %v1812, %v1816
        %v1819 = vshll.u32 %v1689, 16
        %v1821 = vrot.slane %v1819, 1
        %v1822 = vsel %vm524, %v1817, %v1821
        %v1824 = vshrl.u32 %v1522, 16
        %v1826 = vshll.u32 %v1522, 16
        %v1828 = vrot.slane %v1826, 1
        %v1829 = vor.u32 %v1824, %v1828
        %v1831 = vshll.u32 %v1523, 16
        %v1833 = vrot.slane %v1831, 1
        %v1834 = vsel %vm524, %v1829, %v1833
        %v1836 = vshrl.u32 %v1693, 16
        %v1838 = vshll.u32 %v1693, 16
        %v1840 = vrot.slane %v1838, 1
        %v1841 = vor.u32 %v1836, %v1840
        %v1843 = vshll.u32 %v1692, 16
        %v1845 = vrot.slane %v1843, 1
        %v1846 = vsel %vm524, %v1841, %v1845
        %v1848 = vshrl.u32 %v1536, 16
        %v1850 = vshll.u32 %v1536, 16
        %v1852 = vrot.slane %v1850, 1
        %v1853 = vor.u32 %v1848, %v1852
        %v1855 = vshll.u32 %v1537, 16
        %v1857 = vrot.slane %v1855, 1
        %v1858 = vsel %vm524, %v1853, %v1857
        %v1860 = vshrl.u32 %v1696, 16
        %v1862 = vshll.u32 %v1696, 16
        %v1864 = vrot.slane %v1862, 1
        %v1865 = vor.u32 %v1860, %v1864
        %v1867 = vshll.u32 %v1695, 16
        %v1869 = vrot.slane %v1867, 1
        %v1870 = vsel %vm524, %v1865, %v1869
        %v1872 = vshrl.u32 %v1550, 16
        %v1874 = vshll.u32 %v1550, 16
        %v1876 = vrot.slane %v1874, 1
        %v1877 = vor.u32 %v1872, %v1876
        %v1879 = vshll.u32 %v1551, 16
        %v1881 = vrot.slane %v1879, 1
        %v1882 = vsel %vm524, %v1877, %v1881
        %v1884 = vshrl.u32 %v1699, 16
        %v1886 = vshll.u32 %v1699, 16
        %v1888 = vrot.slane %v1886, 1
        %v1889 = vor.u32 %v1884, %v1888
        %v1891 = vshll.u32 %v1698, 16
        %v1893 = vrot.slane %v1891, 1
        %v1894 = vsel %vm524, %v1889, %v1893
        %v1896 = vshrl.u32 %v1564, 16
        %v1898 = vshll.u32 %v1564, 16
        %v1900 = vrot.slane %v1898, 1
        %v1901 = vor.u32 %v1896, %v1900
        %v1903 = vshll.u32 %v1565, 16
        %v1905 = vrot.slane %v1903, 1
        %v1906 = vsel %vm524, %v1901, %v1905
        %v1908 = vshrl.u32 %v1702, 16
        %v1910 = vshll.u32 %v1702, 16
        %v1912 = vrot.slane %v1910, 1
        %v1913 = vor.u32 %v1908, %v1912
        %v1915 = vshll.u32 %v1701, 16
        %v1917 = vrot.slane %v1915, 1
        %v1918 = vsel %vm524, %v1913, %v1917
        %v1920 = vshrl.u32 %v1578, 16
        %v1922 = vshll.u32 %v1578, 16
        %v1924 = vrot.slane %v1922, 1
        %v1925 = vor.u32 %v1920, %v1924
        %v1927 = vshll.u32 %v1579, 16
        %v1929 = vrot.slane %v1927, 1
        %v1930 = vsel %vm524, %v1925, %v1929
        %v1932 = vshrl.u32 %v1705, 16
        %v1934 = vshll.u32 %v1705, 16
        %v1936 = vrot.slane %v1934, 1
        %v1937 = vor.u32 %v1932, %v1936
        %v1939 = vshll.u32 %v1704, 16
        %v1941 = vrot.slane %v1939, 1
        %v1942 = vsel %vm524, %v1937, %v1941
        %v1944 = vshrl.u32 %v1592, 16
        %v1946 = vshll.u32 %v1592, 16
        %v1948 = vrot.slane %v1946, 1
        %v1949 = vor.u32 %v1944, %v1948
        %v1951 = vshll.u32 %v1593, 16
        %v1953 = vrot.slane %v1951, 1
        %v1954 = vsel %vm524, %v1949, %v1953
        %v1956 = vshrl.u32 %v1708, 16
        %v1958 = vshll.u32 %v1708, 16
        %v1960 = vrot.slane %v1958, 1
        %v1961 = vor.u32 %v1956, %v1960
        %v1963 = vshll.u32 %v1707, 16
        %v1965 = vrot.slane %v1963, 1
        %v1966 = vsel %vm524, %v1961, %v1965
        %v1968 = vshrl.u32 %v1606, 16
        %v1970 = vshll.u32 %v1606, 16
        %v1972 = vrot.slane %v1970, 1
        %v1973 = vor.u32 %v1968, %v1972
        %v1975 = vshll.u32 %v1607, 16
        %v1977 = vrot.slane %v1975, 1
        %v1978 = vsel %vm524, %v1973, %v1977
        %v1980 = vshrl.u32 %v1711, 16
        %v1982 = vshll.u32 %v1711, 16
        %v1984 = vrot.slane %v1982, 1
        %v1985 = vor.u32 %v1980, %v1984
        %v1987 = vshll.u32 %v1710, 16
        %v1989 = vrot.slane %v1987, 1
        %v1990 = vsel %vm524, %v1985, %v1989
        %v1992 = vshrl.u32 %v1620, 16
        %v1994 = vshll.u32 %v1620, 16
        %v1996 = vrot.slane %v1994, 1
        %v1997 = vor.u32 %v1992, %v1996
        %v1999 = vshll.u32 %v1621, 16
        %v2001 = vrot.slane %v1999, 1
        %v2002 = vsel %vm524, %v1997, %v2001
        %v2004 = vshrl.u32 %v1714, 16
        %v2006 = vshll.u32 %v1714, 16
        %v2008 = vrot.slane %v2006, 1
        %v2009 = vor.u32 %v2004, %v2008
        %v2011 = vshll.u32 %v1713, 16
        %v2013 = vrot.slane %v2011, 1
        %v2014 = vsel %vm524, %v2009, %v2013
        %v2016 = vshrl.u32 %v1634, 16
        %v2018 = vshll.u32 %v1634, 16
        %v2020 = vrot.slane %v2018, 1
        %v2021 = vor.u32 %v2016, %v2020
        %v2023 = vshll.u32 %v1635, 16
        %v2025 = vrot.slane %v2023, 1
        %v2026 = vsel %vm524, %v2021, %v2025
        %v2028 = vshrl.u32 %v1717, 16
        %v2030 = vshll.u32 %v1717, 16
        %v2032 = vrot.slane %v2030, 1
        %v2033 = vor.u32 %v2028, %v2032
        %v2035 = vshll.u32 %v1716, 16
        %v2037 = vrot.slane %v2035, 1
        %v2038 = vsel %vm524, %v2033, %v2037
        %v2040 = vshrl.u32 %v1648, 16
        %v2042 = vshll.u32 %v1648, 16
        %v2044 = vrot.slane %v2042, 1
        %v2045 = vor.u32 %v2040, %v2044
        %v2047 = vshll.u32 %v1649, 16
        %v2049 = vrot.slane %v2047, 1
        %v2050 = vsel %vm524, %v2045, %v2049
        %v2052 = vshrl.u32 %v1720, 16
        %v2054 = vshll.u32 %v1720, 16
        %v2056 = vrot.slane %v2054, 1
        %v2057 = vor.u32 %v2052, %v2056
        %v2059 = vshll.u32 %v1719, 16
        %v2061 = vrot.slane %v2059, 1
        %v2062 = vsel %vm524, %v2057, %v2061
        %v2064 = vshrl.u32 %v1662, 16
        %v2066 = vshll.u32 %v1662, 16
        %v2068 = vrot.slane %v2066, 1
        %v2069 = vor.u32 %v2064, %v2068
        %v2071 = vshll.u32 %v1663, 16
        %v2073 = vrot.slane %v2071, 1
        %v2074 = vsel %vm524, %v2069, %v2073
        %v2076 = vshrl.u32 %v1723, 16
        %v2078 = vshll.u32 %v1723, 16
        %v2080 = vrot.slane %v2078, 1
        %v2081 = vor.u32 %v2076, %v2080
        %v2083 = vshll.u32 %v1722, 16
        %v2085 = vrot.slane %v2083, 1
        %v2086 = vsel %vm524, %v2081, %v2085
        %v2088 = vshrl.u32 %v1676, 16
        %v2090 = vshll.u32 %v1676, 16
        %v2092 = vrot.slane %v2090, 1
        %v2093 = vor.u32 %v2088, %v2092
        %v2095 = vshll.u32 %v1677, 16
        %v2097 = vrot.slane %v2095, 1
        %v2098 = vsel %vm524, %v2093, %v2097
        %v2100 = vshrl.u32 %v1726, 16
        %v2102 = vshll.u32 %v1726, 16
        %v2104 = vrot.slane %v2102, 1
        %v2105 = vor.u32 %v2100, %v2104
        %v2107 = vshll.u32 %v1725, 16
        %v2109 = vrot.slane %v2107, 1
        %v2110 = vsel %vm524, %v2105, %v2109
        %s2159 = scalar_lea.vmem [#allocation3], 192
        %v2160 = vld [vmem:[%s2159] sm:$0xf]
        %v2161 = vld [vmem:[%s2159 + $0x4] sm:$0xf]
        %v2162 = vld [vmem:[%s2159 + $0x8] sm:$0xf]
        %v2163 = vld [vmem:[%s2159 + $0xc] sm:$0xf]
        %v2164 = vld [vmem:[%s2159 + $0x10] sm:$0xf]
        %v2165 = vld [vmem:[%s2159 + $0x14] sm:$0xf]
        %v2166 = vld [vmem:[%s2159 + $0x18] sm:$0xf]
        %v2167 = vld [vmem:[%s2159 + $0x1c] sm:$0xf]
        %v2168 = vld [vmem:[%s2159 + $0x20] sm:$0xf]
        %v2169 = vld [vmem:[%s2159 + $0x24] sm:$0xf]
        %v2170 = vld [vmem:[%s2159 + $0x28] sm:$0xf]
        %v2171 = vld [vmem:[%s2159 + $0x2c] sm:$0xf]
        %v2172 = vld [vmem:[%s2159 + $0x30] sm:$0xf]
        %v2173 = vld [vmem:[%s2159 + $0x34] sm:$0xf]
        %v2174 = vld [vmem:[%s2159 + $0x38] sm:$0xf]
        %v2175 = vld [vmem:[%s2159 + $0x3c] sm:$0xf]
        %v2176 = vld [vmem:[%s2159 + $0x40] sm:$0xf]
        %v2177 = vld [vmem:[%s2159 + $0x44] sm:$0xf]
        %v2178 = vld [vmem:[%s2159 + $0x48] sm:$0xf]
        %v2179 = vld [vmem:[%s2159 + $0x4c] sm:$0xf]
        %v2180 = vld [vmem:[%s2159 + $0x50] sm:$0xf]
        %v2181 = vld [vmem:[%s2159 + $0x54] sm:$0xf]
        %v2182 = vld [vmem:[%s2159 + $0x58] sm:$0xf]
        %v2183 = vld [vmem:[%s2159 + $0x5c] sm:$0xf]
        %v2184 = vld [vmem:[%s2159 + $0x60] sm:$0xf]
        %v2185 = vld [vmem:[%s2159 + $0x64] sm:$0xf]
        %v2186 = vld [vmem:[%s2159 + $0x68] sm:$0xf]
        %v2187 = vld [vmem:[%s2159 + $0x6c] sm:$0xf]
        %v2188 = vld [vmem:[%s2159 + $0x70] sm:$0xf]
        %v2189 = vld [vmem:[%s2159 + $0x74] sm:$0xf]
        %v2190 = vld [vmem:[%s2159 + $0x78] sm:$0xf]
        %v2191 = vld [vmem:[%s2159 + $0x7c] sm:$0xf]
        %v2192 = vld [vmem:[%s2159 + $0x80] sm:$0xf]
        %v2193 = vld [vmem:[%s2159 + $0x84] sm:$0xf]
        %v2194 = vld [vmem:[%s2159 + $0x88] sm:$0xf]
        %v2195 = vld [vmem:[%s2159 + $0x8c] sm:$0xf]
        %v2196 = vld [vmem:[%s2159 + $0x90] sm:$0xf]
        %v2197 = vld [vmem:[%s2159 + $0x94] sm:$0xf]
        %v2198 = vld [vmem:[%s2159 + $0x98] sm:$0xf]
        %v2199 = vld [vmem:[%s2159 + $0x9c] sm:$0xf]
        %v2200 = vld [vmem:[%s2159 + $0xa0] sm:$0xf]
        %v2201 = vld [vmem:[%s2159 + $0xa4] sm:$0xf]
        %v2202 = vld [vmem:[%s2159 + $0xa8] sm:$0xf]
        %v2203 = vld [vmem:[%s2159 + $0xac] sm:$0xf]
        %v2204 = vld [vmem:[%s2159 + $0xb0] sm:$0xf]
        %v2205 = vld [vmem:[%s2159 + $0xb4] sm:$0xf]
        %v2206 = vld [vmem:[%s2159 + $0xb8] sm:$0xf]
        %v2207 = vld [vmem:[%s2159 + $0xbc] sm:$0xf]
        %v2256 = vunpack.c.l.b16 %v2160
        %v2257 = vunpack.c.l.b16 %v2161
        %v2258 = vunpack.c.l.b16 %v2162
        %v2259 = vunpack.c.l.b16 %v2163
        %v2260 = vunpack.c.l.b16 %v2164
        %v2261 = vunpack.c.l.b16 %v2165
        %v2262 = vunpack.c.l.b16 %v2166
        %v2263 = vunpack.c.l.b16 %v2167
        %v2264 = vunpack.c.l.b16 %v2168
        %v2265 = vunpack.c.l.b16 %v2169
        %v2266 = vunpack.c.l.b16 %v2170
        %v2267 = vunpack.c.l.b16 %v2171
        %v2268 = vunpack.c.l.b16 %v2172
        %v2269 = vunpack.c.l.b16 %v2173
        %v2270 = vunpack.c.l.b16 %v2174
        %v2271 = vunpack.c.l.b16 %v2175
        %v2272 = vunpack.c.l.b16 %v2176
        %v2273 = vunpack.c.l.b16 %v2177
        %v2274 = vunpack.c.l.b16 %v2178
        %v2275 = vunpack.c.l.b16 %v2179
        %v2276 = vunpack.c.l.b16 %v2180
        %v2277 = vunpack.c.l.b16 %v2181
        %v2278 = vunpack.c.l.b16 %v2182
        %v2279 = vunpack.c.l.b16 %v2183
        %v2280 = vunpack.c.l.b16 %v2184
        %v2281 = vunpack.c.l.b16 %v2185
        %v2282 = vunpack.c.l.b16 %v2186
        %v2283 = vunpack.c.l.b16 %v2187
        %v2284 = vunpack.c.l.b16 %v2188
        %v2285 = vunpack.c.l.b16 %v2189
        %v2286 = vunpack.c.l.b16 %v2190
        %v2287 = vunpack.c.l.b16 %v2191
        %v2288 = vunpack.c.l.b16 %v2192
        %v2289 = vunpack.c.l.b16 %v2193
        %v2290 = vunpack.c.l.b16 %v2194
        %v2291 = vunpack.c.l.b16 %v2195
        %v2292 = vunpack.c.l.b16 %v2196
        %v2293 = vunpack.c.l.b16 %v2197
        %v2294 = vunpack.c.l.b16 %v2198
        %v2295 = vunpack.c.l.b16 %v2199
        %v2296 = vunpack.c.l.b16 %v2200
        %v2297 = vunpack.c.l.b16 %v2201
        %v2298 = vunpack.c.l.b16 %v2202
        %v2299 = vunpack.c.l.b16 %v2203
        %v2300 = vunpack.c.l.b16 %v2204
        %v2301 = vunpack.c.l.b16 %v2205
        %v2302 = vunpack.c.l.b16 %v2206
        %v2303 = vunpack.c.l.b16 %v2207
        %v2304 = vpack.c.b16 %v2257, %v2256
        %v2305 = vpack.c.b16 %v2259, %v2258
        %v2306 = vpack.c.b16 %v2261, %v2260
        %v2307 = vpack.c.b16 %v2263, %v2262
        %v2308 = vpack.c.b16 %v2265, %v2264
        %v2309 = vpack.c.b16 %v2267, %v2266
        %v2310 = vpack.c.b16 %v2269, %v2268
        %v2311 = vpack.c.b16 %v2271, %v2270
        %v2312 = vpack.c.b16 %v2273, %v2272
        %v2313 = vpack.c.b16 %v2275, %v2274
        %v2314 = vpack.c.b16 %v2277, %v2276
        %v2315 = vpack.c.b16 %v2279, %v2278
        %v2316 = vpack.c.b16 %v2281, %v2280
        %v2317 = vpack.c.b16 %v2283, %v2282
        %v2318 = vpack.c.b16 %v2285, %v2284
        %v2319 = vpack.c.b16 %v2287, %v2286
        %v2320 = vpack.c.b16 %v2289, %v2288
        %v2321 = vpack.c.b16 %v2291, %v2290
        %v2322 = vpack.c.b16 %v2293, %v2292
        %v2323 = vpack.c.b16 %v2295, %v2294
        %v2324 = vpack.c.b16 %v2297, %v2296
        %v2325 = vpack.c.b16 %v2299, %v2298
        %v2326 = vpack.c.b16 %v2301, %v2300
        %v2327 = vpack.c.b16 %v2303, %v2302
        %2352 = vmatprep.subr.bf16.mxu0 0
        %2353 = vmatpush1.bf16.msra.mxu0 %v2304
        %2354 = vmatprep.subr.bf16.mxu0 0
        %2355 = vmatpush1.bf16.msra.mxu0 %v2305
        %2356 = vmatprep.subr.bf16.mxu0 0
        %2357 = vmatpush1.bf16.msra.mxu0 %v2306
        %2358 = vmatprep.subr.bf16.mxu0 0
        %2359 = vmatpush1.bf16.msra.mxu0 %v2307
        %2360 = vmatprep.subr.bf16.mxu0 0
        %2361 = vmatpush1.bf16.msra.mxu0 %v2308
        %2362 = vmatprep.subr.bf16.mxu0 0
        %2363 = vmatpush1.bf16.msra.mxu0 %v2309
        %2364 = vmatprep.subr.bf16.mxu0 0
        %2365 = vmatpush1.bf16.msra.mxu0 %v2310
        %2366 = vmatprep.subr.bf16.mxu0 0
        %2367 = vmatpush1.bf16.msra.mxu0 %v2311
        %2368 = vmatprep.subr.bf16.mxu0 0
        %2369 = vmatpush1.bf16.msra.mxu0 %v2312
        %2370 = vmatprep.subr.bf16.mxu0 0
        %2371 = vmatpush1.bf16.msra.mxu0 %v2313
        %2372 = vmatprep.subr.bf16.mxu0 0
        %2373 = vmatpush1.bf16.msra.mxu0 %v2314
        %2374 = vmatprep.subr.bf16.mxu0 0
        %2375 = vmatpush1.bf16.msra.mxu0 %v2315
        %2376 = vmatprep.subr.bf16.mxu0 0
        %2377 = vmatpush1.bf16.msra.mxu0 %v2316
        %2378 = vmatprep.subr.bf16.mxu0 0
        %2379 = vmatpush1.bf16.msra.mxu0 %v2317
        %2380 = vmatprep.subr.bf16.mxu0 0
        %2381 = vmatpush1.bf16.msra.mxu0 %v2318
        %2382 = vmatprep.subr.bf16.mxu0 0
        %2383 = vmatpush1.bf16.msra.mxu0 %v2319
        %2384 = vmatprep.mubr.bf16.mxu0 %v1738
        %2385 = vmatmul.mubr.bf16.gmra.mrb[0].mxu0 %v1466
        %v2386 = vpop.f32.mrb[0].mxu0
        %v2387 = vadd.f32 0.0, %v2386
        %v2388 = vpop.f32.mrb[0].mxu0
        %v2389 = vpop.f32.mrb[0].mxu0
        %v2390 = vadd.f32 0.0, %v2389
        %v2391 = vpop.f32.mrb[0].mxu0
        %2392 = vmatprep.mubr.bf16.mxu0 %v1762
        %2393 = vmatmul.mubr.bf16.gmra.mrb[0].mxu0 %v1480
        %v2394 = vpop.f32.mrb[0].mxu0
        %v2395 = vadd.f32 0.0, %v2394
        %v2396 = vpop.f32.mrb[0].mxu0
        %v2397 = vpop.f32.mrb[0].mxu0
        %v2398 = vadd.f32 0.0, %v2397
        %v2399 = vpop.f32.mrb[0].mxu0
        %2400 = vmatprep.mubr.bf16.mxu0 %v1786
        %2401 = vmatmul.mubr.bf16.gmra.mrb[0].mxu0 %v1494
        %v2402 = vpop.f32.mrb[0].mxu0
        %v2403 = vadd.f32 0.0, %v2402
        %v2404 = vpop.f32.mrb[0].mxu0
        %v2405 = vpop.f32.mrb[0].mxu0
        %v2406 = vadd.f32 0.0, %v2405
        %v2407 = vpop.f32.mrb[0].mxu0
        %2408 = vmatprep.mubr.bf16.mxu0 %v1810
        %2409 = vmatmul.mubr.bf16.gmra.mrb[0].mxu0 %v1508
        %v2410 = vpop.f32.mrb[0].mxu0
        %v2411 = vadd.f32 0.0, %v2410
        %v2412 = vpop.f32.mrb[0].mxu0
        %v2413 = vpop.f32.mrb[0].mxu0
        %v2414 = vadd.f32 0.0, %v2413
        %v2415 = vpop.f32.mrb[0].mxu0
        %2416 = vmatprep.mubr.bf16.mxu0 %v1834
        %2417 = vmatmul.mubr.bf16.gmra.mrb[0].mxu0 %v1522
        %v2418 = vpop.f32.mrb[0].mxu0
        %v2419 = vadd.f32 0.0, %v2418
        %v2420 = vpop.f32.mrb[0].mxu0
        %v2421 = vpop.f32.mrb[0].mxu0
        %v2422 = vadd.f32 0.0, %v2421
        %v2423 = vpop.f32.mrb[0].mxu0
        %2424 = vmatprep.mubr.bf16.mxu0 %v1858
        %2425 = vmatmul.mubr.bf16.gmra.mrb[0].mxu0 %v1536
        %v2426 = vpop.f32.mrb[0].mxu0
        %v2427 = vadd.f32 0.0, %v2426
        %v2428 = vpop.f32.mrb[0].mxu0
        %v2429 = vpop.f32.mrb[0].mxu0
        %v2430 = vadd.f32 0.0, %v2429
        %v2431 = vpop.f32.mrb[0].mxu0
        %2432 = vmatprep.mubr.bf16.mxu0 %v1882
        %2433 = vmatmul.mubr.bf16.gmra.mrb[0].mxu0 %v1550
        %v2434 = vpop.f32.mrb[0].mxu0
        %v2435 = vadd.f32 0.0, %v2434
        %v2436 = vpop.f32.mrb[0].mxu0
        %v2437 = vpop.f32.mrb[0].mxu0
        %v2438 = vadd.f32 0.0, %v2437
        %v2439 = vpop.f32.mrb[0].mxu0
        %2440 = vmatprep.mubr.bf16.mxu0 %v1906
        %2441 = vmatmul.mubr.bf16.gmra.mrb[0].mxu0 %v1564
        %v2442 = vpop.f32.mrb[0].mxu0
        %v2443 = vadd.f32 0.0, %v2442
        %v2444 = vpop.f32.mrb[0].mxu0
        %v2445 = vpop.f32.mrb[0].mxu0
        %v2446 = vadd.f32 0.0, %v2445
        %v2447 = vpop.f32.mrb[0].mxu0
        %2448 = vmatprep.mubr.bf16.mxu0 %v1930
        %2449 = vmatmul.mubr.bf16.gmra.mrb[0].mxu0 %v1578
        %v2450 = vpop.f32.mrb[0].mxu0
        %v2451 = vadd.f32 0.0, %v2450
        %v2452 = vpop.f32.mrb[0].mxu0
        %v2453 = vpop.f32.mrb[0].mxu0
        %v2454 = vadd.f32 0.0, %v2453
        %v2455 = vpop.f32.mrb[0].mxu0
        %2456 = vmatprep.mubr.bf16.mxu0 %v1954
        %2457 = vmatmul.mubr.bf16.gmra.mrb[0].mxu0 %v1592
        %v2458 = vpop.f32.mrb[0].mxu0
        %v2459 = vadd.f32 0.0, %v2458
        %v2460 = vpop.f32.mrb[0].mxu0
        %v2461 = vpop.f32.mrb[0].mxu0
        %v2462 = vadd.f32 0.0, %v2461
        %v2463 = vpop.f32.mrb[0].mxu0
        %2464 = vmatprep.mubr.bf16.mxu0 %v1978
        %2465 = vmatmul.mubr.bf16.gmra.mrb[0].mxu0 %v1606
        %v2466 = vpop.f32.mrb[0].mxu0
        %v2467 = vadd.f32 0.0, %v2466
        %v2468 = vpop.f32.mrb[0].mxu0
        %v2469 = vpop.f32.mrb[0].mxu0
        %v2470 = vadd.f32 0.0, %v2469
        %v2471 = vpop.f32.mrb[0].mxu0
        %2472 = vmatprep.mubr.bf16.mxu0 %v2002
        %2473 = vmatmul.mubr.bf16.gmra.mrb[0].mxu0 %v1620
        %v2474 = vpop.f32.mrb[0].mxu0
        %v2475 = vadd.f32 0.0, %v2474
        %v2476 = vpop.f32.mrb[0].mxu0
        %v2477 = vpop.f32.mrb[0].mxu0
        %v2478 = vadd.f32 0.0, %v2477
        %v2479 = vpop.f32.mrb[0].mxu0
        %2480 = vmatprep.mubr.bf16.mxu0 %v2026
        %2481 = vmatmul.mubr.bf16.gmra.mrb[0].mxu0 %v1634
        %v2482 = vpop.f32.mrb[0].mxu0
        %v2483 = vadd.f32 0.0, %v2482
        %v2484 = vpop.f32.mrb[0].mxu0
        %v2485 = vpop.f32.mrb[0].mxu0
        %v2486 = vadd.f32 0.0, %v2485
        %v2487 = vpop.f32.mrb[0].mxu0
        %2488 = vmatprep.mubr.bf16.mxu0 %v2050
        %2489 = vmatmul.mubr.bf16.gmra.mrb[0].mxu0 %v1648
        %v2490 = vpop.f32.mrb[0].mxu0
        %v2491 = vadd.f32 0.0, %v2490
        %v2492 = vpop.f32.mrb[0].mxu0
        %v2493 = vpop.f32.mrb[0].mxu0
        %v2494 = vadd.f32 0.0, %v2493
        %v2495 = vpop.f32.mrb[0].mxu0
        %2496 = vmatprep.mubr.bf16.mxu0 %v2074
        %2497 = vmatmul.mubr.bf16.gmra.mrb[0].mxu0 %v1662
        %v2498 = vpop.f32.mrb[0].mxu0
        %v2499 = vadd.f32 0.0, %v2498
        %v2500 = vpop.f32.mrb[0].mxu0
        %v2501 = vpop.f32.mrb[0].mxu0
        %v2502 = vadd.f32 0.0, %v2501
        %v2503 = vpop.f32.mrb[0].mxu0
        %2504 = vmatprep.mubr.bf16.mxu0 %v2098
        %2505 = vmatmul.mubr.bf16.gmra.mrb[0].mxu0 %v1676
        %v2506 = vpop.f32.mrb[0].mxu0
        %v2507 = vadd.f32 0.0, %v2506
        %v2508 = vpop.f32.mrb[0].mxu0
        %v2509 = vpop.f32.mrb[0].mxu0
        %v2510 = vadd.f32 0.0, %v2509
        %v2511 = vpop.f32.mrb[0].mxu0
        %2512 = vdwg.mxu0
        %2513 = vmatprep.subr.bf16.mxu0 0
        %2514 = vmatpush1.bf16.msra.mxu0 %v2320
        %2515 = vmatprep.subr.bf16.mxu0 0
        %2516 = vmatpush1.bf16.msra.mxu0 %v2321
        %2517 = vmatprep.subr.bf16.mxu0 0
        %2518 = vmatpush1.bf16.msra.mxu0 %v2322
        %2519 = vmatprep.subr.bf16.mxu0 0
        %2520 = vmatpush1.bf16.msra.mxu0 %v2323
        %2521 = vmatprep.subr.bf16.mxu0 0
        %2522 = vmatpush1.bf16.msra.mxu0 %v2324
        %2523 = vmatprep.subr.bf16.mxu0 0
        %2524 = vmatpush1.bf16.msra.mxu0 %v2325
        %2525 = vmatprep.subr.bf16.mxu0 0
        %2526 = vmatpush1.bf16.msra.mxu0 %v2326
        %2527 = vmatprep.subr.bf16.mxu0 0
        %2528 = vmatpush1.bf16.msra.mxu0 %v2327
        %2529 = vmatprep.subr.bf16.mxu0 0
        %2530 = vmatpush1.bf16.msra.mxu0 0
        %2531 = vmatprep.subr.bf16.mxu0 0
        %2532 = vmatpush1.bf16.msra.mxu0 0
        %2533 = vmatprep.subr.bf16.mxu0 0
        %2534 = vmatpush1.bf16.msra.mxu0 0
        %2535 = vmatprep.subr.bf16.mxu0 0
        %2536 = vmatpush1.bf16.msra.mxu0 0
        %2537 = vmatprep.subr.bf16.mxu0 0
        %2538 = vmatpush1.bf16.msra.mxu0 0
        %2539 = vmatprep.subr.bf16.mxu0 0
        %2540 = vmatpush1.bf16.msra.mxu0 0
        %2541 = vmatprep.subr.bf16.mxu0 0
        %2542 = vmatpush1.bf16.msra.mxu0 0
        %2543 = vmatprep.subr.bf16.mxu0 0
        %2544 = vmatpush1.bf16.msra.mxu0 0
        %2545 = vmatprep.mubr.bf16.mxu0 0
        %2546 = vmatmul.mubr.bf16.gmra.mrb[0].mxu0 %v1750
        %v2547 = vpop.f32.mrb[0].mxu0
        %v2548 = vadd.f32 %v2387, %v2547
        %v2549 = vpop.f32.mrb[0].mxu0
        %v2550 = vpop.f32.mrb[0].mxu0
        %v2551 = vadd.f32 %v2390, %v2550
        %v2552 = vpop.f32.mrb[0].mxu0
        %2553 = vmatprep.mubr.bf16.mxu0 0
        %2554 = vmatmul.mubr.bf16.gmra.mrb[0].mxu0 %v1774
        %v2555 = vpop.f32.mrb[0].mxu0
        %v2556 = vadd.f32 %v2395, %v2555
        %v2557 = vpop.f32.mrb[0].mxu0
        %v2558 = vpop.f32.mrb[0].mxu0
        %v2559 = vadd.f32 %v2398, %v2558
        %v2560 = vpop.f32.mrb[0].mxu0
        %2561 = vmatprep.mubr.bf16.mxu0 0
        %2562 = vmatmul.mubr.bf16.gmra.mrb[0].mxu0 %v1798
        %v2563 = vpop.f32.mrb[0].mxu0
        %v2564 = vadd.f32 %v2403, %v2563
        %v2565 = vpop.f32.mrb[0].mxu0
        %v2566 = vpop.f32.mrb[0].mxu0
        %v2567 = vadd.f32 %v2406, %v2566
        %v2568 = vpop.f32.mrb[0].mxu0
        %2569 = vmatprep.mubr.bf16.mxu0 0
        %2570 = vmatmul.mubr.bf16.gmra.mrb[0].mxu0 %v1822
        %v2571 = vpop.f32.mrb[0].mxu0
        %v2572 = vadd.f32 %v2411, %v2571
        %v2573 = vpop.f32.mrb[0].mxu0
        %v2574 = vpop.f32.mrb[0].mxu0
        %v2575 = vadd.f32 %v2414, %v2574
        %v2576 = vpop.f32.mrb[0].mxu0
        %2577 = vmatprep.mubr.bf16.mxu0 0
        %2578 = vmatmul.mubr.bf16.gmra.mrb[0].mxu0 %v1846
        %v2579 = vpop.f32.mrb[0].mxu0
        %v2580 = vadd.f32 %v2419, %v2579
        %v2581 = vpop.f32.mrb[0].mxu0
        %v2582 = vpop.f32.mrb[0].mxu0
        %v2583 = vadd.f32 %v2422, %v2582
        %v2584 = vpop.f32.mrb[0].mxu0
        %2585 = vmatprep.mubr.bf16.mxu0 0
        %2586 = vmatmul.mubr.bf16.gmra.mrb[0].mxu0 %v1870
        %v2587 = vpop.f32.mrb[0].mxu0
        %v2588 = vadd.f32 %v2427, %v2587
        %v2589 = vpop.f32.mrb[0].mxu0
        %v2590 = vpop.f32.mrb[0].mxu0
        %v2591 = vadd.f32 %v2430, %v2590
        %v2592 = vpop.f32.mrb[0].mxu0
        %2593 = vmatprep.mubr.bf16.mxu0 0
        %2594 = vmatmul.mubr.bf16.gmra.mrb[0].mxu0 %v1894
        %v2595 = vpop.f32.mrb[0].mxu0
        %v2596 = vadd.f32 %v2435, %v2595
        %v2597 = vpop.f32.mrb[0].mxu0
        %v2598 = vpop.f32.mrb[0].mxu0
        %v2599 = vadd.f32 %v2438, %v2598
        %v2600 = vpop.f32.mrb[0].mxu0
        %2601 = vmatprep.mubr.bf16.mxu0 0
        %2602 = vmatmul.mubr.bf16.gmra.mrb[0].mxu0 %v1918
        %v2603 = vpop.f32.mrb[0].mxu0
        %v2604 = vadd.f32 %v2443, %v2603
        %v2605 = vpop.f32.mrb[0].mxu0
        %v2606 = vpop.f32.mrb[0].mxu0
        %v2607 = vadd.f32 %v2446, %v2606
        %v2608 = vpop.f32.mrb[0].mxu0
        %2609 = vmatprep.mubr.bf16.mxu0 0
        %2610 = vmatmul.mubr.bf16.gmra.mrb[0].mxu0 %v1942
        %v2611 = vpop.f32.mrb[0].mxu0
        %v2612 = vadd.f32 %v2451, %v2611
        %v2613 = vpop.f32.mrb[0].mxu0
        %v2614 = vpop.f32.mrb[0].mxu0
        %v2615 = vadd.f32 %v2454, %v2614
        %v2616 = vpop.f32.mrb[0].mxu0
        %2617 = vmatprep.mubr.bf16.mxu0 0
        %2618 = vmatmul.mubr.bf16.gmra.mrb[0].mxu0 %v1966
        %v2619 = vpop.f32.mrb[0].mxu0
        %v2620 = vadd.f32 %v2459, %v2619
        %v2621 = vpop.f32.mrb[0].mxu0
        %v2622 = vpop.f32.mrb[0].mxu0
        %v2623 = vadd.f32 %v2462, %v2622
        %v2624 = vpop.f32.mrb[0].mxu0
        %2625 = vmatprep.mubr.bf16.mxu0 0
        %2626 = vmatmul.mubr.bf16.gmra.mrb[0].mxu0 %v1990
        %v2627 = vpop.f32.mrb[0].mxu0
        %v2628 = vadd.f32 %v2467, %v2627
        %v2629 = vpop.f32.mrb[0].mxu0
        %v2630 = vpop.f32.mrb[0].mxu0
        %v2631 = vadd.f32 %v2470, %v2630
        %v2632 = vpop.f32.mrb[0].mxu0
        %2633 = vmatprep.mubr.bf16.mxu0 0
        %2634 = vmatmul.mubr.bf16.gmra.mrb[0].mxu0 %v2014
        %v2635 = vpop.f32.mrb[0].mxu0
        %v2636 = vadd.f32 %v2475, %v2635
        %v2637 = vpop.f32.mrb[0].mxu0
        %v2638 = vpop.f32.mrb[0].mxu0
        %v2639 = vadd.f32 %v2478, %v2638
        %v2640 = vpop.f32.mrb[0].mxu0
        %2641 = vmatprep.mubr.bf16.mxu0 0
        %2642 = vmatmul.mubr.bf16.gmra.mrb[0].mxu0 %v2038
        %v2643 = vpop.f32.mrb[0].mxu0
        %v2644 = vadd.f32 %v2483, %v2643
        %v2645 = vpop.f32.mrb[0].mxu0
        %v2646 = vpop.f32.mrb[0].mxu0
        %v2647 = vadd.f32 %v2486, %v2646
        %v2648 = vpop.f32.mrb[0].mxu0
        %2649 = vmatprep.mubr.bf16.mxu0 0
        %2650 = vmatmul.mubr.bf16.gmra.mrb[0].mxu0 %v2062
        %v2651 = vpop.f32.mrb[0].mxu0
        %v2652 = vadd.f32 %v2491, %v2651
        %v2653 = vpop.f32.mrb[0].mxu0
        %v2654 = vpop.f32.mrb[0].mxu0
        %v2655 = vadd.f32 %v2494, %v2654
        %v2656 = vpop.f32.mrb[0].mxu0
        %2657 = vmatprep.mubr.bf16.mxu0 0
        %2658 = vmatmul.mubr.bf16.gmra.mrb[0].mxu0 %v2086
        %v2659 = vpop.f32.mrb[0].mxu0
        %v2660 = vadd.f32 %v2499, %v2659
        %v2661 = vpop.f32.mrb[0].mxu0
        %v2662 = vpop.f32.mrb[0].mxu0
        %v2663 = vadd.f32 %v2502, %v2662
        %v2664 = vpop.f32.mrb[0].mxu0
        %2665 = vmatprep.mubr.bf16.mxu0 0
        %2666 = vmatmul.mubr.bf16.gmra.mrb[0].mxu0 %v2110
        %v2667 = vpop.f32.mrb[0].mxu0
        %v2668 = vadd.f32 %v2507, %v2667
        %v2669 = vpop.f32.mrb[0].mxu0
        %v2670 = vpop.f32.mrb[0].mxu0
        %v2671 = vadd.f32 %v2510, %v2670
        %v2672 = vpop.f32.mrb[0].mxu0
        %2673 = vdwg.mxu0
        %v2722 = vunpack.c.l.b16 %v1230
        %v2723 = vunpack.c.l.b16 %v1231
        %v2724 = vunpack.c.l.b16 %v1232
        %v2725 = vunpack.c.l.b16 %v1233
        %v2726 = vunpack.c.l.b16 %v1234
        %v2727 = vunpack.c.l.b16 %v1235
        %v2728 = vunpack.c.l.b16 %v1236
        %v2729 = vunpack.c.l.b16 %v1237
        %v2730 = vunpack.c.l.b16 %v1238
        %v2731 = vunpack.c.l.b16 %v1239
        %v2732 = vunpack.c.l.b16 %v1240
        %v2733 = vunpack.c.l.b16 %v1241
        %v2734 = vunpack.c.l.b16 %v1242
        %v2735 = vunpack.c.l.b16 %v1243
        %v2736 = vunpack.c.l.b16 %v1244
        %v2737 = vunpack.c.l.b16 %v1245
        %v2738 = vunpack.c.l.b16 %v1246
        %v2739 = vunpack.c.l.b16 %v1247
        %v2740 = vunpack.c.l.b16 %v1248
        %v2741 = vunpack.c.l.b16 %v1249
        %v2742 = vunpack.c.l.b16 %v1250
        %v2743 = vunpack.c.l.b16 %v1251
        %v2744 = vunpack.c.l.b16 %v1252
        %v2745 = vunpack.c.l.b16 %v1253
        %v2746 = vunpack.c.l.b16 %v1254
        %v2747 = vunpack.c.l.b16 %v1255
        %v2748 = vunpack.c.l.b16 %v1256
        %v2749 = vunpack.c.l.b16 %v1257
        %v2750 = vunpack.c.l.b16 %v1258
        %v2751 = vunpack.c.l.b16 %v1259
        %v2752 = vunpack.c.l.b16 %v1260
        %v2753 = vunpack.c.l.b16 %v1261
        %v2754 = vunpack.c.l.b16 %v1262
        %v2755 = vunpack.c.l.b16 %v1263
        %v2756 = vunpack.c.l.b16 %v1264
        %v2757 = vunpack.c.l.b16 %v1265
        %v2758 = vunpack.c.l.b16 %v1266
        %v2759 = vunpack.c.l.b16 %v1267
        %v2760 = vunpack.c.l.b16 %v1268
        %v2761 = vunpack.c.l.b16 %v1269
        %v2762 = vunpack.c.l.b16 %v1270
        %v2763 = vunpack.c.l.b16 %v1271
        %v2764 = vunpack.c.l.b16 %v1272
        %v2765 = vunpack.c.l.b16 %v1273
        %v2766 = vunpack.c.l.b16 %v1274
        %v2767 = vunpack.c.l.b16 %v1275
        %v2768 = vunpack.c.l.b16 %v1276
        %v2769 = vunpack.c.l.b16 %v1277
        %v2770 = vpack.c.b16 %v2723, %v2722
        %v2771 = vpack.c.b16 %v2725, %v2724
        %v2772 = vpack.c.b16 %v2727, %v2726
        %v2773 = vpack.c.b16 %v2729, %v2728
        %v2774 = vpack.c.b16 %v2731, %v2730
        %v2775 = vpack.c.b16 %v2733, %v2732
        %v2776 = vpack.c.b16 %v2735, %v2734
        %v2777 = vpack.c.b16 %v2737, %v2736
        %v2778 = vpack.c.b16 %v2739, %v2738
        %v2779 = vpack.c.b16 %v2741, %v2740
        %v2780 = vpack.c.b16 %v2743, %v2742
        %v2781 = vpack.c.b16 %v2745, %v2744
        %v2782 = vpack.c.b16 %v2747, %v2746
        %v2783 = vpack.c.b16 %v2749, %v2748
        %v2784 = vpack.c.b16 %v2751, %v2750
        %v2785 = vpack.c.b16 %v2753, %v2752
        %v2786 = vpack.c.b16 %v2755, %v2754
        %v2787 = vpack.c.b16 %v2757, %v2756
        %v2788 = vpack.c.b16 %v2759, %v2758
        %v2789 = vpack.c.b16 %v2761, %v2760
        %v2790 = vpack.c.b16 %v2763, %v2762
        %v2791 = vpack.c.b16 %v2765, %v2764
        %v2792 = vpack.c.b16 %v2767, %v2766
        %v2793 = vpack.c.b16 %v2769, %v2768
        %2818 = vmatprep.subr.bf16.mxu0 0
        %2819 = vmatpush1.bf16.msra.mxu0 %v2770
        %2820 = vmatprep.subr.bf16.mxu0 0
        %2821 = vmatpush1.bf16.msra.mxu0 %v2771
        %2822 = vmatprep.subr.bf16.mxu0 0
        %2823 = vmatpush1.bf16.msra.mxu0 %v2772
        %2824 = vmatprep.subr.bf16.mxu0 0
        %2825 = vmatpush1.bf16.msra.mxu0 %v2773
        %2826 = vmatprep.subr.bf16.mxu0 0
        %2827 = vmatpush1.bf16.msra.mxu0 %v2774
        %2828 = vmatprep.subr.bf16.mxu0 0
        %2829 = vmatpush1.bf16.msra.mxu0 %v2775
        %2830 = vmatprep.subr.bf16.mxu0 0
        %2831 = vmatpush1.bf16.msra.mxu0 %v2776
        %2832 = vmatprep.subr.bf16.mxu0 0
        %2833 = vmatpush1.bf16.msra.mxu0 %v2777
        %2834 = vmatprep.subr.bf16.mxu0 0
        %2835 = vmatpush1.bf16.msra.mxu0 %v2778
        %2836 = vmatprep.subr.bf16.mxu0 0
        %2837 = vmatpush1.bf16.msra.mxu0 %v2779
        %2838 = vmatprep.subr.bf16.mxu0 0
        %2839 = vmatpush1.bf16.msra.mxu0 %v2780
        %2840 = vmatprep.subr.bf16.mxu0 0
        %2841 = vmatpush1.bf16.msra.mxu0 %v2781
        %2842 = vmatprep.subr.bf16.mxu0 0
        %2843 = vmatpush1.bf16.msra.mxu0 %v2782
        %2844 = vmatprep.subr.bf16.mxu0 0
        %2845 = vmatpush1.bf16.msra.mxu0 %v2783
        %2846 = vmatprep.subr.bf16.mxu0 0
        %2847 = vmatpush1.bf16.msra.mxu0 %v2784
        %2848 = vmatprep.subr.bf16.mxu0 0
        %2849 = vmatpush1.bf16.msra.mxu0 %v2785
        %2850 = vmatprep.mubr.bf16.mxu0 %v809
        %2851 = vmatmul.mubr.bf16.gmra.mrb[0].mxu0 %v536
        %v2852 = vpop.f32.mrb[0].mxu0
        %v2853 = vadd.f32 %v2548, %v2852
        %v2854 = vpop.f32.mrb[0].mxu0
        %v2855 = vpop.f32.mrb[0].mxu0
        %v2856 = vadd.f32 %v2551, %v2855
        %v2857 = vpop.f32.mrb[0].mxu0
        %2858 = vmatprep.mubr.bf16.mxu0 %v833
        %2859 = vmatmul.mubr.bf16.gmra.mrb[0].mxu0 %v550
        %v2860 = vpop.f32.mrb[0].mxu0
        %v2861 = vadd.f32 %v2556, %v2860
        %v2862 = vpop.f32.mrb[0].mxu0
        %v2863 = vpop.f32.mrb[0].mxu0
        %v2864 = vadd.f32 %v2559, %v2863
        %v2865 = vpop.f32.mrb[0].mxu0
        %2866 = vmatprep.mubr.bf16.mxu0 %v857
        %2867 = vmatmul.mubr.bf16.gmra.mrb[0].mxu0 %v564
        %v2868 = vpop.f32.mrb[0].mxu0
        %v2869 = vadd.f32 %v2564, %v2868
        %v2870 = vpop.f32.mrb[0].mxu0
        %v2871 = vpop.f32.mrb[0].mxu0
        %v2872 = vadd.f32 %v2567, %v2871
        %v2873 = vpop.f32.mrb[0].mxu0
        %2874 = vmatprep.mubr.bf16.mxu0 %v881
        %2875 = vmatmul.mubr.bf16.gmra.mrb[0].mxu0 %v578
        %v2876 = vpop.f32.mrb[0].mxu0
        %v2877 = vadd.f32 %v2572, %v2876
        %v2878 = vpop.f32.mrb[0].mxu0
        %v2879 = vpop.f32.mrb[0].mxu0
        %v2880 = vadd.f32 %v2575, %v2879
        %v2881 = vpop.f32.mrb[0].mxu0
        %2882 = vmatprep.mubr.bf16.mxu0 %v905
        %2883 = vmatmul.mubr.bf16.gmra.mrb[0].mxu0 %v592
        %v2884 = vpop.f32.mrb[0].mxu0
        %v2885 = vadd.f32 %v2580, %v2884
        %v2886 = vpop.f32.mrb[0].mxu0
        %v2887 = vpop.f32.mrb[0].mxu0
        %v2888 = vadd.f32 %v2583, %v2887
        %v2889 = vpop.f32.mrb[0].mxu0
        %2890 = vmatprep.mubr.bf16.mxu0 %v929
        %2891 = vmatmul.mubr.bf16.gmra.mrb[0].mxu0 %v606
        %v2892 = vpop.f32.mrb[0].mxu0
        %v2893 = vadd.f32 %v2588, %v2892
        %v2894 = vpop.f32.mrb[0].mxu0
        %v2895 = vpop.f32.mrb[0].mxu0
        %v2896 = vadd.f32 %v2591, %v2895
        %v2897 = vpop.f32.mrb[0].mxu0
        %2898 = vmatprep.mubr.bf16.mxu0 %v953
        %2899 = vmatmul.mubr.bf16.gmra.mrb[0].mxu0 %v620
        %v2900 = vpop.f32.mrb[0].mxu0
        %v2901 = vadd.f32 %v2596, %v2900
        %v2902 = vpop.f32.mrb[0].mxu0
        %v2903 = vpop.f32.mrb[0].mxu0
        %v2904 = vadd.f32 %v2599, %v2903
        %v2905 = vpop.f32.mrb[0].mxu0
        %2906 = vmatprep.mubr.bf16.mxu0 %v977
        %2907 = vmatmul.mubr.bf16.gmra.mrb[0].mxu0 %v634
        %v2908 = vpop.f32.mrb[0].mxu0
        %v2909 = vadd.f32 %v2604, %v2908
        %v2910 = vpop.f32.mrb[0].mxu0
        %v2911 = vpop.f32.mrb[0].mxu0
        %v2912 = vadd.f32 %v2607, %v2911
        %v2913 = vpop.f32.mrb[0].mxu0
        %2914 = vmatprep.mubr.bf16.mxu0 %v1001
        %2915 = vmatmul.mubr.bf16.gmra.mrb[0].mxu0 %v648
        %v2916 = vpop.f32.mrb[0].mxu0
        %v2917 = vadd.f32 %v2612, %v2916
        %v2918 = vpop.f32.mrb[0].mxu0
        %v2919 = vpop.f32.mrb[0].mxu0
        %v2920 = vadd.f32 %v2615, %v2919
        %v2921 = vpop.f32.mrb[0].mxu0
        %2922 = vmatprep.mubr.bf16.mxu0 %v1025
        %2923 = vmatmul.mubr.bf16.gmra.mrb[0].mxu0 %v662
        %v2924 = vpop.f32.mrb[0].mxu0
        %v2925 = vadd.f32 %v2620, %v2924
        %v2926 = vpop.f32.mrb[0].mxu0
        %v2927 = vpop.f32.mrb[0].mxu0
        %v2928 = vadd.f32 %v2623, %v2927
        %v2929 = vpop.f32.mrb[0].mxu0
        %2930 = vmatprep.mubr.bf16.mxu0 %v1049
        %2931 = vmatmul.mubr.bf16.gmra.mrb[0].mxu0 %v676
        %v2932 = vpop.f32.mrb[0].mxu0
        %v2933 = vadd.f32 %v2628, %v2932
        %v2934 = vpop.f32.mrb[0].mxu0
        %v2935 = vpop.f32.mrb[0].mxu0
        %v2936 = vadd.f32 %v2631, %v2935
        %v2937 = vpop.f32.mrb[0].mxu0
        %2938 = vmatprep.mubr.bf16.mxu0 %v1073
        %2939 = vmatmul.mubr.bf16.gmra.mrb[0].mxu0 %v690
        %v2940 = vpop.f32.mrb[0].mxu0
        %v2941 = vadd.f32 %v2636, %v2940
        %v2942 = vpop.f32.mrb[0].mxu0
        %v2943 = vpop.f32.mrb[0].mxu0
        %v2944 = vadd.f32 %v2639, %v2943
        %v2945 = vpop.f32.mrb[0].mxu0
        %2946 = vmatprep.mubr.bf16.mxu0 %v1097
        %2947 = vmatmul.mubr.bf16.gmra.mrb[0].mxu0 %v704
        %v2948 = vpop.f32.mrb[0].mxu0
        %v2949 = vadd.f32 %v2644, %v2948
        %v2950 = vpop.f32.mrb[0].mxu0
        %v2951 = vpop.f32.mrb[0].mxu0
        %v2952 = vadd.f32 %v2647, %v2951
        %v2953 = vpop.f32.mrb[0].mxu0
        %2954 = vmatprep.mubr.bf16.mxu0 %v1121
        %2955 = vmatmul.mubr.bf16.gmra.mrb[0].mxu0 %v718
        %v2956 = vpop.f32.mrb[0].mxu0
        %v2957 = vadd.f32 %v2652, %v2956
        %v2958 = vpop.f32.mrb[0].mxu0
        %v2959 = vpop.f32.mrb[0].mxu0
        %v2960 = vadd.f32 %v2655, %v2959
        %v2961 = vpop.f32.mrb[0].mxu0
        %2962 = vmatprep.mubr.bf16.mxu0 %v1145
        %2963 = vmatmul.mubr.bf16.gmra.mrb[0].mxu0 %v732
        %v2964 = vpop.f32.mrb[0].mxu0
        %v2965 = vadd.f32 %v2660, %v2964
        %v2966 = vpop.f32.mrb[0].mxu0
        %v2967 = vpop.f32.mrb[0].mxu0
        %v2968 = vadd.f32 %v2663, %v2967
        %v2969 = vpop.f32.mrb[0].mxu0
        %2970 = vmatprep.mubr.bf16.mxu0 %v1169
        %2971 = vmatmul.mubr.bf16.gmra.mrb[0].mxu0 %v746
        %v2972 = vpop.f32.mrb[0].mxu0
        %v2973 = vadd.f32 %v2668, %v2972
        %v2974 = vpop.f32.mrb[0].mxu0
        %v2975 = vpop.f32.mrb[0].mxu0
        %v2976 = vadd.f32 %v2671, %v2975
        %v2977 = vpop.f32.mrb[0].mxu0
        %2978 = vdwg.mxu0
        %2979 = vmatprep.subr.bf16.mxu0 0
        %2980 = vmatpush1.bf16.msra.mxu0 %v2786
        %2981 = vmatprep.subr.bf16.mxu0 0
        %2982 = vmatpush1.bf16.msra.mxu0 %v2787
        %2983 = vmatprep.subr.bf16.mxu0 0
        %2984 = vmatpush1.bf16.msra.mxu0 %v2788
        %2985 = vmatprep.subr.bf16.mxu0 0
        %2986 = vmatpush1.bf16.msra.mxu0 %v2789
        %2987 = vmatprep.subr.bf16.mxu0 0
        %2988 = vmatpush1.bf16.msra.mxu0 %v2790
        %2989 = vmatprep.subr.bf16.mxu0 0
        %2990 = vmatpush1.bf16.msra.mxu0 %v2791
        %2991 = vmatprep.subr.bf16.mxu0 0
        %2992 = vmatpush1.bf16.msra.mxu0 %v2792
        %2993 = vmatprep.subr.bf16.mxu0 0
        %2994 = vmatpush1.bf16.msra.mxu0 %v2793
        %2995 = vmatprep.subr.bf16.mxu0 0
        %2996 = vmatpush1.bf16.msra.mxu0 0
        %2997 = vmatprep.subr.bf16.mxu0 0
        %2998 = vmatpush1.bf16.msra.mxu0 0
        %2999 = vmatprep.subr.bf16.mxu0 0
        %3000 = vmatpush1.bf16.msra.mxu0 0
        %3001 = vmatprep.subr.bf16.mxu0 0
        %3002 = vmatpush1.bf16.msra.mxu0 0
        %3003 = vmatprep.subr.bf16.mxu0 0
        %3004 = vmatpush1.bf16.msra.mxu0 0
        %3005 = vmatprep.subr.bf16.mxu0 0
        %3006 = vmatpush1.bf16.msra.mxu0 0
        %3007 = vmatprep.subr.bf16.mxu0 0
        %3008 = vmatpush1.bf16.msra.mxu0 0
        %3009 = vmatprep.subr.bf16.mxu0 0
        %3010 = vmatpush1.bf16.msra.mxu0 0
        %3011 = vmatprep.mubr.bf16.mxu0 0
        %3012 = vmatmul.mubr.bf16.gmra.mrb[0].mxu0 %v821
        %v3013 = vpop.f32.mrb[0].mxu0
        %v3014 = vadd.f32 %v2853, %v3013
        %v3015 = vpop.f32.mrb[0].mxu0
        %v3016 = vpop.f32.mrb[0].mxu0
        %v3017 = vadd.f32 %v2856, %v3016
        %v3018 = vpop.f32.mrb[0].mxu0
        %3019 = vmatprep.mubr.bf16.mxu0 0
        %3020 = vmatmul.mubr.bf16.gmra.mrb[0].mxu0 %v845
        %v3021 = vpop.f32.mrb[0].mxu0
        %v3022 = vadd.f32 %v2861, %v3021
        %v3023 = vpop.f32.mrb[0].mxu0
        %v3024 = vpop.f32.mrb[0].mxu0
        %v3025 = vadd.f32 %v2864, %v3024
        %v3026 = vpop.f32.mrb[0].mxu0
        %3027 = vmatprep.mubr.bf16.mxu0 0
        %3028 = vmatmul.mubr.bf16.gmra.mrb[0].mxu0 %v869
        %v3029 = vpop.f32.mrb[0].mxu0
        %v3030 = vadd.f32 %v2869, %v3029
        %v3031 = vpop.f32.mrb[0].mxu0
        %v3032 = vpop.f32.mrb[0].mxu0
        %v3033 = vadd.f32 %v2872, %v3032
        %v3034 = vpop.f32.mrb[0].mxu0
        %3035 = vmatprep.mubr.bf16.mxu0 0
        %3036 = vmatmul.mubr.bf16.gmra.mrb[0].mxu0 %v893
        %v3037 = vpop.f32.mrb[0].mxu0
        %v3038 = vadd.f32 %v2877, %v3037
        %v3039 = vpop.f32.mrb[0].mxu0
        %v3040 = vpop.f32.mrb[0].mxu0
        %v3041 = vadd.f32 %v2880, %v3040
        %v3042 = vpop.f32.mrb[0].mxu0
        %3043 = vmatprep.mubr.bf16.mxu0 0
        %3044 = vmatmul.mubr.bf16.gmra.mrb[0].mxu0 %v917
        %v3045 = vpop.f32.mrb[0].mxu0
        %v3046 = vadd.f32 %v2885, %v3045
        %v3047 = vpop.f32.mrb[0].mxu0
        %v3048 = vpop.f32.mrb[0].mxu0
        %v3049 = vadd.f32 %v2888, %v3048
        %v3050 = vpop.f32.mrb[0].mxu0
        %3051 = vmatprep.mubr.bf16.mxu0 0
        %3052 = vmatmul.mubr.bf16.gmra.mrb[0].mxu0 %v941
        %v3053 = vpop.f32.mrb[0].mxu0
        %v3054 = vadd.f32 %v2893, %v3053
        %v3055 = vpop.f32.mrb[0].mxu0
        %v3056 = vpop.f32.mrb[0].mxu0
        %v3057 = vadd.f32 %v2896, %v3056
        %v3058 = vpop.f32.mrb[0].mxu0
        %3059 = vmatprep.mubr.bf16.mxu0 0
        %3060 = vmatmul.mubr.bf16.gmra.mrb[0].mxu0 %v965
        %v3061 = vpop.f32.mrb[0].mxu0
        %v3062 = vadd.f32 %v2901, %v3061
        %v3063 = vpop.f32.mrb[0].mxu0
        %v3064 = vpop.f32.mrb[0].mxu0
        %v3065 = vadd.f32 %v2904, %v3064
        %v3066 = vpop.f32.mrb[0].mxu0
        %3067 = vmatprep.mubr.bf16.mxu0 0
        %3068 = vmatmul.mubr.bf16.gmra.mrb[0].mxu0 %v989
        %v3069 = vpop.f32.mrb[0].mxu0
        %v3070 = vadd.f32 %v2909, %v3069
        %v3071 = vpop.f32.mrb[0].mxu0
        %v3072 = vpop.f32.mrb[0].mxu0
        %v3073 = vadd.f32 %v2912, %v3072
        %v3074 = vpop.f32.mrb[0].mxu0
        %3075 = vmatprep.mubr.bf16.mxu0 0
        %3076 = vmatmul.mubr.bf16.gmra.mrb[0].mxu0 %v1013
        %v3077 = vpop.f32.mrb[0].mxu0
        %v3078 = vadd.f32 %v2917, %v3077
        %v3079 = vpop.f32.mrb[0].mxu0
        %v3080 = vpop.f32.mrb[0].mxu0
        %v3081 = vadd.f32 %v2920, %v3080
        %v3082 = vpop.f32.mrb[0].mxu0
        %3083 = vmatprep.mubr.bf16.mxu0 0
        %3084 = vmatmul.mubr.bf16.gmra.mrb[0].mxu0 %v1037
        %v3085 = vpop.f32.mrb[0].mxu0
        %v3086 = vadd.f32 %v2925, %v3085
        %v3087 = vpop.f32.mrb[0].mxu0
        %v3088 = vpop.f32.mrb[0].mxu0
        %v3089 = vadd.f32 %v2928, %v3088
        %v3090 = vpop.f32.mrb[0].mxu0
        %3091 = vmatprep.mubr.bf16.mxu0 0
        %3092 = vmatmul.mubr.bf16.gmra.mrb[0].mxu0 %v1061
        %v3093 = vpop.f32.mrb[0].mxu0
        %v3094 = vadd.f32 %v2933, %v3093
        %v3095 = vpop.f32.mrb[0].mxu0
        %v3096 = vpop.f32.mrb[0].mxu0
        %v3097 = vadd.f32 %v2936, %v3096
        %v3098 = vpop.f32.mrb[0].mxu0
        %3099 = vmatprep.mubr.bf16.mxu0 0
        %3100 = vmatmul.mubr.bf16.gmra.mrb[0].mxu0 %v1085
        %v3101 = vpop.f32.mrb[0].mxu0
        %v3102 = vadd.f32 %v2941, %v3101
        %v3103 = vpop.f32.mrb[0].mxu0
        %v3104 = vpop.f32.mrb[0].mxu0
        %v3105 = vadd.f32 %v2944, %v3104
        %v3106 = vpop.f32.mrb[0].mxu0
        %3107 = vmatprep.mubr.bf16.mxu0 0
        %3108 = vmatmul.mubr.bf16.gmra.mrb[0].mxu0 %v1109
        %v3109 = vpop.f32.mrb[0].mxu0
        %v3110 = vadd.f32 %v2949, %v3109
        %v3111 = vpop.f32.mrb[0].mxu0
        %v3112 = vpop.f32.mrb[0].mxu0
        %v3113 = vadd.f32 %v2952, %v3112
        %v3114 = vpop.f32.mrb[0].mxu0
        %3115 = vmatprep.mubr.bf16.mxu0 0
        %3116 = vmatmul.mubr.bf16.gmra.mrb[0].mxu0 %v1133
        %v3117 = vpop.f32.mrb[0].mxu0
        %v3118 = vadd.f32 %v2957, %v3117
        %v3119 = vpop.f32.mrb[0].mxu0
        %v3120 = vpop.f32.mrb[0].mxu0
        %v3121 = vadd.f32 %v2960, %v3120
        %v3122 = vpop.f32.mrb[0].mxu0
        %3123 = vmatprep.mubr.bf16.mxu0 0
        %3124 = vmatmul.mubr.bf16.gmra.mrb[0].mxu0 %v1157
        %v3125 = vpop.f32.mrb[0].mxu0
        %v3126 = vadd.f32 %v2965, %v3125
        %v3127 = vpop.f32.mrb[0].mxu0
        %v3128 = vpop.f32.mrb[0].mxu0
        %v3129 = vadd.f32 %v2968, %v3128
        %v3130 = vpop.f32.mrb[0].mxu0
        %3131 = vmatprep.mubr.bf16.mxu0 0
        %3132 = vmatmul.mubr.bf16.gmra.mrb[0].mxu0 %v1181
        %v3133 = vpop.f32.mrb[0].mxu0
        %v3134 = vadd.f32 %v2973, %v3133
        %v3135 = vpop.f32.mrb[0].mxu0
        %v3136 = vpop.f32.mrb[0].mxu0
        %v3137 = vadd.f32 %v2976, %v3136
        %v3138 = vpop.f32.mrb[0].mxu0
        %3139 = vdwg.mxu0
        %s3140 = scalar_lea.vmem %s345, 36
        %v3141 = vld [vmem:[%s3140] sm:$0xf]
        %v3142 = vld [vmem:[%s3140 + $0x4] sm:$0xf]
        %v3143 = vld [vmem:[%s3140 + $0x8] sm:$0x3]
        %v3144 = vld [vmem:[%s3140 + $0xc] sm:$0xf]
        %v3145 = vld [vmem:[%s3140 + $0x10] sm:$0xf]
        %v3146 = vld [vmem:[%s3140 + $0x14] sm:$0x3]
        %v3147 = vld [vmem:[%s3140 + $0x18] sm:$0xf]
        %v3148 = vld [vmem:[%s3140 + $0x1c] sm:$0xf]
        %v3149 = vld [vmem:[%s3140 + $0x20] sm:$0x3]
        %v3150 = vld [vmem:[%s3140 + $0x24] sm:$0xf]
        %v3151 = vld [vmem:[%s3140 + $0x28] sm:$0xf]
        %v3152 = vld [vmem:[%s3140 + $0x2c] sm:$0x3]
        %v3153 = vld [vmem:[%s3140 + $0x30] sm:$0xf]
        %v3154 = vld [vmem:[%s3140 + $0x34] sm:$0xf]
        %v3155 = vld [vmem:[%s3140 + $0x38] sm:$0x3]
        %v3156 = vld [vmem:[%s3140 + $0x3c] sm:$0xf]
        %v3157 = vld [vmem:[%s3140 + $0x40] sm:$0xf]
        %v3158 = vld [vmem:[%s3140 + $0x44] sm:$0x3]
        %v3159 = vld [vmem:[%s3140 + $0x48] sm:$0xf]
        %v3160 = vld [vmem:[%s3140 + $0x4c] sm:$0xf]
        %v3161 = vld [vmem:[%s3140 + $0x50] sm:$0x3]
        %v3162 = vld [vmem:[%s3140 + $0x54] sm:$0xf]
        %v3163 = vld [vmem:[%s3140 + $0x58] sm:$0xf]
        %v3164 = vld [vmem:[%s3140 + $0x5c] sm:$0x3]
        %v3165 = vld [vmem:[%s3140 + $0x60] sm:$0xf]
        %v3166 = vld [vmem:[%s3140 + $0x64] sm:$0xf]
        %v3167 = vld [vmem:[%s3140 + $0x68] sm:$0x3]
        %v3168 = vld [vmem:[%s3140 + $0x6c] sm:$0xf]
        %v3169 = vld [vmem:[%s3140 + $0x70] sm:$0xf]
        %v3170 = vld [vmem:[%s3140 + $0x74] sm:$0x3]
        %v3171 = vld [vmem:[%s3140 + $0x78] sm:$0xf]
        %v3172 = vld [vmem:[%s3140 + $0x7c] sm:$0xf]
        %v3173 = vld [vmem:[%s3140 + $0x80] sm:$0x3]
        %v3174 = vld [vmem:[%s3140 + $0x84] sm:$0xf]
        %v3175 = vld [vmem:[%s3140 + $0x88] sm:$0xf]
        %v3176 = vld [vmem:[%s3140 + $0x8c] sm:$0x3]
        %v3177 = vld [vmem:[%s3140 + $0x90] sm:$0xf]
        %v3178 = vld [vmem:[%s3140 + $0x94] sm:$0xf]
        %v3179 = vld [vmem:[%s3140 + $0x98] sm:$0x3]
        %v3180 = vld [vmem:[%s3140 + $0x9c] sm:$0xf]
        %v3181 = vld [vmem:[%s3140 + $0xa0] sm:$0xf]
        %v3182 = vld [vmem:[%s3140 + $0xa4] sm:$0x3]
        %v3183 = vld [vmem:[%s3140 + $0xa8] sm:$0xf]
        %v3184 = vld [vmem:[%s3140 + $0xac] sm:$0xf]
        %v3185 = vld [vmem:[%s3140 + $0xb0] sm:$0x3]
        %v3186 = vld [vmem:[%s3140 + $0xb4] sm:$0xf]
        %v3187 = vld [vmem:[%s3140 + $0xb8] sm:$0xf]
        %v3188 = vld [vmem:[%s3140 + $0xbc] sm:$0x3]
        %v3237 = vunpack.c.l.b16 %v3141
        %v3238 = vunpack.c.l.b16 %v3142
        %v3239 = vunpack.c.l.b16 %v3143
        %v3240 = vunpack.c.l.b16 %v3144
        %v3241 = vunpack.c.l.b16 %v3145
        %v3242 = vunpack.c.l.b16 %v3146
        %v3243 = vunpack.c.l.b16 %v3147
        %v3244 = vunpack.c.l.b16 %v3148
        %v3245 = vunpack.c.l.b16 %v3149
        %v3246 = vunpack.c.l.b16 %v3150
        %v3247 = vunpack.c.l.b16 %v3151
        %v3248 = vunpack.c.l.b16 %v3152
        %v3249 = vunpack.c.l.b16 %v3153
        %v3250 = vunpack.c.l.b16 %v3154
        %v3251 = vunpack.c.l.b16 %v3155
        %v3252 = vunpack.c.l.b16 %v3156
        %v3253 = vunpack.c.l.b16 %v3157
        %v3254 = vunpack.c.l.b16 %v3158
        %v3255 = vunpack.c.l.b16 %v3159
        %v3256 = vunpack.c.l.b16 %v3160
        %v3257 = vunpack.c.l.b16 %v3161
        %v3258 = vunpack.c.l.b16 %v3162
        %v3259 = vunpack.c.l.b16 %v3163
        %v3260 = vunpack.c.l.b16 %v3164
        %v3261 = vunpack.c.l.b16 %v3165
        %v3262 = vunpack.c.l.b16 %v3166
        %v3263 = vunpack.c.l.b16 %v3167
        %v3264 = vunpack.c.l.b16 %v3168
        %v3265 = vunpack.c.l.b16 %v3169
        %v3266 = vunpack.c.l.b16 %v3170
        %v3267 = vunpack.c.l.b16 %v3171
        %v3268 = vunpack.c.l.b16 %v3172
        %v3269 = vunpack.c.l.b16 %v3173
        %v3270 = vunpack.c.l.b16 %v3174
        %v3271 = vunpack.c.l.b16 %v3175
        %v3272 = vunpack.c.l.b16 %v3176
        %v3273 = vunpack.c.l.b16 %v3177
        %v3274 = vunpack.c.l.b16 %v3178
        %v3275 = vunpack.c.l.b16 %v3179
        %v3276 = vunpack.c.l.b16 %v3180
        %v3277 = vunpack.c.l.b16 %v3181
        %v3278 = vunpack.c.l.b16 %v3182
        %v3279 = vunpack.c.l.b16 %v3183
        %v3280 = vunpack.c.l.b16 %v3184
        %v3281 = vunpack.c.l.b16 %v3185
        %v3282 = vunpack.c.l.b16 %v3186
        %v3283 = vunpack.c.l.b16 %v3187
        %v3284 = vunpack.c.l.b16 %v3188
        %v3285 = vpack.c.b16 %v3238, %v3237
        %v3286 = vpack.c.b16 %v3239, %v3239
        %v3287 = vpack.c.b16 %v3241, %v3240
        %v3288 = vpack.c.b16 %v3242, %v3242
        %v3289 = vpack.c.b16 %v3244, %v3243
        %v3290 = vpack.c.b16 %v3245, %v3245
        %v3291 = vpack.c.b16 %v3247, %v3246
        %v3292 = vpack.c.b16 %v3248, %v3248
        %v3293 = vpack.c.b16 %v3250, %v3249
        %v3294 = vpack.c.b16 %v3251, %v3251
        %v3295 = vpack.c.b16 %v3253, %v3252
        %v3296 = vpack.c.b16 %v3254, %v3254
        %v3297 = vpack.c.b16 %v3256, %v3255
        %v3298 = vpack.c.b16 %v3257, %v3257
        %v3299 = vpack.c.b16 %v3259, %v3258
        %v3300 = vpack.c.b16 %v3260, %v3260
        %v3301 = vpack.c.b16 %v3262, %v3261
        %v3302 = vpack.c.b16 %v3263, %v3263
        %v3303 = vpack.c.b16 %v3265, %v3264
        %v3304 = vpack.c.b16 %v3266, %v3266
        %v3305 = vpack.c.b16 %v3268, %v3267
        %v3306 = vpack.c.b16 %v3269, %v3269
        %v3307 = vpack.c.b16 %v3271, %v3270
        %v3308 = vpack.c.b16 %v3272, %v3272
        %v3309 = vpack.c.b16 %v3274, %v3273
        %v3310 = vpack.c.b16 %v3275, %v3275
        %v3311 = vpack.c.b16 %v3277, %v3276
        %v3312 = vpack.c.b16 %v3278, %v3278
        %v3313 = vpack.c.b16 %v3280, %v3279
        %v3314 = vpack.c.b16 %v3281, %v3281
        %v3315 = vpack.c.b16 %v3283, %v3282
        %v3316 = vpack.c.b16 %v3284, %v3284
        %v3318 = vshrl.u32 %v3285, 16
        %v3320 = vshll.u32 %v3285, 16
        %v3322 = vrot.slane %v3320, 1
        %v3323 = vor.u32 %v3318, %v3322
        %v3325 = vshll.u32 %v3286, 16
        %v3327 = vrot.slane %v3325, 1
        %v3328 = vsel %vm524, %v3323, %v3327
        %v3329 = vshrl.u32 %v3286, 16
        %v3332 = vshrl.u32 %v3287, 16
        %v3334 = vshll.u32 %v3287, 16
        %v3336 = vrot.slane %v3334, 1
        %v3337 = vor.u32 %v3332, %v3336
        %v3339 = vshll.u32 %v3288, 16
        %v3341 = vrot.slane %v3339, 1
        %v3342 = vsel %vm524, %v3337, %v3341
        %v3343 = vshrl.u32 %v3288, 16
        %v3346 = vshrl.u32 %v3289, 16
        %v3348 = vshll.u32 %v3289, 16
        %v3350 = vrot.slane %v3348, 1
        %v3351 = vor.u32 %v3346, %v3350
        %v3353 = vshll.u32 %v3290, 16
        %v3355 = vrot.slane %v3353, 1
        %v3356 = vsel %vm524, %v3351, %v3355
        %v3357 = vshrl.u32 %v3290, 16
        %v3360 = vshrl.u32 %v3291, 16
        %v3362 = vshll.u32 %v3291, 16
        %v3364 = vrot.slane %v3362, 1
        %v3365 = vor.u32 %v3360, %v3364
        %v3367 = vshll.u32 %v3292, 16
        %v3369 = vrot.slane %v3367, 1
        %v3370 = vsel %vm524, %v3365, %v3369
        %v3371 = vshrl.u32 %v3292, 16
        %v3374 = vshrl.u32 %v3293, 16
        %v3376 = vshll.u32 %v3293, 16
        %v3378 = vrot.slane %v3376, 1
        %v3379 = vor.u32 %v3374, %v3378
        %v3381 = vshll.u32 %v3294, 16
        %v3383 = vrot.slane %v3381, 1
        %v3384 = vsel %vm524, %v3379, %v3383
        %v3385 = vshrl.u32 %v3294, 16
        %v3388 = vshrl.u32 %v3295, 16
        %v3390 = vshll.u32 %v3295, 16
        %v3392 = vrot.slane %v3390, 1
        %v3393 = vor.u32 %v3388, %v3392
        %v3395 = vshll.u32 %v3296, 16
        %v3397 = vrot.slane %v3395, 1
        %v3398 = vsel %vm524, %v3393, %v3397
        %v3399 = vshrl.u32 %v3296, 16
        %v3402 = vshrl.u32 %v3297, 16
        %v3404 = vshll.u32 %v3297, 16
        %v3406 = vrot.slane %v3404, 1
        %v3407 = vor.u32 %v3402, %v3406
        %v3409 = vshll.u32 %v3298, 16
        %v3411 = vrot.slane %v3409, 1
        %v3412 = vsel %vm524, %v3407, %v3411
        %v3413 = vshrl.u32 %v3298, 16
        %v3416 = vshrl.u32 %v3299, 16
        %v3418 = vshll.u32 %v3299, 16
        %v3420 = vrot.slane %v3418, 1
        %v3421 = vor.u32 %v3416, %v3420
        %v3423 = vshll.u32 %v3300, 16
        %v3425 = vrot.slane %v3423, 1
        %v3426 = vsel %vm524, %v3421, %v3425
        %v3427 = vshrl.u32 %v3300, 16
        %v3430 = vshrl.u32 %v3301, 16
        %v3432 = vshll.u32 %v3301, 16
        %v3434 = vrot.slane %v3432, 1
        %v3435 = vor.u32 %v3430, %v3434
        %v3437 = vshll.u32 %v3302, 16
        %v3439 = vrot.slane %v3437, 1
        %v3440 = vsel %vm524, %v3435, %v3439
        %v3441 = vshrl.u32 %v3302, 16
        %v3444 = vshrl.u32 %v3303, 16
        %v3446 = vshll.u32 %v3303, 16
        %v3448 = vrot.slane %v3446, 1
        %v3449 = vor.u32 %v3444, %v3448
        %v3451 = vshll.u32 %v3304, 16
        %v3453 = vrot.slane %v3451, 1
        %v3454 = vsel %vm524, %v3449, %v3453
        %v3455 = vshrl.u32 %v3304, 16
        %v3458 = vshrl.u32 %v3305, 16
        %v3460 = vshll.u32 %v3305, 16
        %v3462 = vrot.slane %v3460, 1
        %v3463 = vor.u32 %v3458, %v3462
        %v3465 = vshll.u32 %v3306, 16
        %v3467 = vrot.slane %v3465, 1
        %v3468 = vsel %vm524, %v3463, %v3467
        %v3469 = vshrl.u32 %v3306, 16
        %v3472 = vshrl.u32 %v3307, 16
        %v3474 = vshll.u32 %v3307, 16
        %v3476 = vrot.slane %v3474, 1
        %v3477 = vor.u32 %v3472, %v3476
        %v3479 = vshll.u32 %v3308, 16
        %v3481 = vrot.slane %v3479, 1
        %v3482 = vsel %vm524, %v3477, %v3481
        %v3483 = vshrl.u32 %v3308, 16
        %v3486 = vshrl.u32 %v3309, 16
        %v3488 = vshll.u32 %v3309, 16
        %v3490 = vrot.slane %v3488, 1
        %v3491 = vor.u32 %v3486, %v3490
        %v3493 = vshll.u32 %v3310, 16
        %v3495 = vrot.slane %v3493, 1
        %v3496 = vsel %vm524, %v3491, %v3495
        %v3497 = vshrl.u32 %v3310, 16
        %v3500 = vshrl.u32 %v3311, 16
        %v3502 = vshll.u32 %v3311, 16
        %v3504 = vrot.slane %v3502, 1
        %v3505 = vor.u32 %v3500, %v3504
        %v3507 = vshll.u32 %v3312, 16
        %v3509 = vrot.slane %v3507, 1
        %v3510 = vsel %vm524, %v3505, %v3509
        %v3511 = vshrl.u32 %v3312, 16
        %v3514 = vshrl.u32 %v3313, 16
        %v3516 = vshll.u32 %v3313, 16
        %v3518 = vrot.slane %v3516, 1
        %v3519 = vor.u32 %v3514, %v3518
        %v3521 = vshll.u32 %v3314, 16
        %v3523 = vrot.slane %v3521, 1
        %v3524 = vsel %vm524, %v3519, %v3523
        %v3525 = vshrl.u32 %v3314, 16
        %v3528 = vshrl.u32 %v3315, 16
        %v3530 = vshll.u32 %v3315, 16
        %v3532 = vrot.slane %v3530, 1
        %v3533 = vor.u32 %v3528, %v3532
        %v3535 = vshll.u32 %v3316, 16
        %v3537 = vrot.slane %v3535, 1
        %v3538 = vsel %vm524, %v3533, %v3537
        %v3539 = vshrl.u32 %v3316, 16
        %v3541 = vrot.slane %v3285, 1
        %v3542 = vrot.slane %v3286, 1
        %v3543 = vsel %vm749, %v3541, %v3542
        %v3544 = vrot.slane %v3287, 1
        %v3545 = vrot.slane %v3288, 1
        %v3546 = vsel %vm749, %v3544, %v3545
        %v3547 = vrot.slane %v3289, 1
        %v3548 = vrot.slane %v3290, 1
        %v3549 = vsel %vm749, %v3547, %v3548
        %v3550 = vrot.slane %v3291, 1
        %v3551 = vrot.slane %v3292, 1
        %v3552 = vsel %vm749, %v3550, %v3551
        %v3553 = vrot.slane %v3293, 1
        %v3554 = vrot.slane %v3294, 1
        %v3555 = vsel %vm749, %v3553, %v3554
        %v3556 = vrot.slane %v3295, 1
        %v3557 = vrot.slane %v3296, 1
        %v3558 = vsel %vm749, %v3556, %v3557
        %v3559 = vrot.slane %v3297, 1
        %v3560 = vrot.slane %v3298, 1
        %v3561 = vsel %vm749, %v3559, %v3560
        %v3562 = vrot.slane %v3299, 1
        %v3563 = vrot.slane %v3300, 1
        %v3564 = vsel %vm749, %v3562, %v3563
        %v3565 = vrot.slane %v3301, 1
        %v3566 = vrot.slane %v3302, 1
        %v3567 = vsel %vm749, %v3565, %v3566
        %v3568 = vrot.slane %v3303, 1
        %v3569 = vrot.slane %v3304, 1
        %v3570 = vsel %vm749, %v3568, %v3569
        %v3571 = vrot.slane %v3305, 1
        %v3572 = vrot.slane %v3306, 1
        %v3573 = vsel %vm749, %v3571, %v3572
        %v3574 = vrot.slane %v3307, 1
        %v3575 = vrot.slane %v3308, 1
        %v3576 = vsel %vm749, %v3574, %v3575
        %v3577 = vrot.slane %v3309, 1
        %v3578 = vrot.slane %v3310, 1
        %v3579 = vsel %vm749, %v3577, %v3578
        %v3580 = vrot.slane %v3311, 1
        %v3581 = vrot.slane %v3312, 1
        %v3582 = vsel %vm749, %v3580, %v3581
        %v3583 = vrot.slane %v3313, 1
        %v3584 = vrot.slane %v3314, 1
        %v3585 = vsel %vm749, %v3583, %v3584
        %v3586 = vrot.slane %v3315, 1
        %v3587 = vrot.slane %v3316, 1
        %v3588 = vsel %vm749, %v3586, %v3587
        %v3590 = vshrl.u32 %v3328, 16
        %v3592 = vshll.u32 %v3328, 16
        %v3594 = vrot.slane %v3592, 1
        %v3595 = vor.u32 %v3590, %v3594
        %v3597 = vshll.u32 %v3329, 16
        %v3599 = vrot.slane %v3597, 1
        %v3600 = vsel %vm524, %v3595, %v3599
        %v3602 = vshrl.u32 %v3543, 16
        %v3604 = vshll.u32 %v3543, 16
        %v3606 = vrot.slane %v3604, 1
        %v3607 = vor.u32 %v3602, %v3606
        %v3609 = vshll.u32 %v3542, 16
        %v3611 = vrot.slane %v3609, 1
        %v3612 = vsel %vm524, %v3607, %v3611
        %v3614 = vshrl.u32 %v3342, 16
        %v3616 = vshll.u32 %v3342, 16
        %v3618 = vrot.slane %v3616, 1
        %v3619 = vor.u32 %v3614, %v3618
        %v3621 = vshll.u32 %v3343, 16
        %v3623 = vrot.slane %v3621, 1
        %v3624 = vsel %vm524, %v3619, %v3623
        %v3626 = vshrl.u32 %v3546, 16
        %v3628 = vshll.u32 %v3546, 16
        %v3630 = vrot.slane %v3628, 1
        %v3631 = vor.u32 %v3626, %v3630
        %v3633 = vshll.u32 %v3545, 16
        %v3635 = vrot.slane %v3633, 1
        %v3636 = vsel %vm524, %v3631, %v3635
        %v3638 = vshrl.u32 %v3356, 16
        %v3640 = vshll.u32 %v3356, 16
        %v3642 = vrot.slane %v3640, 1
        %v3643 = vor.u32 %v3638, %v3642
        %v3645 = vshll.u32 %v3357, 16
        %v3647 = vrot.slane %v3645, 1
        %v3648 = vsel %vm524, %v3643, %v3647
        %v3650 = vshrl.u32 %v3549, 16
        %v3652 = vshll.u32 %v3549, 16
        %v3654 = vrot.slane %v3652, 1
        %v3655 = vor.u32 %v3650, %v3654
        %v3657 = vshll.u32 %v3548, 16
        %v3659 = vrot.slane %v3657, 1
        %v3660 = vsel %vm524, %v3655, %v3659
        %v3662 = vshrl.u32 %v3370, 16
        %v3664 = vshll.u32 %v3370, 16
        %v3666 = vrot.slane %v3664, 1
        %v3667 = vor.u32 %v3662, %v3666
        %v3669 = vshll.u32 %v3371, 16
        %v3671 = vrot.slane %v3669, 1
        %v3672 = vsel %vm524, %v3667, %v3671
        %v3674 = vshrl.u32 %v3552, 16
        %v3676 = vshll.u32 %v3552, 16
        %v3678 = vrot.slane %v3676, 1
        %v3679 = vor.u32 %v3674, %v3678
        %v3681 = vshll.u32 %v3551, 16
        %v3683 = vrot.slane %v3681, 1
        %v3684 = vsel %vm524, %v3679, %v3683
        %v3686 = vshrl.u32 %v3384, 16
        %v3688 = vshll.u32 %v3384, 16
        %v3690 = vrot.slane %v3688, 1
        %v3691 = vor.u32 %v3686, %v3690
        %v3693 = vshll.u32 %v3385, 16
        %v3695 = vrot.slane %v3693, 1
        %v3696 = vsel %vm524, %v3691, %v3695
        %v3698 = vshrl.u32 %v3555, 16
        %v3700 = vshll.u32 %v3555, 16
        %v3702 = vrot.slane %v3700, 1
        %v3703 = vor.u32 %v3698, %v3702
        %v3705 = vshll.u32 %v3554, 16
        %v3707 = vrot.slane %v3705, 1
        %v3708 = vsel %vm524, %v3703, %v3707
        %v3710 = vshrl.u32 %v3398, 16
        %v3712 = vshll.u32 %v3398, 16
        %v3714 = vrot.slane %v3712, 1
        %v3715 = vor.u32 %v3710, %v3714
        %v3717 = vshll.u32 %v3399, 16
        %v3719 = vrot.slane %v3717, 1
        %v3720 = vsel %vm524, %v3715, %v3719
        %v3722 = vshrl.u32 %v3558, 16
        %v3724 = vshll.u32 %v3558, 16
        %v3726 = vrot.slane %v3724, 1
        %v3727 = vor.u32 %v3722, %v3726
        %v3729 = vshll.u32 %v3557, 16
        %v3731 = vrot.slane %v3729, 1
        %v3732 = vsel %vm524, %v3727, %v3731
        %v3734 = vshrl.u32 %v3412, 16
        %v3736 = vshll.u32 %v3412, 16
        %v3738 = vrot.slane %v3736, 1
        %v3739 = vor.u32 %v3734, %v3738
        %v3741 = vshll.u32 %v3413, 16
        %v3743 = vrot.slane %v3741, 1
        %v3744 = vsel %vm524, %v3739, %v3743
        %v3746 = vshrl.u32 %v3561, 16
        %v3748 = vshll.u32 %v3561, 16
        %v3750 = vrot.slane %v3748, 1
        %v3751 = vor.u32 %v3746, %v3750
        %v3753 = vshll.u32 %v3560, 16
        %v3755 = vrot.slane %v3753, 1
        %v3756 = vsel %vm524, %v3751, %v3755
        %v3758 = vshrl.u32 %v3426, 16
        %v3760 = vshll.u32 %v3426, 16
        %v3762 = vrot.slane %v3760, 1
        %v3763 = vor.u32 %v3758, %v3762
        %v3765 = vshll.u32 %v3427, 16
        %v3767 = vrot.slane %v3765, 1
        %v3768 = vsel %vm524, %v3763, %v3767
        %v3770 = vshrl.u32 %v3564, 16
        %v3772 = vshll.u32 %v3564, 16
        %v3774 = vrot.slane %v3772, 1
        %v3775 = vor.u32 %v3770, %v3774
        %v3777 = vshll.u32 %v3563, 16
        %v3779 = vrot.slane %v3777, 1
        %v3780 = vsel %vm524, %v3775, %v3779
        %v3782 = vshrl.u32 %v3440, 16
        %v3784 = vshll.u32 %v3440, 16
        %v3786 = vrot.slane %v3784, 1
        %v3787 = vor.u32 %v3782, %v3786
        %v3789 = vshll.u32 %v3441, 16
        %v3791 = vrot.slane %v3789, 1
        %v3792 = vsel %vm524, %v3787, %v3791
        %v3794 = vshrl.u32 %v3567, 16
        %v3796 = vshll.u32 %v3567, 16
        %v3798 = vrot.slane %v3796, 1
        %v3799 = vor.u32 %v3794, %v3798
        %v3801 = vshll.u32 %v3566, 16
        %v3803 = vrot.slane %v3801, 1
        %v3804 = vsel %vm524, %v3799, %v3803
        %v3806 = vshrl.u32 %v3454, 16
        %v3808 = vshll.u32 %v3454, 16
        %v3810 = vrot.slane %v3808, 1
        %v3811 = vor.u32 %v3806, %v3810
        %v3813 = vshll.u32 %v3455, 16
        %v3815 = vrot.slane %v3813, 1
        %v3816 = vsel %vm524, %v3811, %v3815
        %v3818 = vshrl.u32 %v3570, 16
        %v3820 = vshll.u32 %v3570, 16
        %v3822 = vrot.slane %v3820, 1
        %v3823 = vor.u32 %v3818, %v3822
        %v3825 = vshll.u32 %v3569, 16
        %v3827 = vrot.slane %v3825, 1
        %v3828 = vsel %vm524, %v3823, %v3827
        %v3830 = vshrl.u32 %v3468, 16
        %v3832 = vshll.u32 %v3468, 16
        %v3834 = vrot.slane %v3832, 1
        %v3835 = vor.u32 %v3830, %v3834
        %v3837 = vshll.u32 %v3469, 16
        %v3839 = vrot.slane %v3837, 1
        %v3840 = vsel %vm524, %v3835, %v3839
        %v3842 = vshrl.u32 %v3573, 16
        %v3844 = vshll.u32 %v3573, 16
        %v3846 = vrot.slane %v3844, 1
        %v3847 = vor.u32 %v3842, %v3846
        %v3849 = vshll.u32 %v3572, 16
        %v3851 = vrot.slane %v3849, 1
        %v3852 = vsel %vm524, %v3847, %v3851
        %v3854 = vshrl.u32 %v3482, 16
        %v3856 = vshll.u32 %v3482, 16
        %v3858 = vrot.slane %v3856, 1
        %v3859 = vor.u32 %v3854, %v3858
        %v3861 = vshll.u32 %v3483, 16
        %v3863 = vrot.slane %v3861, 1
        %v3864 = vsel %vm524, %v3859, %v3863
        %v3866 = vshrl.u32 %v3576, 16
        %v3868 = vshll.u32 %v3576, 16
        %v3870 = vrot.slane %v3868, 1
        %v3871 = vor.u32 %v3866, %v3870
        %v3873 = vshll.u32 %v3575, 16
        %v3875 = vrot.slane %v3873, 1
        %v3876 = vsel %vm524, %v3871, %v3875
        %v3878 = vshrl.u32 %v3496, 16
        %v3880 = vshll.u32 %v3496, 16
        %v3882 = vrot.slane %v3880, 1
        %v3883 = vor.u32 %v3878, %v3882
        %v3885 = vshll.u32 %v3497, 16
        %v3887 = vrot.slane %v3885, 1
        %v3888 = vsel %vm524, %v3883, %v3887
        %v3890 = vshrl.u32 %v3579, 16
        %v3892 = vshll.u32 %v3579, 16
        %v3894 = vrot.slane %v3892, 1
        %v3895 = vor.u32 %v3890, %v3894
        %v3897 = vshll.u32 %v3578, 16
        %v3899 = vrot.slane %v3897, 1
        %v3900 = vsel %vm524, %v3895, %v3899
        %v3902 = vshrl.u32 %v3510, 16
        %v3904 = vshll.u32 %v3510, 16
        %v3906 = vrot.slane %v3904, 1
        %v3907 = vor.u32 %v3902, %v3906
        %v3909 = vshll.u32 %v3511, 16
        %v3911 = vrot.slane %v3909, 1
        %v3912 = vsel %vm524, %v3907, %v3911
        %v3914 = vshrl.u32 %v3582, 16
        %v3916 = vshll.u32 %v3582, 16
        %v3918 = vrot.slane %v3916, 1
        %v3919 = vor.u32 %v3914, %v3918
        %v3921 = vshll.u32 %v3581, 16
        %v3923 = vrot.slane %v3921, 1
        %v3924 = vsel %vm524, %v3919, %v3923
        %v3926 = vshrl.u32 %v3524, 16
        %v3928 = vshll.u32 %v3524, 16
        %v3930 = vrot.slane %v3928, 1
        %v3931 = vor.u32 %v3926, %v3930
        %v3933 = vshll.u32 %v3525, 16
        %v3935 = vrot.slane %v3933, 1
        %v3936 = vsel %vm524, %v3931, %v3935
        %v3938 = vshrl.u32 %v3585, 16
        %v3940 = vshll.u32 %v3585, 16
        %v3942 = vrot.slane %v3940, 1
        %v3943 = vor.u32 %v3938, %v3942
        %v3945 = vshll.u32 %v3584, 16
        %v3947 = vrot.slane %v3945, 1
        %v3948 = vsel %vm524, %v3943, %v3947
        %v3950 = vshrl.u32 %v3538, 16
        %v3952 = vshll.u32 %v3538, 16
        %v3954 = vrot.slane %v3952, 1
        %v3955 = vor.u32 %v3950, %v3954
        %v3957 = vshll.u32 %v3539, 16
        %v3959 = vrot.slane %v3957, 1
        %v3960 = vsel %vm524, %v3955, %v3959
        %v3962 = vshrl.u32 %v3588, 16
        %v3964 = vshll.u32 %v3588, 16
        %v3966 = vrot.slane %v3964, 1
        %v3967 = vor.u32 %v3962, %v3966
        %v3969 = vshll.u32 %v3587, 16
        %v3971 = vrot.slane %v3969, 1
        %v3972 = vsel %vm524, %v3967, %v3971
        %s4021 = scalar_lea.vmem [#allocation3], 384
        %v4022 = vld [vmem:[%s4021] sm:$0xf]
        %v4023 = vld [vmem:[%s4021 + $0x4] sm:$0xf]
        %v4024 = vld [vmem:[%s4021 + $0x8] sm:$0xf]
        %v4025 = vld [vmem:[%s4021 + $0xc] sm:$0xf]
        %v4026 = vld [vmem:[%s4021 + $0x10] sm:$0xf]
        %v4027 = vld [vmem:[%s4021 + $0x14] sm:$0xf]
        %v4028 = vld [vmem:[%s4021 + $0x18] sm:$0xf]
        %v4029 = vld [vmem:[%s4021 + $0x1c] sm:$0xf]
        %v4030 = vld [vmem:[%s4021 + $0x20] sm:$0xf]
        %v4031 = vld [vmem:[%s4021 + $0x24] sm:$0xf]
        %v4032 = vld [vmem:[%s4021 + $0x28] sm:$0xf]
        %v4033 = vld [vmem:[%s4021 + $0x2c] sm:$0xf]
        %v4034 = vld [vmem:[%s4021 + $0x30] sm:$0xf]
        %v4035 = vld [vmem:[%s4021 + $0x34] sm:$0xf]
        %v4036 = vld [vmem:[%s4021 + $0x38] sm:$0xf]
        %v4037 = vld [vmem:[%s4021 + $0x3c] sm:$0xf]
        %v4038 = vld [vmem:[%s4021 + $0x40] sm:$0xf]
        %v4039 = vld [vmem:[%s4021 + $0x44] sm:$0xf]
        %v4040 = vld [vmem:[%s4021 + $0x48] sm:$0xf]
        %v4041 = vld [vmem:[%s4021 + $0x4c] sm:$0xf]
        %v4042 = vld [vmem:[%s4021 + $0x50] sm:$0xf]
        %v4043 = vld [vmem:[%s4021 + $0x54] sm:$0xf]
        %v4044 = vld [vmem:[%s4021 + $0x58] sm:$0xf]
        %v4045 = vld [vmem:[%s4021 + $0x5c] sm:$0xf]
        %v4046 = vld [vmem:[%s4021 + $0x60] sm:$0xf]
        %v4047 = vld [vmem:[%s4021 + $0x64] sm:$0xf]
        %v4048 = vld [vmem:[%s4021 + $0x68] sm:$0xf]
        %v4049 = vld [vmem:[%s4021 + $0x6c] sm:$0xf]
        %v4050 = vld [vmem:[%s4021 + $0x70] sm:$0xf]
        %v4051 = vld [vmem:[%s4021 + $0x74] sm:$0xf]
        %v4052 = vld [vmem:[%s4021 + $0x78] sm:$0xf]
        %v4053 = vld [vmem:[%s4021 + $0x7c] sm:$0xf]
        %v4054 = vld [vmem:[%s4021 + $0x80] sm:$0xf]
        %v4055 = vld [vmem:[%s4021 + $0x84] sm:$0xf]
        %v4056 = vld [vmem:[%s4021 + $0x88] sm:$0xf]
        %v4057 = vld [vmem:[%s4021 + $0x8c] sm:$0xf]
        %v4058 = vld [vmem:[%s4021 + $0x90] sm:$0xf]
        %v4059 = vld [vmem:[%s4021 + $0x94] sm:$0xf]
        %v4060 = vld [vmem:[%s4021 + $0x98] sm:$0xf]
        %v4061 = vld [vmem:[%s4021 + $0x9c] sm:$0xf]
        %v4062 = vld [vmem:[%s4021 + $0xa0] sm:$0xf]
        %v4063 = vld [vmem:[%s4021 + $0xa4] sm:$0xf]
        %v4064 = vld [vmem:[%s4021 + $0xa8] sm:$0xf]
        %v4065 = vld [vmem:[%s4021 + $0xac] sm:$0xf]
        %v4066 = vld [vmem:[%s4021 + $0xb0] sm:$0xf]
        %v4067 = vld [vmem:[%s4021 + $0xb4] sm:$0xf]
        %v4068 = vld [vmem:[%s4021 + $0xb8] sm:$0xf]
        %v4069 = vld [vmem:[%s4021 + $0xbc] sm:$0xf]
        %v4118 = vunpack.c.l.b16 %v4022
        %v4119 = vunpack.c.l.b16 %v4023
        %v4120 = vunpack.c.l.b16 %v4024
        %v4121 = vunpack.c.l.b16 %v4025
        %v4122 = vunpack.c.l.b16 %v4026
        %v4123 = vunpack.c.l.b16 %v4027
        %v4124 = vunpack.c.l.b16 %v4028
        %v4125 = vunpack.c.l.b16 %v4029
        %v4126 = vunpack.c.l.b16 %v4030
        %v4127 = vunpack.c.l.b16 %v4031
        %v4128 = vunpack.c.l.b16 %v4032
        %v4129 = vunpack.c.l.b16 %v4033
        %v4130 = vunpack.c.l.b16 %v4034
        %v4131 = vunpack.c.l.b16 %v4035
        %v4132 = vunpack.c.l.b16 %v4036
        %v4133 = vunpack.c.l.b16 %v4037
        %v4134 = vunpack.c.l.b16 %v4038
        %v4135 = vunpack.c.l.b16 %v4039
        %v4136 = vunpack.c.l.b16 %v4040
        %v4137 = vunpack.c.l.b16 %v4041
        %v4138 = vunpack.c.l.b16 %v4042
        %v4139 = vunpack.c.l.b16 %v4043
        %v4140 = vunpack.c.l.b16 %v4044
        %v4141 = vunpack.c.l.b16 %v4045
        %v4142 = vunpack.c.l.b16 %v4046
        %v4143 = vunpack.c.l.b16 %v4047
        %v4144 = vunpack.c.l.b16 %v4048
        %v4145 = vunpack.c.l.b16 %v4049
        %v4146 = vunpack.c.l.b16 %v4050
        %v4147 = vunpack.c.l.b16 %v4051
        %v4148 = vunpack.c.l.b16 %v4052
        %v4149 = vunpack.c.l.b16 %v4053
        %v4150 = vunpack.c.l.b16 %v4054
        %v4151 = vunpack.c.l.b16 %v4055
        %v4152 = vunpack.c.l.b16 %v4056
        %v4153 = vunpack.c.l.b16 %v4057
        %v4154 = vunpack.c.l.b16 %v4058
        %v4155 = vunpack.c.l.b16 %v4059
        %v4156 = vunpack.c.l.b16 %v4060
        %v4157 = vunpack.c.l.b16 %v4061
        %v4158 = vunpack.c.l.b16 %v4062
        %v4159 = vunpack.c.l.b16 %v4063
        %v4160 = vunpack.c.l.b16 %v4064
        %v4161 = vunpack.c.l.b16 %v4065
        %v4162 = vunpack.c.l.b16 %v4066
        %v4163 = vunpack.c.l.b16 %v4067
        %v4164 = vunpack.c.l.b16 %v4068
        %v4165 = vunpack.c.l.b16 %v4069
        %v4166 = vpack.c.b16 %v4119, %v4118
        %v4167 = vpack.c.b16 %v4121, %v4120
        %v4168 = vpack.c.b16 %v4123, %v4122
        %v4169 = vpack.c.b16 %v4125, %v4124
        %v4170 = vpack.c.b16 %v4127, %v4126
        %v4171 = vpack.c.b16 %v4129, %v4128
        %v4172 = vpack.c.b16 %v4131, %v4130
        %v4173 = vpack.c.b16 %v4133, %v4132
        %v4174 = vpack.c.b16 %v4135, %v4134
        %v4175 = vpack.c.b16 %v4137, %v4136
        %v4176 = vpack.c.b16 %v4139, %v4138
        %v4177 = vpack.c.b16 %v4141, %v4140
        %v4178 = vpack.c.b16 %v4143, %v4142
        %v4179 = vpack.c.b16 %v4145, %v4144
        %v4180 = vpack.c.b16 %v4147, %v4146
        %v4181 = vpack.c.b16 %v4149, %v4148
        %v4182 = vpack.c.b16 %v4151, %v4150
        %v4183 = vpack.c.b16 %v4153, %v4152
        %v4184 = vpack.c.b16 %v4155, %v4154
        %v4185 = vpack.c.b16 %v4157, %v4156
        %v4186 = vpack.c.b16 %v4159, %v4158
        %v4187 = vpack.c.b16 %v4161, %v4160
        %v4188 = vpack.c.b16 %v4163, %v4162
        %v4189 = vpack.c.b16 %v4165, %v4164
        %4214 = vmatprep.subr.bf16.mxu0 0
        %4215 = vmatpush1.bf16.msra.mxu0 %v4166
        %4216 = vmatprep.subr.bf16.mxu0 0
        %4217 = vmatpush1.bf16.msra.mxu0 %v4167
        %4218 = vmatprep.subr.bf16.mxu0 0
        %4219 = vmatpush1.bf16.msra.mxu0 %v4168
        %4220 = vmatprep.subr.bf16.mxu0 0
        %4221 = vmatpush1.bf16.msra.mxu0 %v4169
        %4222 = vmatprep.subr.bf16.mxu0 0
        %4223 = vmatpush1.bf16.msra.mxu0 %v4170
        %4224 = vmatprep.subr.bf16.mxu0 0
        %4225 = vmatpush1.bf16.msra.mxu0 %v4171
        %4226 = vmatprep.subr.bf16.mxu0 0
        %4227 = vmatpush1.bf16.msra.mxu0 %v4172
        %4228 = vmatprep.subr.bf16.mxu0 0
        %4229 = vmatpush1.bf16.msra.mxu0 %v4173
        %4230 = vmatprep.subr.bf16.mxu0 0
        %4231 = vmatpush1.bf16.msra.mxu0 %v4174
        %4232 = vmatprep.subr.bf16.mxu0 0
        %4233 = vmatpush1.bf16.msra.mxu0 %v4175
        %4234 = vmatprep.subr.bf16.mxu0 0
        %4235 = vmatpush1.bf16.msra.mxu0 %v4176
        %4236 = vmatprep.subr.bf16.mxu0 0
        %4237 = vmatpush1.bf16.msra.mxu0 %v4177
        %4238 = vmatprep.subr.bf16.mxu0 0
        %4239 = vmatpush1.bf16.msra.mxu0 %v4178
        %4240 = vmatprep.subr.bf16.mxu0 0
        %4241 = vmatpush1.bf16.msra.mxu0 %v4179
        %4242 = vmatprep.subr.bf16.mxu0 0
        %4243 = vmatpush1.bf16.msra.mxu0 %v4180
        %4244 = vmatprep.subr.bf16.mxu0 0
        %4245 = vmatpush1.bf16.msra.mxu0 %v4181
        %4246 = vmatprep.mubr.bf16.mxu0 %v3600
        %4247 = vmatmul.mubr.bf16.gmra.mrb[0].mxu0 %v3328
        %v4248 = vpop.f32.mrb[0].mxu0
        %v4249 = vadd.f32 0.0, %v4248
        %v4250 = vpop.f32.mrb[0].mxu0
        %v4251 = vpop.f32.mrb[0].mxu0
        %v4252 = vadd.f32 0.0, %v4251
        %v4253 = vpop.f32.mrb[0].mxu0
        %4254 = vmatprep.mubr.bf16.mxu0 %v3624
        %4255 = vmatmul.mubr.bf16.gmra.mrb[0].mxu0 %v3342
        %v4256 = vpop.f32.mrb[0].mxu0
        %v4257 = vadd.f32 0.0, %v4256
        %v4258 = vpop.f32.mrb[0].mxu0
        %v4259 = vpop.f32.mrb[0].mxu0
        %v4260 = vadd.f32 0.0, %v4259
        %v4261 = vpop.f32.mrb[0].mxu0
        %4262 = vmatprep.mubr.bf16.mxu0 %v3648
        %4263 = vmatmul.mubr.bf16.gmra.mrb[0].mxu0 %v3356
        %v4264 = vpop.f32.mrb[0].mxu0
        %v4265 = vadd.f32 0.0, %v4264
        %v4266 = vpop.f32.mrb[0].mxu0
        %v4267 = vpop.f32.mrb[0].mxu0
        %v4268 = vadd.f32 0.0, %v4267
        %v4269 = vpop.f32.mrb[0].mxu0
        %4270 = vmatprep.mubr.bf16.mxu0 %v3672
        %4271 = vmatmul.mubr.bf16.gmra.mrb[0].mxu0 %v3370
        %v4272 = vpop.f32.mrb[0].mxu0
        %v4273 = vadd.f32 0.0, %v4272
        %v4274 = vpop.f32.mrb[0].mxu0
        %v4275 = vpop.f32.mrb[0].mxu0
        %v4276 = vadd.f32 0.0, %v4275
        %v4277 = vpop.f32.mrb[0].mxu0
        %4278 = vmatprep.mubr.bf16.mxu0 %v3696
        %4279 = vmatmul.mubr.bf16.gmra.mrb[0].mxu0 %v3384
        %v4280 = vpop.f32.mrb[0].mxu0
        %v4281 = vadd.f32 0.0, %v4280
        %v4282 = vpop.f32.mrb[0].mxu0
        %v4283 = vpop.f32.mrb[0].mxu0
        %v4284 = vadd.f32 0.0, %v4283
        %v4285 = vpop.f32.mrb[0].mxu0
        %4286 = vmatprep.mubr.bf16.mxu0 %v3720
        %4287 = vmatmul.mubr.bf16.gmra.mrb[0].mxu0 %v3398
        %v4288 = vpop.f32.mrb[0].mxu0
        %v4289 = vadd.f32 0.0, %v4288
        %v4290 = vpop.f32.mrb[0].mxu0
        %v4291 = vpop.f32.mrb[0].mxu0
        %v4292 = vadd.f32 0.0, %v4291
        %v4293 = vpop.f32.mrb[0].mxu0
        %4294 = vmatprep.mubr.bf16.mxu0 %v3744
        %4295 = vmatmul.mubr.bf16.gmra.mrb[0].mxu0 %v3412
        %v4296 = vpop.f32.mrb[0].mxu0
        %v4297 = vadd.f32 0.0, %v4296
        %v4298 = vpop.f32.mrb[0].mxu0
        %v4299 = vpop.f32.mrb[0].mxu0
        %v4300 = vadd.f32 0.0, %v4299
        %v4301 = vpop.f32.mrb[0].mxu0
        %4302 = vmatprep.mubr.bf16.mxu0 %v3768
        %4303 = vmatmul.mubr.bf16.gmra.mrb[0].mxu0 %v3426
        %v4304 = vpop.f32.mrb[0].mxu0
        %v4305 = vadd.f32 0.0, %v4304
        %v4306 = vpop.f32.mrb[0].mxu0
        %v4307 = vpop.f32.mrb[0].mxu0
        %v4308 = vadd.f32 0.0, %v4307
        %v4309 = vpop.f32.mrb[0].mxu0
        %4310 = vmatprep.mubr.bf16.mxu0 %v3792
        %4311 = vmatmul.mubr.bf16.gmra.mrb[0].mxu0 %v3440
        %v4312 = vpop.f32.mrb[0].mxu0
        %v4313 = vadd.f32 0.0, %v4312
        %v4314 = vpop.f32.mrb[0].mxu0
        %v4315 = vpop.f32.mrb[0].mxu0
        %v4316 = vadd.f32 0.0, %v4315
        %v4317 = vpop.f32.mrb[0].mxu0
        %4318 = vmatprep.mubr.bf16.mxu0 %v3816
        %4319 = vmatmul.mubr.bf16.gmra.mrb[0].mxu0 %v3454
        %v4320 = vpop.f32.mrb[0].mxu0
        %v4321 = vadd.f32 0.0, %v4320
        %v4322 = vpop.f32.mrb[0].mxu0
        %v4323 = vpop.f32.mrb[0].mxu0
        %v4324 = vadd.f32 0.0, %v4323
        %v4325 = vpop.f32.mrb[0].mxu0
        %4326 = vmatprep.mubr.bf16.mxu0 %v3840
        %4327 = vmatmul.mubr.bf16.gmra.mrb[0].mxu0 %v3468
        %v4328 = vpop.f32.mrb[0].mxu0
        %v4329 = vadd.f32 0.0, %v4328
        %v4330 = vpop.f32.mrb[0].mxu0
        %v4331 = vpop.f32.mrb[0].mxu0
        %v4332 = vadd.f32 0.0, %v4331
        %v4333 = vpop.f32.mrb[0].mxu0
        %4334 = vmatprep.mubr.bf16.mxu0 %v3864
        %4335 = vmatmul.mubr.bf16.gmra.mrb[0].mxu0 %v3482
        %v4336 = vpop.f32.mrb[0].mxu0
        %v4337 = vadd.f32 0.0, %v4336
        %v4338 = vpop.f32.mrb[0].mxu0
        %v4339 = vpop.f32.mrb[0].mxu0
        %v4340 = vadd.f32 0.0, %v4339
        %v4341 = vpop.f32.mrb[0].mxu0
        %4342 = vmatprep.mubr.bf16.mxu0 %v3888
        %4343 = vmatmul.mubr.bf16.gmra.mrb[0].mxu0 %v3496
        %v4344 = vpop.f32.mrb[0].mxu0
        %v4345 = vadd.f32 0.0, %v4344
        %v4346 = vpop.f32.mrb[0].mxu0
        %v4347 = vpop.f32.mrb[0].mxu0
        %v4348 = vadd.f32 0.0, %v4347
        %v4349 = vpop.f32.mrb[0].mxu0
        %4350 = vmatprep.mubr.bf16.mxu0 %v3912
        %4351 = vmatmul.mubr.bf16.gmra.mrb[0].mxu0 %v3510
        %v4352 = vpop.f32.mrb[0].mxu0
        %v4353 = vadd.f32 0.0, %v4352
        %v4354 = vpop.f32.mrb[0].mxu0
        %v4355 = vpop.f32.mrb[0].mxu0
        %v4356 = vadd.f32 0.0, %v4355
        %v4357 = vpop.f32.mrb[0].mxu0
        %4358 = vmatprep.mubr.bf16.mxu0 %v3936
        %4359 = vmatmul.mubr.bf16.gmra.mrb[0].mxu0 %v3524
        %v4360 = vpop.f32.mrb[0].mxu0
        %v4361 = vadd.f32 0.0, %v4360
        %v4362 = vpop.f32.mrb[0].mxu0
        %v4363 = vpop.f32.mrb[0].mxu0
        %v4364 = vadd.f32 0.0, %v4363
        %v4365 = vpop.f32.mrb[0].mxu0
        %4366 = vmatprep.mubr.bf16.mxu0 %v3960
        %4367 = vmatmul.mubr.bf16.gmra.mrb[0].mxu0 %v3538
        %v4368 = vpop.f32.mrb[0].mxu0
        %v4369 = vadd.f32 0.0, %v4368
        %v4370 = vpop.f32.mrb[0].mxu0
        %v4371 = vpop.f32.mrb[0].mxu0
        %v4372 = vadd.f32 0.0, %v4371
        %v4373 = vpop.f32.mrb[0].mxu0
        %4374 = vdwg.mxu0
        %4375 = vmatprep.subr.bf16.mxu0 0
        %4376 = vmatpush1.bf16.msra.mxu0 %v4182
        %4377 = vmatprep.subr.bf16.mxu0 0
        %4378 = vmatpush1.bf16.msra.mxu0 %v4183
        %4379 = vmatprep.subr.bf16.mxu0 0
        %4380 = vmatpush1.bf16.msra.mxu0 %v4184
        %4381 = vmatprep.subr.bf16.mxu0 0
        %4382 = vmatpush1.bf16.msra.mxu0 %v4185
        %4383 = vmatprep.subr.bf16.mxu0 0
        %4384 = vmatpush1.bf16.msra.mxu0 %v4186
        %4385 = vmatprep.subr.bf16.mxu0 0
        %4386 = vmatpush1.bf16.msra.mxu0 %v4187
        %4387 = vmatprep.subr.bf16.mxu0 0
        %4388 = vmatpush1.bf16.msra.mxu0 %v4188
        %4389 = vmatprep.subr.bf16.mxu0 0
        %4390 = vmatpush1.bf16.msra.mxu0 %v4189
        %4391 = vmatprep.subr.bf16.mxu0 0
        %4392 = vmatpush1.bf16.msra.mxu0 0
        %4393 = vmatprep.subr.bf16.mxu0 0
        %4394 = vmatpush1.bf16.msra.mxu0 0
        %4395 = vmatprep.subr.bf16.mxu0 0
        %4396 = vmatpush1.bf16.msra.mxu0 0
        %4397 = vmatprep.subr.bf16.mxu0 0
        %4398 = vmatpush1.bf16.msra.mxu0 0
        %4399 = vmatprep.subr.bf16.mxu0 0
        %4400 = vmatpush1.bf16.msra.mxu0 0
        %4401 = vmatprep.subr.bf16.mxu0 0
        %4402 = vmatpush1.bf16.msra.mxu0 0
        %4403 = vmatprep.subr.bf16.mxu0 0
        %4404 = vmatpush1.bf16.msra.mxu0 0
        %4405 = vmatprep.subr.bf16.mxu0 0
        %4406 = vmatpush1.bf16.msra.mxu0 0
        %4407 = vmatprep.mubr.bf16.mxu0 0
        %4408 = vmatmul.mubr.bf16.gmra.mrb[0].mxu0 %v3612
        %v4409 = vpop.f32.mrb[0].mxu0
        %v4410 = vadd.f32 %v4249, %v4409
        %v4411 = vpop.f32.mrb[0].mxu0
        %v4412 = vpop.f32.mrb[0].mxu0
        %v4413 = vadd.f32 %v4252, %v4412
        %v4414 = vpop.f32.mrb[0].mxu0
        %4415 = vmatprep.mubr.bf16.mxu0 0
        %4416 = vmatmul.mubr.bf16.gmra.mrb[0].mxu0 %v3636
        %v4417 = vpop.f32.mrb[0].mxu0
        %v4418 = vadd.f32 %v4257, %v4417
        %v4419 = vpop.f32.mrb[0].mxu0
        %v4420 = vpop.f32.mrb[0].mxu0
        %v4421 = vadd.f32 %v4260, %v4420
        %v4422 = vpop.f32.mrb[0].mxu0
        %4423 = vmatprep.mubr.bf16.mxu0 0
        %4424 = vmatmul.mubr.bf16.gmra.mrb[0].mxu0 %v3660
        %v4425 = vpop.f32.mrb[0].mxu0
        %v4426 = vadd.f32 %v4265, %v4425
        %v4427 = vpop.f32.mrb[0].mxu0
        %v4428 = vpop.f32.mrb[0].mxu0
        %v4429 = vadd.f32 %v4268, %v4428
        %v4430 = vpop.f32.mrb[0].mxu0
        %4431 = vmatprep.mubr.bf16.mxu0 0
        %4432 = vmatmul.mubr.bf16.gmra.mrb[0].mxu0 %v3684
        %v4433 = vpop.f32.mrb[0].mxu0
        %v4434 = vadd.f32 %v4273, %v4433
        %v4435 = vpop.f32.mrb[0].mxu0
        %v4436 = vpop.f32.mrb[0].mxu0
        %v4437 = vadd.f32 %v4276, %v4436
        %v4438 = vpop.f32.mrb[0].mxu0
        %4439 = vmatprep.mubr.bf16.mxu0 0
        %4440 = vmatmul.mubr.bf16.gmra.mrb[0].mxu0 %v3708
        %v4441 = vpop.f32.mrb[0].mxu0
        %v4442 = vadd.f32 %v4281, %v4441
        %v4443 = vpop.f32.mrb[0].mxu0
        %v4444 = vpop.f32.mrb[0].mxu0
        %v4445 = vadd.f32 %v4284, %v4444
        %v4446 = vpop.f32.mrb[0].mxu0
        %4447 = vmatprep.mubr.bf16.mxu0 0
        %4448 = vmatmul.mubr.bf16.gmra.mrb[0].mxu0 %v3732
        %v4449 = vpop.f32.mrb[0].mxu0
        %v4450 = vadd.f32 %v4289, %v4449
        %v4451 = vpop.f32.mrb[0].mxu0
        %v4452 = vpop.f32.mrb[0].mxu0
        %v4453 = vadd.f32 %v4292, %v4452
        %v4454 = vpop.f32.mrb[0].mxu0
        %4455 = vmatprep.mubr.bf16.mxu0 0
        %4456 = vmatmul.mubr.bf16.gmra.mrb[0].mxu0 %v3756
        %v4457 = vpop.f32.mrb[0].mxu0
        %v4458 = vadd.f32 %v4297, %v4457
        %v4459 = vpop.f32.mrb[0].mxu0
        %v4460 = vpop.f32.mrb[0].mxu0
        %v4461 = vadd.f32 %v4300, %v4460
        %v4462 = vpop.f32.mrb[0].mxu0
        %4463 = vmatprep.mubr.bf16.mxu0 0
        %4464 = vmatmul.mubr.bf16.gmra.mrb[0].mxu0 %v3780
        %v4465 = vpop.f32.mrb[0].mxu0
        %v4466 = vadd.f32 %v4305, %v4465
        %v4467 = vpop.f32.mrb[0].mxu0
        %v4468 = vpop.f32.mrb[0].mxu0
        %v4469 = vadd.f32 %v4308, %v4468
        %v4470 = vpop.f32.mrb[0].mxu0
        %4471 = vmatprep.mubr.bf16.mxu0 0
        %4472 = vmatmul.mubr.bf16.gmra.mrb[0].mxu0 %v3804
        %v4473 = vpop.f32.mrb[0].mxu0
        %v4474 = vadd.f32 %v4313, %v4473
        %v4475 = vpop.f32.mrb[0].mxu0
        %v4476 = vpop.f32.mrb[0].mxu0
        %v4477 = vadd.f32 %v4316, %v4476
        %v4478 = vpop.f32.mrb[0].mxu0
        %4479 = vmatprep.mubr.bf16.mxu0 0
        %4480 = vmatmul.mubr.bf16.gmra.mrb[0].mxu0 %v3828
        %v4481 = vpop.f32.mrb[0].mxu0
        %v4482 = vadd.f32 %v4321, %v4481
        %v4483 = vpop.f32.mrb[0].mxu0
        %v4484 = vpop.f32.mrb[0].mxu0
        %v4485 = vadd.f32 %v4324, %v4484
        %v4486 = vpop.f32.mrb[0].mxu0
        %4487 = vmatprep.mubr.bf16.mxu0 0
        %4488 = vmatmul.mubr.bf16.gmra.mrb[0].mxu0 %v3852
        %v4489 = vpop.f32.mrb[0].mxu0
        %v4490 = vadd.f32 %v4329, %v4489
        %v4491 = vpop.f32.mrb[0].mxu0
        %v4492 = vpop.f32.mrb[0].mxu0
        %v4493 = vadd.f32 %v4332, %v4492
        %v4494 = vpop.f32.mrb[0].mxu0
        %4495 = vmatprep.mubr.bf16.mxu0 0
        %4496 = vmatmul.mubr.bf16.gmra.mrb[0].mxu0 %v3876
        %v4497 = vpop.f32.mrb[0].mxu0
        %v4498 = vadd.f32 %v4337, %v4497
        %v4499 = vpop.f32.mrb[0].mxu0
        %v4500 = vpop.f32.mrb[0].mxu0
        %v4501 = vadd.f32 %v4340, %v4500
        %v4502 = vpop.f32.mrb[0].mxu0
        %4503 = vmatprep.mubr.bf16.mxu0 0
        %4504 = vmatmul.mubr.bf16.gmra.mrb[0].mxu0 %v3900
        %v4505 = vpop.f32.mrb[0].mxu0
        %v4506 = vadd.f32 %v4345, %v4505
        %v4507 = vpop.f32.mrb[0].mxu0
        %v4508 = vpop.f32.mrb[0].mxu0
        %v4509 = vadd.f32 %v4348, %v4508
        %v4510 = vpop.f32.mrb[0].mxu0
        %4511 = vmatprep.mubr.bf16.mxu0 0
        %4512 = vmatmul.mubr.bf16.gmra.mrb[0].mxu0 %v3924
        %v4513 = vpop.f32.mrb[0].mxu0
        %v4514 = vadd.f32 %v4353, %v4513
        %v4515 = vpop.f32.mrb[0].mxu0
        %v4516 = vpop.f32.mrb[0].mxu0
        %v4517 = vadd.f32 %v4356, %v4516
        %v4518 = vpop.f32.mrb[0].mxu0
        %4519 = vmatprep.mubr.bf16.mxu0 0
        %4520 = vmatmul.mubr.bf16.gmra.mrb[0].mxu0 %v3948
        %v4521 = vpop.f32.mrb[0].mxu0
        %v4522 = vadd.f32 %v4361, %v4521
        %v4523 = vpop.f32.mrb[0].mxu0
        %v4524 = vpop.f32.mrb[0].mxu0
        %v4525 = vadd.f32 %v4364, %v4524
        %v4526 = vpop.f32.mrb[0].mxu0
        %4527 = vmatprep.mubr.bf16.mxu0 0
        %4528 = vmatmul.mubr.bf16.gmra.mrb[0].mxu0 %v3972
        %v4529 = vpop.f32.mrb[0].mxu0
        %v4530 = vadd.f32 %v4369, %v4529
        %v4531 = vpop.f32.mrb[0].mxu0
        %v4532 = vpop.f32.mrb[0].mxu0
        %v4533 = vadd.f32 %v4372, %v4532
        %v4534 = vpop.f32.mrb[0].mxu0
        %4535 = vdwg.mxu0
        %v4536 = vadd.f32 %v3014, %v4410
        %v4537 = vadd.f32 %v3017, %v4413
        %v4538 = vadd.f32 %v3022, %v4418
        %v4539 = vadd.f32 %v3025, %v4421
        %v4540 = vadd.f32 %v3030, %v4426
        %v4541 = vadd.f32 %v3033, %v4429
        %v4542 = vadd.f32 %v3038, %v4434
        %v4543 = vadd.f32 %v3041, %v4437
        %v4544 = vadd.f32 %v3046, %v4442
        %v4545 = vadd.f32 %v3049, %v4445
        %v4546 = vadd.f32 %v3054, %v4450
        %v4547 = vadd.f32 %v3057, %v4453
        %v4548 = vadd.f32 %v3062, %v4458
        %v4549 = vadd.f32 %v3065, %v4461
        %v4550 = vadd.f32 %v3070, %v4466
        %v4551 = vadd.f32 %v3073, %v4469
        %v4552 = vadd.f32 %v3078, %v4474
        %v4553 = vadd.f32 %v3081, %v4477
        %v4554 = vadd.f32 %v3086, %v4482
        %v4555 = vadd.f32 %v3089, %v4485
        %v4556 = vadd.f32 %v3094, %v4490
        %v4557 = vadd.f32 %v3097, %v4493
        %v4558 = vadd.f32 %v3102, %v4498
        %v4559 = vadd.f32 %v3105, %v4501
        %v4560 = vadd.f32 %v3110, %v4506
        %v4561 = vadd.f32 %v3113, %v4509
        %v4562 = vadd.f32 %v3118, %v4514
        %v4563 = vadd.f32 %v3121, %v4517
        %v4564 = vadd.f32 %v3126, %v4522
        %v4565 = vadd.f32 %v3129, %v4525
        %v4566 = vadd.f32 %v3134, %v4530
        %v4567 = vadd.f32 %v3137, %v4533
        %v4568 = vld [vmem:[%s2] sm:$0x1]
        %v4569 = vlaneseq
        %v4570 = vshrl.u32 %v4569, 7
        %v4571 = vsub.s32 0, %v4570
        %v4572 = vrot.slane %v4568, %v4571
        %v4573 = vmul.f32 %v4536, %v4572
        %v4574 = vmul.f32 %v4537, %v4572
        %v4575 = vmul.f32 %v4538, %v4572
        %v4576 = vmul.f32 %v4539, %v4572
        %v4577 = vmul.f32 %v4540, %v4572
        %v4578 = vmul.f32 %v4541, %v4572
        %v4579 = vmul.f32 %v4542, %v4572
        %v4580 = vmul.f32 %v4543, %v4572
        %v4581 = vmul.f32 %v4544, %v4572
        %v4582 = vmul.f32 %v4545, %v4572
        %v4583 = vmul.f32 %v4546, %v4572
        %v4584 = vmul.f32 %v4547, %v4572
        %v4585 = vmul.f32 %v4548, %v4572
        %v4586 = vmul.f32 %v4549, %v4572
        %v4587 = vmul.f32 %v4550, %v4572
        %v4588 = vmul.f32 %v4551, %v4572
        %v4589 = vmul.f32 %v4552, %v4572
        %v4590 = vmul.f32 %v4553, %v4572
        %v4591 = vmul.f32 %v4554, %v4572
        %v4592 = vmul.f32 %v4555, %v4572
        %v4593 = vmul.f32 %v4556, %v4572
        %v4594 = vmul.f32 %v4557, %v4572
        %v4595 = vmul.f32 %v4558, %v4572
        %v4596 = vmul.f32 %v4559, %v4572
        %v4597 = vmul.f32 %v4560, %v4572
        %v4598 = vmul.f32 %v4561, %v4572
        %v4599 = vmul.f32 %v4562, %v4572
        %v4600 = vmul.f32 %v4563, %v4572
        %v4601 = vmul.f32 %v4564, %v4572
        %v4602 = vmul.f32 %v4565, %v4572
        %v4603 = vmul.f32 %v4566, %v4572
        %v4604 = vmul.f32 %v4567, %v4572
        %v4605 = vld [vmem:[%s3] sm:$0x1]
        %v4606 = vlaneseq
        %v4607 = vshrl.u32 %v4606, 7
        %v4608 = vsub.s32 0, %v4607
        %v4609 = vrot.slane %v4605, %v4608
        %v4610 = vadd.f32 %v4573, %v4609
        %v4611 = vadd.f32 %v4574, %v4609
        %v4612 = vadd.f32 %v4575, %v4609
        %v4613 = vadd.f32 %v4576, %v4609
        %v4614 = vadd.f32 %v4577, %v4609
        %v4615 = vadd.f32 %v4578, %v4609
        %v4616 = vadd.f32 %v4579, %v4609
        %v4617 = vadd.f32 %v4580, %v4609
        %v4618 = vadd.f32 %v4581, %v4609
        %v4619 = vadd.f32 %v4582, %v4609
        %v4620 = vadd.f32 %v4583, %v4609
        %v4621 = vadd.f32 %v4584, %v4609
        %v4622 = vadd.f32 %v4585, %v4609
        %v4623 = vadd.f32 %v4586, %v4609
        %v4624 = vadd.f32 %v4587, %v4609
        %v4625 = vadd.f32 %v4588, %v4609
        %v4626 = vadd.f32 %v4589, %v4609
        %v4627 = vadd.f32 %v4590, %v4609
        %v4628 = vadd.f32 %v4591, %v4609
        %v4629 = vadd.f32 %v4592, %v4609
        %v4630 = vadd.f32 %v4593, %v4609
        %v4631 = vadd.f32 %v4594, %v4609
        %v4632 = vadd.f32 %v4595, %v4609
        %v4633 = vadd.f32 %v4596, %v4609
        %v4634 = vadd.f32 %v4597, %v4609
        %v4635 = vadd.f32 %v4598, %v4609
        %v4636 = vadd.f32 %v4599, %v4609
        %v4637 = vadd.f32 %v4600, %v4609
        %v4638 = vadd.f32 %v4601, %v4609
        %v4639 = vadd.f32 %v4602, %v4609
        %v4640 = vadd.f32 %v4603, %v4609
        %v4641 = vadd.f32 %v4604, %v4609
        %v4642 = vmax.f32 %v4610, 0.0
        %v4643 = vmax.f32 %v4611, 0.0
        %v4644 = vmax.f32 %v4612, 0.0
        %v4645 = vmax.f32 %v4613, 0.0
        %v4646 = vmax.f32 %v4614, 0.0
        %v4647 = vmax.f32 %v4615, 0.0
        %v4648 = vmax.f32 %v4616, 0.0
        %v4649 = vmax.f32 %v4617, 0.0
        %v4650 = vmax.f32 %v4618, 0.0
        %v4651 = vmax.f32 %v4619, 0.0
        %v4652 = vmax.f32 %v4620, 0.0
        %v4653 = vmax.f32 %v4621, 0.0
        %v4654 = vmax.f32 %v4622, 0.0
        %v4655 = vmax.f32 %v4623, 0.0
        %v4656 = vmax.f32 %v4624, 0.0
        %v4657 = vmax.f32 %v4625, 0.0
        %v4658 = vmax.f32 %v4626, 0.0
        %v4659 = vmax.f32 %v4627, 0.0
        %v4660 = vmax.f32 %v4628, 0.0
        %v4661 = vmax.f32 %v4629, 0.0
        %v4662 = vmax.f32 %v4630, 0.0
        %v4663 = vmax.f32 %v4631, 0.0
        %v4664 = vmax.f32 %v4632, 0.0
        %v4665 = vmax.f32 %v4633, 0.0
        %v4666 = vmax.f32 %v4634, 0.0
        %v4667 = vmax.f32 %v4635, 0.0
        %v4668 = vmax.f32 %v4636, 0.0
        %v4669 = vmax.f32 %v4637, 0.0
        %v4670 = vmax.f32 %v4638, 0.0
        %v4671 = vmax.f32 %v4639, 0.0
        %v4672 = vmax.f32 %v4640, 0.0
        %v4673 = vmax.f32 %v4641, 0.0
        %4674 = vst [vmem:[#allocation2] sm:$0xff] %v4642
        %4675 = vst [vmem:[#allocation2 + $0x8] sm:$0xff] %v4643
        %4676 = vst [vmem:[#allocation2 + $0x10] sm:$0xff] %v4644
        %4677 = vst [vmem:[#allocation2 + $0x18] sm:$0xff] %v4645
        %4678 = vst [vmem:[#allocation2 + $0x20] sm:$0xff] %v4646
        %4679 = vst [vmem:[#allocation2 + $0x28] sm:$0xff] %v4647
        %4680 = vst [vmem:[#allocation2 + $0x30] sm:$0xff] %v4648
        %4681 = vst [vmem:[#allocation2 + $0x38] sm:$0xff] %v4649
        %4682 = vst [vmem:[#allocation2 + $0x40] sm:$0xff] %v4650
        %4683 = vst [vmem:[#allocation2 + $0x48] sm:$0xff] %v4651
        %4684 = vst [vmem:[#allocation2 + $0x50] sm:$0xff] %v4652
        %4685 = vst [vmem:[#allocation2 + $0x58] sm:$0xff] %v4653
        %4686 = vst [vmem:[#allocation2 + $0x60] sm:$0xff] %v4654
        %4687 = vst [vmem:[#allocation2 + $0x68] sm:$0xff] %v4655
        %4688 = vst [vmem:[#allocation2 + $0x70] sm:$0xff] %v4656
        %4689 = vst [vmem:[#allocation2 + $0x78] sm:$0xff] %v4657
        %4690 = vst [vmem:[#allocation2 + $0x80] sm:$0xff] %v4658
        %4691 = vst [vmem:[#allocation2 + $0x88] sm:$0xff] %v4659
        %4692 = vst [vmem:[#allocation2 + $0x90] sm:$0xff] %v4660
        %4693 = vst [vmem:[#allocation2 + $0x98] sm:$0xff] %v4661
        %4694 = vst [vmem:[#allocation2 + $0xa0] sm:$0xff] %v4662
        %4695 = vst [vmem:[#allocation2 + $0xa8] sm:$0xff] %v4663
        %4696 = vst [vmem:[#allocation2 + $0xb0] sm:$0xff] %v4664
        %4697 = vst [vmem:[#allocation2 + $0xb8] sm:$0xff] %v4665
        %4698 = vst [vmem:[#allocation2 + $0xc0] sm:$0xff] %v4666
        %4699 = vst [vmem:[#allocation2 + $0xc8] sm:$0xff] %v4667
        %4700 = vst [vmem:[#allocation2 + $0xd0] sm:$0xff] %v4668
        %4701 = vst [vmem:[#allocation2 + $0xd8] sm:$0xff] %v4669
        %4702 = vst [vmem:[#allocation2 + $0xe0] sm:$0xff] %v4670
        %4703 = vst [vmem:[#allocation2 + $0xe8] sm:$0xff] %v4671
        %4704 = vst [vmem:[#allocation2 + $0xf0] sm:$0xff] %v4672
        %4705 = vst [vmem:[#allocation2 + $0xf8] sm:$0xff] %v4673
        %v4706 = vld [vmem:[%s345] sm:$0xf]
        %v4707 = vld [vmem:[%s345 + $0x4] sm:$0xf]
        %v4708 = vld [vmem:[%s345 + $0x8] sm:$0x3]
        %v4709 = vld [vmem:[%s345 + $0xc] sm:$0xf]
        %v4710 = vld [vmem:[%s345 + $0x10] sm:$0xf]
        %v4711 = vld [vmem:[%s345 + $0x14] sm:$0x3]
        %v4712 = vld [vmem:[%s345 + $0x18] sm:$0xf]
        %v4713 = vld [vmem:[%s345 + $0x1c] sm:$0xf]
        %v4714 = vld [vmem:[%s345 + $0x20] sm:$0x3]
        %v4715 = vld [vmem:[%s345 + $0x24] sm:$0xf]
        %v4716 = vld [vmem:[%s345 + $0x28] sm:$0xf]
        %v4717 = vld [vmem:[%s345 + $0x2c] sm:$0x3]
        %v4718 = vld [vmem:[%s345 + $0x30] sm:$0xf]
        %v4719 = vld [vmem:[%s345 + $0x34] sm:$0xf]
        %v4720 = vld [vmem:[%s345 + $0x38] sm:$0x3]
        %v4721 = vld [vmem:[%s345 + $0x3c] sm:$0xf]
        %v4722 = vld [vmem:[%s345 + $0x40] sm:$0xf]
        %v4723 = vld [vmem:[%s345 + $0x44] sm:$0x3]
        %v4724 = vld [vmem:[%s345 + $0x48] sm:$0xf]
        %v4725 = vld [vmem:[%s345 + $0x4c] sm:$0xf]
        %v4726 = vld [vmem:[%s345 + $0x50] sm:$0x3]
        %v4727 = vld [vmem:[%s345 + $0x54] sm:$0xf]
        %v4728 = vld [vmem:[%s345 + $0x58] sm:$0xf]
        %v4729 = vld [vmem:[%s345 + $0x5c] sm:$0x3]
        %v4730 = vld [vmem:[%s345 + $0x60] sm:$0xf]
        %v4731 = vld [vmem:[%s345 + $0x64] sm:$0xf]
        %v4732 = vld [vmem:[%s345 + $0x68] sm:$0x3]
        %v4733 = vld [vmem:[%s345 + $0x6c] sm:$0xf]
        %v4734 = vld [vmem:[%s345 + $0x70] sm:$0xf]
        %v4735 = vld [vmem:[%s345 + $0x74] sm:$0x3]
        %v4736 = vld [vmem:[%s345 + $0x78] sm:$0xf]
        %v4737 = vld [vmem:[%s345 + $0x7c] sm:$0xf]
        %v4738 = vld [vmem:[%s345 + $0x80] sm:$0x3]
        %v4739 = vld [vmem:[%s345 + $0x84] sm:$0xf]
        %v4740 = vld [vmem:[%s345 + $0x88] sm:$0xf]
        %v4741 = vld [vmem:[%s345 + $0x8c] sm:$0x3]
        %v4742 = vld [vmem:[%s345 + $0x90] sm:$0xf]
        %v4743 = vld [vmem:[%s345 + $0x94] sm:$0xf]
        %v4744 = vld [vmem:[%s345 + $0x98] sm:$0x3]
        %v4745 = vld [vmem:[%s345 + $0x9c] sm:$0xf]
        %v4746 = vld [vmem:[%s345 + $0xa0] sm:$0xf]
        %v4747 = vld [vmem:[%s345 + $0xa4] sm:$0x3]
        %v4748 = vld [vmem:[%s345 + $0xa8] sm:$0xf]
        %v4749 = vld [vmem:[%s345 + $0xac] sm:$0xf]
        %v4750 = vld [vmem:[%s345 + $0xb0] sm:$0x3]
        %v4751 = vld [vmem:[%s345 + $0xb4] sm:$0xf]
        %v4752 = vld [vmem:[%s345 + $0xb8] sm:$0xf]
        %v4753 = vld [vmem:[%s345 + $0xbc] sm:$0x3]
        %v4786 = vunpack.c.l.b16 %v4706
        %v4787 = vunpack.c.l.b16 %v4707
        %v4788 = vunpack.c.l.b16 %v4709
        %v4789 = vunpack.c.l.b16 %v4710
        %v4790 = vunpack.c.l.b16 %v4712
        %v4791 = vunpack.c.l.b16 %v4713
        %v4792 = vunpack.c.l.b16 %v4715
        %v4793 = vunpack.c.l.b16 %v4716
        %v4794 = vunpack.c.l.b16 %v4718
        %v4795 = vunpack.c.l.b16 %v4719
        %v4796 = vunpack.c.l.b16 %v4721
        %v4797 = vunpack.c.l.b16 %v4722
        %v4798 = vunpack.c.l.b16 %v4724
        %v4799 = vunpack.c.l.b16 %v4725
        %v4800 = vunpack.c.l.b16 %v4727
        %v4801 = vunpack.c.l.b16 %v4728
        %v4802 = vunpack.c.l.b16 %v4730
        %v4803 = vunpack.c.l.b16 %v4731
        %v4804 = vunpack.c.l.b16 %v4733
        %v4805 = vunpack.c.l.b16 %v4734
        %v4806 = vunpack.c.l.b16 %v4736
        %v4807 = vunpack.c.l.b16 %v4737
        %v4808 = vunpack.c.l.b16 %v4739
        %v4809 = vunpack.c.l.b16 %v4740
        %v4810 = vunpack.c.l.b16 %v4742
        %v4811 = vunpack.c.l.b16 %v4743
        %v4812 = vunpack.c.l.b16 %v4745
        %v4813 = vunpack.c.l.b16 %v4746
        %v4814 = vunpack.c.l.b16 %v4748
        %v4815 = vunpack.c.l.b16 %v4749
        %v4816 = vunpack.c.l.b16 %v4751
        %v4817 = vunpack.c.l.b16 %v4752
        %v4818 = vpack.c.b16 %v4787, %v4786
        %v4819 = vpack.c.b16 %v4789, %v4788
        %v4820 = vpack.c.b16 %v4791, %v4790
        %v4821 = vpack.c.b16 %v4793, %v4792
        %v4822 = vpack.c.b16 %v4795, %v4794
        %v4823 = vpack.c.b16 %v4797, %v4796
        %v4824 = vpack.c.b16 %v4799, %v4798
        %v4825 = vpack.c.b16 %v4801, %v4800
        %v4826 = vpack.c.b16 %v4803, %v4802
        %v4827 = vpack.c.b16 %v4805, %v4804
        %v4828 = vpack.c.b16 %v4807, %v4806
        %v4829 = vpack.c.b16 %v4809, %v4808
        %v4830 = vpack.c.b16 %v4811, %v4810
        %v4831 = vpack.c.b16 %v4813, %v4812
        %v4832 = vpack.c.b16 %v4815, %v4814
        %v4833 = vpack.c.b16 %v4817, %v4816
        %v4866 = vunpack.c.l.b16 %v4708
        %v4867 = vunpack.c.l.b16 %v4711
        %v4868 = vunpack.c.l.b16 %v4714
        %v4869 = vunpack.c.l.b16 %v4717
        %v4870 = vunpack.c.l.b16 %v4720
        %v4871 = vunpack.c.l.b16 %v4723
        %v4872 = vunpack.c.l.b16 %v4726
        %v4873 = vunpack.c.l.b16 %v4729
        %v4874 = vunpack.c.l.b16 %v4732
        %v4875 = vunpack.c.l.b16 %v4735
        %v4876 = vunpack.c.l.b16 %v4738
        %v4877 = vunpack.c.l.b16 %v4741
        %v4878 = vunpack.c.l.b16 %v4744
        %v4879 = vunpack.c.l.b16 %v4747
        %v4880 = vunpack.c.l.b16 %v4750
        %v4881 = vunpack.c.l.b16 %v4753
        %v4882 = vpack.c.b16 %v4866, %v4866
        %v4883 = vpack.c.b16 %v4867, %v4867
        %v4884 = vpack.c.b16 %v4868, %v4868
        %v4885 = vpack.c.b16 %v4869, %v4869
        %v4886 = vpack.c.b16 %v4870, %v4870
        %v4887 = vpack.c.b16 %v4871, %v4871
        %v4888 = vpack.c.b16 %v4872, %v4872
        %v4889 = vpack.c.b16 %v4873, %v4873
        %v4890 = vpack.c.b16 %v4874, %v4874
        %v4891 = vpack.c.b16 %v4875, %v4875
        %v4892 = vpack.c.b16 %v4876, %v4876
        %v4893 = vpack.c.b16 %v4877, %v4877
        %v4894 = vpack.c.b16 %v4878, %v4878
        %v4895 = vpack.c.b16 %v4879, %v4879
        %v4896 = vpack.c.b16 %v4880, %v4880
        %v4897 = vpack.c.b16 %v4881, %v4881
        %v4898 = vrot.slane %v4818, 1
        %v4899 = vrot.slane %v4882, 1
        %v4900 = vsel %vm749, %v4898, %v4899
        %v4901 = vrot.slane %v4819, 1
        %v4902 = vrot.slane %v4883, 1
        %v4903 = vsel %vm749, %v4901, %v4902
        %v4904 = vrot.slane %v4820, 1
        %v4905 = vrot.slane %v4884, 1
        %v4906 = vsel %vm749, %v4904, %v4905
        %v4907 = vrot.slane %v4821, 1
        %v4908 = vrot.slane %v4885, 1
        %v4909 = vsel %vm749, %v4907, %v4908
        %v4910 = vrot.slane %v4822, 1
        %v4911 = vrot.slane %v4886, 1
        %v4912 = vsel %vm749, %v4910, %v4911
        %v4913 = vrot.slane %v4823, 1
        %v4914 = vrot.slane %v4887, 1
        %v4915 = vsel %vm749, %v4913, %v4914
        %v4916 = vrot.slane %v4824, 1
        %v4917 = vrot.slane %v4888, 1
        %v4918 = vsel %vm749, %v4916, %v4917
        %v4919 = vrot.slane %v4825, 1
        %v4920 = vrot.slane %v4889, 1
        %v4921 = vsel %vm749, %v4919, %v4920
        %v4922 = vrot.slane %v4826, 1
        %v4923 = vrot.slane %v4890, 1
        %v4924 = vsel %vm749, %v4922, %v4923
        %v4925 = vrot.slane %v4827, 1
        %v4926 = vrot.slane %v4891, 1
        %v4927 = vsel %vm749, %v4925, %v4926
        %v4928 = vrot.slane %v4828, 1
        %v4929 = vrot.slane %v4892, 1
        %v4930 = vsel %vm749, %v4928, %v4929
        %v4931 = vrot.slane %v4829, 1
        %v4932 = vrot.slane %v4893, 1
        %v4933 = vsel %vm749, %v4931, %v4932
        %v4934 = vrot.slane %v4830, 1
        %v4935 = vrot.slane %v4894, 1
        %v4936 = vsel %vm749, %v4934, %v4935
        %v4937 = vrot.slane %v4831, 1
        %v4938 = vrot.slane %v4895, 1
        %v4939 = vsel %vm749, %v4937, %v4938
        %v4940 = vrot.slane %v4832, 1
        %v4941 = vrot.slane %v4896, 1
        %v4942 = vsel %vm749, %v4940, %v4941
        %v4943 = vrot.slane %v4833, 1
        %v4944 = vrot.slane %v4897, 1
        %v4945 = vsel %vm749, %v4943, %v4944
        %vm4962 = vcmask 1045504
        %v4963 = vrot.slane %v4818, 2
        %v4964 = vrot.slane %v4882, 2
        %v4965 = vsel %vm4962, %v4963, %v4964
        %v4966 = vrot.slane %v4819, 2
        %v4967 = vrot.slane %v4883, 2
        %v4968 = vsel %vm4962, %v4966, %v4967
        %v4969 = vrot.slane %v4820, 2
        %v4970 = vrot.slane %v4884, 2
        %v4971 = vsel %vm4962, %v4969, %v4970
        %v4972 = vrot.slane %v4821, 2
        %v4973 = vrot.slane %v4885, 2
        %v4974 = vsel %vm4962, %v4972, %v4973
        %v4975 = vrot.slane %v4822, 2
        %v4976 = vrot.slane %v4886, 2
        %v4977 = vsel %vm4962, %v4975, %v4976
        %v4978 = vrot.slane %v4823, 2
        %v4979 = vrot.slane %v4887, 2
        %v4980 = vsel %vm4962, %v4978, %v4979
        %v4981 = vrot.slane %v4824, 2
        %v4982 = vrot.slane %v4888, 2
        %v4983 = vsel %vm4962, %v4981, %v4982
        %v4984 = vrot.slane %v4825, 2
        %v4985 = vrot.slane %v4889, 2
        %v4986 = vsel %vm4962, %v4984, %v4985
        %v4987 = vrot.slane %v4826, 2
        %v4988 = vrot.slane %v4890, 2
        %v4989 = vsel %vm4962, %v4987, %v4988
        %v4990 = vrot.slane %v4827, 2
        %v4991 = vrot.slane %v4891, 2
        %v4992 = vsel %vm4962, %v4990, %v4991
        %v4993 = vrot.slane %v4828, 2
        %v4994 = vrot.slane %v4892, 2
        %v4995 = vsel %vm4962, %v4993, %v4994
        %v4996 = vrot.slane %v4829, 2
        %v4997 = vrot.slane %v4893, 2
        %v4998 = vsel %vm4962, %v4996, %v4997
        %v4999 = vrot.slane %v4830, 2
        %v5000 = vrot.slane %v4894, 2
        %v5001 = vsel %vm4962, %v4999, %v5000
        %v5002 = vrot.slane %v4831, 2
        %v5003 = vrot.slane %v4895, 2
        %v5004 = vsel %vm4962, %v5002, %v5003
        %v5005 = vrot.slane %v4832, 2
        %v5006 = vrot.slane %v4896, 2
        %v5007 = vsel %vm4962, %v5005, %v5006
        %v5008 = vrot.slane %v4833, 2
        %v5009 = vrot.slane %v4897, 2
        %v5010 = vsel %vm4962, %v5008, %v5009
        %s5027 = scalar_lea.vmem [#allocation3], 576
        %v5028 = vld [vmem:[%s5027] sm:$0xf]
        %v5029 = vld [vmem:[%s5027 + $0x4] sm:$0xf]
        %v5030 = vld [vmem:[%s5027 + $0x8] sm:$0xf]
        %v5031 = vld [vmem:[%s5027 + $0xc] sm:$0xf]
        %v5032 = vld [vmem:[%s5027 + $0x10] sm:$0xf]
        %v5033 = vld [vmem:[%s5027 + $0x14] sm:$0xf]
        %v5034 = vld [vmem:[%s5027 + $0x18] sm:$0xf]
        %v5035 = vld [vmem:[%s5027 + $0x1c] sm:$0xf]
        %v5036 = vld [vmem:[%s5027 + $0x20] sm:$0xf]
        %v5037 = vld [vmem:[%s5027 + $0x24] sm:$0xf]
        %v5038 = vld [vmem:[%s5027 + $0x28] sm:$0xf]
        %v5039 = vld [vmem:[%s5027 + $0x2c] sm:$0xf]
        %v5040 = vld [vmem:[%s5027 + $0x30] sm:$0xf]
        %v5041 = vld [vmem:[%s5027 + $0x34] sm:$0xf]
        %v5042 = vld [vmem:[%s5027 + $0x38] sm:$0xf]
        %v5043 = vld [vmem:[%s5027 + $0x3c] sm:$0xf]
        %v5044 = vld [vmem:[%s5027 + $0x40] sm:$0xf]
        %v5045 = vld [vmem:[%s5027 + $0x44] sm:$0xf]
        %v5046 = vld [vmem:[%s5027 + $0x48] sm:$0xf]
        %v5047 = vld [vmem:[%s5027 + $0x4c] sm:$0xf]
        %v5048 = vld [vmem:[%s5027 + $0x50] sm:$0xf]
        %v5049 = vld [vmem:[%s5027 + $0x54] sm:$0xf]
        %v5050 = vld [vmem:[%s5027 + $0x58] sm:$0xf]
        %v5051 = vld [vmem:[%s5027 + $0x5c] sm:$0xf]
        %v5052 = vld [vmem:[%s5027 + $0x60] sm:$0xf]
        %v5053 = vld [vmem:[%s5027 + $0x64] sm:$0xf]
        %v5054 = vld [vmem:[%s5027 + $0x68] sm:$0xf]
        %v5055 = vld [vmem:[%s5027 + $0x6c] sm:$0xf]
        %v5056 = vld [vmem:[%s5027 + $0x70] sm:$0xf]
        %v5057 = vld [vmem:[%s5027 + $0x74] sm:$0xf]
        %v5058 = vld [vmem:[%s5027 + $0x78] sm:$0xf]
        %v5059 = vld [vmem:[%s5027 + $0x7c] sm:$0xf]
        %v5060 = vld [vmem:[%s5027 + $0x80] sm:$0xf]
        %v5061 = vld [vmem:[%s5027 + $0x84] sm:$0xf]
        %v5062 = vld [vmem:[%s5027 + $0x88] sm:$0xf]
        %v5063 = vld [vmem:[%s5027 + $0x8c] sm:$0xf]
        %v5064 = vld [vmem:[%s5027 + $0x90] sm:$0xf]
        %v5065 = vld [vmem:[%s5027 + $0x94] sm:$0xf]
        %v5066 = vld [vmem:[%s5027 + $0x98] sm:$0xf]
        %v5067 = vld [vmem:[%s5027 + $0x9c] sm:$0xf]
        %v5068 = vld [vmem:[%s5027 + $0xa0] sm:$0xf]
        %v5069 = vld [vmem:[%s5027 + $0xa4] sm:$0xf]
        %v5070 = vld [vmem:[%s5027 + $0xa8] sm:$0xf]
        %v5071 = vld [vmem:[%s5027 + $0xac] sm:$0xf]
        %v5072 = vld [vmem:[%s5027 + $0xb0] sm:$0xf]
        %v5073 = vld [vmem:[%s5027 + $0xb4] sm:$0xf]
        %v5074 = vld [vmem:[%s5027 + $0xb8] sm:$0xf]
        %v5075 = vld [vmem:[%s5027 + $0xbc] sm:$0xf]
        %v5076 = vld [vmem:[%s1278] sm:$0xf]
        %v5077 = vld [vmem:[%s1278 + $0x4] sm:$0xf]
        %v5078 = vld [vmem:[%s1278 + $0x8] sm:$0x3]
        %v5079 = vld [vmem:[%s1278 + $0xc] sm:$0xf]
        %v5080 = vld [vmem:[%s1278 + $0x10] sm:$0xf]
        %v5081 = vld [vmem:[%s1278 + $0x14] sm:$0x3]
        %v5082 = vld [vmem:[%s1278 + $0x18] sm:$0xf]
        %v5083 = vld [vmem:[%s1278 + $0x1c] sm:$0xf]
        %v5084 = vld [vmem:[%s1278 + $0x20] sm:$0x3]
        %v5085 = vld [vmem:[%s1278 + $0x24] sm:$0xf]
        %v5086 = vld [vmem:[%s1278 + $0x28] sm:$0xf]
        %v5087 = vld [vmem:[%s1278 + $0x2c] sm:$0x3]
        %v5088 = vld [vmem:[%s1278 + $0x30] sm:$0xf]
        %v5089 = vld [vmem:[%s1278 + $0x34] sm:$0xf]
        %v5090 = vld [vmem:[%s1278 + $0x38] sm:$0x3]
        %v5091 = vld [vmem:[%s1278 + $0x3c] sm:$0xf]
        %v5092 = vld [vmem:[%s1278 + $0x40] sm:$0xf]
        %v5093 = vld [vmem:[%s1278 + $0x44] sm:$0x3]
        %v5094 = vld [vmem:[%s1278 + $0x48] sm:$0xf]
        %v5095 = vld [vmem:[%s1278 + $0x4c] sm:$0xf]
        %v5096 = vld [vmem:[%s1278 + $0x50] sm:$0x3]
        %v5097 = vld [vmem:[%s1278 + $0x54] sm:$0xf]
        %v5098 = vld [vmem:[%s1278 + $0x58] sm:$0xf]
        %v5099 = vld [vmem:[%s1278 + $0x5c] sm:$0x3]
        %v5100 = vld [vmem:[%s1278 + $0x60] sm:$0xf]
        %v5101 = vld [vmem:[%s1278 + $0x64] sm:$0xf]
        %v5102 = vld [vmem:[%s1278 + $0x68] sm:$0x3]
        %v5103 = vld [vmem:[%s1278 + $0x6c] sm:$0xf]
        %v5104 = vld [vmem:[%s1278 + $0x70] sm:$0xf]
        %v5105 = vld [vmem:[%s1278 + $0x74] sm:$0x3]
        %v5106 = vld [vmem:[%s1278 + $0x78] sm:$0xf]
        %v5107 = vld [vmem:[%s1278 + $0x7c] sm:$0xf]
        %v5108 = vld [vmem:[%s1278 + $0x80] sm:$0x3]
        %v5109 = vld [vmem:[%s1278 + $0x84] sm:$0xf]
        %v5110 = vld [vmem:[%s1278 + $0x88] sm:$0xf]
        %v5111 = vld [vmem:[%s1278 + $0x8c] sm:$0x3]
        %v5112 = vld [vmem:[%s1278 + $0x90] sm:$0xf]
        %v5113 = vld [vmem:[%s1278 + $0x94] sm:$0xf]
        %v5114 = vld [vmem:[%s1278 + $0x98] sm:$0x3]
        %v5115 = vld [vmem:[%s1278 + $0x9c] sm:$0xf]
        %v5116 = vld [vmem:[%s1278 + $0xa0] sm:$0xf]
        %v5117 = vld [vmem:[%s1278 + $0xa4] sm:$0x3]
        %v5118 = vld [vmem:[%s1278 + $0xa8] sm:$0xf]
        %v5119 = vld [vmem:[%s1278 + $0xac] sm:$0xf]
        %v5120 = vld [vmem:[%s1278 + $0xb0] sm:$0x3]
        %v5121 = vld [vmem:[%s1278 + $0xb4] sm:$0xf]
        %v5122 = vld [vmem:[%s1278 + $0xb8] sm:$0xf]
        %v5123 = vld [vmem:[%s1278 + $0xbc] sm:$0x3]
        %v5156 = vunpack.c.l.b16 %v5076
        %v5157 = vunpack.c.l.b16 %v5077
        %v5158 = vunpack.c.l.b16 %v5079
        %v5159 = vunpack.c.l.b16 %v5080
        %v5160 = vunpack.c.l.b16 %v5082
        %v5161 = vunpack.c.l.b16 %v5083
        %v5162 = vunpack.c.l.b16 %v5085
        %v5163 = vunpack.c.l.b16 %v5086
        %v5164 = vunpack.c.l.b16 %v5088
        %v5165 = vunpack.c.l.b16 %v5089
        %v5166 = vunpack.c.l.b16 %v5091
        %v5167 = vunpack.c.l.b16 %v5092
        %v5168 = vunpack.c.l.b16 %v5094
        %v5169 = vunpack.c.l.b16 %v5095
        %v5170 = vunpack.c.l.b16 %v5097
        %v5171 = vunpack.c.l.b16 %v5098
        %v5172 = vunpack.c.l.b16 %v5100
        %v5173 = vunpack.c.l.b16 %v5101
        %v5174 = vunpack.c.l.b16 %v5103
        %v5175 = vunpack.c.l.b16 %v5104
        %v5176 = vunpack.c.l.b16 %v5106
        %v5177 = vunpack.c.l.b16 %v5107
        %v5178 = vunpack.c.l.b16 %v5109
        %v5179 = vunpack.c.l.b16 %v5110
        %v5180 = vunpack.c.l.b16 %v5112
        %v5181 = vunpack.c.l.b16 %v5113
        %v5182 = vunpack.c.l.b16 %v5115
        %v5183 = vunpack.c.l.b16 %v5116
        %v5184 = vunpack.c.l.b16 %v5118
        %v5185 = vunpack.c.l.b16 %v5119
        %v5186 = vunpack.c.l.b16 %v5121
        %v5187 = vunpack.c.l.b16 %v5122
        %v5188 = vpack.c.b16 %v5157, %v5156
        %v5189 = vpack.c.b16 %v5159, %v5158
        %v5190 = vpack.c.b16 %v5161, %v5160
        %v5191 = vpack.c.b16 %v5163, %v5162
        %v5192 = vpack.c.b16 %v5165, %v5164
        %v5193 = vpack.c.b16 %v5167, %v5166
        %v5194 = vpack.c.b16 %v5169, %v5168
        %v5195 = vpack.c.b16 %v5171, %v5170
        %v5196 = vpack.c.b16 %v5173, %v5172
        %v5197 = vpack.c.b16 %v5175, %v5174
        %v5198 = vpack.c.b16 %v5177, %v5176
        %v5199 = vpack.c.b16 %v5179, %v5178
        %v5200 = vpack.c.b16 %v5181, %v5180
        %v5201 = vpack.c.b16 %v5183, %v5182
        %v5202 = vpack.c.b16 %v5185, %v5184
        %v5203 = vpack.c.b16 %v5187, %v5186
        %v5236 = vunpack.c.l.b16 %v5078
        %v5237 = vunpack.c.l.b16 %v5081
        %v5238 = vunpack.c.l.b16 %v5084
        %v5239 = vunpack.c.l.b16 %v5087
        %v5240 = vunpack.c.l.b16 %v5090
        %v5241 = vunpack.c.l.b16 %v5093
        %v5242 = vunpack.c.l.b16 %v5096
        %v5243 = vunpack.c.l.b16 %v5099
        %v5244 = vunpack.c.l.b16 %v5102
        %v5245 = vunpack.c.l.b16 %v5105
        %v5246 = vunpack.c.l.b16 %v5108
        %v5247 = vunpack.c.l.b16 %v5111
        %v5248 = vunpack.c.l.b16 %v5114
        %v5249 = vunpack.c.l.b16 %v5117
        %v5250 = vunpack.c.l.b16 %v5120
        %v5251 = vunpack.c.l.b16 %v5123
        %v5252 = vpack.c.b16 %v5236, %v5236
        %v5253 = vpack.c.b16 %v5237, %v5237
        %v5254 = vpack.c.b16 %v5238, %v5238
        %v5255 = vpack.c.b16 %v5239, %v5239
        %v5256 = vpack.c.b16 %v5240, %v5240
        %v5257 = vpack.c.b16 %v5241, %v5241
        %v5258 = vpack.c.b16 %v5242, %v5242
        %v5259 = vpack.c.b16 %v5243, %v5243
        %v5260 = vpack.c.b16 %v5244, %v5244
        %v5261 = vpack.c.b16 %v5245, %v5245
        %v5262 = vpack.c.b16 %v5246, %v5246
        %v5263 = vpack.c.b16 %v5247, %v5247
        %v5264 = vpack.c.b16 %v5248, %v5248
        %v5265 = vpack.c.b16 %v5249, %v5249
        %v5266 = vpack.c.b16 %v5250, %v5250
        %v5267 = vpack.c.b16 %v5251, %v5251
        %v5268 = vrot.slane %v5188, 1
        %v5269 = vrot.slane %v5252, 1
        %v5270 = vsel %vm749, %v5268, %v5269
        %v5271 = vrot.slane %v5189, 1
        %v5272 = vrot.slane %v5253, 1
        %v5273 = vsel %vm749, %v5271, %v5272
        %v5274 = vrot.slane %v5190, 1
        %v5275 = vrot.slane %v5254, 1
        %v5276 = vsel %vm749, %v5274, %v5275
        %v5277 = vrot.slane %v5191, 1
        %v5278 = vrot.slane %v5255, 1
        %v5279 = vsel %vm749, %v5277, %v5278
        %v5280 = vrot.slane %v5192, 1
        %v5281 = vrot.slane %v5256, 1
        %v5282 = vsel %vm749, %v5280, %v5281
        %v5283 = vrot.slane %v5193, 1
        %v5284 = vrot.slane %v5257, 1
        %v5285 = vsel %vm749, %v5283, %v5284
        %v5286 = vrot.slane %v5194, 1
        %v5287 = vrot.slane %v5258, 1
        %v5288 = vsel %vm749, %v5286, %v5287
        %v5289 = vrot.slane %v5195, 1
        %v5290 = vrot.slane %v5259, 1
        %v5291 = vsel %vm749, %v5289, %v5290
        %v5292 = vrot.slane %v5196, 1
        %v5293 = vrot.slane %v5260, 1
        %v5294 = vsel %vm749, %v5292, %v5293
        %v5295 = vrot.slane %v5197, 1
        %v5296 = vrot.slane %v5261, 1
        %v5297 = vsel %vm749, %v5295, %v5296
        %v5298 = vrot.slane %v5198, 1
        %v5299 = vrot.slane %v5262, 1
        %v5300 = vsel %vm749, %v5298, %v5299
        %v5301 = vrot.slane %v5199, 1
        %v5302 = vrot.slane %v5263, 1
        %v5303 = vsel %vm749, %v5301, %v5302
        %v5304 = vrot.slane %v5200, 1
        %v5305 = vrot.slane %v5264, 1
        %v5306 = vsel %vm749, %v5304, %v5305
        %v5307 = vrot.slane %v5201, 1
        %v5308 = vrot.slane %v5265, 1
        %v5309 = vsel %vm749, %v5307, %v5308
        %v5310 = vrot.slane %v5202, 1
        %v5311 = vrot.slane %v5266, 1
        %v5312 = vsel %vm749, %v5310, %v5311
        %v5313 = vrot.slane %v5203, 1
        %v5314 = vrot.slane %v5267, 1
        %v5315 = vsel %vm749, %v5313, %v5314
        %v5332 = vrot.slane %v5188, 2
        %v5333 = vrot.slane %v5252, 2
        %v5334 = vsel %vm4962, %v5332, %v5333
        %v5335 = vrot.slane %v5189, 2
        %v5336 = vrot.slane %v5253, 2
        %v5337 = vsel %vm4962, %v5335, %v5336
        %v5338 = vrot.slane %v5190, 2
        %v5339 = vrot.slane %v5254, 2
        %v5340 = vsel %vm4962, %v5338, %v5339
        %v5341 = vrot.slane %v5191, 2
        %v5342 = vrot.slane %v5255, 2
        %v5343 = vsel %vm4962, %v5341, %v5342
        %v5344 = vrot.slane %v5192, 2
        %v5345 = vrot.slane %v5256, 2
        %v5346 = vsel %vm4962, %v5344, %v5345
        %v5347 = vrot.slane %v5193, 2
        %v5348 = vrot.slane %v5257, 2
        %v5349 = vsel %vm4962, %v5347, %v5348
        %v5350 = vrot.slane %v5194, 2
        %v5351 = vrot.slane %v5258, 2
        %v5352 = vsel %vm4962, %v5350, %v5351
        %v5353 = vrot.slane %v5195, 2
        %v5354 = vrot.slane %v5259, 2
        %v5355 = vsel %vm4962, %v5353, %v5354
        %v5356 = vrot.slane %v5196, 2
        %v5357 = vrot.slane %v5260, 2
        %v5358 = vsel %vm4962, %v5356, %v5357
        %v5359 = vrot.slane %v5197, 2
        %v5360 = vrot.slane %v5261, 2
        %v5361 = vsel %vm4962, %v5359, %v5360
        %v5362 = vrot.slane %v5198, 2
        %v5363 = vrot.slane %v5262, 2
        %v5364 = vsel %vm4962, %v5362, %v5363
        %v5365 = vrot.slane %v5199, 2
        %v5366 = vrot.slane %v5263, 2
        %v5367 = vsel %vm4962, %v5365, %v5366
        %v5368 = vrot.slane %v5200, 2
        %v5369 = vrot.slane %v5264, 2
        %v5370 = vsel %vm4962, %v5368, %v5369
        %v5371 = vrot.slane %v5201, 2
        %v5372 = vrot.slane %v5265, 2
        %v5373 = vsel %vm4962, %v5371, %v5372
        %v5374 = vrot.slane %v5202, 2
        %v5375 = vrot.slane %v5266, 2
        %v5376 = vsel %vm4962, %v5374, %v5375
        %v5377 = vrot.slane %v5203, 2
        %v5378 = vrot.slane %v5267, 2
        %v5379 = vsel %vm4962, %v5377, %v5378
        %s5396 = scalar_lea.vmem [#allocation3], 768
        %v5397 = vld [vmem:[%s5396] sm:$0xf]
        %v5398 = vld [vmem:[%s5396 + $0x4] sm:$0xf]
        %v5399 = vld [vmem:[%s5396 + $0x8] sm:$0xf]
        %v5400 = vld [vmem:[%s5396 + $0xc] sm:$0xf]
        %v5401 = vld [vmem:[%s5396 + $0x10] sm:$0xf]
        %v5402 = vld [vmem:[%s5396 + $0x14] sm:$0xf]
        %v5403 = vld [vmem:[%s5396 + $0x18] sm:$0xf]
        %v5404 = vld [vmem:[%s5396 + $0x1c] sm:$0xf]
        %v5405 = vld [vmem:[%s5396 + $0x20] sm:$0xf]
        %v5406 = vld [vmem:[%s5396 + $0x24] sm:$0xf]
        %v5407 = vld [vmem:[%s5396 + $0x28] sm:$0xf]
        %v5408 = vld [vmem:[%s5396 + $0x2c] sm:$0xf]
        %v5409 = vld [vmem:[%s5396 + $0x30] sm:$0xf]
        %v5410 = vld [vmem:[%s5396 + $0x34] sm:$0xf]
        %v5411 = vld [vmem:[%s5396 + $0x38] sm:$0xf]
        %v5412 = vld [vmem:[%s5396 + $0x3c] sm:$0xf]
        %v5413 = vld [vmem:[%s5396 + $0x40] sm:$0xf]
        %v5414 = vld [vmem:[%s5396 + $0x44] sm:$0xf]
        %v5415 = vld [vmem:[%s5396 + $0x48] sm:$0xf]
        %v5416 = vld [vmem:[%s5396 + $0x4c] sm:$0xf]
        %v5417 = vld [vmem:[%s5396 + $0x50] sm:$0xf]
        %v5418 = vld [vmem:[%s5396 + $0x54] sm:$0xf]
        %v5419 = vld [vmem:[%s5396 + $0x58] sm:$0xf]
        %v5420 = vld [vmem:[%s5396 + $0x5c] sm:$0xf]
        %v5421 = vld [vmem:[%s5396 + $0x60] sm:$0xf]
        %v5422 = vld [vmem:[%s5396 + $0x64] sm:$0xf]
        %v5423 = vld [vmem:[%s5396 + $0x68] sm:$0xf]
        %v5424 = vld [vmem:[%s5396 + $0x6c] sm:$0xf]
        %v5425 = vld [vmem:[%s5396 + $0x70] sm:$0xf]
        %v5426 = vld [vmem:[%s5396 + $0x74] sm:$0xf]
        %v5427 = vld [vmem:[%s5396 + $0x78] sm:$0xf]
        %v5428 = vld [vmem:[%s5396 + $0x7c] sm:$0xf]
        %v5429 = vld [vmem:[%s5396 + $0x80] sm:$0xf]
        %v5430 = vld [vmem:[%s5396 + $0x84] sm:$0xf]
        %v5431 = vld [vmem:[%s5396 + $0x88] sm:$0xf]
        %v5432 = vld [vmem:[%s5396 + $0x8c] sm:$0xf]
        %v5433 = vld [vmem:[%s5396 + $0x90] sm:$0xf]
        %v5434 = vld [vmem:[%s5396 + $0x94] sm:$0xf]
        %v5435 = vld [vmem:[%s5396 + $0x98] sm:$0xf]
        %v5436 = vld [vmem:[%s5396 + $0x9c] sm:$0xf]
        %v5437 = vld [vmem:[%s5396 + $0xa0] sm:$0xf]
        %v5438 = vld [vmem:[%s5396 + $0xa4] sm:$0xf]
        %v5439 = vld [vmem:[%s5396 + $0xa8] sm:$0xf]
        %v5440 = vld [vmem:[%s5396 + $0xac] sm:$0xf]
        %v5441 = vld [vmem:[%s5396 + $0xb0] sm:$0xf]
        %v5442 = vld [vmem:[%s5396 + $0xb4] sm:$0xf]
        %v5443 = vld [vmem:[%s5396 + $0xb8] sm:$0xf]
        %v5444 = vld [vmem:[%s5396 + $0xbc] sm:$0xf]
        %v5493 = vunpack.c.l.b16 %v5397
        %v5494 = vunpack.c.l.b16 %v5398
        %v5495 = vunpack.c.l.b16 %v5399
        %v5496 = vunpack.c.l.b16 %v5400
        %v5497 = vunpack.c.l.b16 %v5401
        %v5498 = vunpack.c.l.b16 %v5402
        %v5499 = vunpack.c.l.b16 %v5403
        %v5500 = vunpack.c.l.b16 %v5404
        %v5501 = vunpack.c.l.b16 %v5405
        %v5502 = vunpack.c.l.b16 %v5406
        %v5503 = vunpack.c.l.b16 %v5407
        %v5504 = vunpack.c.l.b16 %v5408
        %v5505 = vunpack.c.l.b16 %v5409
        %v5506 = vunpack.c.l.b16 %v5410
        %v5507 = vunpack.c.l.b16 %v5411
        %v5508 = vunpack.c.l.b16 %v5412
        %v5509 = vunpack.c.l.b16 %v5413
        %v5510 = vunpack.c.l.b16 %v5414
        %v5511 = vunpack.c.l.b16 %v5415
        %v5512 = vunpack.c.l.b16 %v5416
        %v5513 = vunpack.c.l.b16 %v5417
        %v5514 = vunpack.c.l.b16 %v5418
        %v5515 = vunpack.c.l.b16 %v5419
        %v5516 = vunpack.c.l.b16 %v5420
        %v5517 = vunpack.c.l.b16 %v5421
        %v5518 = vunpack.c.l.b16 %v5422
        %v5519 = vunpack.c.l.b16 %v5423
        %v5520 = vunpack.c.l.b16 %v5424
        %v5521 = vunpack.c.l.b16 %v5425
        %v5522 = vunpack.c.l.b16 %v5426
        %v5523 = vunpack.c.l.b16 %v5427
        %v5524 = vunpack.c.l.b16 %v5428
        %v5525 = vunpack.c.l.b16 %v5429
        %v5526 = vunpack.c.l.b16 %v5430
        %v5527 = vunpack.c.l.b16 %v5431
        %v5528 = vunpack.c.l.b16 %v5432
        %v5529 = vunpack.c.l.b16 %v5433
        %v5530 = vunpack.c.l.b16 %v5434
        %v5531 = vunpack.c.l.b16 %v5435
        %v5532 = vunpack.c.l.b16 %v5436
        %v5533 = vunpack.c.l.b16 %v5437
        %v5534 = vunpack.c.l.b16 %v5438
        %v5535 = vunpack.c.l.b16 %v5439
        %v5536 = vunpack.c.l.b16 %v5440
        %v5537 = vunpack.c.l.b16 %v5441
        %v5538 = vunpack.c.l.b16 %v5442
        %v5539 = vunpack.c.l.b16 %v5443
        %v5540 = vunpack.c.l.b16 %v5444
        %v5541 = vpack.c.b16 %v5494, %v5493
        %v5542 = vpack.c.b16 %v5496, %v5495
        %v5543 = vpack.c.b16 %v5498, %v5497
        %v5544 = vpack.c.b16 %v5500, %v5499
        %v5545 = vpack.c.b16 %v5502, %v5501
        %v5546 = vpack.c.b16 %v5504, %v5503
        %v5547 = vpack.c.b16 %v5506, %v5505
        %v5548 = vpack.c.b16 %v5508, %v5507
        %v5549 = vpack.c.b16 %v5510, %v5509
        %v5550 = vpack.c.b16 %v5512, %v5511
        %v5551 = vpack.c.b16 %v5514, %v5513
        %v5552 = vpack.c.b16 %v5516, %v5515
        %v5553 = vpack.c.b16 %v5518, %v5517
        %v5554 = vpack.c.b16 %v5520, %v5519
        %v5555 = vpack.c.b16 %v5522, %v5521
        %v5556 = vpack.c.b16 %v5524, %v5523
        %v5557 = vpack.c.b16 %v5526, %v5525
        %v5558 = vpack.c.b16 %v5528, %v5527
        %v5559 = vpack.c.b16 %v5530, %v5529
        %v5560 = vpack.c.b16 %v5532, %v5531
        %v5561 = vpack.c.b16 %v5534, %v5533
        %v5562 = vpack.c.b16 %v5536, %v5535
        %v5563 = vpack.c.b16 %v5538, %v5537
        %v5564 = vpack.c.b16 %v5540, %v5539
        %5589 = vmatprep.subr.bf16.mxu0 0
        %5590 = vmatpush1.bf16.msra.mxu0 %v5541
        %5591 = vmatprep.subr.bf16.mxu0 0
        %5592 = vmatpush1.bf16.msra.mxu0 %v5542
        %5593 = vmatprep.subr.bf16.mxu0 0
        %5594 = vmatpush1.bf16.msra.mxu0 %v5543
        %5595 = vmatprep.subr.bf16.mxu0 0
        %5596 = vmatpush1.bf16.msra.mxu0 %v5544
        %5597 = vmatprep.subr.bf16.mxu0 0
        %5598 = vmatpush1.bf16.msra.mxu0 %v5545
        %5599 = vmatprep.subr.bf16.mxu0 0
        %5600 = vmatpush1.bf16.msra.mxu0 %v5546
        %5601 = vmatprep.subr.bf16.mxu0 0
        %5602 = vmatpush1.bf16.msra.mxu0 %v5547
        %5603 = vmatprep.subr.bf16.mxu0 0
        %5604 = vmatpush1.bf16.msra.mxu0 %v5548
        %5605 = vmatprep.subr.bf16.mxu0 0
        %5606 = vmatpush1.bf16.msra.mxu0 %v5549
        %5607 = vmatprep.subr.bf16.mxu0 0
        %5608 = vmatpush1.bf16.msra.mxu0 %v5550
        %5609 = vmatprep.subr.bf16.mxu0 0
        %5610 = vmatpush1.bf16.msra.mxu0 %v5551
        %5611 = vmatprep.subr.bf16.mxu0 0
        %5612 = vmatpush1.bf16.msra.mxu0 %v5552
        %5613 = vmatprep.subr.bf16.mxu0 0
        %5614 = vmatpush1.bf16.msra.mxu0 %v5553
        %5615 = vmatprep.subr.bf16.mxu0 0
        %5616 = vmatpush1.bf16.msra.mxu0 %v5554
        %5617 = vmatprep.subr.bf16.mxu0 0
        %5618 = vmatpush1.bf16.msra.mxu0 %v5555
        %5619 = vmatprep.subr.bf16.mxu0 0
        %5620 = vmatpush1.bf16.msra.mxu0 %v5556
        %5621 = vmatprep.mubr.bf16.mxu0 %v5270
        %5622 = vmatmul.mubr.bf16.gmra.mrb[0].mxu0 %v5188
        %v5623 = vpop.f32.mrb[0].mxu0
        %v5624 = vadd.f32 0.0, %v5623
        %v5625 = vpop.f32.mrb[0].mxu0
        %v5626 = vpop.f32.mrb[0].mxu0
        %v5627 = vadd.f32 0.0, %v5626
        %v5628 = vpop.f32.mrb[0].mxu0
        %5629 = vmatprep.mubr.bf16.mxu0 %v5273
        %5630 = vmatmul.mubr.bf16.gmra.mrb[0].mxu0 %v5189
        %v5631 = vpop.f32.mrb[0].mxu0
        %v5632 = vadd.f32 0.0, %v5631
        %v5633 = vpop.f32.mrb[0].mxu0
        %v5634 = vpop.f32.mrb[0].mxu0
        %v5635 = vadd.f32 0.0, %v5634
        %v5636 = vpop.f32.mrb[0].mxu0
        %5637 = vmatprep.mubr.bf16.mxu0 %v5276
        %5638 = vmatmul.mubr.bf16.gmra.mrb[0].mxu0 %v5190
        %v5639 = vpop.f32.mrb[0].mxu0
        %v5640 = vadd.f32 0.0, %v5639
        %v5641 = vpop.f32.mrb[0].mxu0
        %v5642 = vpop.f32.mrb[0].mxu0
        %v5643 = vadd.f32 0.0, %v5642
        %v5644 = vpop.f32.mrb[0].mxu0
        %5645 = vmatprep.mubr.bf16.mxu0 %v5279
        %5646 = vmatmul.mubr.bf16.gmra.mrb[0].mxu0 %v5191
        %v5647 = vpop.f32.mrb[0].mxu0
        %v5648 = vadd.f32 0.0, %v5647
        %v5649 = vpop.f32.mrb[0].mxu0
        %v5650 = vpop.f32.mrb[0].mxu0
        %v5651 = vadd.f32 0.0, %v5650
        %v5652 = vpop.f32.mrb[0].mxu0
        %5653 = vmatprep.mubr.bf16.mxu0 %v5282
        %5654 = vmatmul.mubr.bf16.gmra.mrb[0].mxu0 %v5192
        %v5655 = vpop.f32.mrb[0].mxu0
        %v5656 = vadd.f32 0.0, %v5655
        %v5657 = vpop.f32.mrb[0].mxu0
        %v5658 = vpop.f32.mrb[0].mxu0
        %v5659 = vadd.f32 0.0, %v5658
        %v5660 = vpop.f32.mrb[0].mxu0
        %5661 = vmatprep.mubr.bf16.mxu0 %v5285
        %5662 = vmatmul.mubr.bf16.gmra.mrb[0].mxu0 %v5193
        %v5663 = vpop.f32.mrb[0].mxu0
        %v5664 = vadd.f32 0.0, %v5663
        %v5665 = vpop.f32.mrb[0].mxu0
        %v5666 = vpop.f32.mrb[0].mxu0
        %v5667 = vadd.f32 0.0, %v5666
        %v5668 = vpop.f32.mrb[0].mxu0
        %5669 = vmatprep.mubr.bf16.mxu0 %v5288
        %5670 = vmatmul.mubr.bf16.gmra.mrb[0].mxu0 %v5194
        %v5671 = vpop.f32.mrb[0].mxu0
        %v5672 = vadd.f32 0.0, %v5671
        %v5673 = vpop.f32.mrb[0].mxu0
        %v5674 = vpop.f32.mrb[0].mxu0
        %v5675 = vadd.f32 0.0, %v5674
        %v5676 = vpop.f32.mrb[0].mxu0
        %5677 = vmatprep.mubr.bf16.mxu0 %v5291
        %5678 = vmatmul.mubr.bf16.gmra.mrb[0].mxu0 %v5195
        %v5679 = vpop.f32.mrb[0].mxu0
        %v5680 = vadd.f32 0.0, %v5679
        %v5681 = vpop.f32.mrb[0].mxu0
        %v5682 = vpop.f32.mrb[0].mxu0
        %v5683 = vadd.f32 0.0, %v5682
        %v5684 = vpop.f32.mrb[0].mxu0
        %5685 = vmatprep.mubr.bf16.mxu0 %v5294
        %5686 = vmatmul.mubr.bf16.gmra.mrb[0].mxu0 %v5196
        %v5687 = vpop.f32.mrb[0].mxu0
        %v5688 = vadd.f32 0.0, %v5687
        %v5689 = vpop.f32.mrb[0].mxu0
        %v5690 = vpop.f32.mrb[0].mxu0
        %v5691 = vadd.f32 0.0, %v5690
        %v5692 = vpop.f32.mrb[0].mxu0
        %5693 = vmatprep.mubr.bf16.mxu0 %v5297
        %5694 = vmatmul.mubr.bf16.gmra.mrb[0].mxu0 %v5197
        %v5695 = vpop.f32.mrb[0].mxu0
        %v5696 = vadd.f32 0.0, %v5695
        %v5697 = vpop.f32.mrb[0].mxu0
        %v5698 = vpop.f32.mrb[0].mxu0
        %v5699 = vadd.f32 0.0, %v5698
        %v5700 = vpop.f32.mrb[0].mxu0
        %5701 = vmatprep.mubr.bf16.mxu0 %v5300
        %5702 = vmatmul.mubr.bf16.gmra.mrb[0].mxu0 %v5198
        %v5703 = vpop.f32.mrb[0].mxu0
        %v5704 = vadd.f32 0.0, %v5703
        %v5705 = vpop.f32.mrb[0].mxu0
        %v5706 = vpop.f32.mrb[0].mxu0
        %v5707 = vadd.f32 0.0, %v5706
        %v5708 = vpop.f32.mrb[0].mxu0
        %5709 = vmatprep.mubr.bf16.mxu0 %v5303
        %5710 = vmatmul.mubr.bf16.gmra.mrb[0].mxu0 %v5199
        %v5711 = vpop.f32.mrb[0].mxu0
        %v5712 = vadd.f32 0.0, %v5711
        %v5713 = vpop.f32.mrb[0].mxu0
        %v5714 = vpop.f32.mrb[0].mxu0
        %v5715 = vadd.f32 0.0, %v5714
        %v5716 = vpop.f32.mrb[0].mxu0
        %5717 = vmatprep.mubr.bf16.mxu0 %v5306
        %5718 = vmatmul.mubr.bf16.gmra.mrb[0].mxu0 %v5200
        %v5719 = vpop.f32.mrb[0].mxu0
        %v5720 = vadd.f32 0.0, %v5719
        %v5721 = vpop.f32.mrb[0].mxu0
        %v5722 = vpop.f32.mrb[0].mxu0
        %v5723 = vadd.f32 0.0, %v5722
        %v5724 = vpop.f32.mrb[0].mxu0
        %5725 = vmatprep.mubr.bf16.mxu0 %v5309
        %5726 = vmatmul.mubr.bf16.gmra.mrb[0].mxu0 %v5201
        %v5727 = vpop.f32.mrb[0].mxu0
        %v5728 = vadd.f32 0.0, %v5727
        %v5729 = vpop.f32.mrb[0].mxu0
        %v5730 = vpop.f32.mrb[0].mxu0
        %v5731 = vadd.f32 0.0, %v5730
        %v5732 = vpop.f32.mrb[0].mxu0
        %5733 = vmatprep.mubr.bf16.mxu0 %v5312
        %5734 = vmatmul.mubr.bf16.gmra.mrb[0].mxu0 %v5202
        %v5735 = vpop.f32.mrb[0].mxu0
        %v5736 = vadd.f32 0.0, %v5735
        %v5737 = vpop.f32.mrb[0].mxu0
        %v5738 = vpop.f32.mrb[0].mxu0
        %v5739 = vadd.f32 0.0, %v5738
        %v5740 = vpop.f32.mrb[0].mxu0
        %5741 = vmatprep.mubr.bf16.mxu0 %v5315
        %5742 = vmatmul.mubr.bf16.gmra.mrb[0].mxu0 %v5203
        %v5743 = vpop.f32.mrb[0].mxu0
        %v5744 = vadd.f32 0.0, %v5743
        %v5745 = vpop.f32.mrb[0].mxu0
        %v5746 = vpop.f32.mrb[0].mxu0
        %v5747 = vadd.f32 0.0, %v5746
        %v5748 = vpop.f32.mrb[0].mxu0
        %5749 = vdwg.mxu0
        %5750 = vmatprep.subr.bf16.mxu0 0
        %5751 = vmatpush1.bf16.msra.mxu0 %v5557
        %5752 = vmatprep.subr.bf16.mxu0 0
        %5753 = vmatpush1.bf16.msra.mxu0 %v5558
        %5754 = vmatprep.subr.bf16.mxu0 0
        %5755 = vmatpush1.bf16.msra.mxu0 %v5559
        %5756 = vmatprep.subr.bf16.mxu0 0
        %5757 = vmatpush1.bf16.msra.mxu0 %v5560
        %5758 = vmatprep.subr.bf16.mxu0 0
        %5759 = vmatpush1.bf16.msra.mxu0 %v5561
        %5760 = vmatprep.subr.bf16.mxu0 0
        %5761 = vmatpush1.bf16.msra.mxu0 %v5562
        %5762 = vmatprep.subr.bf16.mxu0 0
        %5763 = vmatpush1.bf16.msra.mxu0 %v5563
        %5764 = vmatprep.subr.bf16.mxu0 0
        %5765 = vmatpush1.bf16.msra.mxu0 %v5564
        %5766 = vmatprep.subr.bf16.mxu0 0
        %5767 = vmatpush1.bf16.msra.mxu0 0
        %5768 = vmatprep.subr.bf16.mxu0 0
        %5769 = vmatpush1.bf16.msra.mxu0 0
        %5770 = vmatprep.subr.bf16.mxu0 0
        %5771 = vmatpush1.bf16.msra.mxu0 0
        %5772 = vmatprep.subr.bf16.mxu0 0
        %5773 = vmatpush1.bf16.msra.mxu0 0
        %5774 = vmatprep.subr.bf16.mxu0 0
        %5775 = vmatpush1.bf16.msra.mxu0 0
        %5776 = vmatprep.subr.bf16.mxu0 0
        %5777 = vmatpush1.bf16.msra.mxu0 0
        %5778 = vmatprep.subr.bf16.mxu0 0
        %5779 = vmatpush1.bf16.msra.mxu0 0
        %5780 = vmatprep.subr.bf16.mxu0 0
        %5781 = vmatpush1.bf16.msra.mxu0 0
        %5782 = vmatprep.mubr.bf16.mxu0 0
        %5783 = vmatmul.mubr.bf16.gmra.mrb[0].mxu0 %v5334
        %v5784 = vpop.f32.mrb[0].mxu0
        %v5785 = vadd.f32 %v5624, %v5784
        %v5786 = vpop.f32.mrb[0].mxu0
        %v5787 = vpop.f32.mrb[0].mxu0
        %v5788 = vadd.f32 %v5627, %v5787
        %v5789 = vpop.f32.mrb[0].mxu0
        %5790 = vmatprep.mubr.bf16.mxu0 0
        %5791 = vmatmul.mubr.bf16.gmra.mrb[0].mxu0 %v5337
        %v5792 = vpop.f32.mrb[0].mxu0
        %v5793 = vadd.f32 %v5632, %v5792
        %v5794 = vpop.f32.mrb[0].mxu0
        %v5795 = vpop.f32.mrb[0].mxu0
        %v5796 = vadd.f32 %v5635, %v5795
        %v5797 = vpop.f32.mrb[0].mxu0
        %5798 = vmatprep.mubr.bf16.mxu0 0
        %5799 = vmatmul.mubr.bf16.gmra.mrb[0].mxu0 %v5340
        %v5800 = vpop.f32.mrb[0].mxu0
        %v5801 = vadd.f32 %v5640, %v5800
        %v5802 = vpop.f32.mrb[0].mxu0
        %v5803 = vpop.f32.mrb[0].mxu0
        %v5804 = vadd.f32 %v5643, %v5803
        %v5805 = vpop.f32.mrb[0].mxu0
        %5806 = vmatprep.mubr.bf16.mxu0 0
        %5807 = vmatmul.mubr.bf16.gmra.mrb[0].mxu0 %v5343
        %v5808 = vpop.f32.mrb[0].mxu0
        %v5809 = vadd.f32 %v5648, %v5808
        %v5810 = vpop.f32.mrb[0].mxu0
        %v5811 = vpop.f32.mrb[0].mxu0
        %v5812 = vadd.f32 %v5651, %v5811
        %v5813 = vpop.f32.mrb[0].mxu0
        %5814 = vmatprep.mubr.bf16.mxu0 0
        %5815 = vmatmul.mubr.bf16.gmra.mrb[0].mxu0 %v5346
        %v5816 = vpop.f32.mrb[0].mxu0
        %v5817 = vadd.f32 %v5656, %v5816
        %v5818 = vpop.f32.mrb[0].mxu0
        %v5819 = vpop.f32.mrb[0].mxu0
        %v5820 = vadd.f32 %v5659, %v5819
        %v5821 = vpop.f32.mrb[0].mxu0
        %5822 = vmatprep.mubr.bf16.mxu0 0
        %5823 = vmatmul.mubr.bf16.gmra.mrb[0].mxu0 %v5349
        %v5824 = vpop.f32.mrb[0].mxu0
        %v5825 = vadd.f32 %v5664, %v5824
        %v5826 = vpop.f32.mrb[0].mxu0
        %v5827 = vpop.f32.mrb[0].mxu0
        %v5828 = vadd.f32 %v5667, %v5827
        %v5829 = vpop.f32.mrb[0].mxu0
        %5830 = vmatprep.mubr.bf16.mxu0 0
        %5831 = vmatmul.mubr.bf16.gmra.mrb[0].mxu0 %v5352
        %v5832 = vpop.f32.mrb[0].mxu0
        %v5833 = vadd.f32 %v5672, %v5832
        %v5834 = vpop.f32.mrb[0].mxu0
        %v5835 = vpop.f32.mrb[0].mxu0
        %v5836 = vadd.f32 %v5675, %v5835
        %v5837 = vpop.f32.mrb[0].mxu0
        %5838 = vmatprep.mubr.bf16.mxu0 0
        %5839 = vmatmul.mubr.bf16.gmra.mrb[0].mxu0 %v5355
        %v5840 = vpop.f32.mrb[0].mxu0
        %v5841 = vadd.f32 %v5680, %v5840
        %v5842 = vpop.f32.mrb[0].mxu0
        %v5843 = vpop.f32.mrb[0].mxu0
        %v5844 = vadd.f32 %v5683, %v5843
        %v5845 = vpop.f32.mrb[0].mxu0
        %5846 = vmatprep.mubr.bf16.mxu0 0
        %5847 = vmatmul.mubr.bf16.gmra.mrb[0].mxu0 %v5358
        %v5848 = vpop.f32.mrb[0].mxu0
        %v5849 = vadd.f32 %v5688, %v5848
        %v5850 = vpop.f32.mrb[0].mxu0
        %v5851 = vpop.f32.mrb[0].mxu0
        %v5852 = vadd.f32 %v5691, %v5851
        %v5853 = vpop.f32.mrb[0].mxu0
        %5854 = vmatprep.mubr.bf16.mxu0 0
        %5855 = vmatmul.mubr.bf16.gmra.mrb[0].mxu0 %v5361
        %v5856 = vpop.f32.mrb[0].mxu0
        %v5857 = vadd.f32 %v5696, %v5856
        %v5858 = vpop.f32.mrb[0].mxu0
        %v5859 = vpop.f32.mrb[0].mxu0
        %v5860 = vadd.f32 %v5699, %v5859
        %v5861 = vpop.f32.mrb[0].mxu0
        %5862 = vmatprep.mubr.bf16.mxu0 0
        %5863 = vmatmul.mubr.bf16.gmra.mrb[0].mxu0 %v5364
        %v5864 = vpop.f32.mrb[0].mxu0
        %v5865 = vadd.f32 %v5704, %v5864
        %v5866 = vpop.f32.mrb[0].mxu0
        %v5867 = vpop.f32.mrb[0].mxu0
        %v5868 = vadd.f32 %v5707, %v5867
        %v5869 = vpop.f32.mrb[0].mxu0
        %5870 = vmatprep.mubr.bf16.mxu0 0
        %5871 = vmatmul.mubr.bf16.gmra.mrb[0].mxu0 %v5367
        %v5872 = vpop.f32.mrb[0].mxu0
        %v5873 = vadd.f32 %v5712, %v5872
        %v5874 = vpop.f32.mrb[0].mxu0
        %v5875 = vpop.f32.mrb[0].mxu0
        %v5876 = vadd.f32 %v5715, %v5875
        %v5877 = vpop.f32.mrb[0].mxu0
        %5878 = vmatprep.mubr.bf16.mxu0 0
        %5879 = vmatmul.mubr.bf16.gmra.mrb[0].mxu0 %v5370
        %v5880 = vpop.f32.mrb[0].mxu0
        %v5881 = vadd.f32 %v5720, %v5880
        %v5882 = vpop.f32.mrb[0].mxu0
        %v5883 = vpop.f32.mrb[0].mxu0
        %v5884 = vadd.f32 %v5723, %v5883
        %v5885 = vpop.f32.mrb[0].mxu0
        %5886 = vmatprep.mubr.bf16.mxu0 0
        %5887 = vmatmul.mubr.bf16.gmra.mrb[0].mxu0 %v5373
        %v5888 = vpop.f32.mrb[0].mxu0
        %v5889 = vadd.f32 %v5728, %v5888
        %v5890 = vpop.f32.mrb[0].mxu0
        %v5891 = vpop.f32.mrb[0].mxu0
        %v5892 = vadd.f32 %v5731, %v5891
        %v5893 = vpop.f32.mrb[0].mxu0
        %5894 = vmatprep.mubr.bf16.mxu0 0
        %5895 = vmatmul.mubr.bf16.gmra.mrb[0].mxu0 %v5376
        %v5896 = vpop.f32.mrb[0].mxu0
        %v5897 = vadd.f32 %v5736, %v5896
        %v5898 = vpop.f32.mrb[0].mxu0
        %v5899 = vpop.f32.mrb[0].mxu0
        %v5900 = vadd.f32 %v5739, %v5899
        %v5901 = vpop.f32.mrb[0].mxu0
        %5902 = vmatprep.mubr.bf16.mxu0 0
        %5903 = vmatmul.mubr.bf16.gmra.mrb[0].mxu0 %v5379
        %v5904 = vpop.f32.mrb[0].mxu0
        %v5905 = vadd.f32 %v5744, %v5904
        %v5906 = vpop.f32.mrb[0].mxu0
        %v5907 = vpop.f32.mrb[0].mxu0
        %v5908 = vadd.f32 %v5747, %v5907
        %v5909 = vpop.f32.mrb[0].mxu0
        %5910 = vdwg.mxu0
        %v5959 = vunpack.c.l.b16 %v5028
        %v5960 = vunpack.c.l.b16 %v5029
        %v5961 = vunpack.c.l.b16 %v5030
        %v5962 = vunpack.c.l.b16 %v5031
        %v5963 = vunpack.c.l.b16 %v5032
        %v5964 = vunpack.c.l.b16 %v5033
        %v5965 = vunpack.c.l.b16 %v5034
        %v5966 = vunpack.c.l.b16 %v5035
        %v5967 = vunpack.c.l.b16 %v5036
        %v5968 = vunpack.c.l.b16 %v5037
        %v5969 = vunpack.c.l.b16 %v5038
        %v5970 = vunpack.c.l.b16 %v5039
        %v5971 = vunpack.c.l.b16 %v5040
        %v5972 = vunpack.c.l.b16 %v5041
        %v5973 = vunpack.c.l.b16 %v5042
        %v5974 = vunpack.c.l.b16 %v5043
        %v5975 = vunpack.c.l.b16 %v5044
        %v5976 = vunpack.c.l.b16 %v5045
        %v5977 = vunpack.c.l.b16 %v5046
        %v5978 = vunpack.c.l.b16 %v5047
        %v5979 = vunpack.c.l.b16 %v5048
        %v5980 = vunpack.c.l.b16 %v5049
        %v5981 = vunpack.c.l.b16 %v5050
        %v5982 = vunpack.c.l.b16 %v5051
        %v5983 = vunpack.c.l.b16 %v5052
        %v5984 = vunpack.c.l.b16 %v5053
        %v5985 = vunpack.c.l.b16 %v5054
        %v5986 = vunpack.c.l.b16 %v5055
        %v5987 = vunpack.c.l.b16 %v5056
        %v5988 = vunpack.c.l.b16 %v5057
        %v5989 = vunpack.c.l.b16 %v5058
        %v5990 = vunpack.c.l.b16 %v5059
        %v5991 = vunpack.c.l.b16 %v5060
        %v5992 = vunpack.c.l.b16 %v5061
        %v5993 = vunpack.c.l.b16 %v5062
        %v5994 = vunpack.c.l.b16 %v5063
        %v5995 = vunpack.c.l.b16 %v5064
        %v5996 = vunpack.c.l.b16 %v5065
        %v5997 = vunpack.c.l.b16 %v5066
        %v5998 = vunpack.c.l.b16 %v5067
        %v5999 = vunpack.c.l.b16 %v5068
        %v6000 = vunpack.c.l.b16 %v5069
        %v6001 = vunpack.c.l.b16 %v5070
        %v6002 = vunpack.c.l.b16 %v5071
        %v6003 = vunpack.c.l.b16 %v5072
        %v6004 = vunpack.c.l.b16 %v5073
        %v6005 = vunpack.c.l.b16 %v5074
        %v6006 = vunpack.c.l.b16 %v5075
        %v6007 = vpack.c.b16 %v5960, %v5959
        %v6008 = vpack.c.b16 %v5962, %v5961
        %v6009 = vpack.c.b16 %v5964, %v5963
        %v6010 = vpack.c.b16 %v5966, %v5965
        %v6011 = vpack.c.b16 %v5968, %v5967
        %v6012 = vpack.c.b16 %v5970, %v5969
        %v6013 = vpack.c.b16 %v5972, %v5971
        %v6014 = vpack.c.b16 %v5974, %v5973
        %v6015 = vpack.c.b16 %v5976, %v5975
        %v6016 = vpack.c.b16 %v5978, %v5977
        %v6017 = vpack.c.b16 %v5980, %v5979
        %v6018 = vpack.c.b16 %v5982, %v5981
        %v6019 = vpack.c.b16 %v5984, %v5983
        %v6020 = vpack.c.b16 %v5986, %v5985
        %v6021 = vpack.c.b16 %v5988, %v5987
        %v6022 = vpack.c.b16 %v5990, %v5989
        %v6023 = vpack.c.b16 %v5992, %v5991
        %v6024 = vpack.c.b16 %v5994, %v5993
        %v6025 = vpack.c.b16 %v5996, %v5995
        %v6026 = vpack.c.b16 %v5998, %v5997
        %v6027 = vpack.c.b16 %v6000, %v5999
        %v6028 = vpack.c.b16 %v6002, %v6001
        %v6029 = vpack.c.b16 %v6004, %v6003
        %v6030 = vpack.c.b16 %v6006, %v6005
        %6055 = vmatprep.subr.bf16.mxu0 0
        %6056 = vmatpush1.bf16.msra.mxu0 %v6007
        %6057 = vmatprep.subr.bf16.mxu0 0
        %6058 = vmatpush1.bf16.msra.mxu0 %v6008
        %6059 = vmatprep.subr.bf16.mxu0 0
        %6060 = vmatpush1.bf16.msra.mxu0 %v6009
        %6061 = vmatprep.subr.bf16.mxu0 0
        %6062 = vmatpush1.bf16.msra.mxu0 %v6010
        %6063 = vmatprep.subr.bf16.mxu0 0
        %6064 = vmatpush1.bf16.msra.mxu0 %v6011
        %6065 = vmatprep.subr.bf16.mxu0 0
        %6066 = vmatpush1.bf16.msra.mxu0 %v6012
        %6067 = vmatprep.subr.bf16.mxu0 0
        %6068 = vmatpush1.bf16.msra.mxu0 %v6013
        %6069 = vmatprep.subr.bf16.mxu0 0
        %6070 = vmatpush1.bf16.msra.mxu0 %v6014
        %6071 = vmatprep.subr.bf16.mxu0 0
        %6072 = vmatpush1.bf16.msra.mxu0 %v6015
        %6073 = vmatprep.subr.bf16.mxu0 0
        %6074 = vmatpush1.bf16.msra.mxu0 %v6016
        %6075 = vmatprep.subr.bf16.mxu0 0
        %6076 = vmatpush1.bf16.msra.mxu0 %v6017
        %6077 = vmatprep.subr.bf16.mxu0 0
        %6078 = vmatpush1.bf16.msra.mxu0 %v6018
        %6079 = vmatprep.subr.bf16.mxu0 0
        %6080 = vmatpush1.bf16.msra.mxu0 %v6019
        %6081 = vmatprep.subr.bf16.mxu0 0
        %6082 = vmatpush1.bf16.msra.mxu0 %v6020
        %6083 = vmatprep.subr.bf16.mxu0 0
        %6084 = vmatpush1.bf16.msra.mxu0 %v6021
        %6085 = vmatprep.subr.bf16.mxu0 0
        %6086 = vmatpush1.bf16.msra.mxu0 %v6022
        %6087 = vmatprep.mubr.bf16.mxu0 %v4900
        %6088 = vmatmul.mubr.bf16.gmra.mrb[0].mxu0 %v4818
        %v6089 = vpop.f32.mrb[0].mxu0
        %v6090 = vadd.f32 %v5785, %v6089
        %v6091 = vpop.f32.mrb[0].mxu0
        %v6092 = vpop.f32.mrb[0].mxu0
        %v6093 = vadd.f32 %v5788, %v6092
        %v6094 = vpop.f32.mrb[0].mxu0
        %6095 = vmatprep.mubr.bf16.mxu0 %v4903
        %6096 = vmatmul.mubr.bf16.gmra.mrb[0].mxu0 %v4819
        %v6097 = vpop.f32.mrb[0].mxu0
        %v6098 = vadd.f32 %v5793, %v6097
        %v6099 = vpop.f32.mrb[0].mxu0
        %v6100 = vpop.f32.mrb[0].mxu0
        %v6101 = vadd.f32 %v5796, %v6100
        %v6102 = vpop.f32.mrb[0].mxu0
        %6103 = vmatprep.mubr.bf16.mxu0 %v4906
        %6104 = vmatmul.mubr.bf16.gmra.mrb[0].mxu0 %v4820
        %v6105 = vpop.f32.mrb[0].mxu0
        %v6106 = vadd.f32 %v5801, %v6105
        %v6107 = vpop.f32.mrb[0].mxu0
        %v6108 = vpop.f32.mrb[0].mxu0
        %v6109 = vadd.f32 %v5804, %v6108
        %v6110 = vpop.f32.mrb[0].mxu0
        %6111 = vmatprep.mubr.bf16.mxu0 %v4909
        %6112 = vmatmul.mubr.bf16.gmra.mrb[0].mxu0 %v4821
        %v6113 = vpop.f32.mrb[0].mxu0
        %v6114 = vadd.f32 %v5809, %v6113
        %v6115 = vpop.f32.mrb[0].mxu0
        %v6116 = vpop.f32.mrb[0].mxu0
        %v6117 = vadd.f32 %v5812, %v6116
        %v6118 = vpop.f32.mrb[0].mxu0
        %6119 = vmatprep.mubr.bf16.mxu0 %v4912
        %6120 = vmatmul.mubr.bf16.gmra.mrb[0].mxu0 %v4822
        %v6121 = vpop.f32.mrb[0].mxu0
        %v6122 = vadd.f32 %v5817, %v6121
        %v6123 = vpop.f32.mrb[0].mxu0
        %v6124 = vpop.f32.mrb[0].mxu0
        %v6125 = vadd.f32 %v5820, %v6124
        %v6126 = vpop.f32.mrb[0].mxu0
        %6127 = vmatprep.mubr.bf16.mxu0 %v4915
        %6128 = vmatmul.mubr.bf16.gmra.mrb[0].mxu0 %v4823
        %v6129 = vpop.f32.mrb[0].mxu0
        %v6130 = vadd.f32 %v5825, %v6129
        %v6131 = vpop.f32.mrb[0].mxu0
        %v6132 = vpop.f32.mrb[0].mxu0
        %v6133 = vadd.f32 %v5828, %v6132
        %v6134 = vpop.f32.mrb[0].mxu0
        %6135 = vmatprep.mubr.bf16.mxu0 %v4918
        %6136 = vmatmul.mubr.bf16.gmra.mrb[0].mxu0 %v4824
        %v6137 = vpop.f32.mrb[0].mxu0
        %v6138 = vadd.f32 %v5833, %v6137
        %v6139 = vpop.f32.mrb[0].mxu0
        %v6140 = vpop.f32.mrb[0].mxu0
        %v6141 = vadd.f32 %v5836, %v6140
        %v6142 = vpop.f32.mrb[0].mxu0
        %6143 = vmatprep.mubr.bf16.mxu0 %v4921
        %6144 = vmatmul.mubr.bf16.gmra.mrb[0].mxu0 %v4825
        %v6145 = vpop.f32.mrb[0].mxu0
        %v6146 = vadd.f32 %v5841, %v6145
        %v6147 = vpop.f32.mrb[0].mxu0
        %v6148 = vpop.f32.mrb[0].mxu0
        %v6149 = vadd.f32 %v5844, %v6148
        %v6150 = vpop.f32.mrb[0].mxu0
        %6151 = vmatprep.mubr.bf16.mxu0 %v4924
        %6152 = vmatmul.mubr.bf16.gmra.mrb[0].mxu0 %v4826
        %v6153 = vpop.f32.mrb[0].mxu0
        %v6154 = vadd.f32 %v5849, %v6153
        %v6155 = vpop.f32.mrb[0].mxu0
        %v6156 = vpop.f32.mrb[0].mxu0
        %v6157 = vadd.f32 %v5852, %v6156
        %v6158 = vpop.f32.mrb[0].mxu0
        %6159 = vmatprep.mubr.bf16.mxu0 %v4927
        %6160 = vmatmul.mubr.bf16.gmra.mrb[0].mxu0 %v4827
        %v6161 = vpop.f32.mrb[0].mxu0
        %v6162 = vadd.f32 %v5857, %v6161
        %v6163 = vpop.f32.mrb[0].mxu0
        %v6164 = vpop.f32.mrb[0].mxu0
        %v6165 = vadd.f32 %v5860, %v6164
        %v6166 = vpop.f32.mrb[0].mxu0
        %6167 = vmatprep.mubr.bf16.mxu0 %v4930
        %6168 = vmatmul.mubr.bf16.gmra.mrb[0].mxu0 %v4828
        %v6169 = vpop.f32.mrb[0].mxu0
        %v6170 = vadd.f32 %v5865, %v6169
        %v6171 = vpop.f32.mrb[0].mxu0
        %v6172 = vpop.f32.mrb[0].mxu0
        %v6173 = vadd.f32 %v5868, %v6172
        %v6174 = vpop.f32.mrb[0].mxu0
        %6175 = vmatprep.mubr.bf16.mxu0 %v4933
        %6176 = vmatmul.mubr.bf16.gmra.mrb[0].mxu0 %v4829
        %v6177 = vpop.f32.mrb[0].mxu0
        %v6178 = vadd.f32 %v5873, %v6177
        %v6179 = vpop.f32.mrb[0].mxu0
        %v6180 = vpop.f32.mrb[0].mxu0
        %v6181 = vadd.f32 %v5876, %v6180
        %v6182 = vpop.f32.mrb[0].mxu0
        %6183 = vmatprep.mubr.bf16.mxu0 %v4936
        %6184 = vmatmul.mubr.bf16.gmra.mrb[0].mxu0 %v4830
        %v6185 = vpop.f32.mrb[0].mxu0
        %v6186 = vadd.f32 %v5881, %v6185
        %v6187 = vpop.f32.mrb[0].mxu0
        %v6188 = vpop.f32.mrb[0].mxu0
        %v6189 = vadd.f32 %v5884, %v6188
        %v6190 = vpop.f32.mrb[0].mxu0
        %6191 = vmatprep.mubr.bf16.mxu0 %v4939
        %6192 = vmatmul.mubr.bf16.gmra.mrb[0].mxu0 %v4831
        %v6193 = vpop.f32.mrb[0].mxu0
        %v6194 = vadd.f32 %v5889, %v6193
        %v6195 = vpop.f32.mrb[0].mxu0
        %v6196 = vpop.f32.mrb[0].mxu0
        %v6197 = vadd.f32 %v5892, %v6196
        %v6198 = vpop.f32.mrb[0].mxu0
        %6199 = vmatprep.mubr.bf16.mxu0 %v4942
        %6200 = vmatmul.mubr.bf16.gmra.mrb[0].mxu0 %v4832
        %v6201 = vpop.f32.mrb[0].mxu0
        %v6202 = vadd.f32 %v5897, %v6201
        %v6203 = vpop.f32.mrb[0].mxu0
        %v6204 = vpop.f32.mrb[0].mxu0
        %v6205 = vadd.f32 %v5900, %v6204
        %v6206 = vpop.f32.mrb[0].mxu0
        %6207 = vmatprep.mubr.bf16.mxu0 %v4945
        %6208 = vmatmul.mubr.bf16.gmra.mrb[0].mxu0 %v4833
        %v6209 = vpop.f32.mrb[0].mxu0
        %v6210 = vadd.f32 %v5905, %v6209
        %v6211 = vpop.f32.mrb[0].mxu0
        %v6212 = vpop.f32.mrb[0].mxu0
        %v6213 = vadd.f32 %v5908, %v6212
        %v6214 = vpop.f32.mrb[0].mxu0
        %6215 = vdwg.mxu0
        %6216 = vmatprep.subr.bf16.mxu0 0
        %6217 = vmatpush1.bf16.msra.mxu0 %v6023
        %6218 = vmatprep.subr.bf16.mxu0 0
        %6219 = vmatpush1.bf16.msra.mxu0 %v6024
        %6220 = vmatprep.subr.bf16.mxu0 0
        %6221 = vmatpush1.bf16.msra.mxu0 %v6025
        %6222 = vmatprep.subr.bf16.mxu0 0
        %6223 = vmatpush1.bf16.msra.mxu0 %v6026
        %6224 = vmatprep.subr.bf16.mxu0 0
        %6225 = vmatpush1.bf16.msra.mxu0 %v6027
        %6226 = vmatprep.subr.bf16.mxu0 0
        %6227 = vmatpush1.bf16.msra.mxu0 %v6028
        %6228 = vmatprep.subr.bf16.mxu0 0
        %6229 = vmatpush1.bf16.msra.mxu0 %v6029
        %6230 = vmatprep.subr.bf16.mxu0 0
        %6231 = vmatpush1.bf16.msra.mxu0 %v6030
        %6232 = vmatprep.subr.bf16.mxu0 0
        %6233 = vmatpush1.bf16.msra.mxu0 0
        %6234 = vmatprep.subr.bf16.mxu0 0
        %6235 = vmatpush1.bf16.msra.mxu0 0
        %6236 = vmatprep.subr.bf16.mxu0 0
        %6237 = vmatpush1.bf16.msra.mxu0 0
        %6238 = vmatprep.subr.bf16.mxu0 0
        %6239 = vmatpush1.bf16.msra.mxu0 0
        %6240 = vmatprep.subr.bf16.mxu0 0
        %6241 = vmatpush1.bf16.msra.mxu0 0
        %6242 = vmatprep.subr.bf16.mxu0 0
        %6243 = vmatpush1.bf16.msra.mxu0 0
        %6244 = vmatprep.subr.bf16.mxu0 0
        %6245 = vmatpush1.bf16.msra.mxu0 0
        %6246 = vmatprep.subr.bf16.mxu0 0
        %6247 = vmatpush1.bf16.msra.mxu0 0
        %6248 = vmatprep.mubr.bf16.mxu0 0
        %6249 = vmatmul.mubr.bf16.gmra.mrb[0].mxu0 %v4965
        %v6250 = vpop.f32.mrb[0].mxu0
        %v6251 = vadd.f32 %v6090, %v6250
        %v6252 = vpop.f32.mrb[0].mxu0
        %v6253 = vpop.f32.mrb[0].mxu0
        %v6254 = vadd.f32 %v6093, %v6253
        %v6255 = vpop.f32.mrb[0].mxu0
        %6256 = vmatprep.mubr.bf16.mxu0 0
        %6257 = vmatmul.mubr.bf16.gmra.mrb[0].mxu0 %v4968
        %v6258 = vpop.f32.mrb[0].mxu0
        %v6259 = vadd.f32 %v6098, %v6258
        %v6260 = vpop.f32.mrb[0].mxu0
        %v6261 = vpop.f32.mrb[0].mxu0
        %v6262 = vadd.f32 %v6101, %v6261
        %v6263 = vpop.f32.mrb[0].mxu0
        %6264 = vmatprep.mubr.bf16.mxu0 0
        %6265 = vmatmul.mubr.bf16.gmra.mrb[0].mxu0 %v4971
        %v6266 = vpop.f32.mrb[0].mxu0
        %v6267 = vadd.f32 %v6106, %v6266
        %v6268 = vpop.f32.mrb[0].mxu0
        %v6269 = vpop.f32.mrb[0].mxu0
        %v6270 = vadd.f32 %v6109, %v6269
        %v6271 = vpop.f32.mrb[0].mxu0
        %6272 = vmatprep.mubr.bf16.mxu0 0
        %6273 = vmatmul.mubr.bf16.gmra.mrb[0].mxu0 %v4974
        %v6274 = vpop.f32.mrb[0].mxu0
        %v6275 = vadd.f32 %v6114, %v6274
        %v6276 = vpop.f32.mrb[0].mxu0
        %v6277 = vpop.f32.mrb[0].mxu0
        %v6278 = vadd.f32 %v6117, %v6277
        %v6279 = vpop.f32.mrb[0].mxu0
        %6280 = vmatprep.mubr.bf16.mxu0 0
        %6281 = vmatmul.mubr.bf16.gmra.mrb[0].mxu0 %v4977
        %v6282 = vpop.f32.mrb[0].mxu0
        %v6283 = vadd.f32 %v6122, %v6282
        %v6284 = vpop.f32.mrb[0].mxu0
        %v6285 = vpop.f32.mrb[0].mxu0
        %v6286 = vadd.f32 %v6125, %v6285
        %v6287 = vpop.f32.mrb[0].mxu0
        %6288 = vmatprep.mubr.bf16.mxu0 0
        %6289 = vmatmul.mubr.bf16.gmra.mrb[0].mxu0 %v4980
        %v6290 = vpop.f32.mrb[0].mxu0
        %v6291 = vadd.f32 %v6130, %v6290
        %v6292 = vpop.f32.mrb[0].mxu0
        %v6293 = vpop.f32.mrb[0].mxu0
        %v6294 = vadd.f32 %v6133, %v6293
        %v6295 = vpop.f32.mrb[0].mxu0
        %6296 = vmatprep.mubr.bf16.mxu0 0
        %6297 = vmatmul.mubr.bf16.gmra.mrb[0].mxu0 %v4983
        %v6298 = vpop.f32.mrb[0].mxu0
        %v6299 = vadd.f32 %v6138, %v6298
        %v6300 = vpop.f32.mrb[0].mxu0
        %v6301 = vpop.f32.mrb[0].mxu0
        %v6302 = vadd.f32 %v6141, %v6301
        %v6303 = vpop.f32.mrb[0].mxu0
        %6304 = vmatprep.mubr.bf16.mxu0 0
        %6305 = vmatmul.mubr.bf16.gmra.mrb[0].mxu0 %v4986
        %v6306 = vpop.f32.mrb[0].mxu0
        %v6307 = vadd.f32 %v6146, %v6306
        %v6308 = vpop.f32.mrb[0].mxu0
        %v6309 = vpop.f32.mrb[0].mxu0
        %v6310 = vadd.f32 %v6149, %v6309
        %v6311 = vpop.f32.mrb[0].mxu0
        %6312 = vmatprep.mubr.bf16.mxu0 0
        %6313 = vmatmul.mubr.bf16.gmra.mrb[0].mxu0 %v4989
        %v6314 = vpop.f32.mrb[0].mxu0
        %v6315 = vadd.f32 %v6154, %v6314
        %v6316 = vpop.f32.mrb[0].mxu0
        %v6317 = vpop.f32.mrb[0].mxu0
        %v6318 = vadd.f32 %v6157, %v6317
        %v6319 = vpop.f32.mrb[0].mxu0
        %6320 = vmatprep.mubr.bf16.mxu0 0
        %6321 = vmatmul.mubr.bf16.gmra.mrb[0].mxu0 %v4992
        %v6322 = vpop.f32.mrb[0].mxu0
        %v6323 = vadd.f32 %v6162, %v6322
        %v6324 = vpop.f32.mrb[0].mxu0
        %v6325 = vpop.f32.mrb[0].mxu0
        %v6326 = vadd.f32 %v6165, %v6325
        %v6327 = vpop.f32.mrb[0].mxu0
        %6328 = vmatprep.mubr.bf16.mxu0 0
        %6329 = vmatmul.mubr.bf16.gmra.mrb[0].mxu0 %v4995
        %v6330 = vpop.f32.mrb[0].mxu0
        %v6331 = vadd.f32 %v6170, %v6330
        %v6332 = vpop.f32.mrb[0].mxu0
        %v6333 = vpop.f32.mrb[0].mxu0
        %v6334 = vadd.f32 %v6173, %v6333
        %v6335 = vpop.f32.mrb[0].mxu0
        %6336 = vmatprep.mubr.bf16.mxu0 0
        %6337 = vmatmul.mubr.bf16.gmra.mrb[0].mxu0 %v4998
        %v6338 = vpop.f32.mrb[0].mxu0
        %v6339 = vadd.f32 %v6178, %v6338
        %v6340 = vpop.f32.mrb[0].mxu0
        %v6341 = vpop.f32.mrb[0].mxu0
        %v6342 = vadd.f32 %v6181, %v6341
        %v6343 = vpop.f32.mrb[0].mxu0
        %6344 = vmatprep.mubr.bf16.mxu0 0
        %6345 = vmatmul.mubr.bf16.gmra.mrb[0].mxu0 %v5001
        %v6346 = vpop.f32.mrb[0].mxu0
        %v6347 = vadd.f32 %v6186, %v6346
        %v6348 = vpop.f32.mrb[0].mxu0
        %v6349 = vpop.f32.mrb[0].mxu0
        %v6350 = vadd.f32 %v6189, %v6349
        %v6351 = vpop.f32.mrb[0].mxu0
        %6352 = vmatprep.mubr.bf16.mxu0 0
        %6353 = vmatmul.mubr.bf16.gmra.mrb[0].mxu0 %v5004
        %v6354 = vpop.f32.mrb[0].mxu0
        %v6355 = vadd.f32 %v6194, %v6354
        %v6356 = vpop.f32.mrb[0].mxu0
        %v6357 = vpop.f32.mrb[0].mxu0
        %v6358 = vadd.f32 %v6197, %v6357
        %v6359 = vpop.f32.mrb[0].mxu0
        %6360 = vmatprep.mubr.bf16.mxu0 0
        %6361 = vmatmul.mubr.bf16.gmra.mrb[0].mxu0 %v5007
        %v6362 = vpop.f32.mrb[0].mxu0
        %v6363 = vadd.f32 %v6202, %v6362
        %v6364 = vpop.f32.mrb[0].mxu0
        %v6365 = vpop.f32.mrb[0].mxu0
        %v6366 = vadd.f32 %v6205, %v6365
        %v6367 = vpop.f32.mrb[0].mxu0
        %6368 = vmatprep.mubr.bf16.mxu0 0
        %6369 = vmatmul.mubr.bf16.gmra.mrb[0].mxu0 %v5010
        %v6370 = vpop.f32.mrb[0].mxu0
        %v6371 = vadd.f32 %v6210, %v6370
        %v6372 = vpop.f32.mrb[0].mxu0
        %v6373 = vpop.f32.mrb[0].mxu0
        %v6374 = vadd.f32 %v6213, %v6373
        %v6375 = vpop.f32.mrb[0].mxu0
        %6376 = vdwg.mxu0
        %s6377 = scalar_lea.vmem %s345, 48
        %v6378 = vld [vmem:[%s6377] sm:$0xf]
        %v6379 = vld [vmem:[%s6377 + $0x4] sm:$0xf]
        %v6380 = vld [vmem:[%s6377 + $0x8] sm:$0x3]
        %v6381 = vld [vmem:[%s6377 + $0xc] sm:$0xf]
        %v6382 = vld [vmem:[%s6377 + $0x10] sm:$0xf]
        %v6383 = vld [vmem:[%s6377 + $0x14] sm:$0x3]
        %v6384 = vld [vmem:[%s6377 + $0x18] sm:$0xf]
        %v6385 = vld [vmem:[%s6377 + $0x1c] sm:$0xf]
        %v6386 = vld [vmem:[%s6377 + $0x20] sm:$0x3]
        %v6387 = vld [vmem:[%s6377 + $0x24] sm:$0xf]
        %v6388 = vld [vmem:[%s6377 + $0x28] sm:$0xf]
        %v6389 = vld [vmem:[%s6377 + $0x2c] sm:$0x3]
        %v6390 = vld [vmem:[%s6377 + $0x30] sm:$0xf]
        %v6391 = vld [vmem:[%s6377 + $0x34] sm:$0xf]
        %v6392 = vld [vmem:[%s6377 + $0x38] sm:$0x3]
        %v6393 = vld [vmem:[%s6377 + $0x3c] sm:$0xf]
        %v6394 = vld [vmem:[%s6377 + $0x40] sm:$0xf]
        %v6395 = vld [vmem:[%s6377 + $0x44] sm:$0x3]
        %v6396 = vld [vmem:[%s6377 + $0x48] sm:$0xf]
        %v6397 = vld [vmem:[%s6377 + $0x4c] sm:$0xf]
        %v6398 = vld [vmem:[%s6377 + $0x50] sm:$0x3]
        %v6399 = vld [vmem:[%s6377 + $0x54] sm:$0xf]
        %v6400 = vld [vmem:[%s6377 + $0x58] sm:$0xf]
        %v6401 = vld [vmem:[%s6377 + $0x5c] sm:$0x3]
        %v6402 = vld [vmem:[%s6377 + $0x60] sm:$0xf]
        %v6403 = vld [vmem:[%s6377 + $0x64] sm:$0xf]
        %v6404 = vld [vmem:[%s6377 + $0x68] sm:$0x3]
        %v6405 = vld [vmem:[%s6377 + $0x6c] sm:$0xf]
        %v6406 = vld [vmem:[%s6377 + $0x70] sm:$0xf]
        %v6407 = vld [vmem:[%s6377 + $0x74] sm:$0x3]
        %v6408 = vld [vmem:[%s6377 + $0x78] sm:$0xf]
        %v6409 = vld [vmem:[%s6377 + $0x7c] sm:$0xf]
        %v6410 = vld [vmem:[%s6377 + $0x80] sm:$0x3]
        %v6411 = vld [vmem:[%s6377 + $0x84] sm:$0xf]
        %v6412 = vld [vmem:[%s6377 + $0x88] sm:$0xf]
        %v6413 = vld [vmem:[%s6377 + $0x8c] sm:$0x3]
        %v6414 = vld [vmem:[%s6377 + $0x90] sm:$0xf]
        %v6415 = vld [vmem:[%s6377 + $0x94] sm:$0xf]
        %v6416 = vld [vmem:[%s6377 + $0x98] sm:$0x3]
        %v6417 = vld [vmem:[%s6377 + $0x9c] sm:$0xf]
        %v6418 = vld [vmem:[%s6377 + $0xa0] sm:$0xf]
        %v6419 = vld [vmem:[%s6377 + $0xa4] sm:$0x3]
        %v6420 = vld [vmem:[%s6377 + $0xa8] sm:$0xf]
        %v6421 = vld [vmem:[%s6377 + $0xac] sm:$0xf]
        %v6422 = vld [vmem:[%s6377 + $0xb0] sm:$0x3]
        %v6423 = vld [vmem:[%s6377 + $0xb4] sm:$0xf]
        %v6424 = vld [vmem:[%s6377 + $0xb8] sm:$0xf]
        %v6425 = vld [vmem:[%s6377 + $0xbc] sm:$0x3]
        %v6458 = vunpack.c.l.b16 %v6378
        %v6459 = vunpack.c.l.b16 %v6379
        %v6460 = vunpack.c.l.b16 %v6381
        %v6461 = vunpack.c.l.b16 %v6382
        %v6462 = vunpack.c.l.b16 %v6384
        %v6463 = vunpack.c.l.b16 %v6385
        %v6464 = vunpack.c.l.b16 %v6387
        %v6465 = vunpack.c.l.b16 %v6388
        %v6466 = vunpack.c.l.b16 %v6390
        %v6467 = vunpack.c.l.b16 %v6391
        %v6468 = vunpack.c.l.b16 %v6393
        %v6469 = vunpack.c.l.b16 %v6394
        %v6470 = vunpack.c.l.b16 %v6396
        %v6471 = vunpack.c.l.b16 %v6397
        %v6472 = vunpack.c.l.b16 %v6399
        %v6473 = vunpack.c.l.b16 %v6400
        %v6474 = vunpack.c.l.b16 %v6402
        %v6475 = vunpack.c.l.b16 %v6403
        %v6476 = vunpack.c.l.b16 %v6405
        %v6477 = vunpack.c.l.b16 %v6406
        %v6478 = vunpack.c.l.b16 %v6408
        %v6479 = vunpack.c.l.b16 %v6409
        %v6480 = vunpack.c.l.b16 %v6411
        %v6481 = vunpack.c.l.b16 %v6412
        %v6482 = vunpack.c.l.b16 %v6414
        %v6483 = vunpack.c.l.b16 %v6415
        %v6484 = vunpack.c.l.b16 %v6417
        %v6485 = vunpack.c.l.b16 %v6418
        %v6486 = vunpack.c.l.b16 %v6420
        %v6487 = vunpack.c.l.b16 %v6421
        %v6488 = vunpack.c.l.b16 %v6423
        %v6489 = vunpack.c.l.b16 %v6424
        %v6490 = vpack.c.b16 %v6459, %v6458
        %v6491 = vpack.c.b16 %v6461, %v6460
        %v6492 = vpack.c.b16 %v6463, %v6462
        %v6493 = vpack.c.b16 %v6465, %v6464
        %v6494 = vpack.c.b16 %v6467, %v6466
        %v6495 = vpack.c.b16 %v6469, %v6468
        %v6496 = vpack.c.b16 %v6471, %v6470
        %v6497 = vpack.c.b16 %v6473, %v6472
        %v6498 = vpack.c.b16 %v6475, %v6474
        %v6499 = vpack.c.b16 %v6477, %v6476
        %v6500 = vpack.c.b16 %v6479, %v6478
        %v6501 = vpack.c.b16 %v6481, %v6480
        %v6502 = vpack.c.b16 %v6483, %v6482
        %v6503 = vpack.c.b16 %v6485, %v6484
        %v6504 = vpack.c.b16 %v6487, %v6486
        %v6505 = vpack.c.b16 %v6489, %v6488
        %v6538 = vunpack.c.l.b16 %v6380
        %v6539 = vunpack.c.l.b16 %v6383
        %v6540 = vunpack.c.l.b16 %v6386
        %v6541 = vunpack.c.l.b16 %v6389
        %v6542 = vunpack.c.l.b16 %v6392
        %v6543 = vunpack.c.l.b16 %v6395
        %v6544 = vunpack.c.l.b16 %v6398
        %v6545 = vunpack.c.l.b16 %v6401
        %v6546 = vunpack.c.l.b16 %v6404
        %v6547 = vunpack.c.l.b16 %v6407
        %v6548 = vunpack.c.l.b16 %v6410
        %v6549 = vunpack.c.l.b16 %v6413
        %v6550 = vunpack.c.l.b16 %v6416
        %v6551 = vunpack.c.l.b16 %v6419
        %v6552 = vunpack.c.l.b16 %v6422
        %v6553 = vunpack.c.l.b16 %v6425
        %v6554 = vpack.c.b16 %v6538, %v6538
        %v6555 = vpack.c.b16 %v6539, %v6539
        %v6556 = vpack.c.b16 %v6540, %v6540
        %v6557 = vpack.c.b16 %v6541, %v6541
        %v6558 = vpack.c.b16 %v6542, %v6542
        %v6559 = vpack.c.b16 %v6543, %v6543
        %v6560 = vpack.c.b16 %v6544, %v6544
        %v6561 = vpack.c.b16 %v6545, %v6545
        %v6562 = vpack.c.b16 %v6546, %v6546
        %v6563 = vpack.c.b16 %v6547, %v6547
        %v6564 = vpack.c.b16 %v6548, %v6548
        %v6565 = vpack.c.b16 %v6549, %v6549
        %v6566 = vpack.c.b16 %v6550, %v6550
        %v6567 = vpack.c.b16 %v6551, %v6551
        %v6568 = vpack.c.b16 %v6552, %v6552
        %v6569 = vpack.c.b16 %v6553, %v6553
        %v6570 = vrot.slane %v6490, 1
        %v6571 = vrot.slane %v6554, 1
        %v6572 = vsel %vm749, %v6570, %v6571
        %v6573 = vrot.slane %v6491, 1
        %v6574 = vrot.slane %v6555, 1
        %v6575 = vsel %vm749, %v6573, %v6574
        %v6576 = vrot.slane %v6492, 1
        %v6577 = vrot.slane %v6556, 1
        %v6578 = vsel %vm749, %v6576, %v6577
        %v6579 = vrot.slane %v6493, 1
        %v6580 = vrot.slane %v6557, 1
        %v6581 = vsel %vm749, %v6579, %v6580
        %v6582 = vrot.slane %v6494, 1
        %v6583 = vrot.slane %v6558, 1
        %v6584 = vsel %vm749, %v6582, %v6583
        %v6585 = vrot.slane %v6495, 1
        %v6586 = vrot.slane %v6559, 1
        %v6587 = vsel %vm749, %v6585, %v6586
        %v6588 = vrot.slane %v6496, 1
        %v6589 = vrot.slane %v6560, 1
        %v6590 = vsel %vm749, %v6588, %v6589
        %v6591 = vrot.slane %v6497, 1
        %v6592 = vrot.slane %v6561, 1
        %v6593 = vsel %vm749, %v6591, %v6592
        %v6594 = vrot.slane %v6498, 1
        %v6595 = vrot.slane %v6562, 1
        %v6596 = vsel %vm749, %v6594, %v6595
        %v6597 = vrot.slane %v6499, 1
        %v6598 = vrot.slane %v6563, 1
        %v6599 = vsel %vm749, %v6597, %v6598
        %v6600 = vrot.slane %v6500, 1
        %v6601 = vrot.slane %v6564, 1
        %v6602 = vsel %vm749, %v6600, %v6601
        %v6603 = vrot.slane %v6501, 1
        %v6604 = vrot.slane %v6565, 1
        %v6605 = vsel %vm749, %v6603, %v6604
        %v6606 = vrot.slane %v6502, 1
        %v6607 = vrot.slane %v6566, 1
        %v6608 = vsel %vm749, %v6606, %v6607
        %v6609 = vrot.slane %v6503, 1
        %v6610 = vrot.slane %v6567, 1
        %v6611 = vsel %vm749, %v6609, %v6610
        %v6612 = vrot.slane %v6504, 1
        %v6613 = vrot.slane %v6568, 1
        %v6614 = vsel %vm749, %v6612, %v6613
        %v6615 = vrot.slane %v6505, 1
        %v6616 = vrot.slane %v6569, 1
        %v6617 = vsel %vm749, %v6615, %v6616
        %v6634 = vrot.slane %v6490, 2
        %v6635 = vrot.slane %v6554, 2
        %v6636 = vsel %vm4962, %v6634, %v6635
        %v6637 = vrot.slane %v6491, 2
        %v6638 = vrot.slane %v6555, 2
        %v6639 = vsel %vm4962, %v6637, %v6638
        %v6640 = vrot.slane %v6492, 2
        %v6641 = vrot.slane %v6556, 2
        %v6642 = vsel %vm4962, %v6640, %v6641
        %v6643 = vrot.slane %v6493, 2
        %v6644 = vrot.slane %v6557, 2
        %v6645 = vsel %vm4962, %v6643, %v6644
        %v6646 = vrot.slane %v6494, 2
        %v6647 = vrot.slane %v6558, 2
        %v6648 = vsel %vm4962, %v6646, %v6647
        %v6649 = vrot.slane %v6495, 2
        %v6650 = vrot.slane %v6559, 2
        %v6651 = vsel %vm4962, %v6649, %v6650
        %v6652 = vrot.slane %v6496, 2
        %v6653 = vrot.slane %v6560, 2
        %v6654 = vsel %vm4962, %v6652, %v6653
        %v6655 = vrot.slane %v6497, 2
        %v6656 = vrot.slane %v6561, 2
        %v6657 = vsel %vm4962, %v6655, %v6656
        %v6658 = vrot.slane %v6498, 2
        %v6659 = vrot.slane %v6562, 2
        %v6660 = vsel %vm4962, %v6658, %v6659
        %v6661 = vrot.slane %v6499, 2
        %v6662 = vrot.slane %v6563, 2
        %v6663 = vsel %vm4962, %v6661, %v6662
        %v6664 = vrot.slane %v6500, 2
        %v6665 = vrot.slane %v6564, 2
        %v6666 = vsel %vm4962, %v6664, %v6665
        %v6667 = vrot.slane %v6501, 2
        %v6668 = vrot.slane %v6565, 2
        %v6669 = vsel %vm4962, %v6667, %v6668
        %v6670 = vrot.slane %v6502, 2
        %v6671 = vrot.slane %v6566, 2
        %v6672 = vsel %vm4962, %v6670, %v6671
        %v6673 = vrot.slane %v6503, 2
        %v6674 = vrot.slane %v6567, 2
        %v6675 = vsel %vm4962, %v6673, %v6674
        %v6676 = vrot.slane %v6504, 2
        %v6677 = vrot.slane %v6568, 2
        %v6678 = vsel %vm4962, %v6676, %v6677
        %v6679 = vrot.slane %v6505, 2
        %v6680 = vrot.slane %v6569, 2
        %v6681 = vsel %vm4962, %v6679, %v6680
        %s6698 = scalar_lea.vmem [#allocation3], 960
        %v6699 = vld [vmem:[%s6698] sm:$0xf]
        %v6700 = vld [vmem:[%s6698 + $0x4] sm:$0xf]
        %v6701 = vld [vmem:[%s6698 + $0x8] sm:$0xf]
        %v6702 = vld [vmem:[%s6698 + $0xc] sm:$0xf]
        %v6703 = vld [vmem:[%s6698 + $0x10] sm:$0xf]
        %v6704 = vld [vmem:[%s6698 + $0x14] sm:$0xf]
        %v6705 = vld [vmem:[%s6698 + $0x18] sm:$0xf]
        %v6706 = vld [vmem:[%s6698 + $0x1c] sm:$0xf]
        %v6707 = vld [vmem:[%s6698 + $0x20] sm:$0xf]
        %v6708 = vld [vmem:[%s6698 + $0x24] sm:$0xf]
        %v6709 = vld [vmem:[%s6698 + $0x28] sm:$0xf]
        %v6710 = vld [vmem:[%s6698 + $0x2c] sm:$0xf]
        %v6711 = vld [vmem:[%s6698 + $0x30] sm:$0xf]
        %v6712 = vld [vmem:[%s6698 + $0x34] sm:$0xf]
        %v6713 = vld [vmem:[%s6698 + $0x38] sm:$0xf]
        %v6714 = vld [vmem:[%s6698 + $0x3c] sm:$0xf]
        %v6715 = vld [vmem:[%s6698 + $0x40] sm:$0xf]
        %v6716 = vld [vmem:[%s6698 + $0x44] sm:$0xf]
        %v6717 = vld [vmem:[%s6698 + $0x48] sm:$0xf]
        %v6718 = vld [vmem:[%s6698 + $0x4c] sm:$0xf]
        %v6719 = vld [vmem:[%s6698 + $0x50] sm:$0xf]
        %v6720 = vld [vmem:[%s6698 + $0x54] sm:$0xf]
        %v6721 = vld [vmem:[%s6698 + $0x58] sm:$0xf]
        %v6722 = vld [vmem:[%s6698 + $0x5c] sm:$0xf]
        %v6723 = vld [vmem:[%s6698 + $0x60] sm:$0xf]
        %v6724 = vld [vmem:[%s6698 + $0x64] sm:$0xf]
        %v6725 = vld [vmem:[%s6698 + $0x68] sm:$0xf]
        %v6726 = vld [vmem:[%s6698 + $0x6c] sm:$0xf]
        %v6727 = vld [vmem:[%s6698 + $0x70] sm:$0xf]
        %v6728 = vld [vmem:[%s6698 + $0x74] sm:$0xf]
        %v6729 = vld [vmem:[%s6698 + $0x78] sm:$0xf]
        %v6730 = vld [vmem:[%s6698 + $0x7c] sm:$0xf]
        %v6731 = vld [vmem:[%s6698 + $0x80] sm:$0xf]
        %v6732 = vld [vmem:[%s6698 + $0x84] sm:$0xf]
        %v6733 = vld [vmem:[%s6698 + $0x88] sm:$0xf]
        %v6734 = vld [vmem:[%s6698 + $0x8c] sm:$0xf]
        %v6735 = vld [vmem:[%s6698 + $0x90] sm:$0xf]
        %v6736 = vld [vmem:[%s6698 + $0x94] sm:$0xf]
        %v6737 = vld [vmem:[%s6698 + $0x98] sm:$0xf]
        %v6738 = vld [vmem:[%s6698 + $0x9c] sm:$0xf]
        %v6739 = vld [vmem:[%s6698 + $0xa0] sm:$0xf]
        %v6740 = vld [vmem:[%s6698 + $0xa4] sm:$0xf]
        %v6741 = vld [vmem:[%s6698 + $0xa8] sm:$0xf]
        %v6742 = vld [vmem:[%s6698 + $0xac] sm:$0xf]
        %v6743 = vld [vmem:[%s6698 + $0xb0] sm:$0xf]
        %v6744 = vld [vmem:[%s6698 + $0xb4] sm:$0xf]
        %v6745 = vld [vmem:[%s6698 + $0xb8] sm:$0xf]
        %v6746 = vld [vmem:[%s6698 + $0xbc] sm:$0xf]
        %v6795 = vunpack.c.l.b16 %v6699
        %v6796 = vunpack.c.l.b16 %v6700
        %v6797 = vunpack.c.l.b16 %v6701
        %v6798 = vunpack.c.l.b16 %v6702
        %v6799 = vunpack.c.l.b16 %v6703
        %v6800 = vunpack.c.l.b16 %v6704
        %v6801 = vunpack.c.l.b16 %v6705
        %v6802 = vunpack.c.l.b16 %v6706
        %v6803 = vunpack.c.l.b16 %v6707
        %v6804 = vunpack.c.l.b16 %v6708
        %v6805 = vunpack.c.l.b16 %v6709
        %v6806 = vunpack.c.l.b16 %v6710
        %v6807 = vunpack.c.l.b16 %v6711
        %v6808 = vunpack.c.l.b16 %v6712
        %v6809 = vunpack.c.l.b16 %v6713
        %v6810 = vunpack.c.l.b16 %v6714
        %v6811 = vunpack.c.l.b16 %v6715
        %v6812 = vunpack.c.l.b16 %v6716
        %v6813 = vunpack.c.l.b16 %v6717
        %v6814 = vunpack.c.l.b16 %v6718
        %v6815 = vunpack.c.l.b16 %v6719
        %v6816 = vunpack.c.l.b16 %v6720
        %v6817 = vunpack.c.l.b16 %v6721
        %v6818 = vunpack.c.l.b16 %v6722
        %v6819 = vunpack.c.l.b16 %v6723
        %v6820 = vunpack.c.l.b16 %v6724
        %v6821 = vunpack.c.l.b16 %v6725
        %v6822 = vunpack.c.l.b16 %v6726
        %v6823 = vunpack.c.l.b16 %v6727
        %v6824 = vunpack.c.l.b16 %v6728
        %v6825 = vunpack.c.l.b16 %v6729
        %v6826 = vunpack.c.l.b16 %v6730
        %v6827 = vunpack.c.l.b16 %v6731
        %v6828 = vunpack.c.l.b16 %v6732
        %v6829 = vunpack.c.l.b16 %v6733
        %v6830 = vunpack.c.l.b16 %v6734
        %v6831 = vunpack.c.l.b16 %v6735
        %v6832 = vunpack.c.l.b16 %v6736
        %v6833 = vunpack.c.l.b16 %v6737
        %v6834 = vunpack.c.l.b16 %v6738
        %v6835 = vunpack.c.l.b16 %v6739
        %v6836 = vunpack.c.l.b16 %v6740
        %v6837 = vunpack.c.l.b16 %v6741
        %v6838 = vunpack.c.l.b16 %v6742
        %v6839 = vunpack.c.l.b16 %v6743
        %v6840 = vunpack.c.l.b16 %v6744
        %v6841 = vunpack.c.l.b16 %v6745
        %v6842 = vunpack.c.l.b16 %v6746
        %v6843 = vpack.c.b16 %v6796, %v6795
        %v6844 = vpack.c.b16 %v6798, %v6797
        %v6845 = vpack.c.b16 %v6800, %v6799
        %v6846 = vpack.c.b16 %v6802, %v6801
        %v6847 = vpack.c.b16 %v6804, %v6803
        %v6848 = vpack.c.b16 %v6806, %v6805
        %v6849 = vpack.c.b16 %v6808, %v6807
        %v6850 = vpack.c.b16 %v6810, %v6809
        %v6851 = vpack.c.b16 %v6812, %v6811
        %v6852 = vpack.c.b16 %v6814, %v6813
        %v6853 = vpack.c.b16 %v6816, %v6815
        %v6854 = vpack.c.b16 %v6818, %v6817
        %v6855 = vpack.c.b16 %v6820, %v6819
        %v6856 = vpack.c.b16 %v6822, %v6821
        %v6857 = vpack.c.b16 %v6824, %v6823
        %v6858 = vpack.c.b16 %v6826, %v6825
        %v6859 = vpack.c.b16 %v6828, %v6827
        %v6860 = vpack.c.b16 %v6830, %v6829
        %v6861 = vpack.c.b16 %v6832, %v6831
        %v6862 = vpack.c.b16 %v6834, %v6833
        %v6863 = vpack.c.b16 %v6836, %v6835
        %v6864 = vpack.c.b16 %v6838, %v6837
        %v6865 = vpack.c.b16 %v6840, %v6839
        %v6866 = vpack.c.b16 %v6842, %v6841
        %6891 = vmatprep.subr.bf16.mxu0 0
        %6892 = vmatpush1.bf16.msra.mxu0 %v6843
        %6893 = vmatprep.subr.bf16.mxu0 0
        %6894 = vmatpush1.bf16.msra.mxu0 %v6844
        %6895 = vmatprep.subr.bf16.mxu0 0
        %6896 = vmatpush1.bf16.msra.mxu0 %v6845
        %6897 = vmatprep.subr.bf16.mxu0 0
        %6898 = vmatpush1.bf16.msra.mxu0 %v6846
        %6899 = vmatprep.subr.bf16.mxu0 0
        %6900 = vmatpush1.bf16.msra.mxu0 %v6847
        %6901 = vmatprep.subr.bf16.mxu0 0
        %6902 = vmatpush1.bf16.msra.mxu0 %v6848
        %6903 = vmatprep.subr.bf16.mxu0 0
        %6904 = vmatpush1.bf16.msra.mxu0 %v6849
        %6905 = vmatprep.subr.bf16.mxu0 0
        %6906 = vmatpush1.bf16.msra.mxu0 %v6850
        %6907 = vmatprep.subr.bf16.mxu0 0
        %6908 = vmatpush1.bf16.msra.mxu0 %v6851
        %6909 = vmatprep.subr.bf16.mxu0 0
        %6910 = vmatpush1.bf16.msra.mxu0 %v6852
        %6911 = vmatprep.subr.bf16.mxu0 0
        %6912 = vmatpush1.bf16.msra.mxu0 %v6853
        %6913 = vmatprep.subr.bf16.mxu0 0
        %6914 = vmatpush1.bf16.msra.mxu0 %v6854
        %6915 = vmatprep.subr.bf16.mxu0 0
        %6916 = vmatpush1.bf16.msra.mxu0 %v6855
        %6917 = vmatprep.subr.bf16.mxu0 0
        %6918 = vmatpush1.bf16.msra.mxu0 %v6856
        %6919 = vmatprep.subr.bf16.mxu0 0
        %6920 = vmatpush1.bf16.msra.mxu0 %v6857
        %6921 = vmatprep.subr.bf16.mxu0 0
        %6922 = vmatpush1.bf16.msra.mxu0 %v6858
        %6923 = vmatprep.mubr.bf16.mxu0 %v6572
        %6924 = vmatmul.mubr.bf16.gmra.mrb[0].mxu0 %v6490
        %v6925 = vpop.f32.mrb[0].mxu0
        %v6926 = vadd.f32 0.0, %v6925
        %v6927 = vpop.f32.mrb[0].mxu0
        %v6928 = vpop.f32.mrb[0].mxu0
        %v6929 = vadd.f32 0.0, %v6928
        %v6930 = vpop.f32.mrb[0].mxu0
        %6931 = vmatprep.mubr.bf16.mxu0 %v6575
        %6932 = vmatmul.mubr.bf16.gmra.mrb[0].mxu0 %v6491
        %v6933 = vpop.f32.mrb[0].mxu0
        %v6934 = vadd.f32 0.0, %v6933
        %v6935 = vpop.f32.mrb[0].mxu0
        %v6936 = vpop.f32.mrb[0].mxu0
        %v6937 = vadd.f32 0.0, %v6936
        %v6938 = vpop.f32.mrb[0].mxu0
        %6939 = vmatprep.mubr.bf16.mxu0 %v6578
        %6940 = vmatmul.mubr.bf16.gmra.mrb[0].mxu0 %v6492
        %v6941 = vpop.f32.mrb[0].mxu0
        %v6942 = vadd.f32 0.0, %v6941
        %v6943 = vpop.f32.mrb[0].mxu0
        %v6944 = vpop.f32.mrb[0].mxu0
        %v6945 = vadd.f32 0.0, %v6944
        %v6946 = vpop.f32.mrb[0].mxu0
        %6947 = vmatprep.mubr.bf16.mxu0 %v6581
        %6948 = vmatmul.mubr.bf16.gmra.mrb[0].mxu0 %v6493
        %v6949 = vpop.f32.mrb[0].mxu0
        %v6950 = vadd.f32 0.0, %v6949
        %v6951 = vpop.f32.mrb[0].mxu0
        %v6952 = vpop.f32.mrb[0].mxu0
        %v6953 = vadd.f32 0.0, %v6952
        %v6954 = vpop.f32.mrb[0].mxu0
        %6955 = vmatprep.mubr.bf16.mxu0 %v6584
        %6956 = vmatmul.mubr.bf16.gmra.mrb[0].mxu0 %v6494
        %v6957 = vpop.f32.mrb[0].mxu0
        %v6958 = vadd.f32 0.0, %v6957
        %v6959 = vpop.f32.mrb[0].mxu0
        %v6960 = vpop.f32.mrb[0].mxu0
        %v6961 = vadd.f32 0.0, %v6960
        %v6962 = vpop.f32.mrb[0].mxu0
        %6963 = vmatprep.mubr.bf16.mxu0 %v6587
        %6964 = vmatmul.mubr.bf16.gmra.mrb[0].mxu0 %v6495
        %v6965 = vpop.f32.mrb[0].mxu0
        %v6966 = vadd.f32 0.0, %v6965
        %v6967 = vpop.f32.mrb[0].mxu0
        %v6968 = vpop.f32.mrb[0].mxu0
        %v6969 = vadd.f32 0.0, %v6968
        %v6970 = vpop.f32.mrb[0].mxu0
        %6971 = vmatprep.mubr.bf16.mxu0 %v6590
        %6972 = vmatmul.mubr.bf16.gmra.mrb[0].mxu0 %v6496
        %v6973 = vpop.f32.mrb[0].mxu0
        %v6974 = vadd.f32 0.0, %v6973
        %v6975 = vpop.f32.mrb[0].mxu0
        %v6976 = vpop.f32.mrb[0].mxu0
        %v6977 = vadd.f32 0.0, %v6976
        %v6978 = vpop.f32.mrb[0].mxu0
        %6979 = vmatprep.mubr.bf16.mxu0 %v6593
        %6980 = vmatmul.mubr.bf16.gmra.mrb[0].mxu0 %v6497
        %v6981 = vpop.f32.mrb[0].mxu0
        %v6982 = vadd.f32 0.0, %v6981
        %v6983 = vpop.f32.mrb[0].mxu0
        %v6984 = vpop.f32.mrb[0].mxu0
        %v6985 = vadd.f32 0.0, %v6984
        %v6986 = vpop.f32.mrb[0].mxu0
        %6987 = vmatprep.mubr.bf16.mxu0 %v6596
        %6988 = vmatmul.mubr.bf16.gmra.mrb[0].mxu0 %v6498
        %v6989 = vpop.f32.mrb[0].mxu0
        %v6990 = vadd.f32 0.0, %v6989
        %v6991 = vpop.f32.mrb[0].mxu0
        %v6992 = vpop.f32.mrb[0].mxu0
        %v6993 = vadd.f32 0.0, %v6992
        %v6994 = vpop.f32.mrb[0].mxu0
        %6995 = vmatprep.mubr.bf16.mxu0 %v6599
        %6996 = vmatmul.mubr.bf16.gmra.mrb[0].mxu0 %v6499
        %v6997 = vpop.f32.mrb[0].mxu0
        %v6998 = vadd.f32 0.0, %v6997
        %v6999 = vpop.f32.mrb[0].mxu0
        %v7000 = vpop.f32.mrb[0].mxu0
        %v7001 = vadd.f32 0.0, %v7000
        %v7002 = vpop.f32.mrb[0].mxu0
        %7003 = vmatprep.mubr.bf16.mxu0 %v6602
        %7004 = vmatmul.mubr.bf16.gmra.mrb[0].mxu0 %v6500
        %v7005 = vpop.f32.mrb[0].mxu0
        %v7006 = vadd.f32 0.0, %v7005
        %v7007 = vpop.f32.mrb[0].mxu0
        %v7008 = vpop.f32.mrb[0].mxu0
        %v7009 = vadd.f32 0.0, %v7008
        %v7010 = vpop.f32.mrb[0].mxu0
        %7011 = vmatprep.mubr.bf16.mxu0 %v6605
        %7012 = vmatmul.mubr.bf16.gmra.mrb[0].mxu0 %v6501
        %v7013 = vpop.f32.mrb[0].mxu0
        %v7014 = vadd.f32 0.0, %v7013
        %v7015 = vpop.f32.mrb[0].mxu0
        %v7016 = vpop.f32.mrb[0].mxu0
        %v7017 = vadd.f32 0.0, %v7016
        %v7018 = vpop.f32.mrb[0].mxu0
        %7019 = vmatprep.mubr.bf16.mxu0 %v6608
        %7020 = vmatmul.mubr.bf16.gmra.mrb[0].mxu0 %v6502
        %v7021 = vpop.f32.mrb[0].mxu0
        %v7022 = vadd.f32 0.0, %v7021
        %v7023 = vpop.f32.mrb[0].mxu0
        %v7024 = vpop.f32.mrb[0].mxu0
        %v7025 = vadd.f32 0.0, %v7024
        %v7026 = vpop.f32.mrb[0].mxu0
        %7027 = vmatprep.mubr.bf16.mxu0 %v6611
        %7028 = vmatmul.mubr.bf16.gmra.mrb[0].mxu0 %v6503
        %v7029 = vpop.f32.mrb[0].mxu0
        %v7030 = vadd.f32 0.0, %v7029
        %v7031 = vpop.f32.mrb[0].mxu0
        %v7032 = vpop.f32.mrb[0].mxu0
        %v7033 = vadd.f32 0.0, %v7032
        %v7034 = vpop.f32.mrb[0].mxu0
        %7035 = vmatprep.mubr.bf16.mxu0 %v6614
        %7036 = vmatmul.mubr.bf16.gmra.mrb[0].mxu0 %v6504
        %v7037 = vpop.f32.mrb[0].mxu0
        %v7038 = vadd.f32 0.0, %v7037
        %v7039 = vpop.f32.mrb[0].mxu0
        %v7040 = vpop.f32.mrb[0].mxu0
        %v7041 = vadd.f32 0.0, %v7040
        %v7042 = vpop.f32.mrb[0].mxu0
        %7043 = vmatprep.mubr.bf16.mxu0 %v6617
        %7044 = vmatmul.mubr.bf16.gmra.mrb[0].mxu0 %v6505
        %v7045 = vpop.f32.mrb[0].mxu0
        %v7046 = vadd.f32 0.0, %v7045
        %v7047 = vpop.f32.mrb[0].mxu0
        %v7048 = vpop.f32.mrb[0].mxu0
        %v7049 = vadd.f32 0.0, %v7048
        %v7050 = vpop.f32.mrb[0].mxu0
        %7051 = vdwg.mxu0
        %7052 = vmatprep.subr.bf16.mxu0 0
        %7053 = vmatpush1.bf16.msra.mxu0 %v6859
        %7054 = vmatprep.subr.bf16.mxu0 0
        %7055 = vmatpush1.bf16.msra.mxu0 %v6860
        %7056 = vmatprep.subr.bf16.mxu0 0
        %7057 = vmatpush1.bf16.msra.mxu0 %v6861
        %7058 = vmatprep.subr.bf16.mxu0 0
        %7059 = vmatpush1.bf16.msra.mxu0 %v6862
        %7060 = vmatprep.subr.bf16.mxu0 0
        %7061 = vmatpush1.bf16.msra.mxu0 %v6863
        %7062 = vmatprep.subr.bf16.mxu0 0
        %7063 = vmatpush1.bf16.msra.mxu0 %v6864
        %7064 = vmatprep.subr.bf16.mxu0 0
        %7065 = vmatpush1.bf16.msra.mxu0 %v6865
        %7066 = vmatprep.subr.bf16.mxu0 0
        %7067 = vmatpush1.bf16.msra.mxu0 %v6866
        %7068 = vmatprep.subr.bf16.mxu0 0
        %7069 = vmatpush1.bf16.msra.mxu0 0
        %7070 = vmatprep.subr.bf16.mxu0 0
        %7071 = vmatpush1.bf16.msra.mxu0 0
        %7072 = vmatprep.subr.bf16.mxu0 0
        %7073 = vmatpush1.bf16.msra.mxu0 0
        %7074 = vmatprep.subr.bf16.mxu0 0
        %7075 = vmatpush1.bf16.msra.mxu0 0
        %7076 = vmatprep.subr.bf16.mxu0 0
        %7077 = vmatpush1.bf16.msra.mxu0 0
        %7078 = vmatprep.subr.bf16.mxu0 0
        %7079 = vmatpush1.bf16.msra.mxu0 0
        %7080 = vmatprep.subr.bf16.mxu0 0
        %7081 = vmatpush1.bf16.msra.mxu0 0
        %7082 = vmatprep.subr.bf16.mxu0 0
        %7083 = vmatpush1.bf16.msra.mxu0 0
        %7084 = vmatprep.mubr.bf16.mxu0 0
        %7085 = vmatmul.mubr.bf16.gmra.mrb[0].mxu0 %v6636
        %v7086 = vpop.f32.mrb[0].mxu0
        %v7087 = vadd.f32 %v6926, %v7086
        %v7088 = vpop.f32.mrb[0].mxu0
        %v7089 = vpop.f32.mrb[0].mxu0
        %v7090 = vadd.f32 %v6929, %v7089
        %v7091 = vpop.f32.mrb[0].mxu0
        %7092 = vmatprep.mubr.bf16.mxu0 0
        %7093 = vmatmul.mubr.bf16.gmra.mrb[0].mxu0 %v6639
        %v7094 = vpop.f32.mrb[0].mxu0
        %v7095 = vadd.f32 %v6934, %v7094
        %v7096 = vpop.f32.mrb[0].mxu0
        %v7097 = vpop.f32.mrb[0].mxu0
        %v7098 = vadd.f32 %v6937, %v7097
        %v7099 = vpop.f32.mrb[0].mxu0
        %7100 = vmatprep.mubr.bf16.mxu0 0
        %7101 = vmatmul.mubr.bf16.gmra.mrb[0].mxu0 %v6642
        %v7102 = vpop.f32.mrb[0].mxu0
        %v7103 = vadd.f32 %v6942, %v7102
        %v7104 = vpop.f32.mrb[0].mxu0
        %v7105 = vpop.f32.mrb[0].mxu0
        %v7106 = vadd.f32 %v6945, %v7105
        %v7107 = vpop.f32.mrb[0].mxu0
        %7108 = vmatprep.mubr.bf16.mxu0 0
        %7109 = vmatmul.mubr.bf16.gmra.mrb[0].mxu0 %v6645
        %v7110 = vpop.f32.mrb[0].mxu0
        %v7111 = vadd.f32 %v6950, %v7110
        %v7112 = vpop.f32.mrb[0].mxu0
        %v7113 = vpop.f32.mrb[0].mxu0
        %v7114 = vadd.f32 %v6953, %v7113
        %v7115 = vpop.f32.mrb[0].mxu0
        %7116 = vmatprep.mubr.bf16.mxu0 0
        %7117 = vmatmul.mubr.bf16.gmra.mrb[0].mxu0 %v6648
        %v7118 = vpop.f32.mrb[0].mxu0
        %v7119 = vadd.f32 %v6958, %v7118
        %v7120 = vpop.f32.mrb[0].mxu0
        %v7121 = vpop.f32.mrb[0].mxu0
        %v7122 = vadd.f32 %v6961, %v7121
        %v7123 = vpop.f32.mrb[0].mxu0
        %7124 = vmatprep.mubr.bf16.mxu0 0
        %7125 = vmatmul.mubr.bf16.gmra.mrb[0].mxu0 %v6651
        %v7126 = vpop.f32.mrb[0].mxu0
        %v7127 = vadd.f32 %v6966, %v7126
        %v7128 = vpop.f32.mrb[0].mxu0
        %v7129 = vpop.f32.mrb[0].mxu0
        %v7130 = vadd.f32 %v6969, %v7129
        %v7131 = vpop.f32.mrb[0].mxu0
        %7132 = vmatprep.mubr.bf16.mxu0 0
        %7133 = vmatmul.mubr.bf16.gmra.mrb[0].mxu0 %v6654
        %v7134 = vpop.f32.mrb[0].mxu0
        %v7135 = vadd.f32 %v6974, %v7134
        %v7136 = vpop.f32.mrb[0].mxu0
        %v7137 = vpop.f32.mrb[0].mxu0
        %v7138 = vadd.f32 %v6977, %v7137
        %v7139 = vpop.f32.mrb[0].mxu0
        %7140 = vmatprep.mubr.bf16.mxu0 0
        %7141 = vmatmul.mubr.bf16.gmra.mrb[0].mxu0 %v6657
        %v7142 = vpop.f32.mrb[0].mxu0
        %v7143 = vadd.f32 %v6982, %v7142
        %v7144 = vpop.f32.mrb[0].mxu0
        %v7145 = vpop.f32.mrb[0].mxu0
        %v7146 = vadd.f32 %v6985, %v7145
        %v7147 = vpop.f32.mrb[0].mxu0
        %7148 = vmatprep.mubr.bf16.mxu0 0
        %7149 = vmatmul.mubr.bf16.gmra.mrb[0].mxu0 %v6660
        %v7150 = vpop.f32.mrb[0].mxu0
        %v7151 = vadd.f32 %v6990, %v7150
        %v7152 = vpop.f32.mrb[0].mxu0
        %v7153 = vpop.f32.mrb[0].mxu0
        %v7154 = vadd.f32 %v6993, %v7153
        %v7155 = vpop.f32.mrb[0].mxu0
        %7156 = vmatprep.mubr.bf16.mxu0 0
        %7157 = vmatmul.mubr.bf16.gmra.mrb[0].mxu0 %v6663
        %v7158 = vpop.f32.mrb[0].mxu0
        %v7159 = vadd.f32 %v6998, %v7158
        %v7160 = vpop.f32.mrb[0].mxu0
        %v7161 = vpop.f32.mrb[0].mxu0
        %v7162 = vadd.f32 %v7001, %v7161
        %v7163 = vpop.f32.mrb[0].mxu0
        %7164 = vmatprep.mubr.bf16.mxu0 0
        %7165 = vmatmul.mubr.bf16.gmra.mrb[0].mxu0 %v6666
        %v7166 = vpop.f32.mrb[0].mxu0
        %v7167 = vadd.f32 %v7006, %v7166
        %v7168 = vpop.f32.mrb[0].mxu0
        %v7169 = vpop.f32.mrb[0].mxu0
        %v7170 = vadd.f32 %v7009, %v7169
        %v7171 = vpop.f32.mrb[0].mxu0
        %7172 = vmatprep.mubr.bf16.mxu0 0
        %7173 = vmatmul.mubr.bf16.gmra.mrb[0].mxu0 %v6669
        %v7174 = vpop.f32.mrb[0].mxu0
        %v7175 = vadd.f32 %v7014, %v7174
        %v7176 = vpop.f32.mrb[0].mxu0
        %v7177 = vpop.f32.mrb[0].mxu0
        %v7178 = vadd.f32 %v7017, %v7177
        %v7179 = vpop.f32.mrb[0].mxu0
        %7180 = vmatprep.mubr.bf16.mxu0 0
        %7181 = vmatmul.mubr.bf16.gmra.mrb[0].mxu0 %v6672
        %v7182 = vpop.f32.mrb[0].mxu0
        %v7183 = vadd.f32 %v7022, %v7182
        %v7184 = vpop.f32.mrb[0].mxu0
        %v7185 = vpop.f32.mrb[0].mxu0
        %v7186 = vadd.f32 %v7025, %v7185
        %v7187 = vpop.f32.mrb[0].mxu0
        %7188 = vmatprep.mubr.bf16.mxu0 0
        %7189 = vmatmul.mubr.bf16.gmra.mrb[0].mxu0 %v6675
        %v7190 = vpop.f32.mrb[0].mxu0
        %v7191 = vadd.f32 %v7030, %v7190
        %v7192 = vpop.f32.mrb[0].mxu0
        %v7193 = vpop.f32.mrb[0].mxu0
        %v7194 = vadd.f32 %v7033, %v7193
        %v7195 = vpop.f32.mrb[0].mxu0
        %7196 = vmatprep.mubr.bf16.mxu0 0
        %7197 = vmatmul.mubr.bf16.gmra.mrb[0].mxu0 %v6678
        %v7198 = vpop.f32.mrb[0].mxu0
        %v7199 = vadd.f32 %v7038, %v7198
        %v7200 = vpop.f32.mrb[0].mxu0
        %v7201 = vpop.f32.mrb[0].mxu0
        %v7202 = vadd.f32 %v7041, %v7201
        %v7203 = vpop.f32.mrb[0].mxu0
        %7204 = vmatprep.mubr.bf16.mxu0 0
        %7205 = vmatmul.mubr.bf16.gmra.mrb[0].mxu0 %v6681
        %v7206 = vpop.f32.mrb[0].mxu0
        %v7207 = vadd.f32 %v7046, %v7206
        %v7208 = vpop.f32.mrb[0].mxu0
        %v7209 = vpop.f32.mrb[0].mxu0
        %v7210 = vadd.f32 %v7049, %v7209
        %v7211 = vpop.f32.mrb[0].mxu0
        %7212 = vdwg.mxu0
        %v7213 = vadd.f32 %v6251, %v7087
        %v7214 = vadd.f32 %v6254, %v7090
        %v7215 = vadd.f32 %v6259, %v7095
        %v7216 = vadd.f32 %v6262, %v7098
        %v7217 = vadd.f32 %v6267, %v7103
        %v7218 = vadd.f32 %v6270, %v7106
        %v7219 = vadd.f32 %v6275, %v7111
        %v7220 = vadd.f32 %v6278, %v7114
        %v7221 = vadd.f32 %v6283, %v7119
        %v7222 = vadd.f32 %v6286, %v7122
        %v7223 = vadd.f32 %v6291, %v7127
        %v7224 = vadd.f32 %v6294, %v7130
        %v7225 = vadd.f32 %v6299, %v7135
        %v7226 = vadd.f32 %v6302, %v7138
        %v7227 = vadd.f32 %v6307, %v7143
        %v7228 = vadd.f32 %v6310, %v7146
        %v7229 = vadd.f32 %v6315, %v7151
        %v7230 = vadd.f32 %v6318, %v7154
        %v7231 = vadd.f32 %v6323, %v7159
        %v7232 = vadd.f32 %v6326, %v7162
        %v7233 = vadd.f32 %v6331, %v7167
        %v7234 = vadd.f32 %v6334, %v7170
        %v7235 = vadd.f32 %v6339, %v7175
        %v7236 = vadd.f32 %v6342, %v7178
        %v7237 = vadd.f32 %v6347, %v7183
        %v7238 = vadd.f32 %v6350, %v7186
        %v7239 = vadd.f32 %v6355, %v7191
        %v7240 = vadd.f32 %v6358, %v7194
        %v7241 = vadd.f32 %v6363, %v7199
        %v7242 = vadd.f32 %v6366, %v7202
        %v7243 = vadd.f32 %v6371, %v7207
        %v7244 = vadd.f32 %v6374, %v7210
        %v7245 = vld [vmem:[%s2 + $0x1] sm:$0x1]
        %v7246 = vlaneseq
        %v7247 = vshrl.u32 %v7246, 7
        %v7248 = vsub.s32 0, %v7247
        %v7249 = vrot.slane %v7245, %v7248
        %v7250 = vmul.f32 %v7213, %v7249
        %v7251 = vmul.f32 %v7214, %v7249
        %v7252 = vmul.f32 %v7215, %v7249
        %v7253 = vmul.f32 %v7216, %v7249
        %v7254 = vmul.f32 %v7217, %v7249
        %v7255 = vmul.f32 %v7218, %v7249
        %v7256 = vmul.f32 %v7219, %v7249
        %v7257 = vmul.f32 %v7220, %v7249
        %v7258 = vmul.f32 %v7221, %v7249
        %v7259 = vmul.f32 %v7222, %v7249
        %v7260 = vmul.f32 %v7223, %v7249
        %v7261 = vmul.f32 %v7224, %v7249
        %v7262 = vmul.f32 %v7225, %v7249
        %v7263 = vmul.f32 %v7226, %v7249
        %v7264 = vmul.f32 %v7227, %v7249
        %v7265 = vmul.f32 %v7228, %v7249
        %v7266 = vmul.f32 %v7229, %v7249
        %v7267 = vmul.f32 %v7230, %v7249
        %v7268 = vmul.f32 %v7231, %v7249
        %v7269 = vmul.f32 %v7232, %v7249
        %v7270 = vmul.f32 %v7233, %v7249
        %v7271 = vmul.f32 %v7234, %v7249
        %v7272 = vmul.f32 %v7235, %v7249
        %v7273 = vmul.f32 %v7236, %v7249
        %v7274 = vmul.f32 %v7237, %v7249
        %v7275 = vmul.f32 %v7238, %v7249
        %v7276 = vmul.f32 %v7239, %v7249
        %v7277 = vmul.f32 %v7240, %v7249
        %v7278 = vmul.f32 %v7241, %v7249
        %v7279 = vmul.f32 %v7242, %v7249
        %v7280 = vmul.f32 %v7243, %v7249
        %v7281 = vmul.f32 %v7244, %v7249
        %v7282 = vld [vmem:[%s3 + $0x1] sm:$0x1]
        %v7283 = vlaneseq
        %v7284 = vshrl.u32 %v7283, 7
        %v7285 = vsub.s32 0, %v7284
        %v7286 = vrot.slane %v7282, %v7285
        %v7287 = vadd.f32 %v7250, %v7286
        %v7288 = vadd.f32 %v7251, %v7286
        %v7289 = vadd.f32 %v7252, %v7286
        %v7290 = vadd.f32 %v7253, %v7286
        %v7291 = vadd.f32 %v7254, %v7286
        %v7292 = vadd.f32 %v7255, %v7286
        %v7293 = vadd.f32 %v7256, %v7286
        %v7294 = vadd.f32 %v7257, %v7286
        %v7295 = vadd.f32 %v7258, %v7286
        %v7296 = vadd.f32 %v7259, %v7286
        %v7297 = vadd.f32 %v7260, %v7286
        %v7298 = vadd.f32 %v7261, %v7286
        %v7299 = vadd.f32 %v7262, %v7286
        %v7300 = vadd.f32 %v7263, %v7286
        %v7301 = vadd.f32 %v7264, %v7286
        %v7302 = vadd.f32 %v7265, %v7286
        %v7303 = vadd.f32 %v7266, %v7286
        %v7304 = vadd.f32 %v7267, %v7286
        %v7305 = vadd.f32 %v7268, %v7286
        %v7306 = vadd.f32 %v7269, %v7286
        %v7307 = vadd.f32 %v7270, %v7286
        %v7308 = vadd.f32 %v7271, %v7286
        %v7309 = vadd.f32 %v7272, %v7286
        %v7310 = vadd.f32 %v7273, %v7286
        %v7311 = vadd.f32 %v7274, %v7286
        %v7312 = vadd.f32 %v7275, %v7286
        %v7313 = vadd.f32 %v7276, %v7286
        %v7314 = vadd.f32 %v7277, %v7286
        %v7315 = vadd.f32 %v7278, %v7286
        %v7316 = vadd.f32 %v7279, %v7286
        %v7317 = vadd.f32 %v7280, %v7286
        %v7318 = vadd.f32 %v7281, %v7286
        %v7319 = vmax.f32 %v7287, 0.0
        %v7320 = vmax.f32 %v7288, 0.0
        %v7321 = vmax.f32 %v7289, 0.0
        %v7322 = vmax.f32 %v7290, 0.0
        %v7323 = vmax.f32 %v7291, 0.0
        %v7324 = vmax.f32 %v7292, 0.0
        %v7325 = vmax.f32 %v7293, 0.0
        %v7326 = vmax.f32 %v7294, 0.0
        %v7327 = vmax.f32 %v7295, 0.0
        %v7328 = vmax.f32 %v7296, 0.0
        %v7329 = vmax.f32 %v7297, 0.0
        %v7330 = vmax.f32 %v7298, 0.0
        %v7331 = vmax.f32 %v7299, 0.0
        %v7332 = vmax.f32 %v7300, 0.0
        %v7333 = vmax.f32 %v7301, 0.0
        %v7334 = vmax.f32 %v7302, 0.0
        %v7335 = vmax.f32 %v7303, 0.0
        %v7336 = vmax.f32 %v7304, 0.0
        %v7337 = vmax.f32 %v7305, 0.0
        %v7338 = vmax.f32 %v7306, 0.0
        %v7339 = vmax.f32 %v7307, 0.0
        %v7340 = vmax.f32 %v7308, 0.0
        %v7341 = vmax.f32 %v7309, 0.0
        %v7342 = vmax.f32 %v7310, 0.0
        %v7343 = vmax.f32 %v7311, 0.0
        %v7344 = vmax.f32 %v7312, 0.0
        %v7345 = vmax.f32 %v7313, 0.0
        %v7346 = vmax.f32 %v7314, 0.0
        %v7347 = vmax.f32 %v7315, 0.0
        %v7348 = vmax.f32 %v7316, 0.0
        %v7349 = vmax.f32 %v7317, 0.0
        %v7350 = vmax.f32 %v7318, 0.0
        %s7351 = scalar_lea.vmem [#allocation2], 256
        %7352 = vst [vmem:[%s7351] sm:$0xff] %v7319
        %7353 = vst [vmem:[%s7351 + $0x8] sm:$0xff] %v7320
        %7354 = vst [vmem:[%s7351 + $0x10] sm:$0xff] %v7321
        %7355 = vst [vmem:[%s7351 + $0x18] sm:$0xff] %v7322
        %7356 = vst [vmem:[%s7351 + $0x20] sm:$0xff] %v7323
        %7357 = vst [vmem:[%s7351 + $0x28] sm:$0xff] %v7324
        %7358 = vst [vmem:[%s7351 + $0x30] sm:$0xff] %v7325
        %7359 = vst [vmem:[%s7351 + $0x38] sm:$0xff] %v7326
        %7360 = vst [vmem:[%s7351 + $0x40] sm:$0xff] %v7327
        %7361 = vst [vmem:[%s7351 + $0x48] sm:$0xff] %v7328
        %7362 = vst [vmem:[%s7351 + $0x50] sm:$0xff] %v7329
        %7363 = vst [vmem:[%s7351 + $0x58] sm:$0xff] %v7330
        %7364 = vst [vmem:[%s7351 + $0x60] sm:$0xff] %v7331
        %7365 = vst [vmem:[%s7351 + $0x68] sm:$0xff] %v7332
        %7366 = vst [vmem:[%s7351 + $0x70] sm:$0xff] %v7333
        %7367 = vst [vmem:[%s7351 + $0x78] sm:$0xff] %v7334
        %7368 = vst [vmem:[%s7351 + $0x80] sm:$0xff] %v7335
        %7369 = vst [vmem:[%s7351 + $0x88] sm:$0xff] %v7336
        %7370 = vst [vmem:[%s7351 + $0x90] sm:$0xff] %v7337
        %7371 = vst [vmem:[%s7351 + $0x98] sm:$0xff] %v7338
        %7372 = vst [vmem:[%s7351 + $0xa0] sm:$0xff] %v7339
        %7373 = vst [vmem:[%s7351 + $0xa8] sm:$0xff] %v7340
        %7374 = vst [vmem:[%s7351 + $0xb0] sm:$0xff] %v7341
        %7375 = vst [vmem:[%s7351 + $0xb8] sm:$0xff] %v7342
        %7376 = vst [vmem:[%s7351 + $0xc0] sm:$0xff] %v7343
        %7377 = vst [vmem:[%s7351 + $0xc8] sm:$0xff] %v7344
        %7378 = vst [vmem:[%s7351 + $0xd0] sm:$0xff] %v7345
        %7379 = vst [vmem:[%s7351 + $0xd8] sm:$0xff] %v7346
        %7380 = vst [vmem:[%s7351 + $0xe0] sm:$0xff] %v7347
        %7381 = vst [vmem:[%s7351 + $0xe8] sm:$0xff] %v7348
        %7382 = vst [vmem:[%s7351 + $0xf0] sm:$0xff] %v7349
        %7383 = vst [vmem:[%s7351 + $0xf8] sm:$0xff] %v7350
        %v7384 = vld [vmem:[#allocation2] sm:$0xff]
        %v7385 = vld [vmem:[#allocation2 + $0x8] sm:$0xff]
        %v7386 = vld [vmem:[#allocation2 + $0x10] sm:$0xff]
        %v7387 = vld [vmem:[#allocation2 + $0x18] sm:$0xff]
        %v7388 = vld [vmem:[#allocation2 + $0x20] sm:$0xff]
        %v7389 = vld [vmem:[#allocation2 + $0x28] sm:$0xff]
        %v7390 = vld [vmem:[#allocation2 + $0x30] sm:$0xff]
        %v7391 = vld [vmem:[#allocation2 + $0x38] sm:$0xff]
        %v7392 = vld [vmem:[#allocation2 + $0x40] sm:$0xff]
        %v7393 = vld [vmem:[#allocation2 + $0x48] sm:$0xff]
        %v7394 = vld [vmem:[#allocation2 + $0x50] sm:$0xff]
        %v7395 = vld [vmem:[#allocation2 + $0x58] sm:$0xff]
        %v7396 = vld [vmem:[#allocation2 + $0x60] sm:$0xff]
        %v7397 = vld [vmem:[#allocation2 + $0x68] sm:$0xff]
        %v7398 = vld [vmem:[#allocation2 + $0x70] sm:$0xff]
        %v7399 = vld [vmem:[#allocation2 + $0x78] sm:$0xff]
        %v7400 = vld [vmem:[#allocation2 + $0x80] sm:$0xff]
        %v7401 = vld [vmem:[#allocation2 + $0x88] sm:$0xff]
        %v7402 = vld [vmem:[#allocation2 + $0x90] sm:$0xff]
        %v7403 = vld [vmem:[#allocation2 + $0x98] sm:$0xff]
        %v7404 = vld [vmem:[#allocation2 + $0xa0] sm:$0xff]
        %v7405 = vld [vmem:[#allocation2 + $0xa8] sm:$0xff]
        %v7406 = vld [vmem:[#allocation2 + $0xb0] sm:$0xff]
        %v7407 = vld [vmem:[#allocation2 + $0xb8] sm:$0xff]
        %v7408 = vld [vmem:[#allocation2 + $0xc0] sm:$0xff]
        %v7409 = vld [vmem:[#allocation2 + $0xc8] sm:$0xff]
        %v7410 = vld [vmem:[#allocation2 + $0xd0] sm:$0xff]
        %v7411 = vld [vmem:[#allocation2 + $0xd8] sm:$0xff]
        %v7412 = vld [vmem:[#allocation2 + $0xe0] sm:$0xff]
        %v7413 = vld [vmem:[#allocation2 + $0xe8] sm:$0xff]
        %v7414 = vld [vmem:[#allocation2 + $0xf0] sm:$0xff]
        %v7415 = vld [vmem:[#allocation2 + $0xf8] sm:$0xff]
        %v7416 = vld [vmem:[%s7351] sm:$0xff]
        %v7417 = vld [vmem:[%s7351 + $0x8] sm:$0xff]
        %v7418 = vld [vmem:[%s7351 + $0x10] sm:$0xff]
        %v7419 = vld [vmem:[%s7351 + $0x18] sm:$0xff]
        %v7420 = vld [vmem:[%s7351 + $0x20] sm:$0xff]
        %v7421 = vld [vmem:[%s7351 + $0x28] sm:$0xff]
        %v7422 = vld [vmem:[%s7351 + $0x30] sm:$0xff]
        %v7423 = vld [vmem:[%s7351 + $0x38] sm:$0xff]
        %v7424 = vld [vmem:[%s7351 + $0x40] sm:$0xff]
        %v7425 = vld [vmem:[%s7351 + $0x48] sm:$0xff]
        %v7426 = vld [vmem:[%s7351 + $0x50] sm:$0xff]
        %v7427 = vld [vmem:[%s7351 + $0x58] sm:$0xff]
        %v7428 = vld [vmem:[%s7351 + $0x60] sm:$0xff]
        %v7429 = vld [vmem:[%s7351 + $0x68] sm:$0xff]
        %v7430 = vld [vmem:[%s7351 + $0x70] sm:$0xff]
        %v7431 = vld [vmem:[%s7351 + $0x78] sm:$0xff]
        %v7432 = vld [vmem:[%s7351 + $0x80] sm:$0xff]
        %v7433 = vld [vmem:[%s7351 + $0x88] sm:$0xff]
        %v7434 = vld [vmem:[%s7351 + $0x90] sm:$0xff]
        %v7435 = vld [vmem:[%s7351 + $0x98] sm:$0xff]
        %v7436 = vld [vmem:[%s7351 + $0xa0] sm:$0xff]
        %v7437 = vld [vmem:[%s7351 + $0xa8] sm:$0xff]
        %v7438 = vld [vmem:[%s7351 + $0xb0] sm:$0xff]
        %v7439 = vld [vmem:[%s7351 + $0xb8] sm:$0xff]
        %v7440 = vld [vmem:[%s7351 + $0xc0] sm:$0xff]
        %v7441 = vld [vmem:[%s7351 + $0xc8] sm:$0xff]
        %v7442 = vld [vmem:[%s7351 + $0xd0] sm:$0xff]
        %v7443 = vld [vmem:[%s7351 + $0xd8] sm:$0xff]
        %v7444 = vld [vmem:[%s7351 + $0xe0] sm:$0xff]
        %v7445 = vld [vmem:[%s7351 + $0xe8] sm:$0xff]
        %v7446 = vld [vmem:[%s7351 + $0xf0] sm:$0xff]
        %v7447 = vld [vmem:[%s7351 + $0xf8] sm:$0xff]
        %v7448 = vadd.f32 %v7384, %v7416
        %v7449 = vadd.f32 %v7385, %v7417
        %v7450 = vadd.f32 %v7386, %v7418
        %v7451 = vadd.f32 %v7387, %v7419
        %v7452 = vadd.f32 %v7388, %v7420
        %v7453 = vadd.f32 %v7389, %v7421
        %v7454 = vadd.f32 %v7390, %v7422
        %v7455 = vadd.f32 %v7391, %v7423
        %v7456 = vadd.f32 %v7392, %v7424
        %v7457 = vadd.f32 %v7393, %v7425
        %v7458 = vadd.f32 %v7394, %v7426
        %v7459 = vadd.f32 %v7395, %v7427
        %v7460 = vadd.f32 %v7396, %v7428
        %v7461 = vadd.f32 %v7397, %v7429
        %v7462 = vadd.f32 %v7398, %v7430
        %v7463 = vadd.f32 %v7399, %v7431
        %v7464 = vadd.f32 %v7400, %v7432
        %v7465 = vadd.f32 %v7401, %v7433
        %v7466 = vadd.f32 %v7402, %v7434
        %v7467 = vadd.f32 %v7403, %v7435
        %v7468 = vadd.f32 %v7404, %v7436
        %v7469 = vadd.f32 %v7405, %v7437
        %v7470 = vadd.f32 %v7406, %v7438
        %v7471 = vadd.f32 %v7407, %v7439
        %v7472 = vadd.f32 %v7408, %v7440
        %v7473 = vadd.f32 %v7409, %v7441
        %v7474 = vadd.f32 %v7410, %v7442
        %v7475 = vadd.f32 %v7411, %v7443
        %v7476 = vadd.f32 %v7412, %v7444
        %v7477 = vadd.f32 %v7413, %v7445
        %v7478 = vadd.f32 %v7414, %v7446
        %v7479 = vadd.f32 %v7415, %v7447
        %v7480 = vadd.f32 %v7448, %v7449
        %v7481 = vadd.f32 %v7480, %v7450
        %v7482 = vadd.f32 %v7481, %v7451
        %v7483 = vadd.f32 %v7482, %v7452
        %v7484 = vadd.f32 %v7483, %v7453
        %v7485 = vadd.f32 %v7484, %v7454
        %v7486 = vadd.f32 %v7485, %v7455
        %v7487 = vadd.f32 %v7486, %v7456
        %v7488 = vadd.f32 %v7487, %v7457
        %v7489 = vadd.f32 %v7488, %v7458
        %v7490 = vadd.f32 %v7489, %v7459
        %v7491 = vadd.f32 %v7490, %v7460
        %v7492 = vadd.f32 %v7491, %v7461
        %v7493 = vadd.f32 %v7492, %v7462
        %v7494 = vadd.f32 %v7493, %v7463
        %v7495 = vadd.f32 %v7494, %v7464
        %v7496 = vadd.f32 %v7495, %v7465
        %v7497 = vadd.f32 %v7496, %v7466
        %v7498 = vadd.f32 %v7497, %v7467
        %v7499 = vadd.f32 %v7498, %v7468
        %v7500 = vadd.f32 %v7499, %v7469
        %v7501 = vadd.f32 %v7500, %v7470
        %v7502 = vadd.f32 %v7501, %v7471
        %v7503 = vadd.f32 %v7502, %v7472
        %v7504 = vadd.f32 %v7503, %v7473
        %v7505 = vadd.f32 %v7504, %v7474
        %v7506 = vadd.f32 %v7505, %v7475
        %v7507 = vadd.f32 %v7506, %v7476
        %v7508 = vadd.f32 %v7507, %v7477
        %v7509 = vadd.f32 %v7508, %v7478
        %v7510 = vadd.f32 %v7509, %v7479
        %v7511 = vrot.slane %v7510, 4
        %v7512 = vadd.f32 %v7510, %v7511
        %v7513 = vrot.slane %v7512, 2
        %v7514 = vadd.f32 %v7512, %v7513
        %v7515 = vrot.slane %v7514, 1
        %v7516 = vadd.f32 %v7514, %v7515
        %v7517 = vmul.f32 %v7516, 0.00390625
        %v7518 = vpack.c.bf16 %v7517, %v7517
        %v7519 = vld [vmem:[%s4] sm:$0xf]
        %v7520 = vld [vmem:[%s4 + $0x4] sm:$0xf]
        %v7521 = vld [vmem:[%s4 + $0x8] sm:$0xf]
        %v7522 = vld [vmem:[%s4 + $0xc] sm:$0xf]
        %v7523 = vld [vmem:[%s4 + $0x10] sm:$0xf]
        %v7524 = vld [vmem:[%s4 + $0x14] sm:$0xf]
        %v7525 = vld [vmem:[%s4 + $0x18] sm:$0xf]
        %v7526 = vld [vmem:[%s4 + $0x1c] sm:$0xf]
        %v7527 = vld [vmem:[%s4 + $0x20] sm:$0xf]
        %v7528 = vld [vmem:[%s4 + $0x24] sm:$0xf]
        %v7529 = vld [vmem:[%s4 + $0x28] sm:$0xf]
        %v7530 = vld [vmem:[%s4 + $0x2c] sm:$0xf]
        %v7531 = vld [vmem:[%s4 + $0x30] sm:$0xf]
        %v7532 = vld [vmem:[%s4 + $0x34] sm:$0xf]
        %v7533 = vld [vmem:[%s4 + $0x38] sm:$0xf]
        %v7534 = vld [vmem:[%s4 + $0x3c] sm:$0xf]
        %v7551 = vunpack.c.l.b16 %v7519
        %v7552 = vunpack.c.l.b16 %v7520
        %v7553 = vunpack.c.l.b16 %v7521
        %v7554 = vunpack.c.l.b16 %v7522
        %v7555 = vunpack.c.l.b16 %v7523
        %v7556 = vunpack.c.l.b16 %v7524
        %v7557 = vunpack.c.l.b16 %v7525
        %v7558 = vunpack.c.l.b16 %v7526
        %v7559 = vunpack.c.l.b16 %v7527
        %v7560 = vunpack.c.l.b16 %v7528
        %v7561 = vunpack.c.l.b16 %v7529
        %v7562 = vunpack.c.l.b16 %v7530
        %v7563 = vunpack.c.l.b16 %v7531
        %v7564 = vunpack.c.l.b16 %v7532
        %v7565 = vunpack.c.l.b16 %v7533
        %v7566 = vunpack.c.l.b16 %v7534
        %v7567 = vpack.c.b16 %v7552, %v7551
        %v7568 = vpack.c.b16 %v7554, %v7553
        %v7569 = vpack.c.b16 %v7556, %v7555
        %v7570 = vpack.c.b16 %v7558, %v7557
        %v7571 = vpack.c.b16 %v7560, %v7559
        %v7572 = vpack.c.b16 %v7562, %v7561
        %v7573 = vpack.c.b16 %v7564, %v7563
        %v7574 = vpack.c.b16 %v7566, %v7565
        %7583 = vmatprep.subr.bf16.mxu0 0
        %7584 = vmatpush1.bf16.msra.mxu0 %v7567
        %7585 = vmatprep.subr.bf16.mxu0 0
        %7586 = vmatpush1.bf16.msra.mxu0 %v7568
        %7587 = vmatprep.subr.bf16.mxu0 0
        %7588 = vmatpush1.bf16.msra.mxu0 %v7569
        %7589 = vmatprep.subr.bf16.mxu0 0
        %7590 = vmatpush1.bf16.msra.mxu0 %v7570
        %7591 = vmatprep.subr.bf16.mxu0 0
        %7592 = vmatpush1.bf16.msra.mxu0 %v7571
        %7593 = vmatprep.subr.bf16.mxu0 0
        %7594 = vmatpush1.bf16.msra.mxu0 %v7572
        %7595 = vmatprep.subr.bf16.mxu0 0
        %7596 = vmatpush1.bf16.msra.mxu0 %v7573
        %7597 = vmatprep.subr.bf16.mxu0 0
        %7598 = vmatpush1.bf16.msra.mxu0 %v7574
        %7599 = vmatprep.subr.bf16.mxu0 0
        %7600 = vmatpush1.bf16.msra.mxu0 0
        %7601 = vmatprep.subr.bf16.mxu0 0
        %7602 = vmatpush1.bf16.msra.mxu0 0
        %7603 = vmatprep.subr.bf16.mxu0 0
        %7604 = vmatpush1.bf16.msra.mxu0 0
        %7605 = vmatprep.subr.bf16.mxu0 0
        %7606 = vmatpush1.bf16.msra.mxu0 0
        %7607 = vmatprep.subr.bf16.mxu0 0
        %7608 = vmatpush1.bf16.msra.mxu0 0
        %7609 = vmatprep.subr.bf16.mxu0 0
        %7610 = vmatpush1.bf16.msra.mxu0 0
        %7611 = vmatprep.subr.bf16.mxu0 0
        %7612 = vmatpush1.bf16.msra.mxu0 0
        %7613 = vmatprep.subr.bf16.mxu0 0
        %7614 = vmatpush1.bf16.msra.mxu0 0
        %7615 = vmatprep.mubr.bf16.mxu0 0
        %7616 = vmatmul.mubr.bf16.gmra.mrb[0].mxu0 %v7518
        %v7617 = vpop.f32.mrb[0].mxu0
        %v7618 = vadd.f32 0.0, %v7617
        %v7619 = vpop.f32.mrb[0].mxu0
        %v7620 = vpop.f32.mrb[0].mxu0
        %v7621 = vpop.f32.mrb[0].mxu0
        %7622 = vdwg.mxu0
        %v7623 = vld [vmem:[%s5] sm:$0x1]
        %v7624 = vmul.f32 %v7618, %v7623
        %v7625 = vld [vmem:[%s6] sm:$0x1]
        %v7626 = vadd.f32 %v7624, %v7625
        %v7627 = vpack.c.bf16 %v7626, %v7626
        %v7628 = vld [vmem:[%s7] sm:$0xf]
        %v7629 = vld [vmem:[%s7 + $0x4] sm:$0xf]
        %v7630 = vld [vmem:[%s7 + $0x8] sm:$0xf]
        %v7631 = vld [vmem:[%s7 + $0xc] sm:$0xf]
        %v7632 = vld [vmem:[%s8] sm:$0x1]
        %v7637 = vunpack.c.l.b16 %v7628
        %v7638 = vunpack.c.l.b16 %v7629
        %v7639 = vunpack.c.l.b16 %v7630
        %v7640 = vunpack.c.l.b16 %v7631
        %v7641 = vpack.c.b16 %v7638, %v7637
        %v7642 = vpack.c.b16 %v7640, %v7639
        %vm7645 = vcmask 261120
        %v7647 = vsel %vm7645, %v7627, 0
        %7649 = vmatprep.subr.bf16.mxu0 0
        %7650 = vmatpush1.bf16.msra.mxu0 %v7641
        %7651 = vmatprep.subr.bf16.mxu0 0
        %7652 = vmatpush1.bf16.msra.mxu0 %v7642
        %7653 = vmatprep.subr.bf16.mxu0 0
        %7654 = vmatpush1.bf16.msra.mxu0 0
        %7655 = vmatprep.subr.bf16.mxu0 0
        %7656 = vmatpush1.bf16.msra.mxu0 0
        %7657 = vmatprep.subr.bf16.mxu0 0
        %7658 = vmatpush1.bf16.msra.mxu0 0
        %7659 = vmatprep.subr.bf16.mxu0 0
        %7660 = vmatpush1.bf16.msra.mxu0 0
        %7661 = vmatprep.subr.bf16.mxu0 0
        %7662 = vmatpush1.bf16.msra.mxu0 0
        %7663 = vmatprep.subr.bf16.mxu0 0
        %7664 = vmatpush1.bf16.msra.mxu0 0
        %7665 = vmatprep.subr.bf16.mxu0 0
        %7666 = vmatpush1.bf16.msra.mxu0 0
        %7667 = vmatprep.subr.bf16.mxu0 0
        %7668 = vmatpush1.bf16.msra.mxu0 0
        %7669 = vmatprep.subr.bf16.mxu0 0
        %7670 = vmatpush1.bf16.msra.mxu0 0
        %7671 = vmatprep.subr.bf16.mxu0 0
        %7672 = vmatpush1.bf16.msra.mxu0 0
        %7673 = vmatprep.subr.bf16.mxu0 0
        %7674 = vmatpush1.bf16.msra.mxu0 0
        %7675 = vmatprep.subr.bf16.mxu0 0
        %7676 = vmatpush1.bf16.msra.mxu0 0
        %7677 = vmatprep.subr.bf16.mxu0 0
        %7678 = vmatpush1.bf16.msra.mxu0 0
        %7679 = vmatprep.subr.bf16.mxu0 0
        %7680 = vmatpush1.bf16.msra.mxu0 0
        %7681 = vmatprep.mubr.bf16.mxu0 0
        %7682 = vmatmul.mubr.bf16.gmra.mrb[0].mxu0 %v7647
        %v7683 = vpop.f32.mrb[0].mxu0
        %v7684 = vadd.f32 %v7632, %v7683
        %v7685 = vpop.f32.mrb[0].mxu0
        %v7686 = vpop.f32.mrb[0].mxu0
        %v7687 = vpop.f32.mrb[0].mxu0
        %7688 = vdwg.mxu0
        %s7689 = scalar_lea.vmem %s7, 16
        %v7690 = vld [vmem:[%s7689] sm:$0xf]
        %v7691 = vld [vmem:[%s7689 + $0x4] sm:$0xf]
        %v7692 = vld [vmem:[%s7689 + $0x8] sm:$0xf]
        %v7693 = vld [vmem:[%s7689 + $0xc] sm:$0xf]
        %v7694 = vld [vmem:[%s8 + $0x1] sm:$0x1]
        %v7699 = vunpack.c.l.b16 %v7690
        %v7700 = vunpack.c.l.b16 %v7691
        %v7701 = vunpack.c.l.b16 %v7692
        %v7702 = vunpack.c.l.b16 %v7693
        %v7703 = vpack.c.b16 %v7700, %v7699
        %v7704 = vpack.c.b16 %v7702, %v7701
        %7707 = vmatprep.subr.bf16.mxu0 0
        %7708 = vmatpush1.bf16.msra.mxu0 %v7703
        %7709 = vmatprep.subr.bf16.mxu0 0
        %7710 = vmatpush1.bf16.msra.mxu0 %v7704
        %7711 = vmatprep.subr.bf16.mxu0 0
        %7712 = vmatpush1.bf16.msra.mxu0 0
        %7713 = vmatprep.subr.bf16.mxu0 0
        %7714 = vmatpush1.bf16.msra.mxu0 0
        %7715 = vmatprep.subr.bf16.mxu0 0
        %7716 = vmatpush1.bf16.msra.mxu0 0
        %7717 = vmatprep.subr.bf16.mxu0 0
        %7718 = vmatpush1.bf16.msra.mxu0 0
        %7719 = vmatprep.subr.bf16.mxu0 0
        %7720 = vmatpush1.bf16.msra.mxu0 0
        %7721 = vmatprep.subr.bf16.mxu0 0
        %7722 = vmatpush1.bf16.msra.mxu0 0
        %7723 = vmatprep.subr.bf16.mxu0 0
        %7724 = vmatpush1.bf16.msra.mxu0 0
        %7725 = vmatprep.subr.bf16.mxu0 0
        %7726 = vmatpush1.bf16.msra.mxu0 0
        %7727 = vmatprep.subr.bf16.mxu0 0
        %7728 = vmatpush1.bf16.msra.mxu0 0
        %7729 = vmatprep.subr.bf16.mxu0 0
        %7730 = vmatpush1.bf16.msra.mxu0 0
        %7731 = vmatprep.subr.bf16.mxu0 0
        %7732 = vmatpush1.bf16.msra.mxu0 0
        %7733 = vmatprep.subr.bf16.mxu0 0
        %7734 = vmatpush1.bf16.msra.mxu0 0
        %7735 = vmatprep.subr.bf16.mxu0 0
        %7736 = vmatpush1.bf16.msra.mxu0 0
        %7737 = vmatprep.subr.bf16.mxu0 0
        %7738 = vmatpush1.bf16.msra.mxu0 0
        %7739 = vmatprep.mubr.bf16.mxu0 0
        %7740 = vmatmul.mubr.bf16.gmra.mrb[0].mxu0 %v7647
        %v7741 = vpop.f32.mrb[0].mxu0
        %v7742 = vadd.f32 %v7694, %v7741
        %v7743 = vpop.f32.mrb[0].mxu0
        %v7744 = vpop.f32.mrb[0].mxu0
        %v7745 = vpop.f32.mrb[0].mxu0
        %7746 = vdwg.mxu0
        %v7748 = vrot.slane %v7742, 7
        %vm7750 = vcmask 1040384
        %v7751 = vsel %vm7750, %v7684, %v7748
        %vm7752 = vcmask 1041408
        %v7753 = vsel %vm7752, %v7751, -inf
        %v7754 = vrot.slane %v7753, 4
        %v7755 = vmax.f32 %v7753, %v7754
        %v7756 = vrot.slane %v7755, 2
        %v7757 = vmax.f32 %v7755, %v7756
        %v7758 = vrot.slane %v7757, 1
        %v7759 = vmax.f32 %v7757, %v7758
        %v7760 = vsub.f32 %v7751, %v7759
        %v7761 = vmul.f32 %v7760, 1.442695
        %v7762 = vpow.pop %v7761
        %v7763 = vsel %vm7752, %v7762, 0.0
        %v7764 = vrot.slane %v7763, 4
        %v7765 = vadd.f32 %v7763, %v7764
        %v7766 = vrot.slane %v7765, 2
        %v7767 = vadd.f32 %v7765, %v7766
        %v7768 = vrot.slane %v7767, 1
        %v7769 = vadd.f32 %v7767, %v7768
        %v7770 = vrcp.pop %v7769
        %v7771 = vmul.f32 %v7762, %v7770
        %v7772 = vlaneseq
        %v7773 = vshrl.u32 %v7772, 7
        %v7774 = vsub.s32 0, %v7773
        %v7775 = vrot.slane %v7771, %v7774
        %v7776 = vmul.f32 %v7384, %v7775
        %v7777 = vmul.f32 %v7385, %v7775
        %v7778 = vmul.f32 %v7386, %v7775
        %v7779 = vmul.f32 %v7387, %v7775
        %v7780 = vmul.f32 %v7388, %v7775
        %v7781 = vmul.f32 %v7389, %v7775
        %v7782 = vmul.f32 %v7390, %v7775
        %v7783 = vmul.f32 %v7391, %v7775
        %v7784 = vmul.f32 %v7392, %v7775
        %v7785 = vmul.f32 %v7393, %v7775
        %v7786 = vmul.f32 %v7394, %v7775
        %v7787 = vmul.f32 %v7395, %v7775
        %v7788 = vmul.f32 %v7396, %v7775
        %v7789 = vmul.f32 %v7397, %v7775
        %v7790 = vmul.f32 %v7398, %v7775
        %v7791 = vmul.f32 %v7399, %v7775
        %v7792 = vmul.f32 %v7400, %v7775
        %v7793 = vmul.f32 %v7401, %v7775
        %v7794 = vmul.f32 %v7402, %v7775
        %v7795 = vmul.f32 %v7403, %v7775
        %v7796 = vmul.f32 %v7404, %v7775
        %v7797 = vmul.f32 %v7405, %v7775
        %v7798 = vmul.f32 %v7406, %v7775
        %v7799 = vmul.f32 %v7407, %v7775
        %v7800 = vmul.f32 %v7408, %v7775
        %v7801 = vmul.f32 %v7409, %v7775
        %v7802 = vmul.f32 %v7410, %v7775
        %v7803 = vmul.f32 %v7411, %v7775
        %v7804 = vmul.f32 %v7412, %v7775
        %v7805 = vmul.f32 %v7413, %v7775
        %v7806 = vmul.f32 %v7414, %v7775
        %v7807 = vmul.f32 %v7415, %v7775
        %v7808 = vlaneseq
        %v7809 = vshrl.u32 %v7808, 7
        %v7810 = vsub.s32 1, %v7809
        %v7811 = vrot.slane %v7771, %v7810
        %v7812 = vmul.f32 %v7416, %v7811
        %v7813 = vmul.f32 %v7417, %v7811
        %v7814 = vmul.f32 %v7418, %v7811
        %v7815 = vmul.f32 %v7419, %v7811
        %v7816 = vmul.f32 %v7420, %v7811
        %v7817 = vmul.f32 %v7421, %v7811
        %v7818 = vmul.f32 %v7422, %v7811
        %v7819 = vmul.f32 %v7423, %v7811
        %v7820 = vmul.f32 %v7424, %v7811
        %v7821 = vmul.f32 %v7425, %v7811
        %v7822 = vmul.f32 %v7426, %v7811
        %v7823 = vmul.f32 %v7427, %v7811
        %v7824 = vmul.f32 %v7428, %v7811
        %v7825 = vmul.f32 %v7429, %v7811
        %v7826 = vmul.f32 %v7430, %v7811
        %v7827 = vmul.f32 %v7431, %v7811
        %v7828 = vmul.f32 %v7432, %v7811
        %v7829 = vmul.f32 %v7433, %v7811
        %v7830 = vmul.f32 %v7434, %v7811
        %v7831 = vmul.f32 %v7435, %v7811
        %v7832 = vmul.f32 %v7436, %v7811
        %v7833 = vmul.f32 %v7437, %v7811
        %v7834 = vmul.f32 %v7438, %v7811
        %v7835 = vmul.f32 %v7439, %v7811
        %v7836 = vmul.f32 %v7440, %v7811
        %v7837 = vmul.f32 %v7441, %v7811
        %v7838 = vmul.f32 %v7442, %v7811
        %v7839 = vmul.f32 %v7443, %v7811
        %v7840 = vmul.f32 %v7444, %v7811
        %v7841 = vmul.f32 %v7445, %v7811
        %v7842 = vmul.f32 %v7446, %v7811
        %v7843 = vmul.f32 %v7447, %v7811
        %v7844 = vadd.f32 %v7776, %v7812
        %v7845 = vadd.f32 %v7777, %v7813
        %v7846 = vadd.f32 %v7778, %v7814
        %v7847 = vadd.f32 %v7779, %v7815
        %v7848 = vadd.f32 %v7780, %v7816
        %v7849 = vadd.f32 %v7781, %v7817
        %v7850 = vadd.f32 %v7782, %v7818
        %v7851 = vadd.f32 %v7783, %v7819
        %v7852 = vadd.f32 %v7784, %v7820
        %v7853 = vadd.f32 %v7785, %v7821
        %v7854 = vadd.f32 %v7786, %v7822
        %v7855 = vadd.f32 %v7787, %v7823
        %v7856 = vadd.f32 %v7788, %v7824
        %v7857 = vadd.f32 %v7789, %v7825
        %v7858 = vadd.f32 %v7790, %v7826
        %v7859 = vadd.f32 %v7791, %v7827
        %v7860 = vadd.f32 %v7792, %v7828
        %v7861 = vadd.f32 %v7793, %v7829
        %v7862 = vadd.f32 %v7794, %v7830
        %v7863 = vadd.f32 %v7795, %v7831
        %v7864 = vadd.f32 %v7796, %v7832
        %v7865 = vadd.f32 %v7797, %v7833
        %v7866 = vadd.f32 %v7798, %v7834
        %v7867 = vadd.f32 %v7799, %v7835
        %v7868 = vadd.f32 %v7800, %v7836
        %v7869 = vadd.f32 %v7801, %v7837
        %v7870 = vadd.f32 %v7802, %v7838
        %v7871 = vadd.f32 %v7803, %v7839
        %v7872 = vadd.f32 %v7804, %v7840
        %v7873 = vadd.f32 %v7805, %v7841
        %v7874 = vadd.f32 %v7806, %v7842
        %v7875 = vadd.f32 %v7807, %v7843
        %7876 = vst [vmem:[%s340] sm:$0xff] %v7844
        %7877 = vst [vmem:[%s340 + $0x8] sm:$0xff] %v7845
        %7878 = vst [vmem:[%s340 + $0x10] sm:$0xff] %v7846
        %7879 = vst [vmem:[%s340 + $0x18] sm:$0xff] %v7847
        %7880 = vst [vmem:[%s340 + $0x20] sm:$0xff] %v7848
        %7881 = vst [vmem:[%s340 + $0x28] sm:$0xff] %v7849
        %7882 = vst [vmem:[%s340 + $0x30] sm:$0xff] %v7850
        %7883 = vst [vmem:[%s340 + $0x38] sm:$0xff] %v7851
        %7884 = vst [vmem:[%s340 + $0x40] sm:$0xff] %v7852
        %7885 = vst [vmem:[%s340 + $0x48] sm:$0xff] %v7853
        %7886 = vst [vmem:[%s340 + $0x50] sm:$0xff] %v7854
        %7887 = vst [vmem:[%s340 + $0x58] sm:$0xff] %v7855
        %7888 = vst [vmem:[%s340 + $0x60] sm:$0xff] %v7856
        %7889 = vst [vmem:[%s340 + $0x68] sm:$0xff] %v7857
        %7890 = vst [vmem:[%s340 + $0x70] sm:$0xff] %v7858
        %7891 = vst [vmem:[%s340 + $0x78] sm:$0xff] %v7859
        %7892 = vst [vmem:[%s340 + $0x80] sm:$0xff] %v7860
        %7893 = vst [vmem:[%s340 + $0x88] sm:$0xff] %v7861
        %7894 = vst [vmem:[%s340 + $0x90] sm:$0xff] %v7862
        %7895 = vst [vmem:[%s340 + $0x98] sm:$0xff] %v7863
        %7896 = vst [vmem:[%s340 + $0xa0] sm:$0xff] %v7864
        %7897 = vst [vmem:[%s340 + $0xa8] sm:$0xff] %v7865
        %7898 = vst [vmem:[%s340 + $0xb0] sm:$0xff] %v7866
        %7899 = vst [vmem:[%s340 + $0xb8] sm:$0xff] %v7867
        %7900 = vst [vmem:[%s340 + $0xc0] sm:$0xff] %v7868
        %7901 = vst [vmem:[%s340 + $0xc8] sm:$0xff] %v7869
        %7902 = vst [vmem:[%s340 + $0xd0] sm:$0xff] %v7870
        %7903 = vst [vmem:[%s340 + $0xd8] sm:$0xff] %v7871
        %7904 = vst [vmem:[%s340 + $0xe0] sm:$0xff] %v7872
        %7905 = vst [vmem:[%s340 + $0xe8] sm:$0xff] %v7873
        %7906 = vst [vmem:[%s340 + $0xf0] sm:$0xff] %v7874
        %7907 = vst [vmem:[%s340 + $0xf8] sm:$0xff] %v7875
        %s7908 = sand.u32 %s226, 1
        %s7909 = scalar_lea.sflag [#allocation5], %s7908
        %s7910 = sand.u32 %s226, 1
        %s7911 = smul.addr %s7910, 256
        %s7912 = scalar_lea.vmem [#allocation6], %s7911
        // Predicated region
        $region61: #{tpu_custom_call.1} parent=55 // pred_check
          %p7913 = pneg %p236
        $region62: #{tpu_custom_call.1} parent=55 // pred_check_branch
          %7915 = sbr.rel (%p7913) target = $region64
        $region63: #{tpu_custom_call.1} parent=55 // pred_region
          %s7917 = ssub.s32 4096, 4096
          %7918 = vsyncadd %s7909, %s7917
          %s7919 = smul.addr %s24, 32
          %s7920 = smul.addr %s7919, 128
          %s7921 = scalar_lea.hbm %s9, %s7920
          %s7922 = sshll.u32 %s7912, 4
          %s7923 = int_to_ptr.vmem [resolvable:$true] %s7922
          %7928 = dma.vmem_to_hbm [thread:$0]  %s7923, 4096, %s7921, %s7909, 128, 128, 8
        $region64: #{tpu_custom_call.1} parent=55 // pred_fallthru
          _
      $region56: #{tpu_custom_call.1} parent=5 // pred_fallthru
        _
      %p7929 = scmp.le.s32.totalorder 2, %s19
      // Predicated region
      $region65: #{tpu_custom_call.1} parent=5 // pred_check
        %p7930 = pneg %p7929
      $region66: #{tpu_custom_call.1} parent=5 // pred_check_branch
        %7932 = sbr.rel (%p7930) target = $region68
      $region67: #{tpu_custom_call.1} parent=5 // pred_region
        %s7933 = ssub.s32 %s19, 2
        // Predicated region
        $region69: #{tpu_custom_call.1} parent=67 // pred_check
          %p7934 = pneg %p242
        $region70: #{tpu_custom_call.1} parent=67 // pred_check_branch
          %7936 = sbr.rel (%p7934) target = $region72
        $region71: #{tpu_custom_call.1} parent=67 // pred_region
          %s7937 = sand.u32 %s227, 1
          %s7938 = scalar_lea.sflag [#allocation5], %s7937
          %s7939 = sand.u32 %s227, 1
          %s7940 = smul.addr %s7939, 256
          %s7941 = scalar_lea.vmem [#allocation6], %s7940
          %7942 = dma.done %s7938, 4096
        $region72: #{tpu_custom_call.1} parent=67 // pred_fallthru
          _
      $region68: #{tpu_custom_call.1} parent=5 // pred_fallthru
        _
    $region6: #{tpu_custom_call.1} parent=1 // loop_footer
      %s23 = sadd.s32 1, %s19
    $region7: #{tpu_custom_call.1} parent=1 // loop_footer_branch
      %18 = sbr.rel target = $region3
    $region8: #{tpu_custom_call.1} parent=1 // loop_exit
      _
    %7943 = vsyncpa [#allocation4], 1
    %s7944 = scalar_lea.sflag [#allocation4], 1
    %7945 = vsyncpa %s7944, 1
    %7946 = vsyncpa [#allocation5], 1
    %s7947 = scalar_lea.sflag [#allocation5], 1
    %7948 = vsyncpa %s7947, 1

</llo_original>
